<compile_context>
chip_gen: v7x
topology: tpu7x:2x2x1
jax: 0.10.0
libtpu: 0.0.40
codegen_flags: <defaults>
</compile_context>

<pallas_src>
import functools

import numpy as np
import jax
import jax.numpy as jnp
from jax import lax
from jax.experimental import pallas as pl
from jax.experimental.pallas import tpu as pltpu


# -----------------------------------------------------------------------------
# Deterministic parameter setup: replicate scipy.ndimage.gaussian_laplace on a
# centered delta (exactly what HFENLoss.__init__ does), in plain numpy.
# -----------------------------------------------------------------------------
def _gaussian_kernel1d(sigma, order, radius):
    """Same math as scipy.ndimage._filters._gaussian_kernel1d."""
    sigma2 = sigma * sigma
    x = np.arange(-radius, radius + 1)
    phi_x = np.exp(-0.5 / sigma2 * x ** 2)
    phi_x = phi_x / phi_x.sum()
    if order == 0:
        return phi_x
    exponent_range = np.arange(order + 1)
    q = np.zeros(order + 1)
    q[0] = 1
    D = np.diag(exponent_range[1:], 1)
    P = np.diag(np.ones(order) / -sigma2, -1)
    Q_deriv = D + P
    for _ in range(order):
        q = Q_deriv.dot(q)
    q = (x[:, None] ** exponent_range).dot(q)
    return q * phi_x


def _correlate1d_reflect(arr, weights, axis):
    """scipy.ndimage.correlate1d with mode='reflect' (== np.pad 'symmetric')."""
    r = len(weights) // 2
    pad = [(0, 0)] * arr.ndim
    pad[axis] = (r, r)
    ap = np.pad(arr, pad, mode="symmetric")
    out = np.zeros_like(arr)
    n = arr.shape[axis]
    for j, w in enumerate(weights):
        sl = [slice(None)] * arr.ndim
        sl[axis] = slice(j, j + n)
        out += w * ap[tuple(sl)]
    return out


def _gaussian_filter(arr, sigma, orders, radius):
    out = arr
    for ax, order in enumerate(orders):
        w = _gaussian_kernel1d(sigma, order, radius)[::-1]
        out = _correlate1d_reflect(out, w, ax)
    return out


def make_log_kernel(kernel_size=11, sigma=2):
    """3-D Laplacian-of-Gaussian kernel, identical to HFENLoss.__init__."""
    assert kernel_size % 2 == 1, "kernel size must be odd"
    delta = np.zeros((kernel_size,) * 3, dtype=np.float64)
    mid = kernel_size // 2
    delta[mid, mid, mid] = 1.0
    radius = int(4.0 * sigma + 0.5)  # scipy default truncate=4.0
    out = np.zeros_like(delta)
    for axis in range(3):            # generic_laplace: sum of 2nd derivatives
        orders = [0, 0, 0]
        orders[axis] = 2
        out += _gaussian_filter(delta, sigma, orders, radius)
    return out.astype(np.float32)    # torch.from_numpy(...).to(torch.float)


# -----------------------------------------------------------------------------
# Pallas kernel + wrapper
# -----------------------------------------------------------------------------
def _round_up(x, m):
    return (x + m - 1) // m * m


def _hfen_kernel(t_ref, x_ref, out_ref, *, D, Dp):
    """Per-batch body.

    t_ref : (K*HWP, HWO) bf16  -- flattened per-depth-tap im2col weights
    x_ref : (M, K*HWP)   bf16  -- depth im2col of the stacked [pred; targ]
                                  zero-padded volume (M = Dp + D rows)
    out_ref: (2, 128)    f32   -- row 0: sum|pf-tf|^2, row 1: sum|tf|^2
    """
    # One MXU matmul: bf16 operands, f32 accumulation.
    acc = jnp.dot(x_ref[...], t_ref[...], preferred_element_type=jnp.float32)

    pf = acc[0:D, :]               # filtered pred (this batch)
    tf = acc[Dp:Dp + D, :]         # filtered targ (this batch)
    diff = pf - tf                 # f32 elementwise math (v5e-safe)

    sd = jnp.sum(diff * diff, keepdims=True)   # (1, 1)
    st = jnp.sum(tf * tf, keepdims=True)       # (1, 1)
    row = lax.broadcasted_iota(jnp.int32, out_ref.shape, 0)
    out_ref[...] = jnp.where(row == 0, sd, st)


def _build_tap_matrices(log_kernel, H, W, HWP, HWO):
    """Per-depth-tap im2col weights, lane-padded and cast to bf16.

    T[kd, h_in*Wp + w_in, h*W + w] = kern[kd, h_in - h, w_in - w]  (if valid)
    Rows >= Hp*Wp and cols >= H*W are zero, so lane padding never changes sums.
    Returns the flattened (K*HWP, HWO) matrix.
    """
    kern = np.asarray(log_kernel, np.float32)
    K = kern.shape[0]
    pad = K // 2
    Hp, Wp = H + 2 * pad, W + 2 * pad
    kh = np.arange(Hp)[:, None] - np.arange(H)[None, :]        # (Hp, H)
    kw = np.arange(Wp)[:, None] - np.arange(W)[None, :]        # (Wp, W)
    vh = (kh >= 0) & (kh < K)
    vw = (kw >= 0) & (kw < K)
    T = kern[:, np.clip(kh, 0, K - 1)[:, None, :, None],
                np.clip(kw, 0, K - 1)[None, :, None, :]]       # (K, Hp, Wp, H, W)
    T = T * (vh[:, None, :, None] & vw[None, :, None, :])
    T = T.reshape(K, Hp * Wp, H * W)
    Tp = np.zeros((K, HWP, HWO), np.float32)
    Tp[:, :Hp * Wp, :H * W] = T
    return jnp.asarray(Tp.reshape(K * HWP, HWO), jnp.bfloat16)


def hfen_loss(pred, targ, log_kernel):
    """HFEN loss. pred/targ: (N, 1, D, H, W) float32 (NCDHW, like F.conv3d)."""
    pred = jnp.asarray(pred, jnp.float32)
    targ = jnp.asarray(targ, jnp.float32)
    N, C, D, H, W = pred.shape
    assert C == 1 and targ.shape == pred.shape
    K = int(log_kernel.shape[0])
    pad = K // 2
    Dp, Hp, Wp = D + 2 * pad, H + 2 * pad, W + 2 * pad
    HWP = _round_up(Hp * Wp, 128)    # lane-padded per-tap contraction dim
    HWO = _round_up(H * W, 128)      # lane-padded output dim
    M = Dp + D                       # rows [0,D): pred conv, [Dp,Dp+D): targ conv

    T = _build_tap_matrices(log_kernel, H, W, HWP, HWO)        # (K*HWP, HWO) bf16

    def pad_flat(x):                                           # (N,D,H,W) -> (N,Dp,Hp*Wp)
        x = jnp.pad(x, ((0, 0), (pad, pad), (pad, pad), (pad, pad)))
        return x.reshape(N, Dp, Hp * Wp)

    # Stack pred and targ along the already zero-padded depth axis.  A depth
    # window of length K starting at output row r < D stays entirely in the
    # pred half, and one starting at r in [Dp, Dp+D) stays in the targ half,
    # so one stacked pass computes both 'same' convolutions.
    xs = jnp.concatenate([pad_flat(pred[:, 0]), pad_flat(targ[:, 0])], axis=1)
    xs = jnp.pad(xs, ((0, 0), (0, 0), (0, HWP - Hp * Wp))).astype(jnp.bfloat16)

    # Host-side depth im2col (layout plumbing, no FLOPs): xi[n, r, kd*HWP + c]
    # = xs[n, r + kd, c].  This lets the kernel issue one aligned matmul
    # instead of K bf16 sublane-misaligned row slices.
    xi = jnp.stack([xs[:, kd:kd + M, :] for kd in range(K)], axis=2)
    xi = xi.reshape(N, M, K * HWP)                             # (N, M, K*HWP) bf16

    kernel_fn = functools.partial(_hfen_kernel, D=D, Dp=Dp)

    flops = 2 * N * M * (K * HWP) * HWO                        # issued matmul MACs*2
    bytes_accessed = int(T.size) * 2 + int(xi.size) * 2 + N * 2 * 128 * 4

    partial = pl.pallas_call(
        kernel_fn,
        out_shape=jax.ShapeDtypeStruct((N, 2, 128), jnp.float32),
        grid=(N,),
        in_specs=[
            pl.BlockSpec((K * HWP, HWO), lambda b: (0, 0)),          # tap weights (resident)
            pl.BlockSpec((None, M, K * HWP), lambda b: (b, 0, 0)),   # per-batch im2col rows
        ],
        out_specs=pl.BlockSpec((None, 2, 128), lambda b: (b, 0, 0)),
        compiler_params=pltpu.CompilerParams(
            dimension_semantics=("parallel",),        # per-batch partials, no carry
            vmem_limit_bytes=48 * 1024 * 1024),       # <= v7x's 64 MiB physical VMEM
        cost_estimate=pl.CostEstimate(
            flops=flops, transcendentals=0, bytes_accessed=bytes_accessed),
    )(T, xi)

    sd = jnp.sum(partial[:, 0, 0])
    st = jnp.sum(partial[:, 1, 0])
    return jnp.sqrt(sd) / jnp.sqrt(st)


if __name__ == "__main__":
    key = jax.random.PRNGKey(0)
    k1, k2 = jax.random.split(key)
    N, C, D, H, W = 2, 1, 8, 16, 16
    pred = jax.random.normal(k1, (N, C, D, H, W), dtype=jnp.float32)
    targ = jax.random.normal(k2, (N, C, D, H, W), dtype=jnp.float32)

    log_k = make_log_kernel(kernel_size=11, sigma=2)

    loss = hfen_loss(pred, targ, log_k)
    loss = jax.block_until_ready(loss)

    # Pure-JAX reference (XLA conv3d, f32) for a sanity check.
    kern = jnp.asarray(log_k)[None, None]                      # (1, 1, K, K, K)
    dn = lax.conv_dimension_numbers(pred.shape, kern.shape,
                                    ("NCDHW", "OIDHW", "NCDHW"))

    def filt(x):
        return lax.conv_general_dilated(x, kern, (1, 1, 1), "SAME",
                                        dimension_numbers=dn,
                                        precision=lax.Precision.HIGHEST)

    pf, tf = filt(pred), filt(targ)
    ref = jnp.sqrt(jnp.sum((pf - tf) ** 2)) / jnp.sqrt(jnp.sum(tf ** 2))

    assert jnp.isfinite(loss), loss
    assert jnp.allclose(loss, ref, rtol=2e-2, atol=1e-4), (float(loss), float(ref))
    print("KERNEL_OK")
</pallas_src>

<mosaic_0001>
module attributes {stable_mosaic.version = 11 : i64} {
  func.func @_hfen_kernel(%arg0: i32, %arg1: memref<8448x256xbf16, #tpu.memory_space<vmem>>, %arg2: memref<1x26x8448xbf16, #tpu.memory_space<vmem>>, %arg3: memref<1x2x128xf32, #tpu.memory_space<vmem>>) attributes {dimension_semantics = [#tpu.dimension_semantics<parallel>], iteration_bounds = array<i64: 2>, scalar_prefetch = 0 : i64, scratch_operands = 0 : i64, tpu.core_type = #tpu.core_type<tc>, window_params = [{pipeline_mode = #tpu.pipeline_mode<synchronous>, transform_indices = @transform_0, window_bounds = array<i64: 8448, 256>}, {transform_indices = @transform_1, window_bounds = array<i64: 1, 26, 8448>}, {transform_indices = @transform_2, window_bounds = array<i64: 1, 2, 128>}]} {
    %c0 = arith.constant 0 : index
    %c0_0 = arith.constant 0 : index
    %c0_1 = arith.constant 0 : index
    %0 = vector.load %arg2[%c0, %c0_0, %c0_1] : memref<1x26x8448xbf16, #tpu.memory_space<vmem>>, vector<1x26x8448xbf16>
    %1 = vector.shape_cast %0 : vector<1x26x8448xbf16> to vector<26x8448xbf16>
    %c0_2 = arith.constant 0 : index
    %c0_3 = arith.constant 0 : index
    %2 = vector.load %arg1[%c0_2, %c0_3] : memref<8448x256xbf16, #tpu.memory_space<vmem>>, vector<8448x256xbf16>
    %cst = arith.constant dense<0.000000e+00> : vector<26x256xf32>
    %3 = tpu.matmul %1, %2, %cst {dimension_numbers = #tpu.dot_dimension_numbers<[1], [0], [0], [1], [0, 0, 1, 1], [], []>} : vector<26x8448xbf16>, vector<8448x256xbf16>, vector<26x256xf32> -> vector<26x256xf32>
    %4 = vector.extract_strided_slice %3 {offsets = [0, 0], sizes = [8, 256], strides = [1, 1]} : vector<26x256xf32> to vector<8x256xf32>
    %5 = vector.extract_strided_slice %3 {offsets = [18, 0], sizes = [8, 256], strides = [1, 1]} : vector<26x256xf32> to vector<8x256xf32>
    %6 = arith.subf %4, %5 : vector<8x256xf32>
    %7 = arith.mulf %6, %6 : vector<8x256xf32>
    %8 = vector.shape_cast %7 : vector<8x256xf32> to vector<1x8x256xf32>
    %cst_4 = arith.constant dense<0.000000e+00> : vector<1xf32>
    %9 = vector.multi_reduction <add>, %8, %cst_4 [1, 2] : vector<1x8x256xf32> to vector<1xf32>
    %10 = vector.shape_cast %9 : vector<1xf32> to vector<1x1x1xf32>
    %11 = vector.extract %10[0, 0, 0] : f32 from vector<1x1x1xf32>
    %12 = vector.broadcast %11 : f32 to vector<1x1xf32>
    %13 = arith.mulf %5, %5 : vector<8x256xf32>
    %14 = vector.shape_cast %13 : vector<8x256xf32> to vector<1x8x256xf32>
    %cst_5 = arith.constant dense<0.000000e+00> : vector<1xf32>
    %15 = vector.multi_reduction <add>, %14, %cst_5 [1, 2] : vector<1x8x256xf32> to vector<1xf32>
    %16 = vector.shape_cast %15 : vector<1xf32> to vector<1x1x1xf32>
    %17 = vector.extract %16[0, 0, 0] : f32 from vector<1x1x1xf32>
    %18 = vector.broadcast %17 : f32 to vector<1x1xf32>
    %19 = tpu.iota {dimensions = array<i32: 0>} : vector<2x128xi32>
    %c0_i32 = arith.constant 0 : i32
    %20 = vector.broadcast %c0_i32 : i32 to vector<2x128xi32>
    %21 = arith.cmpi eq, %19, %20 : vector<2x128xi32>
    %22 = vector.shape_cast %12 : vector<1x1xf32> to vector<1x1xf32>
    %23 = vector.broadcast %22 : vector<1x1xf32> to vector<2x128xf32>
    %24 = vector.shape_cast %18 : vector<1x1xf32> to vector<1x1xf32>
    %25 = vector.broadcast %24 : vector<1x1xf32> to vector<2x128xf32>
    %26 = arith.select %21, %23, %25 : vector<2x128xi1>, vector<2x128xf32>
    %c0_6 = arith.constant 0 : index
    %c0_7 = arith.constant 0 : index
    %c0_8 = arith.constant 0 : index
    %27 = vector.load %arg3[%c0_6, %c0_7, %c0_8] : memref<1x2x128xf32, #tpu.memory_space<vmem>>, vector<1x2x128xf32>
    %28 = vector.shape_cast %27 : vector<1x2x128xf32> to vector<2x128xf32>
    %29 = vector.shape_cast %26 : vector<2x128xf32> to vector<1x2x128xf32>
    tpu.vector_store %arg3[%c0_6, %c0_7, %c0_8], %29 {strides = array<i32>} : memref<1x2x128xf32, #tpu.memory_space<vmem>>, vector<1x2x128xf32>,
    return
  }
  func.func @transform_0(%arg0: i32) -> (i32, i32) {
    %c0_i32 = arith.constant 0 : i32
    %c0_i32_0 = arith.constant 0 : i32
    %c0_i32_1 = arith.constant 0 : i32
    return %c0_i32, %c0_i32_0 : i32, i32
  }
  func.func @transform_1(%arg0: i32) -> (i32, i32, i32) {
    %c0_i32 = arith.constant 0 : i32
    %c0_i32_0 = arith.constant 0 : i32
    %c0_i32_1 = arith.constant 0 : i32
    return %arg0, %c0_i32, %c0_i32_0 : i32, i32, i32
  }
  func.func @transform_2(%arg0: i32) -> (i32, i32, i32) {
    %c0_i32 = arith.constant 0 : i32
    %c0_i32_0 = arith.constant 0 : i32
    %c0_i32_1 = arith.constant 0 : i32
    return %arg0, %c0_i32, %c0_i32_0 : i32, i32, i32
  }
}

</mosaic_0001>

<llo_original>
// kernel: tpu_custom_call.1
$region0: #{tpu_custom_call.1}
  #allocation0 [shape = 'u32[]', space=smem, size = 0x4, offset = 0x4, fixed_abs, tag = 'smem constant byte address 0x4 - core index']
  #allocation1 [shape = 'u32[144,128]{1,0:T(1,128)}', space=vmem, size = 0x12000, scoped, tag = 'internal scratch']
  %s0 = inlined_call_operand.hbm [shape: bf16[8448,256], index: 0, kind: input, shape index: {}]
  %s1 = inlined_call_operand.vmem [shape: bf16[2,26,8448], index: 1, kind: input, shape index: {}]
  %s2 = inlined_call_operand.hbm [shape: f32[2,2,128], index: 2, kind: output, shape index: {}]
  %s3 = sld [smem:[#allocation0]]
  $region45: #{tpu_custom_call.1} parent=0
    _
  %s5 = ssub.s32 1, %s3
  %s6 = scalar_select 0, %s5, %s3
  $region1: #{tpu_custom_call.1} parent=0
    #allocation2 [shape = 'u8[4325376]{0}', space=vmem, size = 0x420000, scoped, tag = 'input window, operand 0, single buffered']
    #allocation3 [shape = 's32[2]{0}', space=sflag, size = 0x8, scoped, tag = 'scoped memory for tpu_custom_call.1']
    #allocation4 [shape = 's32[2]{0}', space=sflag, size = 0x8, scoped, tag = 'scoped memory for tpu_custom_call.1']
    #allocation5 [shape = 'u8[2048]{0}', space=vmem, size = 0x800, scoped, tag = 'output window, operand 0']
    %7 = vsyncpa [#allocation3], 0
    %8 = vsyncpa [#allocation4], 0
    %s9 = scalar_lea.sflag [#allocation4], 1
    %10 = vsyncpa %s9, 0
    loop: start=0, step=1, limit=4
    $region2: #{tpu_custom_call.1} parent=1 // loop_pre_header
      _
    $region3: #{tpu_custom_call.1} parent=1 // loop_header
      %s12 = sphi 0, %s16
      %p13 = scmp.ge.s32.totalorder %s12, 4
      %s20 = sphi 0, %s20
      %s22 = sphi 0, %s20
      %s23 = sphi 0, %s22
      %s37 = sphi 0, %s23
      %s43 = sphi 0, %s45
      %s46 = sphi 0, %s43
      %s47 = sphi 0, %s46
      %s63 = sphi 0, %s47
      %s69 = sphi 0, %s71
      %s72 = sphi 0, %s69
      %s73 = sphi 0, %s72
      %s89 = sphi 0, %s73
    $region4: #{tpu_custom_call.1} parent=1 // loop_header_branch
      %15 = sbr.rel (%p13) target = $region8
    $region5: #{tpu_custom_call.1} parent=1 // loop_body
      %s17 = ssub.s32 %s12, 1
      %s18 = ssub.s32 %s12, 2
      %s19 = sadd.s32 %s12, 1
      %s21 = sadd.s32 %s20, 1
      %p24 = scmp.eq.s32.totalorder %s12, 1
      %p25 = scmp.ne.s32.totalorder %s20, %s22
      %p26 = scmp.eq.s32.totalorder %s12, 0
      %p27 = por %p25, %p26
      %p28 = scmp.ne.s32.totalorder %s20, %s22
      %p29 = scmp.eq.s32.totalorder %s17, 1
      %p30 = por %p28, %p29
      %p31 = scmp.ne.s32.totalorder %s22, %s23
      %p32 = scmp.eq.s32.totalorder %s17, 0
      %p33 = por %p31, %p32
      %p34 = scmp.ne.s32.totalorder %s22, %s23
      %p35 = scmp.eq.s32.totalorder %s18, 1
      %p36 = por %p34, %p35
      %p38 = scmp.ne.s32.totalorder %s23, %s37
      %p39 = scmp.eq.s32.totalorder %s18, 0
      %p40 = por %p38, %p39
      %s41 = ssub.s32 %s12, %s19
      %p42 = scmp.eq.s32.totalorder %s41, 0
      %s44 = sadd.s32 %s43, 1
      %s45 = scalar_select %p42, %s43, %s44
      %p48 = pneg %p42
      %p49 = scmp.eq.s32.totalorder %s12, 1
      %p50 = por %p48, %p49
      %p51 = scmp.ne.s32.totalorder %s43, %s46
      %p52 = scmp.eq.s32.totalorder %s12, 0
      %p53 = por %p51, %p52
      %p54 = scmp.ne.s32.totalorder %s43, %s46
      %p55 = scmp.eq.s32.totalorder %s17, 1
      %p56 = por %p54, %p55
      %p57 = scmp.ne.s32.totalorder %s46, %s47
      %p58 = scmp.eq.s32.totalorder %s17, 0
      %p59 = por %p57, %p58
      %p60 = scmp.ne.s32.totalorder %s46, %s47
      %p61 = scmp.eq.s32.totalorder %s18, 1
      %p62 = por %p60, %p61
      %p64 = scmp.ne.s32.totalorder %s47, %s63
      %p65 = scmp.eq.s32.totalorder %s18, 0
      %p66 = por %p64, %p65
      %s67 = ssub.s32 %s12, %s19
      %p68 = scmp.eq.s32.totalorder %s67, 0
      %s70 = sadd.s32 %s69, 1
      %s71 = scalar_select %p68, %s69, %s70
      %p74 = pneg %p68
      %p75 = scmp.eq.s32.totalorder %s12, 1
      %p76 = por %p74, %p75
      %p77 = scmp.ne.s32.totalorder %s69, %s72
      %p78 = scmp.eq.s32.totalorder %s12, 0
      %p79 = por %p77, %p78
      %p80 = scmp.ne.s32.totalorder %s69, %s72
      %p81 = scmp.eq.s32.totalorder %s17, 1
      %p82 = por %p80, %p81
      %p83 = scmp.ne.s32.totalorder %s72, %s73
      %p84 = scmp.eq.s32.totalorder %s17, 0
      %p85 = por %p83, %p84
      %p86 = scmp.ne.s32.totalorder %s72, %s73
      %p87 = scmp.eq.s32.totalorder %s18, 1
      %p88 = por %p86, %p87
      %p90 = scmp.ne.s32.totalorder %s73, %s89
      %p91 = scmp.eq.s32.totalorder %s18, 0
      %p92 = por %p90, %p91
      %p93 = scmp.le.s32.totalorder 1, %s12
      %p94 = scmp.lt.s32.totalorder %s12, 3
      %p95 = pnand %p93, %p94
      %p96 = pneg %p95
      // Predicated region
      $region9: #{tpu_custom_call.1} parent=5 // pred_check
        _
      $region10: #{tpu_custom_call.1} parent=5 // pred_check_branch
        %98 = sbr.rel (%p95) target = $region12
      $region11: #{tpu_custom_call.1} parent=5 // pred_region
        %s99 = ssub.s32 %s12, 1
        // Predicated region
        $region13: #{tpu_custom_call.1} parent=11 // pred_check
          %p100 = pneg %p33
        $region14: #{tpu_custom_call.1} parent=11 // pred_check_branch
          %102 = sbr.rel (%p100) target = $region16
        $region15: #{tpu_custom_call.1} parent=11 // pred_region
          %s104 = ssub.s32 135168, 135168
          %105 = vsyncadd [#allocation3], %s104
          %s106 = sshll.u32 [#allocation2], 4
          %s107 = int_to_ptr.vmem [resolvable:$true] %s106
          %112 = dma.hbm_to_vmem [thread:$0]  %s0, 135168, %s107, [#allocation3], 128, 128, 8
        $region16: #{tpu_custom_call.1} parent=11 // pred_fallthru
          _
      $region12: #{tpu_custom_call.1} parent=5 // pred_fallthru
        _
      %p113 = scmp.lt.s32.totalorder %s12, 2
      // Predicated region
      $region17: #{tpu_custom_call.1} parent=5 // pred_check
        %p114 = pneg %p113
      $region18: #{tpu_custom_call.1} parent=5 // pred_check_branch
        %116 = sbr.rel (%p114) target = $region20
      $region19: #{tpu_custom_call.1} parent=5 // pred_region
        // Predicated region
        $region21: #{tpu_custom_call.1} parent=19 // pred_check
          %p117 = pneg %p53
        $region22: #{tpu_custom_call.1} parent=19 // pred_check_branch
          %119 = sbr.rel (%p117) target = $region24
        $region23: #{tpu_custom_call.1} parent=19 // pred_region
          %p120 = scmp.lt.s32.totalorder %s12, 1
          %s121 = scalar_select %p120, %s12, 1
          %s122 = smul.addr %s121, 264
          %s123 = smul.addr %s122, 4
          %s124 = scalar_lea.vmem %s1, %s123
        $region24: #{tpu_custom_call.1} parent=19 // pred_fallthru
          _
      $region20: #{tpu_custom_call.1} parent=5 // pred_fallthru
        _
      %p125 = scmp.le.s32.totalorder 1, %s12
      %p126 = scmp.lt.s32.totalorder %s12, 3
      %p127 = pnand %p125, %p126
      %p128 = pneg %p127
      // Predicated region
      $region25: #{tpu_custom_call.1} parent=5 // pred_check
        _
      $region26: #{tpu_custom_call.1} parent=5 // pred_check_branch
        %130 = sbr.rel (%p127) target = $region28
      $region27: #{tpu_custom_call.1} parent=5 // pred_region
        %s131 = ssub.s32 %s12, 1
        // Predicated region
        $region29: #{tpu_custom_call.1} parent=27 // pred_check
          %p132 = pneg %p33
        $region30: #{tpu_custom_call.1} parent=27 // pred_check_branch
          %134 = sbr.rel (%p132) target = $region32
        $region31: #{tpu_custom_call.1} parent=27 // pred_region
          %135 = dma.done [#allocation3], 135168
        $region32: #{tpu_custom_call.1} parent=27 // pred_fallthru
          _
        %p136 = pneg %p33
        %p137 = pneg %p30
        %p138 = scmp.lt.s32.totalorder %s17, 1
        %s139 = scalar_select %p138, %s17, 1
        %s140 = smul.addr %s139, 264
        %s141 = smul.addr %s140, 4
        %s142 = scalar_lea.vmem %s1, %s141
        %p143 = pneg %p59
        %p144 = pneg %p56
        %p145 = pneg %p85
        %p146 = pneg %p82
        %s147 = sand.u32 %s72, 1
        %s148 = scalar_lea.sflag [#allocation4], %s147
        %s149 = sand.u32 %s72, 1
        %s150 = smul.addr %s149, 2
        %s151 = scalar_lea.vmem [#allocation5], %s150
        %p152 = scmp.lt.s32.totalorder %s17, 1
        %s153 = scalar_select %p152, %s17, 1
        %s154 = smul.addr %s153, 264
        %s155 = smul.addr %s154, 4
        %s156 = scalar_lea.vmem %s1, %s155
        %v157 = vld [vmem:[%s156] sm:$0xff]
        %v158 = vld [vmem:[%s156 + $0x8] sm:$0xff]
        %v159 = vld [vmem:[%s156 + $0x10] sm:$0xff]
        %v160 = vld [vmem:[%s156 + $0x18] sm:$0xff]
        %v161 = vld [vmem:[%s156 + $0x20] sm:$0xff]
        %v162 = vld [vmem:[%s156 + $0x28] sm:$0xff]
        %v163 = vld [vmem:[%s156 + $0x30] sm:$0xff]
        %v164 = vld [vmem:[%s156 + $0x38] sm:$0xff]
        %v165 = vld [vmem:[%s156 + $0x40] sm:$0xff]
        %v166 = vld [vmem:[%s156 + $0x48] sm:$0xff]
        %v167 = vld [vmem:[%s156 + $0x50] sm:$0xff]
        %v168 = vld [vmem:[%s156 + $0x58] sm:$0xff]
        %v169 = vld [vmem:[%s156 + $0x60] sm:$0xff]
        %v170 = vld [vmem:[%s156 + $0x68] sm:$0xff]
        %v171 = vld [vmem:[%s156 + $0x70] sm:$0xff]
        %v172 = vld [vmem:[%s156 + $0x78] sm:$0xff]
        %v173 = vld [vmem:[%s156 + $0x80] sm:$0xff]
        %v174 = vld [vmem:[%s156 + $0x88] sm:$0xff]
        %v175 = vld [vmem:[%s156 + $0x90] sm:$0xff]
        %v176 = vld [vmem:[%s156 + $0x98] sm:$0xff]
        %v177 = vld [vmem:[%s156 + $0xa0] sm:$0xff]
        %v178 = vld [vmem:[%s156 + $0xa8] sm:$0xff]
        %v179 = vld [vmem:[%s156 + $0xb0] sm:$0xff]
        %v180 = vld [vmem:[%s156 + $0xb8] sm:$0xff]
        %v181 = vld [vmem:[%s156 + $0xc0] sm:$0xff]
        %v182 = vld [vmem:[%s156 + $0xc8] sm:$0xff]
        %v183 = vld [vmem:[%s156 + $0xd0] sm:$0xff]
        %v184 = vld [vmem:[%s156 + $0xd8] sm:$0xff]
        %v185 = vld [vmem:[%s156 + $0xe0] sm:$0xff]
        %v186 = vld [vmem:[%s156 + $0xe8] sm:$0xff]
        %v187 = vld [vmem:[%s156 + $0xf0] sm:$0xff]
        %v188 = vld [vmem:[%s156 + $0xf8] sm:$0xff]
        %v189 = vld [vmem:[%s156 + $0x100] sm:$0xff]
        %v190 = vld [vmem:[%s156 + $0x108] sm:$0xff]
        %v191 = vld [vmem:[%s156 + $0x110] sm:$0xff]
        %v192 = vld [vmem:[%s156 + $0x118] sm:$0xff]
        %v193 = vld [vmem:[%s156 + $0x120] sm:$0xff]
        %v194 = vld [vmem:[%s156 + $0x128] sm:$0xff]
        %v195 = vld [vmem:[%s156 + $0x130] sm:$0xff]
        %v196 = vld [vmem:[%s156 + $0x138] sm:$0xff]
        %v197 = vld [vmem:[%s156 + $0x140] sm:$0xff]
        %v198 = vld [vmem:[%s156 + $0x148] sm:$0xff]
        %v199 = vld [vmem:[%s156 + $0x150] sm:$0xff]
        %v200 = vld [vmem:[%s156 + $0x158] sm:$0xff]
        %v201 = vld [vmem:[%s156 + $0x160] sm:$0xff]
        %v202 = vld [vmem:[%s156 + $0x168] sm:$0xff]
        %v203 = vld [vmem:[%s156 + $0x170] sm:$0xff]
        %v204 = vld [vmem:[%s156 + $0x178] sm:$0xff]
        %v205 = vld [vmem:[%s156 + $0x180] sm:$0xff]
        %v206 = vld [vmem:[%s156 + $0x188] sm:$0xff]
        %v207 = vld [vmem:[%s156 + $0x190] sm:$0xff]
        %v208 = vld [vmem:[%s156 + $0x198] sm:$0xff]
        %v209 = vld [vmem:[%s156 + $0x1a0] sm:$0xff]
        %v210 = vld [vmem:[%s156 + $0x1a8] sm:$0xff]
        %v211 = vld [vmem:[%s156 + $0x1b0] sm:$0xff]
        %v212 = vld [vmem:[%s156 + $0x1b8] sm:$0xff]
        %v213 = vld [vmem:[%s156 + $0x1c0] sm:$0xff]
        %v214 = vld [vmem:[%s156 + $0x1c8] sm:$0xff]
        %v215 = vld [vmem:[%s156 + $0x1d0] sm:$0xff]
        %v216 = vld [vmem:[%s156 + $0x1d8] sm:$0xff]
        %v217 = vld [vmem:[%s156 + $0x1e0] sm:$0xff]
        %v218 = vld [vmem:[%s156 + $0x1e8] sm:$0xff]
        %v219 = vld [vmem:[%s156 + $0x1f0] sm:$0xff]
        %v220 = vld [vmem:[%s156 + $0x1f8] sm:$0xff]
        %v221 = vld [vmem:[%s156 + $0x200] sm:$0xff]
        %v222 = vld [vmem:[%s156 + $0x208] sm:$0xff]
        %v223 = vld [vmem:[%s156 + $0x210] sm:$0xff]
        %v224 = vld [vmem:[%s156 + $0x218] sm:$0xff]
        %v225 = vld [vmem:[%s156 + $0x220] sm:$0xff]
        %v226 = vld [vmem:[%s156 + $0x228] sm:$0xff]
        %v227 = vld [vmem:[%s156 + $0x230] sm:$0xff]
        %v228 = vld [vmem:[%s156 + $0x238] sm:$0xff]
        %v229 = vld [vmem:[%s156 + $0x240] sm:$0xff]
        %v230 = vld [vmem:[%s156 + $0x248] sm:$0xff]
        %v231 = vld [vmem:[%s156 + $0x250] sm:$0xff]
        %v232 = vld [vmem:[%s156 + $0x258] sm:$0xff]
        %v233 = vld [vmem:[%s156 + $0x260] sm:$0xff]
        %v234 = vld [vmem:[%s156 + $0x268] sm:$0xff]
        %v235 = vld [vmem:[%s156 + $0x270] sm:$0xff]
        %v236 = vld [vmem:[%s156 + $0x278] sm:$0xff]
        %v237 = vld [vmem:[%s156 + $0x280] sm:$0xff]
        %v238 = vld [vmem:[%s156 + $0x288] sm:$0xff]
        %v239 = vld [vmem:[%s156 + $0x290] sm:$0xff]
        %v240 = vld [vmem:[%s156 + $0x298] sm:$0xff]
        %v241 = vld [vmem:[%s156 + $0x2a0] sm:$0xff]
        %v242 = vld [vmem:[%s156 + $0x2a8] sm:$0xff]
        %v243 = vld [vmem:[%s156 + $0x2b0] sm:$0xff]
        %v244 = vld [vmem:[%s156 + $0x2b8] sm:$0xff]
        %v245 = vld [vmem:[%s156 + $0x2c0] sm:$0xff]
        %v246 = vld [vmem:[%s156 + $0x2c8] sm:$0xff]
        %v247 = vld [vmem:[%s156 + $0x2d0] sm:$0xff]
        %v248 = vld [vmem:[%s156 + $0x2d8] sm:$0xff]
        %v249 = vld [vmem:[%s156 + $0x2e0] sm:$0xff]
        %v250 = vld [vmem:[%s156 + $0x2e8] sm:$0xff]
        %v251 = vld [vmem:[%s156 + $0x2f0] sm:$0xff]
        %v252 = vld [vmem:[%s156 + $0x2f8] sm:$0xff]
        %v253 = vld [vmem:[%s156 + $0x300] sm:$0xff]
        %v254 = vld [vmem:[%s156 + $0x308] sm:$0xff]
        %v255 = vld [vmem:[%s156 + $0x310] sm:$0xff]
        %v256 = vld [vmem:[%s156 + $0x318] sm:$0x11]
        %v257 = vld [vmem:[%s156 + $0x320] sm:$0x11]
        %v258 = vld [vmem:[%s156 + $0x328] sm:$0x11]
        %v259 = vld [vmem:[%s156 + $0x330] sm:$0x11]
        %v260 = vld [vmem:[%s156 + $0x338] sm:$0x11]
        %v261 = vld [vmem:[%s156 + $0x340] sm:$0x11]
        %v262 = vld [vmem:[%s156 + $0x348] sm:$0x11]
        %v263 = vld [vmem:[%s156 + $0x350] sm:$0x11]
        %v264 = vld [vmem:[%s156 + $0x358] sm:$0x11]
        %v265 = vld [vmem:[%s156 + $0x360] sm:$0x11]
        %v266 = vld [vmem:[%s156 + $0x368] sm:$0x11]
        %v267 = vld [vmem:[%s156 + $0x370] sm:$0x11]
        %v268 = vld [vmem:[%s156 + $0x378] sm:$0x11]
        %v269 = vld [vmem:[%s156 + $0x380] sm:$0x11]
        %v270 = vld [vmem:[%s156 + $0x388] sm:$0x11]
        %v271 = vld [vmem:[%s156 + $0x390] sm:$0x11]
        %v272 = vld [vmem:[%s156 + $0x398] sm:$0x11]
        %v273 = vld [vmem:[%s156 + $0x3a0] sm:$0x11]
        %v274 = vld [vmem:[%s156 + $0x3a8] sm:$0x11]
        %v275 = vld [vmem:[%s156 + $0x3b0] sm:$0x11]
        %v276 = vld [vmem:[%s156 + $0x3b8] sm:$0x11]
        %v277 = vld [vmem:[%s156 + $0x3c0] sm:$0x11]
        %v278 = vld [vmem:[%s156 + $0x3c8] sm:$0x11]
        %v279 = vld [vmem:[%s156 + $0x3d0] sm:$0x11]
        %v280 = vld [vmem:[%s156 + $0x3d8] sm:$0x11]
        %v281 = vld [vmem:[%s156 + $0x3e0] sm:$0x11]
        %v282 = vld [vmem:[%s156 + $0x3e8] sm:$0x11]
        %v283 = vld [vmem:[%s156 + $0x3f0] sm:$0x11]
        %v284 = vld [vmem:[%s156 + $0x3f8] sm:$0x11]
        %v285 = vld [vmem:[%s156 + $0x400] sm:$0x11]
        %v286 = vld [vmem:[%s156 + $0x408] sm:$0x11]
        %v287 = vld [vmem:[%s156 + $0x410] sm:$0x11]
        %v288 = vld [vmem:[%s156 + $0x418] sm:$0x11]
        %v289 = vld [vmem:[#allocation2] sm:$0xff]
        %v290 = vld [vmem:[#allocation2 + $0x8] sm:$0xff]
        %v291 = vld [vmem:[#allocation2 + $0x10] sm:$0xff]
        %v292 = vld [vmem:[#allocation2 + $0x18] sm:$0xff]
        %v293 = vld [vmem:[#allocation2 + $0x20] sm:$0xff]
        %v294 = vld [vmem:[#allocation2 + $0x28] sm:$0xff]
        %v295 = vld [vmem:[#allocation2 + $0x30] sm:$0xff]
        %v296 = vld [vmem:[#allocation2 + $0x38] sm:$0xff]
        %v297 = vld [vmem:[#allocation2 + $0x40] sm:$0xff]
        %v298 = vld [vmem:[#allocation2 + $0x48] sm:$0xff]
        %v299 = vld [vmem:[#allocation2 + $0x50] sm:$0xff]
        %v300 = vld [vmem:[#allocation2 + $0x58] sm:$0xff]
        %v301 = vld [vmem:[#allocation2 + $0x60] sm:$0xff]
        %v302 = vld [vmem:[#allocation2 + $0x68] sm:$0xff]
        %v303 = vld [vmem:[#allocation2 + $0x70] sm:$0xff]
        %v304 = vld [vmem:[#allocation2 + $0x78] sm:$0xff]
        %v305 = vld [vmem:[#allocation2 + $0x80] sm:$0xff]
        %v306 = vld [vmem:[#allocation2 + $0x88] sm:$0xff]
        %v307 = vld [vmem:[#allocation2 + $0x90] sm:$0xff]
        %v308 = vld [vmem:[#allocation2 + $0x98] sm:$0xff]
        %v309 = vld [vmem:[#allocation2 + $0xa0] sm:$0xff]
        %v310 = vld [vmem:[#allocation2 + $0xa8] sm:$0xff]
        %v311 = vld [vmem:[#allocation2 + $0xb0] sm:$0xff]
        %v312 = vld [vmem:[#allocation2 + $0xb8] sm:$0xff]
        %v313 = vld [vmem:[#allocation2 + $0xc0] sm:$0xff]
        %v314 = vld [vmem:[#allocation2 + $0xc8] sm:$0xff]
        %v315 = vld [vmem:[#allocation2 + $0xd0] sm:$0xff]
        %v316 = vld [vmem:[#allocation2 + $0xd8] sm:$0xff]
        %v317 = vld [vmem:[#allocation2 + $0xe0] sm:$0xff]
        %v318 = vld [vmem:[#allocation2 + $0xe8] sm:$0xff]
        %v319 = vld [vmem:[#allocation2 + $0xf0] sm:$0xff]
        %v320 = vld [vmem:[#allocation2 + $0xf8] sm:$0xff]
        %v321 = vld [vmem:[#allocation2 + $0x100] sm:$0xff]
        %v322 = vld [vmem:[#allocation2 + $0x108] sm:$0xff]
        %v323 = vld [vmem:[#allocation2 + $0x110] sm:$0xff]
        %v324 = vld [vmem:[#allocation2 + $0x118] sm:$0xff]
        %v325 = vld [vmem:[#allocation2 + $0x120] sm:$0xff]
        %v326 = vld [vmem:[#allocation2 + $0x128] sm:$0xff]
        %v327 = vld [vmem:[#allocation2 + $0x130] sm:$0xff]
        %v328 = vld [vmem:[#allocation2 + $0x138] sm:$0xff]
        %v329 = vld [vmem:[#allocation2 + $0x140] sm:$0xff]
        %v330 = vld [vmem:[#allocation2 + $0x148] sm:$0xff]
        %v331 = vld [vmem:[#allocation2 + $0x150] sm:$0xff]
        %v332 = vld [vmem:[#allocation2 + $0x158] sm:$0xff]
        %v333 = vld [vmem:[#allocation2 + $0x160] sm:$0xff]
        %v334 = vld [vmem:[#allocation2 + $0x168] sm:$0xff]
        %v335 = vld [vmem:[#allocation2 + $0x170] sm:$0xff]
        %v336 = vld [vmem:[#allocation2 + $0x178] sm:$0xff]
        %v337 = vld [vmem:[#allocation2 + $0x180] sm:$0xff]
        %v338 = vld [vmem:[#allocation2 + $0x188] sm:$0xff]
        %v339 = vld [vmem:[#allocation2 + $0x190] sm:$0xff]
        %v340 = vld [vmem:[#allocation2 + $0x198] sm:$0xff]
        %v341 = vld [vmem:[#allocation2 + $0x1a0] sm:$0xff]
        %v342 = vld [vmem:[#allocation2 + $0x1a8] sm:$0xff]
        %v343 = vld [vmem:[#allocation2 + $0x1b0] sm:$0xff]
        %v344 = vld [vmem:[#allocation2 + $0x1b8] sm:$0xff]
        %v345 = vld [vmem:[#allocation2 + $0x1c0] sm:$0xff]
        %v346 = vld [vmem:[#allocation2 + $0x1c8] sm:$0xff]
        %v347 = vld [vmem:[#allocation2 + $0x1d0] sm:$0xff]
        %v348 = vld [vmem:[#allocation2 + $0x1d8] sm:$0xff]
        %v349 = vld [vmem:[#allocation2 + $0x1e0] sm:$0xff]
        %v350 = vld [vmem:[#allocation2 + $0x1e8] sm:$0xff]
        %v351 = vld [vmem:[#allocation2 + $0x1f0] sm:$0xff]
        %v352 = vld [vmem:[#allocation2 + $0x1f8] sm:$0xff]
        %v353 = vld [vmem:[#allocation2 + $0x200] sm:$0xff]
        %v354 = vld [vmem:[#allocation2 + $0x208] sm:$0xff]
        %v355 = vld [vmem:[#allocation2 + $0x210] sm:$0xff]
        %v356 = vld [vmem:[#allocation2 + $0x218] sm:$0xff]
        %v357 = vld [vmem:[#allocation2 + $0x220] sm:$0xff]
        %v358 = vld [vmem:[#allocation2 + $0x228] sm:$0xff]
        %v359 = vld [vmem:[#allocation2 + $0x230] sm:$0xff]
        %v360 = vld [vmem:[#allocation2 + $0x238] sm:$0xff]
        %v361 = vld [vmem:[#allocation2 + $0x240] sm:$0xff]
        %v362 = vld [vmem:[#allocation2 + $0x248] sm:$0xff]
        %v363 = vld [vmem:[#allocation2 + $0x250] sm:$0xff]
        %v364 = vld [vmem:[#allocation2 + $0x258] sm:$0xff]
        %v365 = vld [vmem:[#allocation2 + $0x260] sm:$0xff]
        %v366 = vld [vmem:[#allocation2 + $0x268] sm:$0xff]
        %v367 = vld [vmem:[#allocation2 + $0x270] sm:$0xff]
        %v368 = vld [vmem:[#allocation2 + $0x278] sm:$0xff]
        %v369 = vld [vmem:[#allocation2 + $0x280] sm:$0xff]
        %v370 = vld [vmem:[#allocation2 + $0x288] sm:$0xff]
        %v371 = vld [vmem:[#allocation2 + $0x290] sm:$0xff]
        %v372 = vld [vmem:[#allocation2 + $0x298] sm:$0xff]
        %v373 = vld [vmem:[#allocation2 + $0x2a0] sm:$0xff]
        %v374 = vld [vmem:[#allocation2 + $0x2a8] sm:$0xff]
        %v375 = vld [vmem:[#allocation2 + $0x2b0] sm:$0xff]
        %v376 = vld [vmem:[#allocation2 + $0x2b8] sm:$0xff]
        %v377 = vld [vmem:[#allocation2 + $0x2c0] sm:$0xff]
        %v378 = vld [vmem:[#allocation2 + $0x2c8] sm:$0xff]
        %v379 = vld [vmem:[#allocation2 + $0x2d0] sm:$0xff]
        %v380 = vld [vmem:[#allocation2 + $0x2d8] sm:$0xff]
        %v381 = vld [vmem:[#allocation2 + $0x2e0] sm:$0xff]
        %v382 = vld [vmem:[#allocation2 + $0x2e8] sm:$0xff]
        %v383 = vld [vmem:[#allocation2 + $0x2f0] sm:$0xff]
        %v384 = vld [vmem:[#allocation2 + $0x2f8] sm:$0xff]
        %v385 = vld [vmem:[#allocation2 + $0x300] sm:$0xff]
        %v386 = vld [vmem:[#allocation2 + $0x308] sm:$0xff]
        %v387 = vld [vmem:[#allocation2 + $0x310] sm:$0xff]
        %v388 = vld [vmem:[#allocation2 + $0x318] sm:$0xff]
        %v389 = vld [vmem:[#allocation2 + $0x320] sm:$0xff]
        %v390 = vld [vmem:[#allocation2 + $0x328] sm:$0xff]
        %v391 = vld [vmem:[#allocation2 + $0x330] sm:$0xff]
        %v392 = vld [vmem:[#allocation2 + $0x338] sm:$0xff]
        %v393 = vld [vmem:[#allocation2 + $0x340] sm:$0xff]
        %v394 = vld [vmem:[#allocation2 + $0x348] sm:$0xff]
        %v395 = vld [vmem:[#allocation2 + $0x350] sm:$0xff]
        %v396 = vld [vmem:[#allocation2 + $0x358] sm:$0xff]
        %v397 = vld [vmem:[#allocation2 + $0x360] sm:$0xff]
        %v398 = vld [vmem:[#allocation2 + $0x368] sm:$0xff]
        %v399 = vld [vmem:[#allocation2 + $0x370] sm:$0xff]
        %v400 = vld [vmem:[#allocation2 + $0x378] sm:$0xff]
        %v401 = vld [vmem:[#allocation2 + $0x380] sm:$0xff]
        %v402 = vld [vmem:[#allocation2 + $0x388] sm:$0xff]
        %v403 = vld [vmem:[#allocation2 + $0x390] sm:$0xff]
        %v404 = vld [vmem:[#allocation2 + $0x398] sm:$0xff]
        %v405 = vld [vmem:[#allocation2 + $0x3a0] sm:$0xff]
        %v406 = vld [vmem:[#allocation2 + $0x3a8] sm:$0xff]
        %v407 = vld [vmem:[#allocation2 + $0x3b0] sm:$0xff]
        %v408 = vld [vmem:[#allocation2 + $0x3b8] sm:$0xff]
        %v409 = vld [vmem:[#allocation2 + $0x3c0] sm:$0xff]
        %v410 = vld [vmem:[#allocation2 + $0x3c8] sm:$0xff]
        %v411 = vld [vmem:[#allocation2 + $0x3d0] sm:$0xff]
        %v412 = vld [vmem:[#allocation2 + $0x3d8] sm:$0xff]
        %v413 = vld [vmem:[#allocation2 + $0x3e0] sm:$0xff]
        %v414 = vld [vmem:[#allocation2 + $0x3e8] sm:$0xff]
        %v415 = vld [vmem:[#allocation2 + $0x3f0] sm:$0xff]
        %v416 = vld [vmem:[#allocation2 + $0x3f8] sm:$0xff]
        %v417 = vld [vmem:[#allocation2 + $0x400] sm:$0xff]
        %v418 = vld [vmem:[#allocation2 + $0x408] sm:$0xff]
        %v419 = vld [vmem:[#allocation2 + $0x410] sm:$0xff]
        %v420 = vld [vmem:[#allocation2 + $0x418] sm:$0xff]
        %v421 = vld [vmem:[#allocation2 + $0x420] sm:$0xff]
        %v422 = vld [vmem:[#allocation2 + $0x428] sm:$0xff]
        %v423 = vld [vmem:[#allocation2 + $0x430] sm:$0xff]
        %v424 = vld [vmem:[#allocation2 + $0x438] sm:$0xff]
        %v425 = vld [vmem:[#allocation2 + $0x440] sm:$0xff]
        %v426 = vld [vmem:[#allocation2 + $0x448] sm:$0xff]
        %v427 = vld [vmem:[#allocation2 + $0x450] sm:$0xff]
        %v428 = vld [vmem:[#allocation2 + $0x458] sm:$0xff]
        %v429 = vld [vmem:[#allocation2 + $0x460] sm:$0xff]
        %v430 = vld [vmem:[#allocation2 + $0x468] sm:$0xff]
        %v431 = vld [vmem:[#allocation2 + $0x470] sm:$0xff]
        %v432 = vld [vmem:[#allocation2 + $0x478] sm:$0xff]
        %v433 = vld [vmem:[#allocation2 + $0x480] sm:$0xff]
        %v434 = vld [vmem:[#allocation2 + $0x488] sm:$0xff]
        %v435 = vld [vmem:[#allocation2 + $0x490] sm:$0xff]
        %v436 = vld [vmem:[#allocation2 + $0x498] sm:$0xff]
        %v437 = vld [vmem:[#allocation2 + $0x4a0] sm:$0xff]
        %v438 = vld [vmem:[#allocation2 + $0x4a8] sm:$0xff]
        %v439 = vld [vmem:[#allocation2 + $0x4b0] sm:$0xff]
        %v440 = vld [vmem:[#allocation2 + $0x4b8] sm:$0xff]
        %v441 = vld [vmem:[#allocation2 + $0x4c0] sm:$0xff]
        %v442 = vld [vmem:[#allocation2 + $0x4c8] sm:$0xff]
        %v443 = vld [vmem:[#allocation2 + $0x4d0] sm:$0xff]
        %v444 = vld [vmem:[#allocation2 + $0x4d8] sm:$0xff]
        %v445 = vld [vmem:[#allocation2 + $0x4e0] sm:$0xff]
        %v446 = vld [vmem:[#allocation2 + $0x4e8] sm:$0xff]
        %v447 = vld [vmem:[#allocation2 + $0x4f0] sm:$0xff]
        %v448 = vld [vmem:[#allocation2 + $0x4f8] sm:$0xff]
        %v449 = vld [vmem:[#allocation2 + $0x500] sm:$0xff]
        %v450 = vld [vmem:[#allocation2 + $0x508] sm:$0xff]
        %v451 = vld [vmem:[#allocation2 + $0x510] sm:$0xff]
        %v452 = vld [vmem:[#allocation2 + $0x518] sm:$0xff]
        %v453 = vld [vmem:[#allocation2 + $0x520] sm:$0xff]
        %v454 = vld [vmem:[#allocation2 + $0x528] sm:$0xff]
        %v455 = vld [vmem:[#allocation2 + $0x530] sm:$0xff]
        %v456 = vld [vmem:[#allocation2 + $0x538] sm:$0xff]
        %v457 = vld [vmem:[#allocation2 + $0x540] sm:$0xff]
        %v458 = vld [vmem:[#allocation2 + $0x548] sm:$0xff]
        %v459 = vld [vmem:[#allocation2 + $0x550] sm:$0xff]
        %v460 = vld [vmem:[#allocation2 + $0x558] sm:$0xff]
        %v461 = vld [vmem:[#allocation2 + $0x560] sm:$0xff]
        %v462 = vld [vmem:[#allocation2 + $0x568] sm:$0xff]
        %v463 = vld [vmem:[#allocation2 + $0x570] sm:$0xff]
        %v464 = vld [vmem:[#allocation2 + $0x578] sm:$0xff]
        %v465 = vld [vmem:[#allocation2 + $0x580] sm:$0xff]
        %v466 = vld [vmem:[#allocation2 + $0x588] sm:$0xff]
        %v467 = vld [vmem:[#allocation2 + $0x590] sm:$0xff]
        %v468 = vld [vmem:[#allocation2 + $0x598] sm:$0xff]
        %v469 = vld [vmem:[#allocation2 + $0x5a0] sm:$0xff]
        %v470 = vld [vmem:[#allocation2 + $0x5a8] sm:$0xff]
        %v471 = vld [vmem:[#allocation2 + $0x5b0] sm:$0xff]
        %v472 = vld [vmem:[#allocation2 + $0x5b8] sm:$0xff]
        %v473 = vld [vmem:[#allocation2 + $0x5c0] sm:$0xff]
        %v474 = vld [vmem:[#allocation2 + $0x5c8] sm:$0xff]
        %v475 = vld [vmem:[#allocation2 + $0x5d0] sm:$0xff]
        %v476 = vld [vmem:[#allocation2 + $0x5d8] sm:$0xff]
        %v477 = vld [vmem:[#allocation2 + $0x5e0] sm:$0xff]
        %v478 = vld [vmem:[#allocation2 + $0x5e8] sm:$0xff]
        %v479 = vld [vmem:[#allocation2 + $0x5f0] sm:$0xff]
        %v480 = vld [vmem:[#allocation2 + $0x5f8] sm:$0xff]
        %v481 = vld [vmem:[#allocation2 + $0x600] sm:$0xff]
        %v482 = vld [vmem:[#allocation2 + $0x608] sm:$0xff]
        %v483 = vld [vmem:[#allocation2 + $0x610] sm:$0xff]
        %v484 = vld [vmem:[#allocation2 + $0x618] sm:$0xff]
        %v485 = vld [vmem:[#allocation2 + $0x620] sm:$0xff]
        %v486 = vld [vmem:[#allocation2 + $0x628] sm:$0xff]
        %v487 = vld [vmem:[#allocation2 + $0x630] sm:$0xff]
        %v488 = vld [vmem:[#allocation2 + $0x638] sm:$0xff]
        %v489 = vld [vmem:[#allocation2 + $0x640] sm:$0xff]
        %v490 = vld [vmem:[#allocation2 + $0x648] sm:$0xff]
        %v491 = vld [vmem:[#allocation2 + $0x650] sm:$0xff]
        %v492 = vld [vmem:[#allocation2 + $0x658] sm:$0xff]
        %v493 = vld [vmem:[#allocation2 + $0x660] sm:$0xff]
        %v494 = vld [vmem:[#allocation2 + $0x668] sm:$0xff]
        %v495 = vld [vmem:[#allocation2 + $0x670] sm:$0xff]
        %v496 = vld [vmem:[#allocation2 + $0x678] sm:$0xff]
        %v497 = vld [vmem:[#allocation2 + $0x680] sm:$0xff]
        %v498 = vld [vmem:[#allocation2 + $0x688] sm:$0xff]
        %v499 = vld [vmem:[#allocation2 + $0x690] sm:$0xff]
        %v500 = vld [vmem:[#allocation2 + $0x698] sm:$0xff]
        %v501 = vld [vmem:[#allocation2 + $0x6a0] sm:$0xff]
        %v502 = vld [vmem:[#allocation2 + $0x6a8] sm:$0xff]
        %v503 = vld [vmem:[#allocation2 + $0x6b0] sm:$0xff]
        %v504 = vld [vmem:[#allocation2 + $0x6b8] sm:$0xff]
        %v505 = vld [vmem:[#allocation2 + $0x6c0] sm:$0xff]
        %v506 = vld [vmem:[#allocation2 + $0x6c8] sm:$0xff]
        %v507 = vld [vmem:[#allocation2 + $0x6d0] sm:$0xff]
        %v508 = vld [vmem:[#allocation2 + $0x6d8] sm:$0xff]
        %v509 = vld [vmem:[#allocation2 + $0x6e0] sm:$0xff]
        %v510 = vld [vmem:[#allocation2 + $0x6e8] sm:$0xff]
        %v511 = vld [vmem:[#allocation2 + $0x6f0] sm:$0xff]
        %v512 = vld [vmem:[#allocation2 + $0x6f8] sm:$0xff]
        %v513 = vld [vmem:[#allocation2 + $0x700] sm:$0xff]
        %v514 = vld [vmem:[#allocation2 + $0x708] sm:$0xff]
        %v515 = vld [vmem:[#allocation2 + $0x710] sm:$0xff]
        %v516 = vld [vmem:[#allocation2 + $0x718] sm:$0xff]
        %v517 = vld [vmem:[#allocation2 + $0x720] sm:$0xff]
        %v518 = vld [vmem:[#allocation2 + $0x728] sm:$0xff]
        %v519 = vld [vmem:[#allocation2 + $0x730] sm:$0xff]
        %v520 = vld [vmem:[#allocation2 + $0x738] sm:$0xff]
        %v521 = vld [vmem:[#allocation2 + $0x740] sm:$0xff]
        %v522 = vld [vmem:[#allocation2 + $0x748] sm:$0xff]
        %v523 = vld [vmem:[#allocation2 + $0x750] sm:$0xff]
        %v524 = vld [vmem:[#allocation2 + $0x758] sm:$0xff]
        %v525 = vld [vmem:[#allocation2 + $0x760] sm:$0xff]
        %v526 = vld [vmem:[#allocation2 + $0x768] sm:$0xff]
        %v527 = vld [vmem:[#allocation2 + $0x770] sm:$0xff]
        %v528 = vld [vmem:[#allocation2 + $0x778] sm:$0xff]
        %v529 = vld [vmem:[#allocation2 + $0x780] sm:$0xff]
        %v530 = vld [vmem:[#allocation2 + $0x788] sm:$0xff]
        %v531 = vld [vmem:[#allocation2 + $0x790] sm:$0xff]
        %v532 = vld [vmem:[#allocation2 + $0x798] sm:$0xff]
        %v533 = vld [vmem:[#allocation2 + $0x7a0] sm:$0xff]
        %v534 = vld [vmem:[#allocation2 + $0x7a8] sm:$0xff]
        %v535 = vld [vmem:[#allocation2 + $0x7b0] sm:$0xff]
        %v536 = vld [vmem:[#allocation2 + $0x7b8] sm:$0xff]
        %v537 = vld [vmem:[#allocation2 + $0x7c0] sm:$0xff]
        %v538 = vld [vmem:[#allocation2 + $0x7c8] sm:$0xff]
        %v539 = vld [vmem:[#allocation2 + $0x7d0] sm:$0xff]
        %v540 = vld [vmem:[#allocation2 + $0x7d8] sm:$0xff]
        %v541 = vld [vmem:[#allocation2 + $0x7e0] sm:$0xff]
        %v542 = vld [vmem:[#allocation2 + $0x7e8] sm:$0xff]
        %v543 = vld [vmem:[#allocation2 + $0x7f0] sm:$0xff]
        %v544 = vld [vmem:[#allocation2 + $0x7f8] sm:$0xff]
        %v545 = vld [vmem:[#allocation2 + $0x800] sm:$0xff]
        %v546 = vld [vmem:[#allocation2 + $0x808] sm:$0xff]
        %v547 = vld [vmem:[#allocation2 + $0x810] sm:$0xff]
        %v548 = vld [vmem:[#allocation2 + $0x818] sm:$0xff]
        %v549 = vld [vmem:[#allocation2 + $0x820] sm:$0xff]
        %v550 = vld [vmem:[#allocation2 + $0x828] sm:$0xff]
        %v551 = vld [vmem:[#allocation2 + $0x830] sm:$0xff]
        %v552 = vld [vmem:[#allocation2 + $0x838] sm:$0xff]
        %v553 = vld [vmem:[#allocation2 + $0x840] sm:$0xff]
        %v554 = vld [vmem:[#allocation2 + $0x848] sm:$0xff]
        %v555 = vld [vmem:[#allocation2 + $0x850] sm:$0xff]
        %v556 = vld [vmem:[#allocation2 + $0x858] sm:$0xff]
        %v557 = vld [vmem:[#allocation2 + $0x860] sm:$0xff]
        %v558 = vld [vmem:[#allocation2 + $0x868] sm:$0xff]
        %v559 = vld [vmem:[#allocation2 + $0x870] sm:$0xff]
        %v560 = vld [vmem:[#allocation2 + $0x878] sm:$0xff]
        %v561 = vld [vmem:[#allocation2 + $0x880] sm:$0xff]
        %v562 = vld [vmem:[#allocation2 + $0x888] sm:$0xff]
        %v563 = vld [vmem:[#allocation2 + $0x890] sm:$0xff]
        %v564 = vld [vmem:[#allocation2 + $0x898] sm:$0xff]
        %v565 = vld [vmem:[#allocation2 + $0x8a0] sm:$0xff]
        %v566 = vld [vmem:[#allocation2 + $0x8a8] sm:$0xff]
        %v567 = vld [vmem:[#allocation2 + $0x8b0] sm:$0xff]
        %v568 = vld [vmem:[#allocation2 + $0x8b8] sm:$0xff]
        %v569 = vld [vmem:[#allocation2 + $0x8c0] sm:$0xff]
        %v570 = vld [vmem:[#allocation2 + $0x8c8] sm:$0xff]
        %v571 = vld [vmem:[#allocation2 + $0x8d0] sm:$0xff]
        %v572 = vld [vmem:[#allocation2 + $0x8d8] sm:$0xff]
        %v573 = vld [vmem:[#allocation2 + $0x8e0] sm:$0xff]
        %v574 = vld [vmem:[#allocation2 + $0x8e8] sm:$0xff]
        %v575 = vld [vmem:[#allocation2 + $0x8f0] sm:$0xff]
        %v576 = vld [vmem:[#allocation2 + $0x8f8] sm:$0xff]
        %v577 = vld [vmem:[#allocation2 + $0x900] sm:$0xff]
        %v578 = vld [vmem:[#allocation2 + $0x908] sm:$0xff]
        %v579 = vld [vmem:[#allocation2 + $0x910] sm:$0xff]
        %v580 = vld [vmem:[#allocation2 + $0x918] sm:$0xff]
        %v581 = vld [vmem:[#allocation2 + $0x920] sm:$0xff]
        %v582 = vld [vmem:[#allocation2 + $0x928] sm:$0xff]
        %v583 = vld [vmem:[#allocation2 + $0x930] sm:$0xff]
        %v584 = vld [vmem:[#allocation2 + $0x938] sm:$0xff]
        %v585 = vld [vmem:[#allocation2 + $0x940] sm:$0xff]
        %v586 = vld [vmem:[#allocation2 + $0x948] sm:$0xff]
        %v587 = vld [vmem:[#allocation2 + $0x950] sm:$0xff]
        %v588 = vld [vmem:[#allocation2 + $0x958] sm:$0xff]
        %v589 = vld [vmem:[#allocation2 + $0x960] sm:$0xff]
        %v590 = vld [vmem:[#allocation2 + $0x968] sm:$0xff]
        %v591 = vld [vmem:[#allocation2 + $0x970] sm:$0xff]
        %v592 = vld [vmem:[#allocation2 + $0x978] sm:$0xff]
        %v593 = vld [vmem:[#allocation2 + $0x980] sm:$0xff]
        %v594 = vld [vmem:[#allocation2 + $0x988] sm:$0xff]
        %v595 = vld [vmem:[#allocation2 + $0x990] sm:$0xff]
        %v596 = vld [vmem:[#allocation2 + $0x998] sm:$0xff]
        %v597 = vld [vmem:[#allocation2 + $0x9a0] sm:$0xff]
        %v598 = vld [vmem:[#allocation2 + $0x9a8] sm:$0xff]
        %v599 = vld [vmem:[#allocation2 + $0x9b0] sm:$0xff]
        %v600 = vld [vmem:[#allocation2 + $0x9b8] sm:$0xff]
        %v601 = vld [vmem:[#allocation2 + $0x9c0] sm:$0xff]
        %v602 = vld [vmem:[#allocation2 + $0x9c8] sm:$0xff]
        %v603 = vld [vmem:[#allocation2 + $0x9d0] sm:$0xff]
        %v604 = vld [vmem:[#allocation2 + $0x9d8] sm:$0xff]
        %v605 = vld [vmem:[#allocation2 + $0x9e0] sm:$0xff]
        %v606 = vld [vmem:[#allocation2 + $0x9e8] sm:$0xff]
        %v607 = vld [vmem:[#allocation2 + $0x9f0] sm:$0xff]
        %v608 = vld [vmem:[#allocation2 + $0x9f8] sm:$0xff]
        %v609 = vld [vmem:[#allocation2 + $0xa00] sm:$0xff]
        %v610 = vld [vmem:[#allocation2 + $0xa08] sm:$0xff]
        %v611 = vld [vmem:[#allocation2 + $0xa10] sm:$0xff]
        %v612 = vld [vmem:[#allocation2 + $0xa18] sm:$0xff]
        %v613 = vld [vmem:[#allocation2 + $0xa20] sm:$0xff]
        %v614 = vld [vmem:[#allocation2 + $0xa28] sm:$0xff]
        %v615 = vld [vmem:[#allocation2 + $0xa30] sm:$0xff]
        %v616 = vld [vmem:[#allocation2 + $0xa38] sm:$0xff]
        %v617 = vld [vmem:[#allocation2 + $0xa40] sm:$0xff]
        %v618 = vld [vmem:[#allocation2 + $0xa48] sm:$0xff]
        %v619 = vld [vmem:[#allocation2 + $0xa50] sm:$0xff]
        %v620 = vld [vmem:[#allocation2 + $0xa58] sm:$0xff]
        %v621 = vld [vmem:[#allocation2 + $0xa60] sm:$0xff]
        %v622 = vld [vmem:[#allocation2 + $0xa68] sm:$0xff]
        %v623 = vld [vmem:[#allocation2 + $0xa70] sm:$0xff]
        %v624 = vld [vmem:[#allocation2 + $0xa78] sm:$0xff]
        %v625 = vld [vmem:[#allocation2 + $0xa80] sm:$0xff]
        %v626 = vld [vmem:[#allocation2 + $0xa88] sm:$0xff]
        %v627 = vld [vmem:[#allocation2 + $0xa90] sm:$0xff]
        %v628 = vld [vmem:[#allocation2 + $0xa98] sm:$0xff]
        %v629 = vld [vmem:[#allocation2 + $0xaa0] sm:$0xff]
        %v630 = vld [vmem:[#allocation2 + $0xaa8] sm:$0xff]
        %v631 = vld [vmem:[#allocation2 + $0xab0] sm:$0xff]
        %v632 = vld [vmem:[#allocation2 + $0xab8] sm:$0xff]
        %v633 = vld [vmem:[#allocation2 + $0xac0] sm:$0xff]
        %v634 = vld [vmem:[#allocation2 + $0xac8] sm:$0xff]
        %v635 = vld [vmem:[#allocation2 + $0xad0] sm:$0xff]
        %v636 = vld [vmem:[#allocation2 + $0xad8] sm:$0xff]
        %v637 = vld [vmem:[#allocation2 + $0xae0] sm:$0xff]
        %v638 = vld [vmem:[#allocation2 + $0xae8] sm:$0xff]
        %v639 = vld [vmem:[#allocation2 + $0xaf0] sm:$0xff]
        %v640 = vld [vmem:[#allocation2 + $0xaf8] sm:$0xff]
        %v641 = vld [vmem:[#allocation2 + $0xb00] sm:$0xff]
        %v642 = vld [vmem:[#allocation2 + $0xb08] sm:$0xff]
        %v643 = vld [vmem:[#allocation2 + $0xb10] sm:$0xff]
        %v644 = vld [vmem:[#allocation2 + $0xb18] sm:$0xff]
        %v645 = vld [vmem:[#allocation2 + $0xb20] sm:$0xff]
        %v646 = vld [vmem:[#allocation2 + $0xb28] sm:$0xff]
        %v647 = vld [vmem:[#allocation2 + $0xb30] sm:$0xff]
        %v648 = vld [vmem:[#allocation2 + $0xb38] sm:$0xff]
        %v649 = vld [vmem:[#allocation2 + $0xb40] sm:$0xff]
        %v650 = vld [vmem:[#allocation2 + $0xb48] sm:$0xff]
        %v651 = vld [vmem:[#allocation2 + $0xb50] sm:$0xff]
        %v652 = vld [vmem:[#allocation2 + $0xb58] sm:$0xff]
        %v653 = vld [vmem:[#allocation2 + $0xb60] sm:$0xff]
        %v654 = vld [vmem:[#allocation2 + $0xb68] sm:$0xff]
        %v655 = vld [vmem:[#allocation2 + $0xb70] sm:$0xff]
        %v656 = vld [vmem:[#allocation2 + $0xb78] sm:$0xff]
        %v657 = vld [vmem:[#allocation2 + $0xb80] sm:$0xff]
        %v658 = vld [vmem:[#allocation2 + $0xb88] sm:$0xff]
        %v659 = vld [vmem:[#allocation2 + $0xb90] sm:$0xff]
        %v660 = vld [vmem:[#allocation2 + $0xb98] sm:$0xff]
        %v661 = vld [vmem:[#allocation2 + $0xba0] sm:$0xff]
        %v662 = vld [vmem:[#allocation2 + $0xba8] sm:$0xff]
        %v663 = vld [vmem:[#allocation2 + $0xbb0] sm:$0xff]
        %v664 = vld [vmem:[#allocation2 + $0xbb8] sm:$0xff]
        %v665 = vld [vmem:[#allocation2 + $0xbc0] sm:$0xff]
        %v666 = vld [vmem:[#allocation2 + $0xbc8] sm:$0xff]
        %v667 = vld [vmem:[#allocation2 + $0xbd0] sm:$0xff]
        %v668 = vld [vmem:[#allocation2 + $0xbd8] sm:$0xff]
        %v669 = vld [vmem:[#allocation2 + $0xbe0] sm:$0xff]
        %v670 = vld [vmem:[#allocation2 + $0xbe8] sm:$0xff]
        %v671 = vld [vmem:[#allocation2 + $0xbf0] sm:$0xff]
        %v672 = vld [vmem:[#allocation2 + $0xbf8] sm:$0xff]
        %v673 = vld [vmem:[#allocation2 + $0xc00] sm:$0xff]
        %v674 = vld [vmem:[#allocation2 + $0xc08] sm:$0xff]
        %v675 = vld [vmem:[#allocation2 + $0xc10] sm:$0xff]
        %v676 = vld [vmem:[#allocation2 + $0xc18] sm:$0xff]
        %v677 = vld [vmem:[#allocation2 + $0xc20] sm:$0xff]
        %v678 = vld [vmem:[#allocation2 + $0xc28] sm:$0xff]
        %v679 = vld [vmem:[#allocation2 + $0xc30] sm:$0xff]
        %v680 = vld [vmem:[#allocation2 + $0xc38] sm:$0xff]
        %v681 = vld [vmem:[#allocation2 + $0xc40] sm:$0xff]
        %v682 = vld [vmem:[#allocation2 + $0xc48] sm:$0xff]
        %v683 = vld [vmem:[#allocation2 + $0xc50] sm:$0xff]
        %v684 = vld [vmem:[#allocation2 + $0xc58] sm:$0xff]
        %v685 = vld [vmem:[#allocation2 + $0xc60] sm:$0xff]
        %v686 = vld [vmem:[#allocation2 + $0xc68] sm:$0xff]
        %v687 = vld [vmem:[#allocation2 + $0xc70] sm:$0xff]
        %v688 = vld [vmem:[#allocation2 + $0xc78] sm:$0xff]
        %v689 = vld [vmem:[#allocation2 + $0xc80] sm:$0xff]
        %v690 = vld [vmem:[#allocation2 + $0xc88] sm:$0xff]
        %v691 = vld [vmem:[#allocation2 + $0xc90] sm:$0xff]
        %v692 = vld [vmem:[#allocation2 + $0xc98] sm:$0xff]
        %v693 = vld [vmem:[#allocation2 + $0xca0] sm:$0xff]
        %v694 = vld [vmem:[#allocation2 + $0xca8] sm:$0xff]
        %v695 = vld [vmem:[#allocation2 + $0xcb0] sm:$0xff]
        %v696 = vld [vmem:[#allocation2 + $0xcb8] sm:$0xff]
        %v697 = vld [vmem:[#allocation2 + $0xcc0] sm:$0xff]
        %v698 = vld [vmem:[#allocation2 + $0xcc8] sm:$0xff]
        %v699 = vld [vmem:[#allocation2 + $0xcd0] sm:$0xff]
        %v700 = vld [vmem:[#allocation2 + $0xcd8] sm:$0xff]
        %v701 = vld [vmem:[#allocation2 + $0xce0] sm:$0xff]
        %v702 = vld [vmem:[#allocation2 + $0xce8] sm:$0xff]
        %v703 = vld [vmem:[#allocation2 + $0xcf0] sm:$0xff]
        %v704 = vld [vmem:[#allocation2 + $0xcf8] sm:$0xff]
        %v705 = vld [vmem:[#allocation2 + $0xd00] sm:$0xff]
        %v706 = vld [vmem:[#allocation2 + $0xd08] sm:$0xff]
        %v707 = vld [vmem:[#allocation2 + $0xd10] sm:$0xff]
        %v708 = vld [vmem:[#allocation2 + $0xd18] sm:$0xff]
        %v709 = vld [vmem:[#allocation2 + $0xd20] sm:$0xff]
        %v710 = vld [vmem:[#allocation2 + $0xd28] sm:$0xff]
        %v711 = vld [vmem:[#allocation2 + $0xd30] sm:$0xff]
        %v712 = vld [vmem:[#allocation2 + $0xd38] sm:$0xff]
        %v713 = vld [vmem:[#allocation2 + $0xd40] sm:$0xff]
        %v714 = vld [vmem:[#allocation2 + $0xd48] sm:$0xff]
        %v715 = vld [vmem:[#allocation2 + $0xd50] sm:$0xff]
        %v716 = vld [vmem:[#allocation2 + $0xd58] sm:$0xff]
        %v717 = vld [vmem:[#allocation2 + $0xd60] sm:$0xff]
        %v718 = vld [vmem:[#allocation2 + $0xd68] sm:$0xff]
        %v719 = vld [vmem:[#allocation2 + $0xd70] sm:$0xff]
        %v720 = vld [vmem:[#allocation2 + $0xd78] sm:$0xff]
        %v721 = vld [vmem:[#allocation2 + $0xd80] sm:$0xff]
        %v722 = vld [vmem:[#allocation2 + $0xd88] sm:$0xff]
        %v723 = vld [vmem:[#allocation2 + $0xd90] sm:$0xff]
        %v724 = vld [vmem:[#allocation2 + $0xd98] sm:$0xff]
        %v725 = vld [vmem:[#allocation2 + $0xda0] sm:$0xff]
        %v726 = vld [vmem:[#allocation2 + $0xda8] sm:$0xff]
        %v727 = vld [vmem:[#allocation2 + $0xdb0] sm:$0xff]
        %v728 = vld [vmem:[#allocation2 + $0xdb8] sm:$0xff]
        %v729 = vld [vmem:[#allocation2 + $0xdc0] sm:$0xff]
        %v730 = vld [vmem:[#allocation2 + $0xdc8] sm:$0xff]
        %v731 = vld [vmem:[#allocation2 + $0xdd0] sm:$0xff]
        %v732 = vld [vmem:[#allocation2 + $0xdd8] sm:$0xff]
        %v733 = vld [vmem:[#allocation2 + $0xde0] sm:$0xff]
        %v734 = vld [vmem:[#allocation2 + $0xde8] sm:$0xff]
        %v735 = vld [vmem:[#allocation2 + $0xdf0] sm:$0xff]
        %v736 = vld [vmem:[#allocation2 + $0xdf8] sm:$0xff]
        %v737 = vld [vmem:[#allocation2 + $0xe00] sm:$0xff]
        %v738 = vld [vmem:[#allocation2 + $0xe08] sm:$0xff]
        %v739 = vld [vmem:[#allocation2 + $0xe10] sm:$0xff]
        %v740 = vld [vmem:[#allocation2 + $0xe18] sm:$0xff]
        %v741 = vld [vmem:[#allocation2 + $0xe20] sm:$0xff]
        %v742 = vld [vmem:[#allocation2 + $0xe28] sm:$0xff]
        %v743 = vld [vmem:[#allocation2 + $0xe30] sm:$0xff]
        %v744 = vld [vmem:[#allocation2 + $0xe38] sm:$0xff]
        %v745 = vld [vmem:[#allocation2 + $0xe40] sm:$0xff]
        %v746 = vld [vmem:[#allocation2 + $0xe48] sm:$0xff]
        %v747 = vld [vmem:[#allocation2 + $0xe50] sm:$0xff]
        %v748 = vld [vmem:[#allocation2 + $0xe58] sm:$0xff]
        %v749 = vld [vmem:[#allocation2 + $0xe60] sm:$0xff]
        %v750 = vld [vmem:[#allocation2 + $0xe68] sm:$0xff]
        %v751 = vld [vmem:[#allocation2 + $0xe70] sm:$0xff]
        %v752 = vld [vmem:[#allocation2 + $0xe78] sm:$0xff]
        %v753 = vld [vmem:[#allocation2 + $0xe80] sm:$0xff]
        %v754 = vld [vmem:[#allocation2 + $0xe88] sm:$0xff]
        %v755 = vld [vmem:[#allocation2 + $0xe90] sm:$0xff]
        %v756 = vld [vmem:[#allocation2 + $0xe98] sm:$0xff]
        %v757 = vld [vmem:[#allocation2 + $0xea0] sm:$0xff]
        %v758 = vld [vmem:[#allocation2 + $0xea8] sm:$0xff]
        %v759 = vld [vmem:[#allocation2 + $0xeb0] sm:$0xff]
        %v760 = vld [vmem:[#allocation2 + $0xeb8] sm:$0xff]
        %v761 = vld [vmem:[#allocation2 + $0xec0] sm:$0xff]
        %v762 = vld [vmem:[#allocation2 + $0xec8] sm:$0xff]
        %v763 = vld [vmem:[#allocation2 + $0xed0] sm:$0xff]
        %v764 = vld [vmem:[#allocation2 + $0xed8] sm:$0xff]
        %v765 = vld [vmem:[#allocation2 + $0xee0] sm:$0xff]
        %v766 = vld [vmem:[#allocation2 + $0xee8] sm:$0xff]
        %v767 = vld [vmem:[#allocation2 + $0xef0] sm:$0xff]
        %v768 = vld [vmem:[#allocation2 + $0xef8] sm:$0xff]
        %v769 = vld [vmem:[#allocation2 + $0xf00] sm:$0xff]
        %v770 = vld [vmem:[#allocation2 + $0xf08] sm:$0xff]
        %v771 = vld [vmem:[#allocation2 + $0xf10] sm:$0xff]
        %v772 = vld [vmem:[#allocation2 + $0xf18] sm:$0xff]
        %v773 = vld [vmem:[#allocation2 + $0xf20] sm:$0xff]
        %v774 = vld [vmem:[#allocation2 + $0xf28] sm:$0xff]
        %v775 = vld [vmem:[#allocation2 + $0xf30] sm:$0xff]
        %v776 = vld [vmem:[#allocation2 + $0xf38] sm:$0xff]
        %v777 = vld [vmem:[#allocation2 + $0xf40] sm:$0xff]
        %v778 = vld [vmem:[#allocation2 + $0xf48] sm:$0xff]
        %v779 = vld [vmem:[#allocation2 + $0xf50] sm:$0xff]
        %v780 = vld [vmem:[#allocation2 + $0xf58] sm:$0xff]
        %v781 = vld [vmem:[#allocation2 + $0xf60] sm:$0xff]
        %v782 = vld [vmem:[#allocation2 + $0xf68] sm:$0xff]
        %v783 = vld [vmem:[#allocation2 + $0xf70] sm:$0xff]
        %v784 = vld [vmem:[#allocation2 + $0xf78] sm:$0xff]
        %v785 = vld [vmem:[#allocation2 + $0xf80] sm:$0xff]
        %v786 = vld [vmem:[#allocation2 + $0xf88] sm:$0xff]
        %v787 = vld [vmem:[#allocation2 + $0xf90] sm:$0xff]
        %v788 = vld [vmem:[#allocation2 + $0xf98] sm:$0xff]
        %v789 = vld [vmem:[#allocation2 + $0xfa0] sm:$0xff]
        %v790 = vld [vmem:[#allocation2 + $0xfa8] sm:$0xff]
        %v791 = vld [vmem:[#allocation2 + $0xfb0] sm:$0xff]
        %v792 = vld [vmem:[#allocation2 + $0xfb8] sm:$0xff]
        %v793 = vld [vmem:[#allocation2 + $0xfc0] sm:$0xff]
        %v794 = vld [vmem:[#allocation2 + $0xfc8] sm:$0xff]
        %v795 = vld [vmem:[#allocation2 + $0xfd0] sm:$0xff]
        %v796 = vld [vmem:[#allocation2 + $0xfd8] sm:$0xff]
        %v797 = vld [vmem:[#allocation2 + $0xfe0] sm:$0xff]
        %v798 = vld [vmem:[#allocation2 + $0xfe8] sm:$0xff]
        %v799 = vld [vmem:[#allocation2 + $0xff0] sm:$0xff]
        %v800 = vld [vmem:[#allocation2 + $0xff8] sm:$0xff]
        %v801 = vld [vmem:[#allocation2 + $0x1000] sm:$0xff]
        %v802 = vld [vmem:[#allocation2 + $0x1008] sm:$0xff]
        %v803 = vld [vmem:[#allocation2 + $0x1010] sm:$0xff]
        %v804 = vld [vmem:[#allocation2 + $0x1018] sm:$0xff]
        %v805 = vld [vmem:[#allocation2 + $0x1020] sm:$0xff]
        %v806 = vld [vmem:[#allocation2 + $0x1028] sm:$0xff]
        %v807 = vld [vmem:[#allocation2 + $0x1030] sm:$0xff]
        %v808 = vld [vmem:[#allocation2 + $0x1038] sm:$0xff]
        %v809 = vld [vmem:[#allocation2 + $0x1040] sm:$0xff]
        %v810 = vld [vmem:[#allocation2 + $0x1048] sm:$0xff]
        %v811 = vld [vmem:[#allocation2 + $0x1050] sm:$0xff]
        %v812 = vld [vmem:[#allocation2 + $0x1058] sm:$0xff]
        %v813 = vld [vmem:[#allocation2 + $0x1060] sm:$0xff]
        %v814 = vld [vmem:[#allocation2 + $0x1068] sm:$0xff]
        %v815 = vld [vmem:[#allocation2 + $0x1070] sm:$0xff]
        %v816 = vld [vmem:[#allocation2 + $0x1078] sm:$0xff]
        %v817 = vld [vmem:[#allocation2 + $0x1080] sm:$0xff]
        %v818 = vld [vmem:[#allocation2 + $0x1088] sm:$0xff]
        %v819 = vld [vmem:[#allocation2 + $0x1090] sm:$0xff]
        %v820 = vld [vmem:[#allocation2 + $0x1098] sm:$0xff]
        %v821 = vld [vmem:[#allocation2 + $0x10a0] sm:$0xff]
        %v822 = vld [vmem:[#allocation2 + $0x10a8] sm:$0xff]
        %v823 = vld [vmem:[#allocation2 + $0x10b0] sm:$0xff]
        %v824 = vld [vmem:[#allocation2 + $0x10b8] sm:$0xff]
        %v825 = vld [vmem:[#allocation2 + $0x10c0] sm:$0xff]
        %v826 = vld [vmem:[#allocation2 + $0x10c8] sm:$0xff]
        %v827 = vld [vmem:[#allocation2 + $0x10d0] sm:$0xff]
        %v828 = vld [vmem:[#allocation2 + $0x10d8] sm:$0xff]
        %v829 = vld [vmem:[#allocation2 + $0x10e0] sm:$0xff]
        %v830 = vld [vmem:[#allocation2 + $0x10e8] sm:$0xff]
        %v831 = vld [vmem:[#allocation2 + $0x10f0] sm:$0xff]
        %v832 = vld [vmem:[#allocation2 + $0x10f8] sm:$0xff]
        %v833 = vld [vmem:[#allocation2 + $0x1100] sm:$0xff]
        %v834 = vld [vmem:[#allocation2 + $0x1108] sm:$0xff]
        %v835 = vld [vmem:[#allocation2 + $0x1110] sm:$0xff]
        %v836 = vld [vmem:[#allocation2 + $0x1118] sm:$0xff]
        %v837 = vld [vmem:[#allocation2 + $0x1120] sm:$0xff]
        %v838 = vld [vmem:[#allocation2 + $0x1128] sm:$0xff]
        %v839 = vld [vmem:[#allocation2 + $0x1130] sm:$0xff]
        %v840 = vld [vmem:[#allocation2 + $0x1138] sm:$0xff]
        %v841 = vld [vmem:[#allocation2 + $0x1140] sm:$0xff]
        %v842 = vld [vmem:[#allocation2 + $0x1148] sm:$0xff]
        %v843 = vld [vmem:[#allocation2 + $0x1150] sm:$0xff]
        %v844 = vld [vmem:[#allocation2 + $0x1158] sm:$0xff]
        %v845 = vld [vmem:[#allocation2 + $0x1160] sm:$0xff]
        %v846 = vld [vmem:[#allocation2 + $0x1168] sm:$0xff]
        %v847 = vld [vmem:[#allocation2 + $0x1170] sm:$0xff]
        %v848 = vld [vmem:[#allocation2 + $0x1178] sm:$0xff]
        %v849 = vld [vmem:[#allocation2 + $0x1180] sm:$0xff]
        %v850 = vld [vmem:[#allocation2 + $0x1188] sm:$0xff]
        %v851 = vld [vmem:[#allocation2 + $0x1190] sm:$0xff]
        %v852 = vld [vmem:[#allocation2 + $0x1198] sm:$0xff]
        %v853 = vld [vmem:[#allocation2 + $0x11a0] sm:$0xff]
        %v854 = vld [vmem:[#allocation2 + $0x11a8] sm:$0xff]
        %v855 = vld [vmem:[#allocation2 + $0x11b0] sm:$0xff]
        %v856 = vld [vmem:[#allocation2 + $0x11b8] sm:$0xff]
        %v857 = vld [vmem:[#allocation2 + $0x11c0] sm:$0xff]
        %v858 = vld [vmem:[#allocation2 + $0x11c8] sm:$0xff]
        %v859 = vld [vmem:[#allocation2 + $0x11d0] sm:$0xff]
        %v860 = vld [vmem:[#allocation2 + $0x11d8] sm:$0xff]
        %v861 = vld [vmem:[#allocation2 + $0x11e0] sm:$0xff]
        %v862 = vld [vmem:[#allocation2 + $0x11e8] sm:$0xff]
        %v863 = vld [vmem:[#allocation2 + $0x11f0] sm:$0xff]
        %v864 = vld [vmem:[#allocation2 + $0x11f8] sm:$0xff]
        %v865 = vld [vmem:[#allocation2 + $0x1200] sm:$0xff]
        %v866 = vld [vmem:[#allocation2 + $0x1208] sm:$0xff]
        %v867 = vld [vmem:[#allocation2 + $0x1210] sm:$0xff]
        %v868 = vld [vmem:[#allocation2 + $0x1218] sm:$0xff]
        %v869 = vld [vmem:[#allocation2 + $0x1220] sm:$0xff]
        %v870 = vld [vmem:[#allocation2 + $0x1228] sm:$0xff]
        %v871 = vld [vmem:[#allocation2 + $0x1230] sm:$0xff]
        %v872 = vld [vmem:[#allocation2 + $0x1238] sm:$0xff]
        %v873 = vld [vmem:[#allocation2 + $0x1240] sm:$0xff]
        %v874 = vld [vmem:[#allocation2 + $0x1248] sm:$0xff]
        %v875 = vld [vmem:[#allocation2 + $0x1250] sm:$0xff]
        %v876 = vld [vmem:[#allocation2 + $0x1258] sm:$0xff]
        %v877 = vld [vmem:[#allocation2 + $0x1260] sm:$0xff]
        %v878 = vld [vmem:[#allocation2 + $0x1268] sm:$0xff]
        %v879 = vld [vmem:[#allocation2 + $0x1270] sm:$0xff]
        %v880 = vld [vmem:[#allocation2 + $0x1278] sm:$0xff]
        %v881 = vld [vmem:[#allocation2 + $0x1280] sm:$0xff]
        %v882 = vld [vmem:[#allocation2 + $0x1288] sm:$0xff]
        %v883 = vld [vmem:[#allocation2 + $0x1290] sm:$0xff]
        %v884 = vld [vmem:[#allocation2 + $0x1298] sm:$0xff]
        %v885 = vld [vmem:[#allocation2 + $0x12a0] sm:$0xff]
        %v886 = vld [vmem:[#allocation2 + $0x12a8] sm:$0xff]
        %v887 = vld [vmem:[#allocation2 + $0x12b0] sm:$0xff]
        %v888 = vld [vmem:[#allocation2 + $0x12b8] sm:$0xff]
        %v889 = vld [vmem:[#allocation2 + $0x12c0] sm:$0xff]
        %v890 = vld [vmem:[#allocation2 + $0x12c8] sm:$0xff]
        %v891 = vld [vmem:[#allocation2 + $0x12d0] sm:$0xff]
        %v892 = vld [vmem:[#allocation2 + $0x12d8] sm:$0xff]
        %v893 = vld [vmem:[#allocation2 + $0x12e0] sm:$0xff]
        %v894 = vld [vmem:[#allocation2 + $0x12e8] sm:$0xff]
        %v895 = vld [vmem:[#allocation2 + $0x12f0] sm:$0xff]
        %v896 = vld [vmem:[#allocation2 + $0x12f8] sm:$0xff]
        %v897 = vld [vmem:[#allocation2 + $0x1300] sm:$0xff]
        %v898 = vld [vmem:[#allocation2 + $0x1308] sm:$0xff]
        %v899 = vld [vmem:[#allocation2 + $0x1310] sm:$0xff]
        %v900 = vld [vmem:[#allocation2 + $0x1318] sm:$0xff]
        %v901 = vld [vmem:[#allocation2 + $0x1320] sm:$0xff]
        %v902 = vld [vmem:[#allocation2 + $0x1328] sm:$0xff]
        %v903 = vld [vmem:[#allocation2 + $0x1330] sm:$0xff]
        %v904 = vld [vmem:[#allocation2 + $0x1338] sm:$0xff]
        %v905 = vld [vmem:[#allocation2 + $0x1340] sm:$0xff]
        %v906 = vld [vmem:[#allocation2 + $0x1348] sm:$0xff]
        %v907 = vld [vmem:[#allocation2 + $0x1350] sm:$0xff]
        %v908 = vld [vmem:[#allocation2 + $0x1358] sm:$0xff]
        %v909 = vld [vmem:[#allocation2 + $0x1360] sm:$0xff]
        %v910 = vld [vmem:[#allocation2 + $0x1368] sm:$0xff]
        %v911 = vld [vmem:[#allocation2 + $0x1370] sm:$0xff]
        %v912 = vld [vmem:[#allocation2 + $0x1378] sm:$0xff]
        %v913 = vld [vmem:[#allocation2 + $0x1380] sm:$0xff]
        %v914 = vld [vmem:[#allocation2 + $0x1388] sm:$0xff]
        %v915 = vld [vmem:[#allocation2 + $0x1390] sm:$0xff]
        %v916 = vld [vmem:[#allocation2 + $0x1398] sm:$0xff]
        %v917 = vld [vmem:[#allocation2 + $0x13a0] sm:$0xff]
        %v918 = vld [vmem:[#allocation2 + $0x13a8] sm:$0xff]
        %v919 = vld [vmem:[#allocation2 + $0x13b0] sm:$0xff]
        %v920 = vld [vmem:[#allocation2 + $0x13b8] sm:$0xff]
        %v921 = vld [vmem:[#allocation2 + $0x13c0] sm:$0xff]
        %v922 = vld [vmem:[#allocation2 + $0x13c8] sm:$0xff]
        %v923 = vld [vmem:[#allocation2 + $0x13d0] sm:$0xff]
        %v924 = vld [vmem:[#allocation2 + $0x13d8] sm:$0xff]
        %v925 = vld [vmem:[#allocation2 + $0x13e0] sm:$0xff]
        %v926 = vld [vmem:[#allocation2 + $0x13e8] sm:$0xff]
        %v927 = vld [vmem:[#allocation2 + $0x13f0] sm:$0xff]
        %v928 = vld [vmem:[#allocation2 + $0x13f8] sm:$0xff]
        %v929 = vld [vmem:[#allocation2 + $0x1400] sm:$0xff]
        %v930 = vld [vmem:[#allocation2 + $0x1408] sm:$0xff]
        %v931 = vld [vmem:[#allocation2 + $0x1410] sm:$0xff]
        %v932 = vld [vmem:[#allocation2 + $0x1418] sm:$0xff]
        %v933 = vld [vmem:[#allocation2 + $0x1420] sm:$0xff]
        %v934 = vld [vmem:[#allocation2 + $0x1428] sm:$0xff]
        %v935 = vld [vmem:[#allocation2 + $0x1430] sm:$0xff]
        %v936 = vld [vmem:[#allocation2 + $0x1438] sm:$0xff]
        %v937 = vld [vmem:[#allocation2 + $0x1440] sm:$0xff]
        %v938 = vld [vmem:[#allocation2 + $0x1448] sm:$0xff]
        %v939 = vld [vmem:[#allocation2 + $0x1450] sm:$0xff]
        %v940 = vld [vmem:[#allocation2 + $0x1458] sm:$0xff]
        %v941 = vld [vmem:[#allocation2 + $0x1460] sm:$0xff]
        %v942 = vld [vmem:[#allocation2 + $0x1468] sm:$0xff]
        %v943 = vld [vmem:[#allocation2 + $0x1470] sm:$0xff]
        %v944 = vld [vmem:[#allocation2 + $0x1478] sm:$0xff]
        %v945 = vld [vmem:[#allocation2 + $0x1480] sm:$0xff]
        %v946 = vld [vmem:[#allocation2 + $0x1488] sm:$0xff]
        %v947 = vld [vmem:[#allocation2 + $0x1490] sm:$0xff]
        %v948 = vld [vmem:[#allocation2 + $0x1498] sm:$0xff]
        %v949 = vld [vmem:[#allocation2 + $0x14a0] sm:$0xff]
        %v950 = vld [vmem:[#allocation2 + $0x14a8] sm:$0xff]
        %v951 = vld [vmem:[#allocation2 + $0x14b0] sm:$0xff]
        %v952 = vld [vmem:[#allocation2 + $0x14b8] sm:$0xff]
        %v953 = vld [vmem:[#allocation2 + $0x14c0] sm:$0xff]
        %v954 = vld [vmem:[#allocation2 + $0x14c8] sm:$0xff]
        %v955 = vld [vmem:[#allocation2 + $0x14d0] sm:$0xff]
        %v956 = vld [vmem:[#allocation2 + $0x14d8] sm:$0xff]
        %v957 = vld [vmem:[#allocation2 + $0x14e0] sm:$0xff]
        %v958 = vld [vmem:[#allocation2 + $0x14e8] sm:$0xff]
        %v959 = vld [vmem:[#allocation2 + $0x14f0] sm:$0xff]
        %v960 = vld [vmem:[#allocation2 + $0x14f8] sm:$0xff]
        %v961 = vld [vmem:[#allocation2 + $0x1500] sm:$0xff]
        %v962 = vld [vmem:[#allocation2 + $0x1508] sm:$0xff]
        %v963 = vld [vmem:[#allocation2 + $0x1510] sm:$0xff]
        %v964 = vld [vmem:[#allocation2 + $0x1518] sm:$0xff]
        %v965 = vld [vmem:[#allocation2 + $0x1520] sm:$0xff]
        %v966 = vld [vmem:[#allocation2 + $0x1528] sm:$0xff]
        %v967 = vld [vmem:[#allocation2 + $0x1530] sm:$0xff]
        %v968 = vld [vmem:[#allocation2 + $0x1538] sm:$0xff]
        %v969 = vld [vmem:[#allocation2 + $0x1540] sm:$0xff]
        %v970 = vld [vmem:[#allocation2 + $0x1548] sm:$0xff]
        %v971 = vld [vmem:[#allocation2 + $0x1550] sm:$0xff]
        %v972 = vld [vmem:[#allocation2 + $0x1558] sm:$0xff]
        %v973 = vld [vmem:[#allocation2 + $0x1560] sm:$0xff]
        %v974 = vld [vmem:[#allocation2 + $0x1568] sm:$0xff]
        %v975 = vld [vmem:[#allocation2 + $0x1570] sm:$0xff]
        %v976 = vld [vmem:[#allocation2 + $0x1578] sm:$0xff]
        %v977 = vld [vmem:[#allocation2 + $0x1580] sm:$0xff]
        %v978 = vld [vmem:[#allocation2 + $0x1588] sm:$0xff]
        %v979 = vld [vmem:[#allocation2 + $0x1590] sm:$0xff]
        %v980 = vld [vmem:[#allocation2 + $0x1598] sm:$0xff]
        %v981 = vld [vmem:[#allocation2 + $0x15a0] sm:$0xff]
        %v982 = vld [vmem:[#allocation2 + $0x15a8] sm:$0xff]
        %v983 = vld [vmem:[#allocation2 + $0x15b0] sm:$0xff]
        %v984 = vld [vmem:[#allocation2 + $0x15b8] sm:$0xff]
        %v985 = vld [vmem:[#allocation2 + $0x15c0] sm:$0xff]
        %v986 = vld [vmem:[#allocation2 + $0x15c8] sm:$0xff]
        %v987 = vld [vmem:[#allocation2 + $0x15d0] sm:$0xff]
        %v988 = vld [vmem:[#allocation2 + $0x15d8] sm:$0xff]
        %v989 = vld [vmem:[#allocation2 + $0x15e0] sm:$0xff]
        %v990 = vld [vmem:[#allocation2 + $0x15e8] sm:$0xff]
        %v991 = vld [vmem:[#allocation2 + $0x15f0] sm:$0xff]
        %v992 = vld [vmem:[#allocation2 + $0x15f8] sm:$0xff]
        %v993 = vld [vmem:[#allocation2 + $0x1600] sm:$0xff]
        %v994 = vld [vmem:[#allocation2 + $0x1608] sm:$0xff]
        %v995 = vld [vmem:[#allocation2 + $0x1610] sm:$0xff]
        %v996 = vld [vmem:[#allocation2 + $0x1618] sm:$0xff]
        %v997 = vld [vmem:[#allocation2 + $0x1620] sm:$0xff]
        %v998 = vld [vmem:[#allocation2 + $0x1628] sm:$0xff]
        %v999 = vld [vmem:[#allocation2 + $0x1630] sm:$0xff]
        %v1000 = vld [vmem:[#allocation2 + $0x1638] sm:$0xff]
        %v1001 = vld [vmem:[#allocation2 + $0x1640] sm:$0xff]
        %v1002 = vld [vmem:[#allocation2 + $0x1648] sm:$0xff]
        %v1003 = vld [vmem:[#allocation2 + $0x1650] sm:$0xff]
        %v1004 = vld [vmem:[#allocation2 + $0x1658] sm:$0xff]
        %v1005 = vld [vmem:[#allocation2 + $0x1660] sm:$0xff]
        %v1006 = vld [vmem:[#allocation2 + $0x1668] sm:$0xff]
        %v1007 = vld [vmem:[#allocation2 + $0x1670] sm:$0xff]
        %v1008 = vld [vmem:[#allocation2 + $0x1678] sm:$0xff]
        %v1009 = vld [vmem:[#allocation2 + $0x1680] sm:$0xff]
        %v1010 = vld [vmem:[#allocation2 + $0x1688] sm:$0xff]
        %v1011 = vld [vmem:[#allocation2 + $0x1690] sm:$0xff]
        %v1012 = vld [vmem:[#allocation2 + $0x1698] sm:$0xff]
        %v1013 = vld [vmem:[#allocation2 + $0x16a0] sm:$0xff]
        %v1014 = vld [vmem:[#allocation2 + $0x16a8] sm:$0xff]
        %v1015 = vld [vmem:[#allocation2 + $0x16b0] sm:$0xff]
        %v1016 = vld [vmem:[#allocation2 + $0x16b8] sm:$0xff]
        %v1017 = vld [vmem:[#allocation2 + $0x16c0] sm:$0xff]
        %v1018 = vld [vmem:[#allocation2 + $0x16c8] sm:$0xff]
        %v1019 = vld [vmem:[#allocation2 + $0x16d0] sm:$0xff]
        %v1020 = vld [vmem:[#allocation2 + $0x16d8] sm:$0xff]
        %v1021 = vld [vmem:[#allocation2 + $0x16e0] sm:$0xff]
        %v1022 = vld [vmem:[#allocation2 + $0x16e8] sm:$0xff]
        %v1023 = vld [vmem:[#allocation2 + $0x16f0] sm:$0xff]
        %v1024 = vld [vmem:[#allocation2 + $0x16f8] sm:$0xff]
        %v1025 = vld [vmem:[#allocation2 + $0x1700] sm:$0xff]
        %v1026 = vld [vmem:[#allocation2 + $0x1708] sm:$0xff]
        %v1027 = vld [vmem:[#allocation2 + $0x1710] sm:$0xff]
        %v1028 = vld [vmem:[#allocation2 + $0x1718] sm:$0xff]
        %v1029 = vld [vmem:[#allocation2 + $0x1720] sm:$0xff]
        %v1030 = vld [vmem:[#allocation2 + $0x1728] sm:$0xff]
        %v1031 = vld [vmem:[#allocation2 + $0x1730] sm:$0xff]
        %v1032 = vld [vmem:[#allocation2 + $0x1738] sm:$0xff]
        %v1033 = vld [vmem:[#allocation2 + $0x1740] sm:$0xff]
        %v1034 = vld [vmem:[#allocation2 + $0x1748] sm:$0xff]
        %v1035 = vld [vmem:[#allocation2 + $0x1750] sm:$0xff]
        %v1036 = vld [vmem:[#allocation2 + $0x1758] sm:$0xff]
        %v1037 = vld [vmem:[#allocation2 + $0x1760] sm:$0xff]
        %v1038 = vld [vmem:[#allocation2 + $0x1768] sm:$0xff]
        %v1039 = vld [vmem:[#allocation2 + $0x1770] sm:$0xff]
        %v1040 = vld [vmem:[#allocation2 + $0x1778] sm:$0xff]
        %v1041 = vld [vmem:[#allocation2 + $0x1780] sm:$0xff]
        %v1042 = vld [vmem:[#allocation2 + $0x1788] sm:$0xff]
        %v1043 = vld [vmem:[#allocation2 + $0x1790] sm:$0xff]
        %v1044 = vld [vmem:[#allocation2 + $0x1798] sm:$0xff]
        %v1045 = vld [vmem:[#allocation2 + $0x17a0] sm:$0xff]
        %v1046 = vld [vmem:[#allocation2 + $0x17a8] sm:$0xff]
        %v1047 = vld [vmem:[#allocation2 + $0x17b0] sm:$0xff]
        %v1048 = vld [vmem:[#allocation2 + $0x17b8] sm:$0xff]
        %v1049 = vld [vmem:[#allocation2 + $0x17c0] sm:$0xff]
        %v1050 = vld [vmem:[#allocation2 + $0x17c8] sm:$0xff]
        %v1051 = vld [vmem:[#allocation2 + $0x17d0] sm:$0xff]
        %v1052 = vld [vmem:[#allocation2 + $0x17d8] sm:$0xff]
        %v1053 = vld [vmem:[#allocation2 + $0x17e0] sm:$0xff]
        %v1054 = vld [vmem:[#allocation2 + $0x17e8] sm:$0xff]
        %v1055 = vld [vmem:[#allocation2 + $0x17f0] sm:$0xff]
        %v1056 = vld [vmem:[#allocation2 + $0x17f8] sm:$0xff]
        %v1057 = vld [vmem:[#allocation2 + $0x1800] sm:$0xff]
        %v1058 = vld [vmem:[#allocation2 + $0x1808] sm:$0xff]
        %v1059 = vld [vmem:[#allocation2 + $0x1810] sm:$0xff]
        %v1060 = vld [vmem:[#allocation2 + $0x1818] sm:$0xff]
        %v1061 = vld [vmem:[#allocation2 + $0x1820] sm:$0xff]
        %v1062 = vld [vmem:[#allocation2 + $0x1828] sm:$0xff]
        %v1063 = vld [vmem:[#allocation2 + $0x1830] sm:$0xff]
        %v1064 = vld [vmem:[#allocation2 + $0x1838] sm:$0xff]
        %v1065 = vld [vmem:[#allocation2 + $0x1840] sm:$0xff]
        %v1066 = vld [vmem:[#allocation2 + $0x1848] sm:$0xff]
        %v1067 = vld [vmem:[#allocation2 + $0x1850] sm:$0xff]
        %v1068 = vld [vmem:[#allocation2 + $0x1858] sm:$0xff]
        %v1069 = vld [vmem:[#allocation2 + $0x1860] sm:$0xff]
        %v1070 = vld [vmem:[#allocation2 + $0x1868] sm:$0xff]
        %v1071 = vld [vmem:[#allocation2 + $0x1870] sm:$0xff]
        %v1072 = vld [vmem:[#allocation2 + $0x1878] sm:$0xff]
        %v1073 = vld [vmem:[#allocation2 + $0x1880] sm:$0xff]
        %v1074 = vld [vmem:[#allocation2 + $0x1888] sm:$0xff]
        %v1075 = vld [vmem:[#allocation2 + $0x1890] sm:$0xff]
        %v1076 = vld [vmem:[#allocation2 + $0x1898] sm:$0xff]
        %v1077 = vld [vmem:[#allocation2 + $0x18a0] sm:$0xff]
        %v1078 = vld [vmem:[#allocation2 + $0x18a8] sm:$0xff]
        %v1079 = vld [vmem:[#allocation2 + $0x18b0] sm:$0xff]
        %v1080 = vld [vmem:[#allocation2 + $0x18b8] sm:$0xff]
        %v1081 = vld [vmem:[#allocation2 + $0x18c0] sm:$0xff]
        %v1082 = vld [vmem:[#allocation2 + $0x18c8] sm:$0xff]
        %v1083 = vld [vmem:[#allocation2 + $0x18d0] sm:$0xff]
        %v1084 = vld [vmem:[#allocation2 + $0x18d8] sm:$0xff]
        %v1085 = vld [vmem:[#allocation2 + $0x18e0] sm:$0xff]
        %v1086 = vld [vmem:[#allocation2 + $0x18e8] sm:$0xff]
        %v1087 = vld [vmem:[#allocation2 + $0x18f0] sm:$0xff]
        %v1088 = vld [vmem:[#allocation2 + $0x18f8] sm:$0xff]
        %v1089 = vld [vmem:[#allocation2 + $0x1900] sm:$0xff]
        %v1090 = vld [vmem:[#allocation2 + $0x1908] sm:$0xff]
        %v1091 = vld [vmem:[#allocation2 + $0x1910] sm:$0xff]
        %v1092 = vld [vmem:[#allocation2 + $0x1918] sm:$0xff]
        %v1093 = vld [vmem:[#allocation2 + $0x1920] sm:$0xff]
        %v1094 = vld [vmem:[#allocation2 + $0x1928] sm:$0xff]
        %v1095 = vld [vmem:[#allocation2 + $0x1930] sm:$0xff]
        %v1096 = vld [vmem:[#allocation2 + $0x1938] sm:$0xff]
        %v1097 = vld [vmem:[#allocation2 + $0x1940] sm:$0xff]
        %v1098 = vld [vmem:[#allocation2 + $0x1948] sm:$0xff]
        %v1099 = vld [vmem:[#allocation2 + $0x1950] sm:$0xff]
        %v1100 = vld [vmem:[#allocation2 + $0x1958] sm:$0xff]
        %v1101 = vld [vmem:[#allocation2 + $0x1960] sm:$0xff]
        %v1102 = vld [vmem:[#allocation2 + $0x1968] sm:$0xff]
        %v1103 = vld [vmem:[#allocation2 + $0x1970] sm:$0xff]
        %v1104 = vld [vmem:[#allocation2 + $0x1978] sm:$0xff]
        %v1105 = vld [vmem:[#allocation2 + $0x1980] sm:$0xff]
        %v1106 = vld [vmem:[#allocation2 + $0x1988] sm:$0xff]
        %v1107 = vld [vmem:[#allocation2 + $0x1990] sm:$0xff]
        %v1108 = vld [vmem:[#allocation2 + $0x1998] sm:$0xff]
        %v1109 = vld [vmem:[#allocation2 + $0x19a0] sm:$0xff]
        %v1110 = vld [vmem:[#allocation2 + $0x19a8] sm:$0xff]
        %v1111 = vld [vmem:[#allocation2 + $0x19b0] sm:$0xff]
        %v1112 = vld [vmem:[#allocation2 + $0x19b8] sm:$0xff]
        %v1113 = vld [vmem:[#allocation2 + $0x19c0] sm:$0xff]
        %v1114 = vld [vmem:[#allocation2 + $0x19c8] sm:$0xff]
        %v1115 = vld [vmem:[#allocation2 + $0x19d0] sm:$0xff]
        %v1116 = vld [vmem:[#allocation2 + $0x19d8] sm:$0xff]
        %v1117 = vld [vmem:[#allocation2 + $0x19e0] sm:$0xff]
        %v1118 = vld [vmem:[#allocation2 + $0x19e8] sm:$0xff]
        %v1119 = vld [vmem:[#allocation2 + $0x19f0] sm:$0xff]
        %v1120 = vld [vmem:[#allocation2 + $0x19f8] sm:$0xff]
        %v1121 = vld [vmem:[#allocation2 + $0x1a00] sm:$0xff]
        %v1122 = vld [vmem:[#allocation2 + $0x1a08] sm:$0xff]
        %v1123 = vld [vmem:[#allocation2 + $0x1a10] sm:$0xff]
        %v1124 = vld [vmem:[#allocation2 + $0x1a18] sm:$0xff]
        %v1125 = vld [vmem:[#allocation2 + $0x1a20] sm:$0xff]
        %v1126 = vld [vmem:[#allocation2 + $0x1a28] sm:$0xff]
        %v1127 = vld [vmem:[#allocation2 + $0x1a30] sm:$0xff]
        %v1128 = vld [vmem:[#allocation2 + $0x1a38] sm:$0xff]
        %v1129 = vld [vmem:[#allocation2 + $0x1a40] sm:$0xff]
        %v1130 = vld [vmem:[#allocation2 + $0x1a48] sm:$0xff]
        %v1131 = vld [vmem:[#allocation2 + $0x1a50] sm:$0xff]
        %v1132 = vld [vmem:[#allocation2 + $0x1a58] sm:$0xff]
        %v1133 = vld [vmem:[#allocation2 + $0x1a60] sm:$0xff]
        %v1134 = vld [vmem:[#allocation2 + $0x1a68] sm:$0xff]
        %v1135 = vld [vmem:[#allocation2 + $0x1a70] sm:$0xff]
        %v1136 = vld [vmem:[#allocation2 + $0x1a78] sm:$0xff]
        %v1137 = vld [vmem:[#allocation2 + $0x1a80] sm:$0xff]
        %v1138 = vld [vmem:[#allocation2 + $0x1a88] sm:$0xff]
        %v1139 = vld [vmem:[#allocation2 + $0x1a90] sm:$0xff]
        %v1140 = vld [vmem:[#allocation2 + $0x1a98] sm:$0xff]
        %v1141 = vld [vmem:[#allocation2 + $0x1aa0] sm:$0xff]
        %v1142 = vld [vmem:[#allocation2 + $0x1aa8] sm:$0xff]
        %v1143 = vld [vmem:[#allocation2 + $0x1ab0] sm:$0xff]
        %v1144 = vld [vmem:[#allocation2 + $0x1ab8] sm:$0xff]
        %v1145 = vld [vmem:[#allocation2 + $0x1ac0] sm:$0xff]
        %v1146 = vld [vmem:[#allocation2 + $0x1ac8] sm:$0xff]
        %v1147 = vld [vmem:[#allocation2 + $0x1ad0] sm:$0xff]
        %v1148 = vld [vmem:[#allocation2 + $0x1ad8] sm:$0xff]
        %v1149 = vld [vmem:[#allocation2 + $0x1ae0] sm:$0xff]
        %v1150 = vld [vmem:[#allocation2 + $0x1ae8] sm:$0xff]
        %v1151 = vld [vmem:[#allocation2 + $0x1af0] sm:$0xff]
        %v1152 = vld [vmem:[#allocation2 + $0x1af8] sm:$0xff]
        %v1153 = vld [vmem:[#allocation2 + $0x1b00] sm:$0xff]
        %v1154 = vld [vmem:[#allocation2 + $0x1b08] sm:$0xff]
        %v1155 = vld [vmem:[#allocation2 + $0x1b10] sm:$0xff]
        %v1156 = vld [vmem:[#allocation2 + $0x1b18] sm:$0xff]
        %v1157 = vld [vmem:[#allocation2 + $0x1b20] sm:$0xff]
        %v1158 = vld [vmem:[#allocation2 + $0x1b28] sm:$0xff]
        %v1159 = vld [vmem:[#allocation2 + $0x1b30] sm:$0xff]
        %v1160 = vld [vmem:[#allocation2 + $0x1b38] sm:$0xff]
        %v1161 = vld [vmem:[#allocation2 + $0x1b40] sm:$0xff]
        %v1162 = vld [vmem:[#allocation2 + $0x1b48] sm:$0xff]
        %v1163 = vld [vmem:[#allocation2 + $0x1b50] sm:$0xff]
        %v1164 = vld [vmem:[#allocation2 + $0x1b58] sm:$0xff]
        %v1165 = vld [vmem:[#allocation2 + $0x1b60] sm:$0xff]
        %v1166 = vld [vmem:[#allocation2 + $0x1b68] sm:$0xff]
        %v1167 = vld [vmem:[#allocation2 + $0x1b70] sm:$0xff]
        %v1168 = vld [vmem:[#allocation2 + $0x1b78] sm:$0xff]
        %v1169 = vld [vmem:[#allocation2 + $0x1b80] sm:$0xff]
        %v1170 = vld [vmem:[#allocation2 + $0x1b88] sm:$0xff]
        %v1171 = vld [vmem:[#allocation2 + $0x1b90] sm:$0xff]
        %v1172 = vld [vmem:[#allocation2 + $0x1b98] sm:$0xff]
        %v1173 = vld [vmem:[#allocation2 + $0x1ba0] sm:$0xff]
        %v1174 = vld [vmem:[#allocation2 + $0x1ba8] sm:$0xff]
        %v1175 = vld [vmem:[#allocation2 + $0x1bb0] sm:$0xff]
        %v1176 = vld [vmem:[#allocation2 + $0x1bb8] sm:$0xff]
        %v1177 = vld [vmem:[#allocation2 + $0x1bc0] sm:$0xff]
        %v1178 = vld [vmem:[#allocation2 + $0x1bc8] sm:$0xff]
        %v1179 = vld [vmem:[#allocation2 + $0x1bd0] sm:$0xff]
        %v1180 = vld [vmem:[#allocation2 + $0x1bd8] sm:$0xff]
        %v1181 = vld [vmem:[#allocation2 + $0x1be0] sm:$0xff]
        %v1182 = vld [vmem:[#allocation2 + $0x1be8] sm:$0xff]
        %v1183 = vld [vmem:[#allocation2 + $0x1bf0] sm:$0xff]
        %v1184 = vld [vmem:[#allocation2 + $0x1bf8] sm:$0xff]
        %v1185 = vld [vmem:[#allocation2 + $0x1c00] sm:$0xff]
        %v1186 = vld [vmem:[#allocation2 + $0x1c08] sm:$0xff]
        %v1187 = vld [vmem:[#allocation2 + $0x1c10] sm:$0xff]
        %v1188 = vld [vmem:[#allocation2 + $0x1c18] sm:$0xff]
        %v1189 = vld [vmem:[#allocation2 + $0x1c20] sm:$0xff]
        %v1190 = vld [vmem:[#allocation2 + $0x1c28] sm:$0xff]
        %v1191 = vld [vmem:[#allocation2 + $0x1c30] sm:$0xff]
        %v1192 = vld [vmem:[#allocation2 + $0x1c38] sm:$0xff]
        %v1193 = vld [vmem:[#allocation2 + $0x1c40] sm:$0xff]
        %v1194 = vld [vmem:[#allocation2 + $0x1c48] sm:$0xff]
        %v1195 = vld [vmem:[#allocation2 + $0x1c50] sm:$0xff]
        %v1196 = vld [vmem:[#allocation2 + $0x1c58] sm:$0xff]
        %v1197 = vld [vmem:[#allocation2 + $0x1c60] sm:$0xff]
        %v1198 = vld [vmem:[#allocation2 + $0x1c68] sm:$0xff]
        %v1199 = vld [vmem:[#allocation2 + $0x1c70] sm:$0xff]
        %v1200 = vld [vmem:[#allocation2 + $0x1c78] sm:$0xff]
        %v1201 = vld [vmem:[#allocation2 + $0x1c80] sm:$0xff]
        %v1202 = vld [vmem:[#allocation2 + $0x1c88] sm:$0xff]
        %v1203 = vld [vmem:[#allocation2 + $0x1c90] sm:$0xff]
        %v1204 = vld [vmem:[#allocation2 + $0x1c98] sm:$0xff]
        %v1205 = vld [vmem:[#allocation2 + $0x1ca0] sm:$0xff]
        %v1206 = vld [vmem:[#allocation2 + $0x1ca8] sm:$0xff]
        %v1207 = vld [vmem:[#allocation2 + $0x1cb0] sm:$0xff]
        %v1208 = vld [vmem:[#allocation2 + $0x1cb8] sm:$0xff]
        %v1209 = vld [vmem:[#allocation2 + $0x1cc0] sm:$0xff]
        %v1210 = vld [vmem:[#allocation2 + $0x1cc8] sm:$0xff]
        %v1211 = vld [vmem:[#allocation2 + $0x1cd0] sm:$0xff]
        %v1212 = vld [vmem:[#allocation2 + $0x1cd8] sm:$0xff]
        %v1213 = vld [vmem:[#allocation2 + $0x1ce0] sm:$0xff]
        %v1214 = vld [vmem:[#allocation2 + $0x1ce8] sm:$0xff]
        %v1215 = vld [vmem:[#allocation2 + $0x1cf0] sm:$0xff]
        %v1216 = vld [vmem:[#allocation2 + $0x1cf8] sm:$0xff]
        %v1217 = vld [vmem:[#allocation2 + $0x1d00] sm:$0xff]
        %v1218 = vld [vmem:[#allocation2 + $0x1d08] sm:$0xff]
        %v1219 = vld [vmem:[#allocation2 + $0x1d10] sm:$0xff]
        %v1220 = vld [vmem:[#allocation2 + $0x1d18] sm:$0xff]
        %v1221 = vld [vmem:[#allocation2 + $0x1d20] sm:$0xff]
        %v1222 = vld [vmem:[#allocation2 + $0x1d28] sm:$0xff]
        %v1223 = vld [vmem:[#allocation2 + $0x1d30] sm:$0xff]
        %v1224 = vld [vmem:[#allocation2 + $0x1d38] sm:$0xff]
        %v1225 = vld [vmem:[#allocation2 + $0x1d40] sm:$0xff]
        %v1226 = vld [vmem:[#allocation2 + $0x1d48] sm:$0xff]
        %v1227 = vld [vmem:[#allocation2 + $0x1d50] sm:$0xff]
        %v1228 = vld [vmem:[#allocation2 + $0x1d58] sm:$0xff]
        %v1229 = vld [vmem:[#allocation2 + $0x1d60] sm:$0xff]
        %v1230 = vld [vmem:[#allocation2 + $0x1d68] sm:$0xff]
        %v1231 = vld [vmem:[#allocation2 + $0x1d70] sm:$0xff]
        %v1232 = vld [vmem:[#allocation2 + $0x1d78] sm:$0xff]
        %v1233 = vld [vmem:[#allocation2 + $0x1d80] sm:$0xff]
        %v1234 = vld [vmem:[#allocation2 + $0x1d88] sm:$0xff]
        %v1235 = vld [vmem:[#allocation2 + $0x1d90] sm:$0xff]
        %v1236 = vld [vmem:[#allocation2 + $0x1d98] sm:$0xff]
        %v1237 = vld [vmem:[#allocation2 + $0x1da0] sm:$0xff]
        %v1238 = vld [vmem:[#allocation2 + $0x1da8] sm:$0xff]
        %v1239 = vld [vmem:[#allocation2 + $0x1db0] sm:$0xff]
        %v1240 = vld [vmem:[#allocation2 + $0x1db8] sm:$0xff]
        %v1241 = vld [vmem:[#allocation2 + $0x1dc0] sm:$0xff]
        %v1242 = vld [vmem:[#allocation2 + $0x1dc8] sm:$0xff]
        %v1243 = vld [vmem:[#allocation2 + $0x1dd0] sm:$0xff]
        %v1244 = vld [vmem:[#allocation2 + $0x1dd8] sm:$0xff]
        %v1245 = vld [vmem:[#allocation2 + $0x1de0] sm:$0xff]
        %v1246 = vld [vmem:[#allocation2 + $0x1de8] sm:$0xff]
        %v1247 = vld [vmem:[#allocation2 + $0x1df0] sm:$0xff]
        %v1248 = vld [vmem:[#allocation2 + $0x1df8] sm:$0xff]
        %v1249 = vld [vmem:[#allocation2 + $0x1e00] sm:$0xff]
        %v1250 = vld [vmem:[#allocation2 + $0x1e08] sm:$0xff]
        %v1251 = vld [vmem:[#allocation2 + $0x1e10] sm:$0xff]
        %v1252 = vld [vmem:[#allocation2 + $0x1e18] sm:$0xff]
        %v1253 = vld [vmem:[#allocation2 + $0x1e20] sm:$0xff]
        %v1254 = vld [vmem:[#allocation2 + $0x1e28] sm:$0xff]
        %v1255 = vld [vmem:[#allocation2 + $0x1e30] sm:$0xff]
        %v1256 = vld [vmem:[#allocation2 + $0x1e38] sm:$0xff]
        %v1257 = vld [vmem:[#allocation2 + $0x1e40] sm:$0xff]
        %v1258 = vld [vmem:[#allocation2 + $0x1e48] sm:$0xff]
        %v1259 = vld [vmem:[#allocation2 + $0x1e50] sm:$0xff]
        %v1260 = vld [vmem:[#allocation2 + $0x1e58] sm:$0xff]
        %v1261 = vld [vmem:[#allocation2 + $0x1e60] sm:$0xff]
        %v1262 = vld [vmem:[#allocation2 + $0x1e68] sm:$0xff]
        %v1263 = vld [vmem:[#allocation2 + $0x1e70] sm:$0xff]
        %v1264 = vld [vmem:[#allocation2 + $0x1e78] sm:$0xff]
        %v1265 = vld [vmem:[#allocation2 + $0x1e80] sm:$0xff]
        %v1266 = vld [vmem:[#allocation2 + $0x1e88] sm:$0xff]
        %v1267 = vld [vmem:[#allocation2 + $0x1e90] sm:$0xff]
        %v1268 = vld [vmem:[#allocation2 + $0x1e98] sm:$0xff]
        %v1269 = vld [vmem:[#allocation2 + $0x1ea0] sm:$0xff]
        %v1270 = vld [vmem:[#allocation2 + $0x1ea8] sm:$0xff]
        %v1271 = vld [vmem:[#allocation2 + $0x1eb0] sm:$0xff]
        %v1272 = vld [vmem:[#allocation2 + $0x1eb8] sm:$0xff]
        %v1273 = vld [vmem:[#allocation2 + $0x1ec0] sm:$0xff]
        %v1274 = vld [vmem:[#allocation2 + $0x1ec8] sm:$0xff]
        %v1275 = vld [vmem:[#allocation2 + $0x1ed0] sm:$0xff]
        %v1276 = vld [vmem:[#allocation2 + $0x1ed8] sm:$0xff]
        %v1277 = vld [vmem:[#allocation2 + $0x1ee0] sm:$0xff]
        %v1278 = vld [vmem:[#allocation2 + $0x1ee8] sm:$0xff]
        %v1279 = vld [vmem:[#allocation2 + $0x1ef0] sm:$0xff]
        %v1280 = vld [vmem:[#allocation2 + $0x1ef8] sm:$0xff]
        %v1281 = vld [vmem:[#allocation2 + $0x1f00] sm:$0xff]
        %v1282 = vld [vmem:[#allocation2 + $0x1f08] sm:$0xff]
        %v1283 = vld [vmem:[#allocation2 + $0x1f10] sm:$0xff]
        %v1284 = vld [vmem:[#allocation2 + $0x1f18] sm:$0xff]
        %v1285 = vld [vmem:[#allocation2 + $0x1f20] sm:$0xff]
        %v1286 = vld [vmem:[#allocation2 + $0x1f28] sm:$0xff]
        %v1287 = vld [vmem:[#allocation2 + $0x1f30] sm:$0xff]
        %v1288 = vld [vmem:[#allocation2 + $0x1f38] sm:$0xff]
        %v1289 = vld [vmem:[#allocation2 + $0x1f40] sm:$0xff]
        %v1290 = vld [vmem:[#allocation2 + $0x1f48] sm:$0xff]
        %v1291 = vld [vmem:[#allocation2 + $0x1f50] sm:$0xff]
        %v1292 = vld [vmem:[#allocation2 + $0x1f58] sm:$0xff]
        %v1293 = vld [vmem:[#allocation2 + $0x1f60] sm:$0xff]
        %v1294 = vld [vmem:[#allocation2 + $0x1f68] sm:$0xff]
        %v1295 = vld [vmem:[#allocation2 + $0x1f70] sm:$0xff]
        %v1296 = vld [vmem:[#allocation2 + $0x1f78] sm:$0xff]
        %v1297 = vld [vmem:[#allocation2 + $0x1f80] sm:$0xff]
        %v1298 = vld [vmem:[#allocation2 + $0x1f88] sm:$0xff]
        %v1299 = vld [vmem:[#allocation2 + $0x1f90] sm:$0xff]
        %v1300 = vld [vmem:[#allocation2 + $0x1f98] sm:$0xff]
        %v1301 = vld [vmem:[#allocation2 + $0x1fa0] sm:$0xff]
        %v1302 = vld [vmem:[#allocation2 + $0x1fa8] sm:$0xff]
        %v1303 = vld [vmem:[#allocation2 + $0x1fb0] sm:$0xff]
        %v1304 = vld [vmem:[#allocation2 + $0x1fb8] sm:$0xff]
        %v1305 = vld [vmem:[#allocation2 + $0x1fc0] sm:$0xff]
        %v1306 = vld [vmem:[#allocation2 + $0x1fc8] sm:$0xff]
        %v1307 = vld [vmem:[#allocation2 + $0x1fd0] sm:$0xff]
        %v1308 = vld [vmem:[#allocation2 + $0x1fd8] sm:$0xff]
        %v1309 = vld [vmem:[#allocation2 + $0x1fe0] sm:$0xff]
        %v1310 = vld [vmem:[#allocation2 + $0x1fe8] sm:$0xff]
        %v1311 = vld [vmem:[#allocation2 + $0x1ff0] sm:$0xff]
        %v1312 = vld [vmem:[#allocation2 + $0x1ff8] sm:$0xff]
        %v1313 = vld [vmem:[#allocation2 + $0x2000] sm:$0xff]
        %v1314 = vld [vmem:[#allocation2 + $0x2008] sm:$0xff]
        %v1315 = vld [vmem:[#allocation2 + $0x2010] sm:$0xff]
        %v1316 = vld [vmem:[#allocation2 + $0x2018] sm:$0xff]
        %v1317 = vld [vmem:[#allocation2 + $0x2020] sm:$0xff]
        %v1318 = vld [vmem:[#allocation2 + $0x2028] sm:$0xff]
        %v1319 = vld [vmem:[#allocation2 + $0x2030] sm:$0xff]
        %v1320 = vld [vmem:[#allocation2 + $0x2038] sm:$0xff]
        %v1321 = vld [vmem:[#allocation2 + $0x2040] sm:$0xff]
        %v1322 = vld [vmem:[#allocation2 + $0x2048] sm:$0xff]
        %v1323 = vld [vmem:[#allocation2 + $0x2050] sm:$0xff]
        %v1324 = vld [vmem:[#allocation2 + $0x2058] sm:$0xff]
        %v1325 = vld [vmem:[#allocation2 + $0x2060] sm:$0xff]
        %v1326 = vld [vmem:[#allocation2 + $0x2068] sm:$0xff]
        %v1327 = vld [vmem:[#allocation2 + $0x2070] sm:$0xff]
        %v1328 = vld [vmem:[#allocation2 + $0x2078] sm:$0xff]
        %v1329 = vld [vmem:[#allocation2 + $0x2080] sm:$0xff]
        %v1330 = vld [vmem:[#allocation2 + $0x2088] sm:$0xff]
        %v1331 = vld [vmem:[#allocation2 + $0x2090] sm:$0xff]
        %v1332 = vld [vmem:[#allocation2 + $0x2098] sm:$0xff]
        %v1333 = vld [vmem:[#allocation2 + $0x20a0] sm:$0xff]
        %v1334 = vld [vmem:[#allocation2 + $0x20a8] sm:$0xff]
        %v1335 = vld [vmem:[#allocation2 + $0x20b0] sm:$0xff]
        %v1336 = vld [vmem:[#allocation2 + $0x20b8] sm:$0xff]
        %v1337 = vld [vmem:[#allocation2 + $0x20c0] sm:$0xff]
        %v1338 = vld [vmem:[#allocation2 + $0x20c8] sm:$0xff]
        %v1339 = vld [vmem:[#allocation2 + $0x20d0] sm:$0xff]
        %v1340 = vld [vmem:[#allocation2 + $0x20d8] sm:$0xff]
        %v1341 = vld [vmem:[#allocation2 + $0x20e0] sm:$0xff]
        %v1342 = vld [vmem:[#allocation2 + $0x20e8] sm:$0xff]
        %v1343 = vld [vmem:[#allocation2 + $0x20f0] sm:$0xff]
        %v1344 = vld [vmem:[#allocation2 + $0x20f8] sm:$0xff]
        %v1477 = vunpack.c.l.b16 %v157
        %v1478 = vunpack.c.h.b16 %v157
        %v1479 = vunpack.c.l.b16 %v158
        %v1480 = vunpack.c.h.b16 %v158
        %v1481 = vunpack.c.l.b16 %v159
        %v1482 = vunpack.c.h.b16 %v159
        %v1483 = vunpack.c.l.b16 %v160
        %v1484 = vunpack.c.h.b16 %v160
        %v1485 = vunpack.c.l.b16 %v161
        %v1486 = vunpack.c.h.b16 %v161
        %v1487 = vunpack.c.l.b16 %v162
        %v1488 = vunpack.c.h.b16 %v162
        %v1489 = vunpack.c.l.b16 %v163
        %v1490 = vunpack.c.h.b16 %v163
        %v1491 = vunpack.c.l.b16 %v164
        %v1492 = vunpack.c.h.b16 %v164
        %v1493 = vunpack.c.l.b16 %v165
        %v1494 = vunpack.c.h.b16 %v165
        %v1495 = vunpack.c.l.b16 %v166
        %v1496 = vunpack.c.h.b16 %v166
        %v1497 = vunpack.c.l.b16 %v167
        %v1498 = vunpack.c.h.b16 %v167
        %v1499 = vunpack.c.l.b16 %v168
        %v1500 = vunpack.c.h.b16 %v168
        %v1501 = vunpack.c.l.b16 %v169
        %v1502 = vunpack.c.h.b16 %v169
        %v1503 = vunpack.c.l.b16 %v170
        %v1504 = vunpack.c.h.b16 %v170
        %v1505 = vunpack.c.l.b16 %v171
        %v1506 = vunpack.c.h.b16 %v171
        %v1507 = vunpack.c.l.b16 %v172
        %v1508 = vunpack.c.h.b16 %v172
        %v1509 = vunpack.c.l.b16 %v173
        %v1510 = vunpack.c.h.b16 %v173
        %v1511 = vunpack.c.l.b16 %v174
        %v1512 = vunpack.c.h.b16 %v174
        %v1513 = vunpack.c.l.b16 %v175
        %v1514 = vunpack.c.h.b16 %v175
        %v1515 = vunpack.c.l.b16 %v176
        %v1516 = vunpack.c.h.b16 %v176
        %v1517 = vunpack.c.l.b16 %v177
        %v1518 = vunpack.c.h.b16 %v177
        %v1519 = vunpack.c.l.b16 %v178
        %v1520 = vunpack.c.h.b16 %v178
        %v1521 = vunpack.c.l.b16 %v179
        %v1522 = vunpack.c.h.b16 %v179
        %v1523 = vunpack.c.l.b16 %v180
        %v1524 = vunpack.c.h.b16 %v180
        %v1525 = vunpack.c.l.b16 %v181
        %v1526 = vunpack.c.h.b16 %v181
        %v1527 = vunpack.c.l.b16 %v182
        %v1528 = vunpack.c.h.b16 %v182
        %v1529 = vunpack.c.l.b16 %v183
        %v1530 = vunpack.c.h.b16 %v183
        %v1531 = vunpack.c.l.b16 %v184
        %v1532 = vunpack.c.h.b16 %v184
        %v1533 = vunpack.c.l.b16 %v185
        %v1534 = vunpack.c.h.b16 %v185
        %v1535 = vunpack.c.l.b16 %v186
        %v1536 = vunpack.c.h.b16 %v186
        %v1537 = vunpack.c.l.b16 %v187
        %v1538 = vunpack.c.h.b16 %v187
        %v1539 = vunpack.c.l.b16 %v188
        %v1540 = vunpack.c.h.b16 %v188
        %v1541 = vunpack.c.l.b16 %v189
        %v1542 = vunpack.c.h.b16 %v189
        %v1543 = vunpack.c.l.b16 %v190
        %v1544 = vunpack.c.h.b16 %v190
        %v1545 = vunpack.c.l.b16 %v191
        %v1546 = vunpack.c.h.b16 %v191
        %v1547 = vunpack.c.l.b16 %v192
        %v1548 = vunpack.c.h.b16 %v192
        %v1549 = vunpack.c.l.b16 %v193
        %v1550 = vunpack.c.h.b16 %v193
        %v1551 = vunpack.c.l.b16 %v194
        %v1552 = vunpack.c.h.b16 %v194
        %v1553 = vunpack.c.l.b16 %v195
        %v1554 = vunpack.c.h.b16 %v195
        %v1555 = vunpack.c.l.b16 %v196
        %v1556 = vunpack.c.h.b16 %v196
        %v1557 = vunpack.c.l.b16 %v197
        %v1558 = vunpack.c.h.b16 %v197
        %v1559 = vunpack.c.l.b16 %v198
        %v1560 = vunpack.c.h.b16 %v198
        %v1561 = vunpack.c.l.b16 %v199
        %v1562 = vunpack.c.h.b16 %v199
        %v1563 = vunpack.c.l.b16 %v200
        %v1564 = vunpack.c.h.b16 %v200
        %v1565 = vunpack.c.l.b16 %v201
        %v1566 = vunpack.c.h.b16 %v201
        %v1567 = vunpack.c.l.b16 %v202
        %v1568 = vunpack.c.h.b16 %v202
        %v1569 = vunpack.c.l.b16 %v203
        %v1570 = vunpack.c.h.b16 %v203
        %v1571 = vunpack.c.l.b16 %v204
        %v1572 = vunpack.c.h.b16 %v204
        %v1573 = vunpack.c.l.b16 %v205
        %v1574 = vunpack.c.h.b16 %v205
        %v1575 = vunpack.c.l.b16 %v206
        %v1576 = vunpack.c.h.b16 %v206
        %v1577 = vunpack.c.l.b16 %v207
        %v1578 = vunpack.c.h.b16 %v207
        %v1579 = vunpack.c.l.b16 %v208
        %v1580 = vunpack.c.h.b16 %v208
        %v1581 = vunpack.c.l.b16 %v209
        %v1582 = vunpack.c.h.b16 %v209
        %v1583 = vunpack.c.l.b16 %v210
        %v1584 = vunpack.c.h.b16 %v210
        %v1585 = vunpack.c.l.b16 %v211
        %v1586 = vunpack.c.h.b16 %v211
        %v1587 = vunpack.c.l.b16 %v212
        %v1588 = vunpack.c.h.b16 %v212
        %v1589 = vunpack.c.l.b16 %v213
        %v1590 = vunpack.c.h.b16 %v213
        %v1591 = vunpack.c.l.b16 %v214
        %v1592 = vunpack.c.h.b16 %v214
        %v1593 = vunpack.c.l.b16 %v215
        %v1594 = vunpack.c.h.b16 %v215
        %v1595 = vunpack.c.l.b16 %v216
        %v1596 = vunpack.c.h.b16 %v216
        %v1597 = vunpack.c.l.b16 %v217
        %v1598 = vunpack.c.h.b16 %v217
        %v1599 = vunpack.c.l.b16 %v218
        %v1600 = vunpack.c.h.b16 %v218
        %v1601 = vunpack.c.l.b16 %v219
        %v1602 = vunpack.c.h.b16 %v219
        %v1603 = vunpack.c.l.b16 %v220
        %v1604 = vunpack.c.h.b16 %v220
        %v1605 = vunpack.c.l.b16 %v221
        %v1606 = vunpack.c.h.b16 %v221
        %v1607 = vunpack.c.l.b16 %v222
        %v1608 = vunpack.c.h.b16 %v222
        %v1609 = vunpack.c.l.b16 %v223
        %v1610 = vunpack.c.h.b16 %v223
        %v1611 = vunpack.c.l.b16 %v224
        %v1612 = vunpack.c.h.b16 %v224
        %v1613 = vunpack.c.l.b16 %v225
        %v1614 = vunpack.c.h.b16 %v225
        %v1615 = vunpack.c.l.b16 %v226
        %v1616 = vunpack.c.h.b16 %v226
        %v1617 = vunpack.c.l.b16 %v227
        %v1618 = vunpack.c.h.b16 %v227
        %v1619 = vunpack.c.l.b16 %v228
        %v1620 = vunpack.c.h.b16 %v228
        %v1621 = vunpack.c.l.b16 %v229
        %v1622 = vunpack.c.h.b16 %v229
        %v1623 = vunpack.c.l.b16 %v230
        %v1624 = vunpack.c.h.b16 %v230
        %v1625 = vunpack.c.l.b16 %v231
        %v1626 = vunpack.c.h.b16 %v231
        %v1627 = vunpack.c.l.b16 %v232
        %v1628 = vunpack.c.h.b16 %v232
        %v1629 = vunpack.c.l.b16 %v233
        %v1630 = vunpack.c.h.b16 %v233
        %v1631 = vunpack.c.l.b16 %v234
        %v1632 = vunpack.c.h.b16 %v234
        %v1633 = vunpack.c.l.b16 %v235
        %v1634 = vunpack.c.h.b16 %v235
        %v1635 = vunpack.c.l.b16 %v236
        %v1636 = vunpack.c.h.b16 %v236
        %v1637 = vunpack.c.l.b16 %v237
        %v1638 = vunpack.c.h.b16 %v237
        %v1639 = vunpack.c.l.b16 %v238
        %v1640 = vunpack.c.h.b16 %v238
        %v1641 = vunpack.c.l.b16 %v239
        %v1642 = vunpack.c.h.b16 %v239
        %v1643 = vunpack.c.l.b16 %v240
        %v1644 = vunpack.c.h.b16 %v240
        %v1645 = vunpack.c.l.b16 %v241
        %v1646 = vunpack.c.h.b16 %v241
        %v1647 = vunpack.c.l.b16 %v242
        %v1648 = vunpack.c.h.b16 %v242
        %v1649 = vunpack.c.l.b16 %v243
        %v1650 = vunpack.c.h.b16 %v243
        %v1651 = vunpack.c.l.b16 %v244
        %v1652 = vunpack.c.h.b16 %v244
        %v1653 = vunpack.c.l.b16 %v245
        %v1654 = vunpack.c.h.b16 %v245
        %v1655 = vunpack.c.l.b16 %v246
        %v1656 = vunpack.c.h.b16 %v246
        %v1657 = vunpack.c.l.b16 %v247
        %v1658 = vunpack.c.h.b16 %v247
        %v1659 = vunpack.c.l.b16 %v248
        %v1660 = vunpack.c.h.b16 %v248
        %v1661 = vunpack.c.l.b16 %v249
        %v1662 = vunpack.c.h.b16 %v249
        %v1663 = vunpack.c.l.b16 %v250
        %v1664 = vunpack.c.h.b16 %v250
        %v1665 = vunpack.c.l.b16 %v251
        %v1666 = vunpack.c.h.b16 %v251
        %v1667 = vunpack.c.l.b16 %v252
        %v1668 = vunpack.c.h.b16 %v252
        %v1669 = vunpack.c.l.b16 %v253
        %v1670 = vunpack.c.h.b16 %v253
        %v1671 = vunpack.c.l.b16 %v254
        %v1672 = vunpack.c.h.b16 %v254
        %v1673 = vunpack.c.l.b16 %v255
        %v1674 = vunpack.c.h.b16 %v255
        %v1675 = vunpack.c.l.b16 %v256
        %v1676 = vunpack.c.h.b16 %v256
        %v1677 = vunpack.c.l.b16 %v257
        %v1678 = vunpack.c.h.b16 %v257
        %v1679 = vunpack.c.l.b16 %v258
        %v1680 = vunpack.c.h.b16 %v258
        %v1681 = vunpack.c.l.b16 %v259
        %v1682 = vunpack.c.h.b16 %v259
        %v1683 = vunpack.c.l.b16 %v260
        %v1684 = vunpack.c.h.b16 %v260
        %v1685 = vunpack.c.l.b16 %v261
        %v1686 = vunpack.c.h.b16 %v261
        %v1687 = vunpack.c.l.b16 %v262
        %v1688 = vunpack.c.h.b16 %v262
        %v1689 = vunpack.c.l.b16 %v263
        %v1690 = vunpack.c.h.b16 %v263
        %v1691 = vunpack.c.l.b16 %v264
        %v1692 = vunpack.c.h.b16 %v264
        %v1693 = vunpack.c.l.b16 %v265
        %v1694 = vunpack.c.h.b16 %v265
        %v1695 = vunpack.c.l.b16 %v266
        %v1696 = vunpack.c.h.b16 %v266
        %v1697 = vunpack.c.l.b16 %v267
        %v1698 = vunpack.c.h.b16 %v267
        %v1699 = vunpack.c.l.b16 %v268
        %v1700 = vunpack.c.h.b16 %v268
        %v1701 = vunpack.c.l.b16 %v269
        %v1702 = vunpack.c.h.b16 %v269
        %v1703 = vunpack.c.l.b16 %v270
        %v1704 = vunpack.c.h.b16 %v270
        %v1705 = vunpack.c.l.b16 %v271
        %v1706 = vunpack.c.h.b16 %v271
        %v1707 = vunpack.c.l.b16 %v272
        %v1708 = vunpack.c.h.b16 %v272
        %v1709 = vunpack.c.l.b16 %v273
        %v1710 = vunpack.c.h.b16 %v273
        %v1711 = vunpack.c.l.b16 %v274
        %v1712 = vunpack.c.h.b16 %v274
        %v1713 = vunpack.c.l.b16 %v275
        %v1714 = vunpack.c.h.b16 %v275
        %v1715 = vunpack.c.l.b16 %v276
        %v1716 = vunpack.c.h.b16 %v276
        %v1717 = vunpack.c.l.b16 %v277
        %v1718 = vunpack.c.h.b16 %v277
        %v1719 = vunpack.c.l.b16 %v278
        %v1720 = vunpack.c.h.b16 %v278
        %v1721 = vunpack.c.l.b16 %v279
        %v1722 = vunpack.c.h.b16 %v279
        %v1723 = vunpack.c.l.b16 %v280
        %v1724 = vunpack.c.h.b16 %v280
        %v1725 = vunpack.c.l.b16 %v281
        %v1726 = vunpack.c.h.b16 %v281
        %v1727 = vunpack.c.l.b16 %v282
        %v1728 = vunpack.c.h.b16 %v282
        %v1729 = vunpack.c.l.b16 %v283
        %v1730 = vunpack.c.h.b16 %v283
        %v1731 = vunpack.c.l.b16 %v284
        %v1732 = vunpack.c.h.b16 %v284
        %v1733 = vunpack.c.l.b16 %v285
        %v1734 = vunpack.c.h.b16 %v285
        %v1735 = vunpack.c.l.b16 %v286
        %v1736 = vunpack.c.h.b16 %v286
        %v1737 = vunpack.c.l.b16 %v287
        %v1738 = vunpack.c.h.b16 %v287
        %v1739 = vunpack.c.l.b16 %v288
        %v1740 = vunpack.c.h.b16 %v288
        %v1741 = vpack.c.b16 %v1543, %v1477
        %v1742 = vpack.c.b16 %v1544, %v1478
        %v1743 = vpack.c.b16 %v1545, %v1479
        %v1744 = vpack.c.b16 %v1546, %v1480
        %v1745 = vpack.c.b16 %v1547, %v1481
        %v1746 = vpack.c.b16 %v1548, %v1482
        %v1747 = vpack.c.b16 %v1549, %v1483
        %v1748 = vpack.c.b16 %v1550, %v1484
        %v1749 = vpack.c.b16 %v1551, %v1485
        %v1750 = vpack.c.b16 %v1552, %v1486
        %v1751 = vpack.c.b16 %v1553, %v1487
        %v1752 = vpack.c.b16 %v1554, %v1488
        %v1753 = vpack.c.b16 %v1555, %v1489
        %v1754 = vpack.c.b16 %v1556, %v1490
        %v1755 = vpack.c.b16 %v1557, %v1491
        %v1756 = vpack.c.b16 %v1558, %v1492
        %v1757 = vpack.c.b16 %v1559, %v1493
        %v1758 = vpack.c.b16 %v1560, %v1494
        %v1759 = vpack.c.b16 %v1561, %v1495
        %v1760 = vpack.c.b16 %v1562, %v1496
        %v1761 = vpack.c.b16 %v1563, %v1497
        %v1762 = vpack.c.b16 %v1564, %v1498
        %v1763 = vpack.c.b16 %v1565, %v1499
        %v1764 = vpack.c.b16 %v1566, %v1500
        %v1765 = vpack.c.b16 %v1567, %v1501
        %v1766 = vpack.c.b16 %v1568, %v1502
        %v1767 = vpack.c.b16 %v1569, %v1503
        %v1768 = vpack.c.b16 %v1570, %v1504
        %v1769 = vpack.c.b16 %v1571, %v1505
        %v1770 = vpack.c.b16 %v1572, %v1506
        %v1771 = vpack.c.b16 %v1573, %v1507
        %v1772 = vpack.c.b16 %v1574, %v1508
        %v1773 = vpack.c.b16 %v1575, %v1509
        %v1774 = vpack.c.b16 %v1576, %v1510
        %v1775 = vpack.c.b16 %v1577, %v1511
        %v1776 = vpack.c.b16 %v1578, %v1512
        %v1777 = vpack.c.b16 %v1579, %v1513
        %v1778 = vpack.c.b16 %v1580, %v1514
        %v1779 = vpack.c.b16 %v1581, %v1515
        %v1780 = vpack.c.b16 %v1582, %v1516
        %v1781 = vpack.c.b16 %v1583, %v1517
        %v1782 = vpack.c.b16 %v1584, %v1518
        %v1783 = vpack.c.b16 %v1585, %v1519
        %v1784 = vpack.c.b16 %v1586, %v1520
        %v1785 = vpack.c.b16 %v1587, %v1521
        %v1786 = vpack.c.b16 %v1588, %v1522
        %v1787 = vpack.c.b16 %v1589, %v1523
        %v1788 = vpack.c.b16 %v1590, %v1524
        %v1789 = vpack.c.b16 %v1591, %v1525
        %v1790 = vpack.c.b16 %v1592, %v1526
        %v1791 = vpack.c.b16 %v1593, %v1527
        %v1792 = vpack.c.b16 %v1594, %v1528
        %v1793 = vpack.c.b16 %v1595, %v1529
        %v1794 = vpack.c.b16 %v1596, %v1530
        %v1795 = vpack.c.b16 %v1597, %v1531
        %v1796 = vpack.c.b16 %v1598, %v1532
        %v1797 = vpack.c.b16 %v1599, %v1533
        %v1798 = vpack.c.b16 %v1600, %v1534
        %v1799 = vpack.c.b16 %v1601, %v1535
        %v1800 = vpack.c.b16 %v1602, %v1536
        %v1801 = vpack.c.b16 %v1603, %v1537
        %v1802 = vpack.c.b16 %v1604, %v1538
        %v1803 = vpack.c.b16 %v1605, %v1539
        %v1804 = vpack.c.b16 %v1606, %v1540
        %v1805 = vpack.c.b16 %v1607, %v1541
        %v1806 = vpack.c.b16 %v1608, %v1542
        %v1807 = vpack.c.b16 %v1675, %v1609
        %v1808 = vpack.c.b16 %v1676, %v1610
        %v1809 = vpack.c.b16 %v1677, %v1611
        %v1810 = vpack.c.b16 %v1678, %v1612
        %v1811 = vpack.c.b16 %v1679, %v1613
        %v1812 = vpack.c.b16 %v1680, %v1614
        %v1813 = vpack.c.b16 %v1681, %v1615
        %v1814 = vpack.c.b16 %v1682, %v1616
        %v1815 = vpack.c.b16 %v1683, %v1617
        %v1816 = vpack.c.b16 %v1684, %v1618
        %v1817 = vpack.c.b16 %v1685, %v1619
        %v1818 = vpack.c.b16 %v1686, %v1620
        %v1819 = vpack.c.b16 %v1687, %v1621
        %v1820 = vpack.c.b16 %v1688, %v1622
        %v1821 = vpack.c.b16 %v1689, %v1623
        %v1822 = vpack.c.b16 %v1690, %v1624
        %v1823 = vpack.c.b16 %v1691, %v1625
        %v1824 = vpack.c.b16 %v1692, %v1626
        %v1825 = vpack.c.b16 %v1693, %v1627
        %v1826 = vpack.c.b16 %v1694, %v1628
        %v1827 = vpack.c.b16 %v1695, %v1629
        %v1828 = vpack.c.b16 %v1696, %v1630
        %v1829 = vpack.c.b16 %v1697, %v1631
        %v1830 = vpack.c.b16 %v1698, %v1632
        %v1831 = vpack.c.b16 %v1699, %v1633
        %v1832 = vpack.c.b16 %v1700, %v1634
        %v1833 = vpack.c.b16 %v1701, %v1635
        %v1834 = vpack.c.b16 %v1702, %v1636
        %v1835 = vpack.c.b16 %v1703, %v1637
        %v1836 = vpack.c.b16 %v1704, %v1638
        %v1837 = vpack.c.b16 %v1705, %v1639
        %v1838 = vpack.c.b16 %v1706, %v1640
        %v1839 = vpack.c.b16 %v1707, %v1641
        %v1840 = vpack.c.b16 %v1708, %v1642
        %v1841 = vpack.c.b16 %v1709, %v1643
        %v1842 = vpack.c.b16 %v1710, %v1644
        %v1843 = vpack.c.b16 %v1711, %v1645
        %v1844 = vpack.c.b16 %v1712, %v1646
        %v1845 = vpack.c.b16 %v1713, %v1647
        %v1846 = vpack.c.b16 %v1714, %v1648
        %v1847 = vpack.c.b16 %v1715, %v1649
        %v1848 = vpack.c.b16 %v1716, %v1650
        %v1849 = vpack.c.b16 %v1717, %v1651
        %v1850 = vpack.c.b16 %v1718, %v1652
        %v1851 = vpack.c.b16 %v1719, %v1653
        %v1852 = vpack.c.b16 %v1720, %v1654
        %v1853 = vpack.c.b16 %v1721, %v1655
        %v1854 = vpack.c.b16 %v1722, %v1656
        %v1855 = vpack.c.b16 %v1723, %v1657
        %v1856 = vpack.c.b16 %v1724, %v1658
        %v1857 = vpack.c.b16 %v1725, %v1659
        %v1858 = vpack.c.b16 %v1726, %v1660
        %v1859 = vpack.c.b16 %v1727, %v1661
        %v1860 = vpack.c.b16 %v1728, %v1662
        %v1861 = vpack.c.b16 %v1729, %v1663
        %v1862 = vpack.c.b16 %v1730, %v1664
        %v1863 = vpack.c.b16 %v1731, %v1665
        %v1864 = vpack.c.b16 %v1732, %v1666
        %v1865 = vpack.c.b16 %v1733, %v1667
        %v1866 = vpack.c.b16 %v1734, %v1668
        %v1867 = vpack.c.b16 %v1735, %v1669
        %v1868 = vpack.c.b16 %v1736, %v1670
        %v1869 = vpack.c.b16 %v1737, %v1671
        %v1870 = vpack.c.b16 %v1738, %v1672
        %v1871 = vpack.c.b16 %v1739, %v1673
        %v1872 = vpack.c.b16 %v1740, %v1674
        %v3061 = vunpack.c.l.b16 %v289
        %v3062 = vunpack.c.h.b16 %v289
        %v3063 = vunpack.c.l.b16 %v290
        %v3064 = vunpack.c.h.b16 %v290
        %v3065 = vunpack.c.l.b16 %v291
        %v3066 = vunpack.c.h.b16 %v291
        %v3067 = vunpack.c.l.b16 %v292
        %v3068 = vunpack.c.h.b16 %v292
        %v3069 = vunpack.c.l.b16 %v293
        %v3070 = vunpack.c.h.b16 %v293
        %v3071 = vunpack.c.l.b16 %v294
        %v3072 = vunpack.c.h.b16 %v294
        %v3073 = vunpack.c.l.b16 %v295
        %v3074 = vunpack.c.h.b16 %v295
        %v3075 = vunpack.c.l.b16 %v296
        %v3076 = vunpack.c.h.b16 %v296
        %v3077 = vunpack.c.l.b16 %v297
        %v3078 = vunpack.c.h.b16 %v297
        %v3079 = vunpack.c.l.b16 %v298
        %v3080 = vunpack.c.h.b16 %v298
        %v3081 = vunpack.c.l.b16 %v299
        %v3082 = vunpack.c.h.b16 %v299
        %v3083 = vunpack.c.l.b16 %v300
        %v3084 = vunpack.c.h.b16 %v300
        %v3085 = vunpack.c.l.b16 %v301
        %v3086 = vunpack.c.h.b16 %v301
        %v3087 = vunpack.c.l.b16 %v302
        %v3088 = vunpack.c.h.b16 %v302
        %v3089 = vunpack.c.l.b16 %v303
        %v3090 = vunpack.c.h.b16 %v303
        %v3091 = vunpack.c.l.b16 %v304
        %v3092 = vunpack.c.h.b16 %v304
        %v3093 = vunpack.c.l.b16 %v305
        %v3094 = vunpack.c.h.b16 %v305
        %v3095 = vunpack.c.l.b16 %v306
        %v3096 = vunpack.c.h.b16 %v306
        %v3097 = vunpack.c.l.b16 %v307
        %v3098 = vunpack.c.h.b16 %v307
        %v3099 = vunpack.c.l.b16 %v308
        %v3100 = vunpack.c.h.b16 %v308
        %v3101 = vunpack.c.l.b16 %v309
        %v3102 = vunpack.c.h.b16 %v309
        %v3103 = vunpack.c.l.b16 %v310
        %v3104 = vunpack.c.h.b16 %v310
        %v3105 = vunpack.c.l.b16 %v311
        %v3106 = vunpack.c.h.b16 %v311
        %v3107 = vunpack.c.l.b16 %v312
        %v3108 = vunpack.c.h.b16 %v312
        %v3109 = vunpack.c.l.b16 %v313
        %v3110 = vunpack.c.h.b16 %v313
        %v3111 = vunpack.c.l.b16 %v314
        %v3112 = vunpack.c.h.b16 %v314
        %v3113 = vunpack.c.l.b16 %v315
        %v3114 = vunpack.c.h.b16 %v315
        %v3115 = vunpack.c.l.b16 %v316
        %v3116 = vunpack.c.h.b16 %v316
        %v3117 = vunpack.c.l.b16 %v317
        %v3118 = vunpack.c.h.b16 %v317
        %v3119 = vunpack.c.l.b16 %v318
        %v3120 = vunpack.c.h.b16 %v318
        %v3121 = vunpack.c.l.b16 %v319
        %v3122 = vunpack.c.h.b16 %v319
        %v3123 = vunpack.c.l.b16 %v320
        %v3124 = vunpack.c.h.b16 %v320
        %v3125 = vunpack.c.l.b16 %v321
        %v3126 = vunpack.c.h.b16 %v321
        %v3127 = vunpack.c.l.b16 %v322
        %v3128 = vunpack.c.h.b16 %v322
        %v3129 = vunpack.c.l.b16 %v323
        %v3130 = vunpack.c.h.b16 %v323
        %v3131 = vunpack.c.l.b16 %v324
        %v3132 = vunpack.c.h.b16 %v324
        %v3133 = vunpack.c.l.b16 %v325
        %v3134 = vunpack.c.h.b16 %v325
        %v3135 = vunpack.c.l.b16 %v326
        %v3136 = vunpack.c.h.b16 %v326
        %v3137 = vunpack.c.l.b16 %v327
        %v3138 = vunpack.c.h.b16 %v327
        %v3139 = vunpack.c.l.b16 %v328
        %v3140 = vunpack.c.h.b16 %v328
        %v3141 = vunpack.c.l.b16 %v329
        %v3142 = vunpack.c.h.b16 %v329
        %v3143 = vunpack.c.l.b16 %v330
        %v3144 = vunpack.c.h.b16 %v330
        %v3145 = vunpack.c.l.b16 %v331
        %v3146 = vunpack.c.h.b16 %v331
        %v3147 = vunpack.c.l.b16 %v332
        %v3148 = vunpack.c.h.b16 %v332
        %v3149 = vunpack.c.l.b16 %v333
        %v3150 = vunpack.c.h.b16 %v333
        %v3151 = vunpack.c.l.b16 %v334
        %v3152 = vunpack.c.h.b16 %v334
        %v3153 = vunpack.c.l.b16 %v335
        %v3154 = vunpack.c.h.b16 %v335
        %v3155 = vunpack.c.l.b16 %v336
        %v3156 = vunpack.c.h.b16 %v336
        %v3157 = vunpack.c.l.b16 %v337
        %v3158 = vunpack.c.h.b16 %v337
        %v3159 = vunpack.c.l.b16 %v338
        %v3160 = vunpack.c.h.b16 %v338
        %v3161 = vunpack.c.l.b16 %v339
        %v3162 = vunpack.c.h.b16 %v339
        %v3163 = vunpack.c.l.b16 %v340
        %v3164 = vunpack.c.h.b16 %v340
        %v3165 = vunpack.c.l.b16 %v341
        %v3166 = vunpack.c.h.b16 %v341
        %v3167 = vunpack.c.l.b16 %v342
        %v3168 = vunpack.c.h.b16 %v342
        %v3169 = vunpack.c.l.b16 %v343
        %v3170 = vunpack.c.h.b16 %v343
        %v3171 = vunpack.c.l.b16 %v344
        %v3172 = vunpack.c.h.b16 %v344
        %v3173 = vunpack.c.l.b16 %v345
        %v3174 = vunpack.c.h.b16 %v345
        %v3175 = vunpack.c.l.b16 %v346
        %v3176 = vunpack.c.h.b16 %v346
        %v3177 = vunpack.c.l.b16 %v347
        %v3178 = vunpack.c.h.b16 %v347
        %v3179 = vunpack.c.l.b16 %v348
        %v3180 = vunpack.c.h.b16 %v348
        %v3181 = vunpack.c.l.b16 %v349
        %v3182 = vunpack.c.h.b16 %v349
        %v3183 = vunpack.c.l.b16 %v350
        %v3184 = vunpack.c.h.b16 %v350
        %v3185 = vunpack.c.l.b16 %v351
        %v3186 = vunpack.c.h.b16 %v351
        %v3187 = vunpack.c.l.b16 %v352
        %v3188 = vunpack.c.h.b16 %v352
        %v3189 = vunpack.c.l.b16 %v353
        %v3190 = vunpack.c.h.b16 %v353
        %v3191 = vunpack.c.l.b16 %v354
        %v3192 = vunpack.c.h.b16 %v354
        %v3193 = vunpack.c.l.b16 %v355
        %v3194 = vunpack.c.h.b16 %v355
        %v3195 = vunpack.c.l.b16 %v356
        %v3196 = vunpack.c.h.b16 %v356
        %v3197 = vunpack.c.l.b16 %v357
        %v3198 = vunpack.c.h.b16 %v357
        %v3199 = vunpack.c.l.b16 %v358
        %v3200 = vunpack.c.h.b16 %v358
        %v3201 = vunpack.c.l.b16 %v359
        %v3202 = vunpack.c.h.b16 %v359
        %v3203 = vunpack.c.l.b16 %v360
        %v3204 = vunpack.c.h.b16 %v360
        %v3205 = vunpack.c.l.b16 %v361
        %v3206 = vunpack.c.h.b16 %v361
        %v3207 = vunpack.c.l.b16 %v362
        %v3208 = vunpack.c.h.b16 %v362
        %v3209 = vunpack.c.l.b16 %v363
        %v3210 = vunpack.c.h.b16 %v363
        %v3211 = vunpack.c.l.b16 %v364
        %v3212 = vunpack.c.h.b16 %v364
        %v3213 = vunpack.c.l.b16 %v365
        %v3214 = vunpack.c.h.b16 %v365
        %v3215 = vunpack.c.l.b16 %v366
        %v3216 = vunpack.c.h.b16 %v366
        %v3217 = vunpack.c.l.b16 %v367
        %v3218 = vunpack.c.h.b16 %v367
        %v3219 = vunpack.c.l.b16 %v368
        %v3220 = vunpack.c.h.b16 %v368
        %v3221 = vunpack.c.l.b16 %v369
        %v3222 = vunpack.c.h.b16 %v369
        %v3223 = vunpack.c.l.b16 %v370
        %v3224 = vunpack.c.h.b16 %v370
        %v3225 = vunpack.c.l.b16 %v371
        %v3226 = vunpack.c.h.b16 %v371
        %v3227 = vunpack.c.l.b16 %v372
        %v3228 = vunpack.c.h.b16 %v372
        %v3229 = vunpack.c.l.b16 %v373
        %v3230 = vunpack.c.h.b16 %v373
        %v3231 = vunpack.c.l.b16 %v374
        %v3232 = vunpack.c.h.b16 %v374
        %v3233 = vunpack.c.l.b16 %v375
        %v3234 = vunpack.c.h.b16 %v375
        %v3235 = vunpack.c.l.b16 %v376
        %v3236 = vunpack.c.h.b16 %v376
        %v3237 = vunpack.c.l.b16 %v377
        %v3238 = vunpack.c.h.b16 %v377
        %v3239 = vunpack.c.l.b16 %v378
        %v3240 = vunpack.c.h.b16 %v378
        %v3241 = vunpack.c.l.b16 %v379
        %v3242 = vunpack.c.h.b16 %v379
        %v3243 = vunpack.c.l.b16 %v380
        %v3244 = vunpack.c.h.b16 %v380
        %v3245 = vunpack.c.l.b16 %v381
        %v3246 = vunpack.c.h.b16 %v381
        %v3247 = vunpack.c.l.b16 %v382
        %v3248 = vunpack.c.h.b16 %v382
        %v3249 = vunpack.c.l.b16 %v383
        %v3250 = vunpack.c.h.b16 %v383
        %v3251 = vunpack.c.l.b16 %v384
        %v3252 = vunpack.c.h.b16 %v384
        %v3253 = vunpack.c.l.b16 %v385
        %v3254 = vunpack.c.h.b16 %v385
        %v3255 = vunpack.c.l.b16 %v386
        %v3256 = vunpack.c.h.b16 %v386
        %v3257 = vunpack.c.l.b16 %v387
        %v3258 = vunpack.c.h.b16 %v387
        %v3259 = vunpack.c.l.b16 %v388
        %v3260 = vunpack.c.h.b16 %v388
        %v3261 = vunpack.c.l.b16 %v389
        %v3262 = vunpack.c.h.b16 %v389
        %v3263 = vunpack.c.l.b16 %v390
        %v3264 = vunpack.c.h.b16 %v390
        %v3265 = vunpack.c.l.b16 %v391
        %v3266 = vunpack.c.h.b16 %v391
        %v3267 = vunpack.c.l.b16 %v392
        %v3268 = vunpack.c.h.b16 %v392
        %v3269 = vunpack.c.l.b16 %v393
        %v3270 = vunpack.c.h.b16 %v393
        %v3271 = vunpack.c.l.b16 %v394
        %v3272 = vunpack.c.h.b16 %v394
        %v3273 = vunpack.c.l.b16 %v395
        %v3274 = vunpack.c.h.b16 %v395
        %v3275 = vunpack.c.l.b16 %v396
        %v3276 = vunpack.c.h.b16 %v396
        %v3277 = vunpack.c.l.b16 %v397
        %v3278 = vunpack.c.h.b16 %v397
        %v3279 = vunpack.c.l.b16 %v398
        %v3280 = vunpack.c.h.b16 %v398
        %v3281 = vunpack.c.l.b16 %v399
        %v3282 = vunpack.c.h.b16 %v399
        %v3283 = vunpack.c.l.b16 %v400
        %v3284 = vunpack.c.h.b16 %v400
        %v3285 = vunpack.c.l.b16 %v401
        %v3286 = vunpack.c.h.b16 %v401
        %v3287 = vunpack.c.l.b16 %v402
        %v3288 = vunpack.c.h.b16 %v402
        %v3289 = vunpack.c.l.b16 %v403
        %v3290 = vunpack.c.h.b16 %v403
        %v3291 = vunpack.c.l.b16 %v404
        %v3292 = vunpack.c.h.b16 %v404
        %v3293 = vunpack.c.l.b16 %v405
        %v3294 = vunpack.c.h.b16 %v405
        %v3295 = vunpack.c.l.b16 %v406
        %v3296 = vunpack.c.h.b16 %v406
        %v3297 = vunpack.c.l.b16 %v407
        %v3298 = vunpack.c.h.b16 %v407
        %v3299 = vunpack.c.l.b16 %v408
        %v3300 = vunpack.c.h.b16 %v408
        %v3301 = vunpack.c.l.b16 %v409
        %v3302 = vunpack.c.h.b16 %v409
        %v3303 = vunpack.c.l.b16 %v410
        %v3304 = vunpack.c.h.b16 %v410
        %v3305 = vunpack.c.l.b16 %v411
        %v3306 = vunpack.c.h.b16 %v411
        %v3307 = vunpack.c.l.b16 %v412
        %v3308 = vunpack.c.h.b16 %v412
        %v3309 = vunpack.c.l.b16 %v413
        %v3310 = vunpack.c.h.b16 %v413
        %v3311 = vunpack.c.l.b16 %v414
        %v3312 = vunpack.c.h.b16 %v414
        %v3313 = vunpack.c.l.b16 %v415
        %v3314 = vunpack.c.h.b16 %v415
        %v3315 = vunpack.c.l.b16 %v416
        %v3316 = vunpack.c.h.b16 %v416
        %v3317 = vunpack.c.l.b16 %v417
        %v3318 = vunpack.c.h.b16 %v417
        %v3319 = vunpack.c.l.b16 %v418
        %v3320 = vunpack.c.h.b16 %v418
        %v3321 = vunpack.c.l.b16 %v419
        %v3322 = vunpack.c.h.b16 %v419
        %v3323 = vunpack.c.l.b16 %v420
        %v3324 = vunpack.c.h.b16 %v420
        %v3325 = vunpack.c.l.b16 %v421
        %v3326 = vunpack.c.h.b16 %v421
        %v3327 = vunpack.c.l.b16 %v422
        %v3328 = vunpack.c.h.b16 %v422
        %v3329 = vunpack.c.l.b16 %v423
        %v3330 = vunpack.c.h.b16 %v423
        %v3331 = vunpack.c.l.b16 %v424
        %v3332 = vunpack.c.h.b16 %v424
        %v3333 = vunpack.c.l.b16 %v425
        %v3334 = vunpack.c.h.b16 %v425
        %v3335 = vunpack.c.l.b16 %v426
        %v3336 = vunpack.c.h.b16 %v426
        %v3337 = vunpack.c.l.b16 %v427
        %v3338 = vunpack.c.h.b16 %v427
        %v3339 = vunpack.c.l.b16 %v428
        %v3340 = vunpack.c.h.b16 %v428
        %v3341 = vunpack.c.l.b16 %v429
        %v3342 = vunpack.c.h.b16 %v429
        %v3343 = vunpack.c.l.b16 %v430
        %v3344 = vunpack.c.h.b16 %v430
        %v3345 = vunpack.c.l.b16 %v431
        %v3346 = vunpack.c.h.b16 %v431
        %v3347 = vunpack.c.l.b16 %v432
        %v3348 = vunpack.c.h.b16 %v432
        %v3349 = vunpack.c.l.b16 %v433
        %v3350 = vunpack.c.h.b16 %v433
        %v3351 = vunpack.c.l.b16 %v434
        %v3352 = vunpack.c.h.b16 %v434
        %v3353 = vunpack.c.l.b16 %v435
        %v3354 = vunpack.c.h.b16 %v435
        %v3355 = vunpack.c.l.b16 %v436
        %v3356 = vunpack.c.h.b16 %v436
        %v3357 = vunpack.c.l.b16 %v437
        %v3358 = vunpack.c.h.b16 %v437
        %v3359 = vunpack.c.l.b16 %v438
        %v3360 = vunpack.c.h.b16 %v438
        %v3361 = vunpack.c.l.b16 %v439
        %v3362 = vunpack.c.h.b16 %v439
        %v3363 = vunpack.c.l.b16 %v440
        %v3364 = vunpack.c.h.b16 %v440
        %v3365 = vunpack.c.l.b16 %v441
        %v3366 = vunpack.c.h.b16 %v441
        %v3367 = vunpack.c.l.b16 %v442
        %v3368 = vunpack.c.h.b16 %v442
        %v3369 = vunpack.c.l.b16 %v443
        %v3370 = vunpack.c.h.b16 %v443
        %v3371 = vunpack.c.l.b16 %v444
        %v3372 = vunpack.c.h.b16 %v444
        %v3373 = vunpack.c.l.b16 %v445
        %v3374 = vunpack.c.h.b16 %v445
        %v3375 = vunpack.c.l.b16 %v446
        %v3376 = vunpack.c.h.b16 %v446
        %v3377 = vunpack.c.l.b16 %v447
        %v3378 = vunpack.c.h.b16 %v447
        %v3379 = vunpack.c.l.b16 %v448
        %v3380 = vunpack.c.h.b16 %v448
        %v3381 = vunpack.c.l.b16 %v449
        %v3382 = vunpack.c.h.b16 %v449
        %v3383 = vunpack.c.l.b16 %v450
        %v3384 = vunpack.c.h.b16 %v450
        %v3385 = vunpack.c.l.b16 %v451
        %v3386 = vunpack.c.h.b16 %v451
        %v3387 = vunpack.c.l.b16 %v452
        %v3388 = vunpack.c.h.b16 %v452
        %v3389 = vunpack.c.l.b16 %v453
        %v3390 = vunpack.c.h.b16 %v453
        %v3391 = vunpack.c.l.b16 %v454
        %v3392 = vunpack.c.h.b16 %v454
        %v3393 = vunpack.c.l.b16 %v455
        %v3394 = vunpack.c.h.b16 %v455
        %v3395 = vunpack.c.l.b16 %v456
        %v3396 = vunpack.c.h.b16 %v456
        %v3397 = vunpack.c.l.b16 %v457
        %v3398 = vunpack.c.h.b16 %v457
        %v3399 = vunpack.c.l.b16 %v458
        %v3400 = vunpack.c.h.b16 %v458
        %v3401 = vunpack.c.l.b16 %v459
        %v3402 = vunpack.c.h.b16 %v459
        %v3403 = vunpack.c.l.b16 %v460
        %v3404 = vunpack.c.h.b16 %v460
        %v3405 = vunpack.c.l.b16 %v461
        %v3406 = vunpack.c.h.b16 %v461
        %v3407 = vunpack.c.l.b16 %v462
        %v3408 = vunpack.c.h.b16 %v462
        %v3409 = vunpack.c.l.b16 %v463
        %v3410 = vunpack.c.h.b16 %v463
        %v3411 = vunpack.c.l.b16 %v464
        %v3412 = vunpack.c.h.b16 %v464
        %v3413 = vunpack.c.l.b16 %v465
        %v3414 = vunpack.c.h.b16 %v465
        %v3415 = vunpack.c.l.b16 %v466
        %v3416 = vunpack.c.h.b16 %v466
        %v3417 = vunpack.c.l.b16 %v467
        %v3418 = vunpack.c.h.b16 %v467
        %v3419 = vunpack.c.l.b16 %v468
        %v3420 = vunpack.c.h.b16 %v468
        %v3421 = vunpack.c.l.b16 %v469
        %v3422 = vunpack.c.h.b16 %v469
        %v3423 = vunpack.c.l.b16 %v470
        %v3424 = vunpack.c.h.b16 %v470
        %v3425 = vunpack.c.l.b16 %v471
        %v3426 = vunpack.c.h.b16 %v471
        %v3427 = vunpack.c.l.b16 %v472
        %v3428 = vunpack.c.h.b16 %v472
        %v3429 = vunpack.c.l.b16 %v473
        %v3430 = vunpack.c.h.b16 %v473
        %v3431 = vunpack.c.l.b16 %v474
        %v3432 = vunpack.c.h.b16 %v474
        %v3433 = vunpack.c.l.b16 %v475
        %v3434 = vunpack.c.h.b16 %v475
        %v3435 = vunpack.c.l.b16 %v476
        %v3436 = vunpack.c.h.b16 %v476
        %v3437 = vunpack.c.l.b16 %v477
        %v3438 = vunpack.c.h.b16 %v477
        %v3439 = vunpack.c.l.b16 %v478
        %v3440 = vunpack.c.h.b16 %v478
        %v3441 = vunpack.c.l.b16 %v479
        %v3442 = vunpack.c.h.b16 %v479
        %v3443 = vunpack.c.l.b16 %v480
        %v3444 = vunpack.c.h.b16 %v480
        %v3445 = vunpack.c.l.b16 %v481
        %v3446 = vunpack.c.h.b16 %v481
        %v3447 = vunpack.c.l.b16 %v482
        %v3448 = vunpack.c.h.b16 %v482
        %v3449 = vunpack.c.l.b16 %v483
        %v3450 = vunpack.c.h.b16 %v483
        %v3451 = vunpack.c.l.b16 %v484
        %v3452 = vunpack.c.h.b16 %v484
        %v3453 = vunpack.c.l.b16 %v485
        %v3454 = vunpack.c.h.b16 %v485
        %v3455 = vunpack.c.l.b16 %v486
        %v3456 = vunpack.c.h.b16 %v486
        %v3457 = vunpack.c.l.b16 %v487
        %v3458 = vunpack.c.h.b16 %v487
        %v3459 = vunpack.c.l.b16 %v488
        %v3460 = vunpack.c.h.b16 %v488
        %v3461 = vunpack.c.l.b16 %v489
        %v3462 = vunpack.c.h.b16 %v489
        %v3463 = vunpack.c.l.b16 %v490
        %v3464 = vunpack.c.h.b16 %v490
        %v3465 = vunpack.c.l.b16 %v491
        %v3466 = vunpack.c.h.b16 %v491
        %v3467 = vunpack.c.l.b16 %v492
        %v3468 = vunpack.c.h.b16 %v492
        %v3469 = vunpack.c.l.b16 %v493
        %v3470 = vunpack.c.h.b16 %v493
        %v3471 = vunpack.c.l.b16 %v494
        %v3472 = vunpack.c.h.b16 %v494
        %v3473 = vunpack.c.l.b16 %v495
        %v3474 = vunpack.c.h.b16 %v495
        %v3475 = vunpack.c.l.b16 %v496
        %v3476 = vunpack.c.h.b16 %v496
        %v3477 = vunpack.c.l.b16 %v497
        %v3478 = vunpack.c.h.b16 %v497
        %v3479 = vunpack.c.l.b16 %v498
        %v3480 = vunpack.c.h.b16 %v498
        %v3481 = vunpack.c.l.b16 %v499
        %v3482 = vunpack.c.h.b16 %v499
        %v3483 = vunpack.c.l.b16 %v500
        %v3484 = vunpack.c.h.b16 %v500
        %v3485 = vunpack.c.l.b16 %v501
        %v3486 = vunpack.c.h.b16 %v501
        %v3487 = vunpack.c.l.b16 %v502
        %v3488 = vunpack.c.h.b16 %v502
        %v3489 = vunpack.c.l.b16 %v503
        %v3490 = vunpack.c.h.b16 %v503
        %v3491 = vunpack.c.l.b16 %v504
        %v3492 = vunpack.c.h.b16 %v504
        %v3493 = vunpack.c.l.b16 %v505
        %v3494 = vunpack.c.h.b16 %v505
        %v3495 = vunpack.c.l.b16 %v506
        %v3496 = vunpack.c.h.b16 %v506
        %v3497 = vunpack.c.l.b16 %v507
        %v3498 = vunpack.c.h.b16 %v507
        %v3499 = vunpack.c.l.b16 %v508
        %v3500 = vunpack.c.h.b16 %v508
        %v3501 = vunpack.c.l.b16 %v509
        %v3502 = vunpack.c.h.b16 %v509
        %v3503 = vunpack.c.l.b16 %v510
        %v3504 = vunpack.c.h.b16 %v510
        %v3505 = vunpack.c.l.b16 %v511
        %v3506 = vunpack.c.h.b16 %v511
        %v3507 = vunpack.c.l.b16 %v512
        %v3508 = vunpack.c.h.b16 %v512
        %v3509 = vunpack.c.l.b16 %v513
        %v3510 = vunpack.c.h.b16 %v513
        %v3511 = vunpack.c.l.b16 %v514
        %v3512 = vunpack.c.h.b16 %v514
        %v3513 = vunpack.c.l.b16 %v515
        %v3514 = vunpack.c.h.b16 %v515
        %v3515 = vunpack.c.l.b16 %v516
        %v3516 = vunpack.c.h.b16 %v516
        %v3517 = vunpack.c.l.b16 %v517
        %v3518 = vunpack.c.h.b16 %v517
        %v3519 = vunpack.c.l.b16 %v518
        %v3520 = vunpack.c.h.b16 %v518
        %v3521 = vunpack.c.l.b16 %v519
        %v3522 = vunpack.c.h.b16 %v519
        %v3523 = vunpack.c.l.b16 %v520
        %v3524 = vunpack.c.h.b16 %v520
        %v3525 = vunpack.c.l.b16 %v521
        %v3526 = vunpack.c.h.b16 %v521
        %v3527 = vunpack.c.l.b16 %v522
        %v3528 = vunpack.c.h.b16 %v522
        %v3529 = vunpack.c.l.b16 %v523
        %v3530 = vunpack.c.h.b16 %v523
        %v3531 = vunpack.c.l.b16 %v524
        %v3532 = vunpack.c.h.b16 %v524
        %v3533 = vunpack.c.l.b16 %v525
        %v3534 = vunpack.c.h.b16 %v525
        %v3535 = vunpack.c.l.b16 %v526
        %v3536 = vunpack.c.h.b16 %v526
        %v3537 = vunpack.c.l.b16 %v527
        %v3538 = vunpack.c.h.b16 %v527
        %v3539 = vunpack.c.l.b16 %v528
        %v3540 = vunpack.c.h.b16 %v528
        %v3541 = vunpack.c.l.b16 %v529
        %v3542 = vunpack.c.h.b16 %v529
        %v3543 = vunpack.c.l.b16 %v530
        %v3544 = vunpack.c.h.b16 %v530
        %v3545 = vunpack.c.l.b16 %v531
        %v3546 = vunpack.c.h.b16 %v531
        %v3547 = vunpack.c.l.b16 %v532
        %v3548 = vunpack.c.h.b16 %v532
        %v3549 = vunpack.c.l.b16 %v533
        %v3550 = vunpack.c.h.b16 %v533
        %v3551 = vunpack.c.l.b16 %v534
        %v3552 = vunpack.c.h.b16 %v534
        %v3553 = vunpack.c.l.b16 %v535
        %v3554 = vunpack.c.h.b16 %v535
        %v3555 = vunpack.c.l.b16 %v536
        %v3556 = vunpack.c.h.b16 %v536
        %v3557 = vunpack.c.l.b16 %v537
        %v3558 = vunpack.c.h.b16 %v537
        %v3559 = vunpack.c.l.b16 %v538
        %v3560 = vunpack.c.h.b16 %v538
        %v3561 = vunpack.c.l.b16 %v539
        %v3562 = vunpack.c.h.b16 %v539
        %v3563 = vunpack.c.l.b16 %v540
        %v3564 = vunpack.c.h.b16 %v540
        %v3565 = vunpack.c.l.b16 %v541
        %v3566 = vunpack.c.h.b16 %v541
        %v3567 = vunpack.c.l.b16 %v542
        %v3568 = vunpack.c.h.b16 %v542
        %v3569 = vunpack.c.l.b16 %v543
        %v3570 = vunpack.c.h.b16 %v543
        %v3571 = vunpack.c.l.b16 %v544
        %v3572 = vunpack.c.h.b16 %v544
        %v3573 = vunpack.c.l.b16 %v545
        %v3574 = vunpack.c.h.b16 %v545
        %v3575 = vunpack.c.l.b16 %v546
        %v3576 = vunpack.c.h.b16 %v546
        %v3577 = vunpack.c.l.b16 %v547
        %v3578 = vunpack.c.h.b16 %v547
        %v3579 = vunpack.c.l.b16 %v548
        %v3580 = vunpack.c.h.b16 %v548
        %v3581 = vunpack.c.l.b16 %v549
        %v3582 = vunpack.c.h.b16 %v549
        %v3583 = vunpack.c.l.b16 %v550
        %v3584 = vunpack.c.h.b16 %v550
        %v3585 = vunpack.c.l.b16 %v551
        %v3586 = vunpack.c.h.b16 %v551
        %v3587 = vunpack.c.l.b16 %v552
        %v3588 = vunpack.c.h.b16 %v552
        %v3589 = vunpack.c.l.b16 %v553
        %v3590 = vunpack.c.h.b16 %v553
        %v3591 = vunpack.c.l.b16 %v554
        %v3592 = vunpack.c.h.b16 %v554
        %v3593 = vunpack.c.l.b16 %v555
        %v3594 = vunpack.c.h.b16 %v555
        %v3595 = vunpack.c.l.b16 %v556
        %v3596 = vunpack.c.h.b16 %v556
        %v3597 = vunpack.c.l.b16 %v557
        %v3598 = vunpack.c.h.b16 %v557
        %v3599 = vunpack.c.l.b16 %v558
        %v3600 = vunpack.c.h.b16 %v558
        %v3601 = vunpack.c.l.b16 %v559
        %v3602 = vunpack.c.h.b16 %v559
        %v3603 = vunpack.c.l.b16 %v560
        %v3604 = vunpack.c.h.b16 %v560
        %v3605 = vunpack.c.l.b16 %v561
        %v3606 = vunpack.c.h.b16 %v561
        %v3607 = vunpack.c.l.b16 %v562
        %v3608 = vunpack.c.h.b16 %v562
        %v3609 = vunpack.c.l.b16 %v563
        %v3610 = vunpack.c.h.b16 %v563
        %v3611 = vunpack.c.l.b16 %v564
        %v3612 = vunpack.c.h.b16 %v564
        %v3613 = vunpack.c.l.b16 %v565
        %v3614 = vunpack.c.h.b16 %v565
        %v3615 = vunpack.c.l.b16 %v566
        %v3616 = vunpack.c.h.b16 %v566
        %v3617 = vunpack.c.l.b16 %v567
        %v3618 = vunpack.c.h.b16 %v567
        %v3619 = vunpack.c.l.b16 %v568
        %v3620 = vunpack.c.h.b16 %v568
        %v3621 = vunpack.c.l.b16 %v569
        %v3622 = vunpack.c.h.b16 %v569
        %v3623 = vunpack.c.l.b16 %v570
        %v3624 = vunpack.c.h.b16 %v570
        %v3625 = vunpack.c.l.b16 %v571
        %v3626 = vunpack.c.h.b16 %v571
        %v3627 = vunpack.c.l.b16 %v572
        %v3628 = vunpack.c.h.b16 %v572
        %v3629 = vunpack.c.l.b16 %v573
        %v3630 = vunpack.c.h.b16 %v573
        %v3631 = vunpack.c.l.b16 %v574
        %v3632 = vunpack.c.h.b16 %v574
        %v3633 = vunpack.c.l.b16 %v575
        %v3634 = vunpack.c.h.b16 %v575
        %v3635 = vunpack.c.l.b16 %v576
        %v3636 = vunpack.c.h.b16 %v576
        %v3637 = vunpack.c.l.b16 %v577
        %v3638 = vunpack.c.h.b16 %v577
        %v3639 = vunpack.c.l.b16 %v578
        %v3640 = vunpack.c.h.b16 %v578
        %v3641 = vunpack.c.l.b16 %v579
        %v3642 = vunpack.c.h.b16 %v579
        %v3643 = vunpack.c.l.b16 %v580
        %v3644 = vunpack.c.h.b16 %v580
        %v3645 = vunpack.c.l.b16 %v581
        %v3646 = vunpack.c.h.b16 %v581
        %v3647 = vunpack.c.l.b16 %v582
        %v3648 = vunpack.c.h.b16 %v582
        %v3649 = vunpack.c.l.b16 %v583
        %v3650 = vunpack.c.h.b16 %v583
        %v3651 = vunpack.c.l.b16 %v584
        %v3652 = vunpack.c.h.b16 %v584
        %v3653 = vunpack.c.l.b16 %v585
        %v3654 = vunpack.c.h.b16 %v585
        %v3655 = vunpack.c.l.b16 %v586
        %v3656 = vunpack.c.h.b16 %v586
        %v3657 = vunpack.c.l.b16 %v587
        %v3658 = vunpack.c.h.b16 %v587
        %v3659 = vunpack.c.l.b16 %v588
        %v3660 = vunpack.c.h.b16 %v588
        %v3661 = vunpack.c.l.b16 %v589
        %v3662 = vunpack.c.h.b16 %v589
        %v3663 = vunpack.c.l.b16 %v590
        %v3664 = vunpack.c.h.b16 %v590
        %v3665 = vunpack.c.l.b16 %v591
        %v3666 = vunpack.c.h.b16 %v591
        %v3667 = vunpack.c.l.b16 %v592
        %v3668 = vunpack.c.h.b16 %v592
        %v3669 = vunpack.c.l.b16 %v593
        %v3670 = vunpack.c.h.b16 %v593
        %v3671 = vunpack.c.l.b16 %v594
        %v3672 = vunpack.c.h.b16 %v594
        %v3673 = vunpack.c.l.b16 %v595
        %v3674 = vunpack.c.h.b16 %v595
        %v3675 = vunpack.c.l.b16 %v596
        %v3676 = vunpack.c.h.b16 %v596
        %v3677 = vunpack.c.l.b16 %v597
        %v3678 = vunpack.c.h.b16 %v597
        %v3679 = vunpack.c.l.b16 %v598
        %v3680 = vunpack.c.h.b16 %v598
        %v3681 = vunpack.c.l.b16 %v599
        %v3682 = vunpack.c.h.b16 %v599
        %v3683 = vunpack.c.l.b16 %v600
        %v3684 = vunpack.c.h.b16 %v600
        %v3685 = vunpack.c.l.b16 %v601
        %v3686 = vunpack.c.h.b16 %v601
        %v3687 = vunpack.c.l.b16 %v602
        %v3688 = vunpack.c.h.b16 %v602
        %v3689 = vunpack.c.l.b16 %v603
        %v3690 = vunpack.c.h.b16 %v603
        %v3691 = vunpack.c.l.b16 %v604
        %v3692 = vunpack.c.h.b16 %v604
        %v3693 = vunpack.c.l.b16 %v605
        %v3694 = vunpack.c.h.b16 %v605
        %v3695 = vunpack.c.l.b16 %v606
        %v3696 = vunpack.c.h.b16 %v606
        %v3697 = vunpack.c.l.b16 %v607
        %v3698 = vunpack.c.h.b16 %v607
        %v3699 = vunpack.c.l.b16 %v608
        %v3700 = vunpack.c.h.b16 %v608
        %v3701 = vunpack.c.l.b16 %v609
        %v3702 = vunpack.c.h.b16 %v609
        %v3703 = vunpack.c.l.b16 %v610
        %v3704 = vunpack.c.h.b16 %v610
        %v3705 = vunpack.c.l.b16 %v611
        %v3706 = vunpack.c.h.b16 %v611
        %v3707 = vunpack.c.l.b16 %v612
        %v3708 = vunpack.c.h.b16 %v612
        %v3709 = vunpack.c.l.b16 %v613
        %v3710 = vunpack.c.h.b16 %v613
        %v3711 = vunpack.c.l.b16 %v614
        %v3712 = vunpack.c.h.b16 %v614
        %v3713 = vunpack.c.l.b16 %v615
        %v3714 = vunpack.c.h.b16 %v615
        %v3715 = vunpack.c.l.b16 %v616
        %v3716 = vunpack.c.h.b16 %v616
        %v3717 = vunpack.c.l.b16 %v617
        %v3718 = vunpack.c.h.b16 %v617
        %v3719 = vunpack.c.l.b16 %v618
        %v3720 = vunpack.c.h.b16 %v618
        %v3721 = vunpack.c.l.b16 %v619
        %v3722 = vunpack.c.h.b16 %v619
        %v3723 = vunpack.c.l.b16 %v620
        %v3724 = vunpack.c.h.b16 %v620
        %v3725 = vunpack.c.l.b16 %v621
        %v3726 = vunpack.c.h.b16 %v621
        %v3727 = vunpack.c.l.b16 %v622
        %v3728 = vunpack.c.h.b16 %v622
        %v3729 = vunpack.c.l.b16 %v623
        %v3730 = vunpack.c.h.b16 %v623
        %v3731 = vunpack.c.l.b16 %v624
        %v3732 = vunpack.c.h.b16 %v624
        %v3733 = vunpack.c.l.b16 %v625
        %v3734 = vunpack.c.h.b16 %v625
        %v3735 = vunpack.c.l.b16 %v626
        %v3736 = vunpack.c.h.b16 %v626
        %v3737 = vunpack.c.l.b16 %v627
        %v3738 = vunpack.c.h.b16 %v627
        %v3739 = vunpack.c.l.b16 %v628
        %v3740 = vunpack.c.h.b16 %v628
        %v3741 = vunpack.c.l.b16 %v629
        %v3742 = vunpack.c.h.b16 %v629
        %v3743 = vunpack.c.l.b16 %v630
        %v3744 = vunpack.c.h.b16 %v630
        %v3745 = vunpack.c.l.b16 %v631
        %v3746 = vunpack.c.h.b16 %v631
        %v3747 = vunpack.c.l.b16 %v632
        %v3748 = vunpack.c.h.b16 %v632
        %v3749 = vunpack.c.l.b16 %v633
        %v3750 = vunpack.c.h.b16 %v633
        %v3751 = vunpack.c.l.b16 %v634
        %v3752 = vunpack.c.h.b16 %v634
        %v3753 = vunpack.c.l.b16 %v635
        %v3754 = vunpack.c.h.b16 %v635
        %v3755 = vunpack.c.l.b16 %v636
        %v3756 = vunpack.c.h.b16 %v636
        %v3757 = vunpack.c.l.b16 %v637
        %v3758 = vunpack.c.h.b16 %v637
        %v3759 = vunpack.c.l.b16 %v638
        %v3760 = vunpack.c.h.b16 %v638
        %v3761 = vunpack.c.l.b16 %v639
        %v3762 = vunpack.c.h.b16 %v639
        %v3763 = vunpack.c.l.b16 %v640
        %v3764 = vunpack.c.h.b16 %v640
        %v3765 = vunpack.c.l.b16 %v641
        %v3766 = vunpack.c.h.b16 %v641
        %v3767 = vunpack.c.l.b16 %v642
        %v3768 = vunpack.c.h.b16 %v642
        %v3769 = vunpack.c.l.b16 %v643
        %v3770 = vunpack.c.h.b16 %v643
        %v3771 = vunpack.c.l.b16 %v644
        %v3772 = vunpack.c.h.b16 %v644
        %v3773 = vunpack.c.l.b16 %v645
        %v3774 = vunpack.c.h.b16 %v645
        %v3775 = vunpack.c.l.b16 %v646
        %v3776 = vunpack.c.h.b16 %v646
        %v3777 = vunpack.c.l.b16 %v647
        %v3778 = vunpack.c.h.b16 %v647
        %v3779 = vunpack.c.l.b16 %v648
        %v3780 = vunpack.c.h.b16 %v648
        %v3781 = vunpack.c.l.b16 %v649
        %v3782 = vunpack.c.h.b16 %v649
        %v3783 = vunpack.c.l.b16 %v650
        %v3784 = vunpack.c.h.b16 %v650
        %v3785 = vunpack.c.l.b16 %v651
        %v3786 = vunpack.c.h.b16 %v651
        %v3787 = vunpack.c.l.b16 %v652
        %v3788 = vunpack.c.h.b16 %v652
        %v3789 = vunpack.c.l.b16 %v653
        %v3790 = vunpack.c.h.b16 %v653
        %v3791 = vunpack.c.l.b16 %v654
        %v3792 = vunpack.c.h.b16 %v654
        %v3793 = vunpack.c.l.b16 %v655
        %v3794 = vunpack.c.h.b16 %v655
        %v3795 = vunpack.c.l.b16 %v656
        %v3796 = vunpack.c.h.b16 %v656
        %v3797 = vunpack.c.l.b16 %v657
        %v3798 = vunpack.c.h.b16 %v657
        %v3799 = vunpack.c.l.b16 %v658
        %v3800 = vunpack.c.h.b16 %v658
        %v3801 = vunpack.c.l.b16 %v659
        %v3802 = vunpack.c.h.b16 %v659
        %v3803 = vunpack.c.l.b16 %v660
        %v3804 = vunpack.c.h.b16 %v660
        %v3805 = vunpack.c.l.b16 %v661
        %v3806 = vunpack.c.h.b16 %v661
        %v3807 = vunpack.c.l.b16 %v662
        %v3808 = vunpack.c.h.b16 %v662
        %v3809 = vunpack.c.l.b16 %v663
        %v3810 = vunpack.c.h.b16 %v663
        %v3811 = vunpack.c.l.b16 %v664
        %v3812 = vunpack.c.h.b16 %v664
        %v3813 = vunpack.c.l.b16 %v665
        %v3814 = vunpack.c.h.b16 %v665
        %v3815 = vunpack.c.l.b16 %v666
        %v3816 = vunpack.c.h.b16 %v666
        %v3817 = vunpack.c.l.b16 %v667
        %v3818 = vunpack.c.h.b16 %v667
        %v3819 = vunpack.c.l.b16 %v668
        %v3820 = vunpack.c.h.b16 %v668
        %v3821 = vunpack.c.l.b16 %v669
        %v3822 = vunpack.c.h.b16 %v669
        %v3823 = vunpack.c.l.b16 %v670
        %v3824 = vunpack.c.h.b16 %v670
        %v3825 = vunpack.c.l.b16 %v671
        %v3826 = vunpack.c.h.b16 %v671
        %v3827 = vunpack.c.l.b16 %v672
        %v3828 = vunpack.c.h.b16 %v672
        %v3829 = vunpack.c.l.b16 %v673
        %v3830 = vunpack.c.h.b16 %v673
        %v3831 = vunpack.c.l.b16 %v674
        %v3832 = vunpack.c.h.b16 %v674
        %v3833 = vunpack.c.l.b16 %v675
        %v3834 = vunpack.c.h.b16 %v675
        %v3835 = vunpack.c.l.b16 %v676
        %v3836 = vunpack.c.h.b16 %v676
        %v3837 = vunpack.c.l.b16 %v677
        %v3838 = vunpack.c.h.b16 %v677
        %v3839 = vunpack.c.l.b16 %v678
        %v3840 = vunpack.c.h.b16 %v678
        %v3841 = vunpack.c.l.b16 %v679
        %v3842 = vunpack.c.h.b16 %v679
        %v3843 = vunpack.c.l.b16 %v680
        %v3844 = vunpack.c.h.b16 %v680
        %v3845 = vunpack.c.l.b16 %v681
        %v3846 = vunpack.c.h.b16 %v681
        %v3847 = vunpack.c.l.b16 %v682
        %v3848 = vunpack.c.h.b16 %v682
        %v3849 = vunpack.c.l.b16 %v683
        %v3850 = vunpack.c.h.b16 %v683
        %v3851 = vunpack.c.l.b16 %v684
        %v3852 = vunpack.c.h.b16 %v684
        %v3853 = vunpack.c.l.b16 %v685
        %v3854 = vunpack.c.h.b16 %v685
        %v3855 = vunpack.c.l.b16 %v686
        %v3856 = vunpack.c.h.b16 %v686
        %v3857 = vunpack.c.l.b16 %v687
        %v3858 = vunpack.c.h.b16 %v687
        %v3859 = vunpack.c.l.b16 %v688
        %v3860 = vunpack.c.h.b16 %v688
        %v3861 = vunpack.c.l.b16 %v689
        %v3862 = vunpack.c.h.b16 %v689
        %v3863 = vunpack.c.l.b16 %v690
        %v3864 = vunpack.c.h.b16 %v690
        %v3865 = vunpack.c.l.b16 %v691
        %v3866 = vunpack.c.h.b16 %v691
        %v3867 = vunpack.c.l.b16 %v692
        %v3868 = vunpack.c.h.b16 %v692
        %v3869 = vunpack.c.l.b16 %v693
        %v3870 = vunpack.c.h.b16 %v693
        %v3871 = vunpack.c.l.b16 %v694
        %v3872 = vunpack.c.h.b16 %v694
        %v3873 = vunpack.c.l.b16 %v695
        %v3874 = vunpack.c.h.b16 %v695
        %v3875 = vunpack.c.l.b16 %v696
        %v3876 = vunpack.c.h.b16 %v696
        %v3877 = vunpack.c.l.b16 %v697
        %v3878 = vunpack.c.h.b16 %v697
        %v3879 = vunpack.c.l.b16 %v698
        %v3880 = vunpack.c.h.b16 %v698
        %v3881 = vunpack.c.l.b16 %v699
        %v3882 = vunpack.c.h.b16 %v699
        %v3883 = vunpack.c.l.b16 %v700
        %v3884 = vunpack.c.h.b16 %v700
        %v3885 = vunpack.c.l.b16 %v701
        %v3886 = vunpack.c.h.b16 %v701
        %v3887 = vunpack.c.l.b16 %v702
        %v3888 = vunpack.c.h.b16 %v702
        %v3889 = vunpack.c.l.b16 %v703
        %v3890 = vunpack.c.h.b16 %v703
        %v3891 = vunpack.c.l.b16 %v704
        %v3892 = vunpack.c.h.b16 %v704
        %v3893 = vunpack.c.l.b16 %v705
        %v3894 = vunpack.c.h.b16 %v705
        %v3895 = vunpack.c.l.b16 %v706
        %v3896 = vunpack.c.h.b16 %v706
        %v3897 = vunpack.c.l.b16 %v707
        %v3898 = vunpack.c.h.b16 %v707
        %v3899 = vunpack.c.l.b16 %v708
        %v3900 = vunpack.c.h.b16 %v708
        %v3901 = vunpack.c.l.b16 %v709
        %v3902 = vunpack.c.h.b16 %v709
        %v3903 = vunpack.c.l.b16 %v710
        %v3904 = vunpack.c.h.b16 %v710
        %v3905 = vunpack.c.l.b16 %v711
        %v3906 = vunpack.c.h.b16 %v711
        %v3907 = vunpack.c.l.b16 %v712
        %v3908 = vunpack.c.h.b16 %v712
        %v3909 = vunpack.c.l.b16 %v713
        %v3910 = vunpack.c.h.b16 %v713
        %v3911 = vunpack.c.l.b16 %v714
        %v3912 = vunpack.c.h.b16 %v714
        %v3913 = vunpack.c.l.b16 %v715
        %v3914 = vunpack.c.h.b16 %v715
        %v3915 = vunpack.c.l.b16 %v716
        %v3916 = vunpack.c.h.b16 %v716
        %v3917 = vunpack.c.l.b16 %v717
        %v3918 = vunpack.c.h.b16 %v717
        %v3919 = vunpack.c.l.b16 %v718
        %v3920 = vunpack.c.h.b16 %v718
        %v3921 = vunpack.c.l.b16 %v719
        %v3922 = vunpack.c.h.b16 %v719
        %v3923 = vunpack.c.l.b16 %v720
        %v3924 = vunpack.c.h.b16 %v720
        %v3925 = vunpack.c.l.b16 %v721
        %v3926 = vunpack.c.h.b16 %v721
        %v3927 = vunpack.c.l.b16 %v722
        %v3928 = vunpack.c.h.b16 %v722
        %v3929 = vunpack.c.l.b16 %v723
        %v3930 = vunpack.c.h.b16 %v723
        %v3931 = vunpack.c.l.b16 %v724
        %v3932 = vunpack.c.h.b16 %v724
        %v3933 = vunpack.c.l.b16 %v725
        %v3934 = vunpack.c.h.b16 %v725
        %v3935 = vunpack.c.l.b16 %v726
        %v3936 = vunpack.c.h.b16 %v726
        %v3937 = vunpack.c.l.b16 %v727
        %v3938 = vunpack.c.h.b16 %v727
        %v3939 = vunpack.c.l.b16 %v728
        %v3940 = vunpack.c.h.b16 %v728
        %v3941 = vunpack.c.l.b16 %v729
        %v3942 = vunpack.c.h.b16 %v729
        %v3943 = vunpack.c.l.b16 %v730
        %v3944 = vunpack.c.h.b16 %v730
        %v3945 = vunpack.c.l.b16 %v731
        %v3946 = vunpack.c.h.b16 %v731
        %v3947 = vunpack.c.l.b16 %v732
        %v3948 = vunpack.c.h.b16 %v732
        %v3949 = vunpack.c.l.b16 %v733
        %v3950 = vunpack.c.h.b16 %v733
        %v3951 = vunpack.c.l.b16 %v734
        %v3952 = vunpack.c.h.b16 %v734
        %v3953 = vunpack.c.l.b16 %v735
        %v3954 = vunpack.c.h.b16 %v735
        %v3955 = vunpack.c.l.b16 %v736
        %v3956 = vunpack.c.h.b16 %v736
        %v3957 = vunpack.c.l.b16 %v737
        %v3958 = vunpack.c.h.b16 %v737
        %v3959 = vunpack.c.l.b16 %v738
        %v3960 = vunpack.c.h.b16 %v738
        %v3961 = vunpack.c.l.b16 %v739
        %v3962 = vunpack.c.h.b16 %v739
        %v3963 = vunpack.c.l.b16 %v740
        %v3964 = vunpack.c.h.b16 %v740
        %v3965 = vunpack.c.l.b16 %v741
        %v3966 = vunpack.c.h.b16 %v741
        %v3967 = vunpack.c.l.b16 %v742
        %v3968 = vunpack.c.h.b16 %v742
        %v3969 = vunpack.c.l.b16 %v743
        %v3970 = vunpack.c.h.b16 %v743
        %v3971 = vunpack.c.l.b16 %v744
        %v3972 = vunpack.c.h.b16 %v744
        %v3973 = vunpack.c.l.b16 %v745
        %v3974 = vunpack.c.h.b16 %v745
        %v3975 = vunpack.c.l.b16 %v746
        %v3976 = vunpack.c.h.b16 %v746
        %v3977 = vunpack.c.l.b16 %v747
        %v3978 = vunpack.c.h.b16 %v747
        %v3979 = vunpack.c.l.b16 %v748
        %v3980 = vunpack.c.h.b16 %v748
        %v3981 = vunpack.c.l.b16 %v749
        %v3982 = vunpack.c.h.b16 %v749
        %v3983 = vunpack.c.l.b16 %v750
        %v3984 = vunpack.c.h.b16 %v750
        %v3985 = vunpack.c.l.b16 %v751
        %v3986 = vunpack.c.h.b16 %v751
        %v3987 = vunpack.c.l.b16 %v752
        %v3988 = vunpack.c.h.b16 %v752
        %v3989 = vunpack.c.l.b16 %v753
        %v3990 = vunpack.c.h.b16 %v753
        %v3991 = vunpack.c.l.b16 %v754
        %v3992 = vunpack.c.h.b16 %v754
        %v3993 = vunpack.c.l.b16 %v755
        %v3994 = vunpack.c.h.b16 %v755
        %v3995 = vunpack.c.l.b16 %v756
        %v3996 = vunpack.c.h.b16 %v756
        %v3997 = vunpack.c.l.b16 %v757
        %v3998 = vunpack.c.h.b16 %v757
        %v3999 = vunpack.c.l.b16 %v758
        %v4000 = vunpack.c.h.b16 %v758
        %v4001 = vunpack.c.l.b16 %v759
        %v4002 = vunpack.c.h.b16 %v759
        %v4003 = vunpack.c.l.b16 %v760
        %v4004 = vunpack.c.h.b16 %v760
        %v4005 = vunpack.c.l.b16 %v761
        %v4006 = vunpack.c.h.b16 %v761
        %v4007 = vunpack.c.l.b16 %v762
        %v4008 = vunpack.c.h.b16 %v762
        %v4009 = vunpack.c.l.b16 %v763
        %v4010 = vunpack.c.h.b16 %v763
        %v4011 = vunpack.c.l.b16 %v764
        %v4012 = vunpack.c.h.b16 %v764
        %v4013 = vunpack.c.l.b16 %v765
        %v4014 = vunpack.c.h.b16 %v765
        %v4015 = vunpack.c.l.b16 %v766
        %v4016 = vunpack.c.h.b16 %v766
        %v4017 = vunpack.c.l.b16 %v767
        %v4018 = vunpack.c.h.b16 %v767
        %v4019 = vunpack.c.l.b16 %v768
        %v4020 = vunpack.c.h.b16 %v768
        %v4021 = vunpack.c.l.b16 %v769
        %v4022 = vunpack.c.h.b16 %v769
        %v4023 = vunpack.c.l.b16 %v770
        %v4024 = vunpack.c.h.b16 %v770
        %v4025 = vunpack.c.l.b16 %v771
        %v4026 = vunpack.c.h.b16 %v771
        %v4027 = vunpack.c.l.b16 %v772
        %v4028 = vunpack.c.h.b16 %v772
        %v4029 = vunpack.c.l.b16 %v773
        %v4030 = vunpack.c.h.b16 %v773
        %v4031 = vunpack.c.l.b16 %v774
        %v4032 = vunpack.c.h.b16 %v774
        %v4033 = vunpack.c.l.b16 %v775
        %v4034 = vunpack.c.h.b16 %v775
        %v4035 = vunpack.c.l.b16 %v776
        %v4036 = vunpack.c.h.b16 %v776
        %v4037 = vunpack.c.l.b16 %v777
        %v4038 = vunpack.c.h.b16 %v777
        %v4039 = vunpack.c.l.b16 %v778
        %v4040 = vunpack.c.h.b16 %v778
        %v4041 = vunpack.c.l.b16 %v779
        %v4042 = vunpack.c.h.b16 %v779
        %v4043 = vunpack.c.l.b16 %v780
        %v4044 = vunpack.c.h.b16 %v780
        %v4045 = vunpack.c.l.b16 %v781
        %v4046 = vunpack.c.h.b16 %v781
        %v4047 = vunpack.c.l.b16 %v782
        %v4048 = vunpack.c.h.b16 %v782
        %v4049 = vunpack.c.l.b16 %v783
        %v4050 = vunpack.c.h.b16 %v783
        %v4051 = vunpack.c.l.b16 %v784
        %v4052 = vunpack.c.h.b16 %v784
        %v4053 = vunpack.c.l.b16 %v785
        %v4054 = vunpack.c.h.b16 %v785
        %v4055 = vunpack.c.l.b16 %v786
        %v4056 = vunpack.c.h.b16 %v786
        %v4057 = vunpack.c.l.b16 %v787
        %v4058 = vunpack.c.h.b16 %v787
        %v4059 = vunpack.c.l.b16 %v788
        %v4060 = vunpack.c.h.b16 %v788
        %v4061 = vunpack.c.l.b16 %v789
        %v4062 = vunpack.c.h.b16 %v789
        %v4063 = vunpack.c.l.b16 %v790
        %v4064 = vunpack.c.h.b16 %v790
        %v4065 = vunpack.c.l.b16 %v791
        %v4066 = vunpack.c.h.b16 %v791
        %v4067 = vunpack.c.l.b16 %v792
        %v4068 = vunpack.c.h.b16 %v792
        %v4069 = vunpack.c.l.b16 %v793
        %v4070 = vunpack.c.h.b16 %v793
        %v4071 = vunpack.c.l.b16 %v794
        %v4072 = vunpack.c.h.b16 %v794
        %v4073 = vunpack.c.l.b16 %v795
        %v4074 = vunpack.c.h.b16 %v795
        %v4075 = vunpack.c.l.b16 %v796
        %v4076 = vunpack.c.h.b16 %v796
        %v4077 = vunpack.c.l.b16 %v797
        %v4078 = vunpack.c.h.b16 %v797
        %v4079 = vunpack.c.l.b16 %v798
        %v4080 = vunpack.c.h.b16 %v798
        %v4081 = vunpack.c.l.b16 %v799
        %v4082 = vunpack.c.h.b16 %v799
        %v4083 = vunpack.c.l.b16 %v800
        %v4084 = vunpack.c.h.b16 %v800
        %v4085 = vunpack.c.l.b16 %v801
        %v4086 = vunpack.c.h.b16 %v801
        %v4087 = vunpack.c.l.b16 %v802
        %v4088 = vunpack.c.h.b16 %v802
        %v4089 = vunpack.c.l.b16 %v803
        %v4090 = vunpack.c.h.b16 %v803
        %v4091 = vunpack.c.l.b16 %v804
        %v4092 = vunpack.c.h.b16 %v804
        %v4093 = vunpack.c.l.b16 %v805
        %v4094 = vunpack.c.h.b16 %v805
        %v4095 = vunpack.c.l.b16 %v806
        %v4096 = vunpack.c.h.b16 %v806
        %v4097 = vunpack.c.l.b16 %v807
        %v4098 = vunpack.c.h.b16 %v807
        %v4099 = vunpack.c.l.b16 %v808
        %v4100 = vunpack.c.h.b16 %v808
        %v4101 = vunpack.c.l.b16 %v809
        %v4102 = vunpack.c.h.b16 %v809
        %v4103 = vunpack.c.l.b16 %v810
        %v4104 = vunpack.c.h.b16 %v810
        %v4105 = vunpack.c.l.b16 %v811
        %v4106 = vunpack.c.h.b16 %v811
        %v4107 = vunpack.c.l.b16 %v812
        %v4108 = vunpack.c.h.b16 %v812
        %v4109 = vunpack.c.l.b16 %v813
        %v4110 = vunpack.c.h.b16 %v813
        %v4111 = vunpack.c.l.b16 %v814
        %v4112 = vunpack.c.h.b16 %v814
        %v4113 = vunpack.c.l.b16 %v815
        %v4114 = vunpack.c.h.b16 %v815
        %v4115 = vunpack.c.l.b16 %v816
        %v4116 = vunpack.c.h.b16 %v816
        %v4117 = vunpack.c.l.b16 %v817
        %v4118 = vunpack.c.h.b16 %v817
        %v4119 = vunpack.c.l.b16 %v818
        %v4120 = vunpack.c.h.b16 %v818
        %v4121 = vunpack.c.l.b16 %v819
        %v4122 = vunpack.c.h.b16 %v819
        %v4123 = vunpack.c.l.b16 %v820
        %v4124 = vunpack.c.h.b16 %v820
        %v4125 = vunpack.c.l.b16 %v821
        %v4126 = vunpack.c.h.b16 %v821
        %v4127 = vunpack.c.l.b16 %v822
        %v4128 = vunpack.c.h.b16 %v822
        %v4129 = vunpack.c.l.b16 %v823
        %v4130 = vunpack.c.h.b16 %v823
        %v4131 = vunpack.c.l.b16 %v824
        %v4132 = vunpack.c.h.b16 %v824
        %v4133 = vunpack.c.l.b16 %v825
        %v4134 = vunpack.c.h.b16 %v825
        %v4135 = vunpack.c.l.b16 %v826
        %v4136 = vunpack.c.h.b16 %v826
        %v4137 = vunpack.c.l.b16 %v827
        %v4138 = vunpack.c.h.b16 %v827
        %v4139 = vunpack.c.l.b16 %v828
        %v4140 = vunpack.c.h.b16 %v828
        %v4141 = vunpack.c.l.b16 %v829
        %v4142 = vunpack.c.h.b16 %v829
        %v4143 = vunpack.c.l.b16 %v830
        %v4144 = vunpack.c.h.b16 %v830
        %v4145 = vunpack.c.l.b16 %v831
        %v4146 = vunpack.c.h.b16 %v831
        %v4147 = vunpack.c.l.b16 %v832
        %v4148 = vunpack.c.h.b16 %v832
        %v4149 = vunpack.c.l.b16 %v833
        %v4150 = vunpack.c.h.b16 %v833
        %v4151 = vunpack.c.l.b16 %v834
        %v4152 = vunpack.c.h.b16 %v834
        %v4153 = vunpack.c.l.b16 %v835
        %v4154 = vunpack.c.h.b16 %v835
        %v4155 = vunpack.c.l.b16 %v836
        %v4156 = vunpack.c.h.b16 %v836
        %v4157 = vunpack.c.l.b16 %v837
        %v4158 = vunpack.c.h.b16 %v837
        %v4159 = vunpack.c.l.b16 %v838
        %v4160 = vunpack.c.h.b16 %v838
        %v4161 = vunpack.c.l.b16 %v839
        %v4162 = vunpack.c.h.b16 %v839
        %v4163 = vunpack.c.l.b16 %v840
        %v4164 = vunpack.c.h.b16 %v840
        %v4165 = vunpack.c.l.b16 %v841
        %v4166 = vunpack.c.h.b16 %v841
        %v4167 = vunpack.c.l.b16 %v842
        %v4168 = vunpack.c.h.b16 %v842
        %v4169 = vunpack.c.l.b16 %v843
        %v4170 = vunpack.c.h.b16 %v843
        %v4171 = vunpack.c.l.b16 %v844
        %v4172 = vunpack.c.h.b16 %v844
        %v4173 = vunpack.c.l.b16 %v845
        %v4174 = vunpack.c.h.b16 %v845
        %v4175 = vunpack.c.l.b16 %v846
        %v4176 = vunpack.c.h.b16 %v846
        %v4177 = vunpack.c.l.b16 %v847
        %v4178 = vunpack.c.h.b16 %v847
        %v4179 = vunpack.c.l.b16 %v848
        %v4180 = vunpack.c.h.b16 %v848
        %v4181 = vunpack.c.l.b16 %v849
        %v4182 = vunpack.c.h.b16 %v849
        %v4183 = vunpack.c.l.b16 %v850
        %v4184 = vunpack.c.h.b16 %v850
        %v4185 = vunpack.c.l.b16 %v851
        %v4186 = vunpack.c.h.b16 %v851
        %v4187 = vunpack.c.l.b16 %v852
        %v4188 = vunpack.c.h.b16 %v852
        %v4189 = vunpack.c.l.b16 %v853
        %v4190 = vunpack.c.h.b16 %v853
        %v4191 = vunpack.c.l.b16 %v854
        %v4192 = vunpack.c.h.b16 %v854
        %v4193 = vunpack.c.l.b16 %v855
        %v4194 = vunpack.c.h.b16 %v855
        %v4195 = vunpack.c.l.b16 %v856
        %v4196 = vunpack.c.h.b16 %v856
        %v4197 = vunpack.c.l.b16 %v857
        %v4198 = vunpack.c.h.b16 %v857
        %v4199 = vunpack.c.l.b16 %v858
        %v4200 = vunpack.c.h.b16 %v858
        %v4201 = vunpack.c.l.b16 %v859
        %v4202 = vunpack.c.h.b16 %v859
        %v4203 = vunpack.c.l.b16 %v860
        %v4204 = vunpack.c.h.b16 %v860
        %v4205 = vunpack.c.l.b16 %v861
        %v4206 = vunpack.c.h.b16 %v861
        %v4207 = vunpack.c.l.b16 %v862
        %v4208 = vunpack.c.h.b16 %v862
        %v4209 = vunpack.c.l.b16 %v863
        %v4210 = vunpack.c.h.b16 %v863
        %v4211 = vunpack.c.l.b16 %v864
        %v4212 = vunpack.c.h.b16 %v864
        %v4213 = vunpack.c.l.b16 %v865
        %v4214 = vunpack.c.h.b16 %v865
        %v4215 = vunpack.c.l.b16 %v866
        %v4216 = vunpack.c.h.b16 %v866
        %v4217 = vunpack.c.l.b16 %v867
        %v4218 = vunpack.c.h.b16 %v867
        %v4219 = vunpack.c.l.b16 %v868
        %v4220 = vunpack.c.h.b16 %v868
        %v4221 = vunpack.c.l.b16 %v869
        %v4222 = vunpack.c.h.b16 %v869
        %v4223 = vunpack.c.l.b16 %v870
        %v4224 = vunpack.c.h.b16 %v870
        %v4225 = vunpack.c.l.b16 %v871
        %v4226 = vunpack.c.h.b16 %v871
        %v4227 = vunpack.c.l.b16 %v872
        %v4228 = vunpack.c.h.b16 %v872
        %v4229 = vunpack.c.l.b16 %v873
        %v4230 = vunpack.c.h.b16 %v873
        %v4231 = vunpack.c.l.b16 %v874
        %v4232 = vunpack.c.h.b16 %v874
        %v4233 = vunpack.c.l.b16 %v875
        %v4234 = vunpack.c.h.b16 %v875
        %v4235 = vunpack.c.l.b16 %v876
        %v4236 = vunpack.c.h.b16 %v876
        %v4237 = vunpack.c.l.b16 %v877
        %v4238 = vunpack.c.h.b16 %v877
        %v4239 = vunpack.c.l.b16 %v878
        %v4240 = vunpack.c.h.b16 %v878
        %v4241 = vunpack.c.l.b16 %v879
        %v4242 = vunpack.c.h.b16 %v879
        %v4243 = vunpack.c.l.b16 %v880
        %v4244 = vunpack.c.h.b16 %v880
        %v4245 = vunpack.c.l.b16 %v881
        %v4246 = vunpack.c.h.b16 %v881
        %v4247 = vunpack.c.l.b16 %v882
        %v4248 = vunpack.c.h.b16 %v882
        %v4249 = vunpack.c.l.b16 %v883
        %v4250 = vunpack.c.h.b16 %v883
        %v4251 = vunpack.c.l.b16 %v884
        %v4252 = vunpack.c.h.b16 %v884
        %v4253 = vunpack.c.l.b16 %v885
        %v4254 = vunpack.c.h.b16 %v885
        %v4255 = vunpack.c.l.b16 %v886
        %v4256 = vunpack.c.h.b16 %v886
        %v4257 = vunpack.c.l.b16 %v887
        %v4258 = vunpack.c.h.b16 %v887
        %v4259 = vunpack.c.l.b16 %v888
        %v4260 = vunpack.c.h.b16 %v888
        %v4261 = vunpack.c.l.b16 %v889
        %v4262 = vunpack.c.h.b16 %v889
        %v4263 = vunpack.c.l.b16 %v890
        %v4264 = vunpack.c.h.b16 %v890
        %v4265 = vunpack.c.l.b16 %v891
        %v4266 = vunpack.c.h.b16 %v891
        %v4267 = vunpack.c.l.b16 %v892
        %v4268 = vunpack.c.h.b16 %v892
        %v4269 = vunpack.c.l.b16 %v893
        %v4270 = vunpack.c.h.b16 %v893
        %v4271 = vunpack.c.l.b16 %v894
        %v4272 = vunpack.c.h.b16 %v894
        %v4273 = vunpack.c.l.b16 %v895
        %v4274 = vunpack.c.h.b16 %v895
        %v4275 = vunpack.c.l.b16 %v896
        %v4276 = vunpack.c.h.b16 %v896
        %v4277 = vunpack.c.l.b16 %v897
        %v4278 = vunpack.c.h.b16 %v897
        %v4279 = vunpack.c.l.b16 %v898
        %v4280 = vunpack.c.h.b16 %v898
        %v4281 = vunpack.c.l.b16 %v899
        %v4282 = vunpack.c.h.b16 %v899
        %v4283 = vunpack.c.l.b16 %v900
        %v4284 = vunpack.c.h.b16 %v900
        %v4285 = vunpack.c.l.b16 %v901
        %v4286 = vunpack.c.h.b16 %v901
        %v4287 = vunpack.c.l.b16 %v902
        %v4288 = vunpack.c.h.b16 %v902
        %v4289 = vunpack.c.l.b16 %v903
        %v4290 = vunpack.c.h.b16 %v903
        %v4291 = vunpack.c.l.b16 %v904
        %v4292 = vunpack.c.h.b16 %v904
        %v4293 = vunpack.c.l.b16 %v905
        %v4294 = vunpack.c.h.b16 %v905
        %v4295 = vunpack.c.l.b16 %v906
        %v4296 = vunpack.c.h.b16 %v906
        %v4297 = vunpack.c.l.b16 %v907
        %v4298 = vunpack.c.h.b16 %v907
        %v4299 = vunpack.c.l.b16 %v908
        %v4300 = vunpack.c.h.b16 %v908
        %v4301 = vunpack.c.l.b16 %v909
        %v4302 = vunpack.c.h.b16 %v909
        %v4303 = vunpack.c.l.b16 %v910
        %v4304 = vunpack.c.h.b16 %v910
        %v4305 = vunpack.c.l.b16 %v911
        %v4306 = vunpack.c.h.b16 %v911
        %v4307 = vunpack.c.l.b16 %v912
        %v4308 = vunpack.c.h.b16 %v912
        %v4309 = vunpack.c.l.b16 %v913
        %v4310 = vunpack.c.h.b16 %v913
        %v4311 = vunpack.c.l.b16 %v914
        %v4312 = vunpack.c.h.b16 %v914
        %v4313 = vunpack.c.l.b16 %v915
        %v4314 = vunpack.c.h.b16 %v915
        %v4315 = vunpack.c.l.b16 %v916
        %v4316 = vunpack.c.h.b16 %v916
        %v4317 = vunpack.c.l.b16 %v917
        %v4318 = vunpack.c.h.b16 %v917
        %v4319 = vunpack.c.l.b16 %v918
        %v4320 = vunpack.c.h.b16 %v918
        %v4321 = vunpack.c.l.b16 %v919
        %v4322 = vunpack.c.h.b16 %v919
        %v4323 = vunpack.c.l.b16 %v920
        %v4324 = vunpack.c.h.b16 %v920
        %v4325 = vunpack.c.l.b16 %v921
        %v4326 = vunpack.c.h.b16 %v921
        %v4327 = vunpack.c.l.b16 %v922
        %v4328 = vunpack.c.h.b16 %v922
        %v4329 = vunpack.c.l.b16 %v923
        %v4330 = vunpack.c.h.b16 %v923
        %v4331 = vunpack.c.l.b16 %v924
        %v4332 = vunpack.c.h.b16 %v924
        %v4333 = vunpack.c.l.b16 %v925
        %v4334 = vunpack.c.h.b16 %v925
        %v4335 = vunpack.c.l.b16 %v926
        %v4336 = vunpack.c.h.b16 %v926
        %v4337 = vunpack.c.l.b16 %v927
        %v4338 = vunpack.c.h.b16 %v927
        %v4339 = vunpack.c.l.b16 %v928
        %v4340 = vunpack.c.h.b16 %v928
        %v4341 = vunpack.c.l.b16 %v929
        %v4342 = vunpack.c.h.b16 %v929
        %v4343 = vunpack.c.l.b16 %v930
        %v4344 = vunpack.c.h.b16 %v930
        %v4345 = vunpack.c.l.b16 %v931
        %v4346 = vunpack.c.h.b16 %v931
        %v4347 = vunpack.c.l.b16 %v932
        %v4348 = vunpack.c.h.b16 %v932
        %v4349 = vunpack.c.l.b16 %v933
        %v4350 = vunpack.c.h.b16 %v933
        %v4351 = vunpack.c.l.b16 %v934
        %v4352 = vunpack.c.h.b16 %v934
        %v4353 = vunpack.c.l.b16 %v935
        %v4354 = vunpack.c.h.b16 %v935
        %v4355 = vunpack.c.l.b16 %v936
        %v4356 = vunpack.c.h.b16 %v936
        %v4357 = vunpack.c.l.b16 %v937
        %v4358 = vunpack.c.h.b16 %v937
        %v4359 = vunpack.c.l.b16 %v938
        %v4360 = vunpack.c.h.b16 %v938
        %v4361 = vunpack.c.l.b16 %v939
        %v4362 = vunpack.c.h.b16 %v939
        %v4363 = vunpack.c.l.b16 %v940
        %v4364 = vunpack.c.h.b16 %v940
        %v4365 = vunpack.c.l.b16 %v941
        %v4366 = vunpack.c.h.b16 %v941
        %v4367 = vunpack.c.l.b16 %v942
        %v4368 = vunpack.c.h.b16 %v942
        %v4369 = vunpack.c.l.b16 %v943
        %v4370 = vunpack.c.h.b16 %v943
        %v4371 = vunpack.c.l.b16 %v944
        %v4372 = vunpack.c.h.b16 %v944
        %v4373 = vunpack.c.l.b16 %v945
        %v4374 = vunpack.c.h.b16 %v945
        %v4375 = vunpack.c.l.b16 %v946
        %v4376 = vunpack.c.h.b16 %v946
        %v4377 = vunpack.c.l.b16 %v947
        %v4378 = vunpack.c.h.b16 %v947
        %v4379 = vunpack.c.l.b16 %v948
        %v4380 = vunpack.c.h.b16 %v948
        %v4381 = vunpack.c.l.b16 %v949
        %v4382 = vunpack.c.h.b16 %v949
        %v4383 = vunpack.c.l.b16 %v950
        %v4384 = vunpack.c.h.b16 %v950
        %v4385 = vunpack.c.l.b16 %v951
        %v4386 = vunpack.c.h.b16 %v951
        %v4387 = vunpack.c.l.b16 %v952
        %v4388 = vunpack.c.h.b16 %v952
        %v4389 = vunpack.c.l.b16 %v953
        %v4390 = vunpack.c.h.b16 %v953
        %v4391 = vunpack.c.l.b16 %v954
        %v4392 = vunpack.c.h.b16 %v954
        %v4393 = vunpack.c.l.b16 %v955
        %v4394 = vunpack.c.h.b16 %v955
        %v4395 = vunpack.c.l.b16 %v956
        %v4396 = vunpack.c.h.b16 %v956
        %v4397 = vunpack.c.l.b16 %v957
        %v4398 = vunpack.c.h.b16 %v957
        %v4399 = vunpack.c.l.b16 %v958
        %v4400 = vunpack.c.h.b16 %v958
        %v4401 = vunpack.c.l.b16 %v959
        %v4402 = vunpack.c.h.b16 %v959
        %v4403 = vunpack.c.l.b16 %v960
        %v4404 = vunpack.c.h.b16 %v960
        %v4405 = vunpack.c.l.b16 %v961
        %v4406 = vunpack.c.h.b16 %v961
        %v4407 = vunpack.c.l.b16 %v962
        %v4408 = vunpack.c.h.b16 %v962
        %v4409 = vunpack.c.l.b16 %v963
        %v4410 = vunpack.c.h.b16 %v963
        %v4411 = vunpack.c.l.b16 %v964
        %v4412 = vunpack.c.h.b16 %v964
        %v4413 = vunpack.c.l.b16 %v965
        %v4414 = vunpack.c.h.b16 %v965
        %v4415 = vunpack.c.l.b16 %v966
        %v4416 = vunpack.c.h.b16 %v966
        %v4417 = vunpack.c.l.b16 %v967
        %v4418 = vunpack.c.h.b16 %v967
        %v4419 = vunpack.c.l.b16 %v968
        %v4420 = vunpack.c.h.b16 %v968
        %v4421 = vunpack.c.l.b16 %v969
        %v4422 = vunpack.c.h.b16 %v969
        %v4423 = vunpack.c.l.b16 %v970
        %v4424 = vunpack.c.h.b16 %v970
        %v4425 = vunpack.c.l.b16 %v971
        %v4426 = vunpack.c.h.b16 %v971
        %v4427 = vunpack.c.l.b16 %v972
        %v4428 = vunpack.c.h.b16 %v972
        %v4429 = vunpack.c.l.b16 %v973
        %v4430 = vunpack.c.h.b16 %v973
        %v4431 = vunpack.c.l.b16 %v974
        %v4432 = vunpack.c.h.b16 %v974
        %v4433 = vunpack.c.l.b16 %v975
        %v4434 = vunpack.c.h.b16 %v975
        %v4435 = vunpack.c.l.b16 %v976
        %v4436 = vunpack.c.h.b16 %v976
        %v4437 = vunpack.c.l.b16 %v977
        %v4438 = vunpack.c.h.b16 %v977
        %v4439 = vunpack.c.l.b16 %v978
        %v4440 = vunpack.c.h.b16 %v978
        %v4441 = vunpack.c.l.b16 %v979
        %v4442 = vunpack.c.h.b16 %v979
        %v4443 = vunpack.c.l.b16 %v980
        %v4444 = vunpack.c.h.b16 %v980
        %v4445 = vunpack.c.l.b16 %v981
        %v4446 = vunpack.c.h.b16 %v981
        %v4447 = vunpack.c.l.b16 %v982
        %v4448 = vunpack.c.h.b16 %v982
        %v4449 = vunpack.c.l.b16 %v983
        %v4450 = vunpack.c.h.b16 %v983
        %v4451 = vunpack.c.l.b16 %v984
        %v4452 = vunpack.c.h.b16 %v984
        %v4453 = vunpack.c.l.b16 %v985
        %v4454 = vunpack.c.h.b16 %v985
        %v4455 = vunpack.c.l.b16 %v986
        %v4456 = vunpack.c.h.b16 %v986
        %v4457 = vunpack.c.l.b16 %v987
        %v4458 = vunpack.c.h.b16 %v987
        %v4459 = vunpack.c.l.b16 %v988
        %v4460 = vunpack.c.h.b16 %v988
        %v4461 = vunpack.c.l.b16 %v989
        %v4462 = vunpack.c.h.b16 %v989
        %v4463 = vunpack.c.l.b16 %v990
        %v4464 = vunpack.c.h.b16 %v990
        %v4465 = vunpack.c.l.b16 %v991
        %v4466 = vunpack.c.h.b16 %v991
        %v4467 = vunpack.c.l.b16 %v992
        %v4468 = vunpack.c.h.b16 %v992
        %v4469 = vunpack.c.l.b16 %v993
        %v4470 = vunpack.c.h.b16 %v993
        %v4471 = vunpack.c.l.b16 %v994
        %v4472 = vunpack.c.h.b16 %v994
        %v4473 = vunpack.c.l.b16 %v995
        %v4474 = vunpack.c.h.b16 %v995
        %v4475 = vunpack.c.l.b16 %v996
        %v4476 = vunpack.c.h.b16 %v996
        %v4477 = vunpack.c.l.b16 %v997
        %v4478 = vunpack.c.h.b16 %v997
        %v4479 = vunpack.c.l.b16 %v998
        %v4480 = vunpack.c.h.b16 %v998
        %v4481 = vunpack.c.l.b16 %v999
        %v4482 = vunpack.c.h.b16 %v999
        %v4483 = vunpack.c.l.b16 %v1000
        %v4484 = vunpack.c.h.b16 %v1000
        %v4485 = vunpack.c.l.b16 %v1001
        %v4486 = vunpack.c.h.b16 %v1001
        %v4487 = vunpack.c.l.b16 %v1002
        %v4488 = vunpack.c.h.b16 %v1002
        %v4489 = vunpack.c.l.b16 %v1003
        %v4490 = vunpack.c.h.b16 %v1003
        %v4491 = vunpack.c.l.b16 %v1004
        %v4492 = vunpack.c.h.b16 %v1004
        %v4493 = vunpack.c.l.b16 %v1005
        %v4494 = vunpack.c.h.b16 %v1005
        %v4495 = vunpack.c.l.b16 %v1006
        %v4496 = vunpack.c.h.b16 %v1006
        %v4497 = vunpack.c.l.b16 %v1007
        %v4498 = vunpack.c.h.b16 %v1007
        %v4499 = vunpack.c.l.b16 %v1008
        %v4500 = vunpack.c.h.b16 %v1008
        %v4501 = vunpack.c.l.b16 %v1009
        %v4502 = vunpack.c.h.b16 %v1009
        %v4503 = vunpack.c.l.b16 %v1010
        %v4504 = vunpack.c.h.b16 %v1010
        %v4505 = vunpack.c.l.b16 %v1011
        %v4506 = vunpack.c.h.b16 %v1011
        %v4507 = vunpack.c.l.b16 %v1012
        %v4508 = vunpack.c.h.b16 %v1012
        %v4509 = vunpack.c.l.b16 %v1013
        %v4510 = vunpack.c.h.b16 %v1013
        %v4511 = vunpack.c.l.b16 %v1014
        %v4512 = vunpack.c.h.b16 %v1014
        %v4513 = vunpack.c.l.b16 %v1015
        %v4514 = vunpack.c.h.b16 %v1015
        %v4515 = vunpack.c.l.b16 %v1016
        %v4516 = vunpack.c.h.b16 %v1016
        %v4517 = vunpack.c.l.b16 %v1017
        %v4518 = vunpack.c.h.b16 %v1017
        %v4519 = vunpack.c.l.b16 %v1018
        %v4520 = vunpack.c.h.b16 %v1018
        %v4521 = vunpack.c.l.b16 %v1019
        %v4522 = vunpack.c.h.b16 %v1019
        %v4523 = vunpack.c.l.b16 %v1020
        %v4524 = vunpack.c.h.b16 %v1020
        %v4525 = vunpack.c.l.b16 %v1021
        %v4526 = vunpack.c.h.b16 %v1021
        %v4527 = vunpack.c.l.b16 %v1022
        %v4528 = vunpack.c.h.b16 %v1022
        %v4529 = vunpack.c.l.b16 %v1023
        %v4530 = vunpack.c.h.b16 %v1023
        %v4531 = vunpack.c.l.b16 %v1024
        %v4532 = vunpack.c.h.b16 %v1024
        %v4533 = vunpack.c.l.b16 %v1025
        %v4534 = vunpack.c.h.b16 %v1025
        %v4535 = vunpack.c.l.b16 %v1026
        %v4536 = vunpack.c.h.b16 %v1026
        %v4537 = vunpack.c.l.b16 %v1027
        %v4538 = vunpack.c.h.b16 %v1027
        %v4539 = vunpack.c.l.b16 %v1028
        %v4540 = vunpack.c.h.b16 %v1028
        %v4541 = vunpack.c.l.b16 %v1029
        %v4542 = vunpack.c.h.b16 %v1029
        %v4543 = vunpack.c.l.b16 %v1030
        %v4544 = vunpack.c.h.b16 %v1030
        %v4545 = vunpack.c.l.b16 %v1031
        %v4546 = vunpack.c.h.b16 %v1031
        %v4547 = vunpack.c.l.b16 %v1032
        %v4548 = vunpack.c.h.b16 %v1032
        %v4549 = vunpack.c.l.b16 %v1033
        %v4550 = vunpack.c.h.b16 %v1033
        %v4551 = vunpack.c.l.b16 %v1034
        %v4552 = vunpack.c.h.b16 %v1034
        %v4553 = vunpack.c.l.b16 %v1035
        %v4554 = vunpack.c.h.b16 %v1035
        %v4555 = vunpack.c.l.b16 %v1036
        %v4556 = vunpack.c.h.b16 %v1036
        %v4557 = vunpack.c.l.b16 %v1037
        %v4558 = vunpack.c.h.b16 %v1037
        %v4559 = vunpack.c.l.b16 %v1038
        %v4560 = vunpack.c.h.b16 %v1038
        %v4561 = vunpack.c.l.b16 %v1039
        %v4562 = vunpack.c.h.b16 %v1039
        %v4563 = vunpack.c.l.b16 %v1040
        %v4564 = vunpack.c.h.b16 %v1040
        %v4565 = vunpack.c.l.b16 %v1041
        %v4566 = vunpack.c.h.b16 %v1041
        %v4567 = vunpack.c.l.b16 %v1042
        %v4568 = vunpack.c.h.b16 %v1042
        %v4569 = vunpack.c.l.b16 %v1043
        %v4570 = vunpack.c.h.b16 %v1043
        %v4571 = vunpack.c.l.b16 %v1044
        %v4572 = vunpack.c.h.b16 %v1044
        %v4573 = vunpack.c.l.b16 %v1045
        %v4574 = vunpack.c.h.b16 %v1045
        %v4575 = vunpack.c.l.b16 %v1046
        %v4576 = vunpack.c.h.b16 %v1046
        %v4577 = vunpack.c.l.b16 %v1047
        %v4578 = vunpack.c.h.b16 %v1047
        %v4579 = vunpack.c.l.b16 %v1048
        %v4580 = vunpack.c.h.b16 %v1048
        %v4581 = vunpack.c.l.b16 %v1049
        %v4582 = vunpack.c.h.b16 %v1049
        %v4583 = vunpack.c.l.b16 %v1050
        %v4584 = vunpack.c.h.b16 %v1050
        %v4585 = vunpack.c.l.b16 %v1051
        %v4586 = vunpack.c.h.b16 %v1051
        %v4587 = vunpack.c.l.b16 %v1052
        %v4588 = vunpack.c.h.b16 %v1052
        %v4589 = vunpack.c.l.b16 %v1053
        %v4590 = vunpack.c.h.b16 %v1053
        %v4591 = vunpack.c.l.b16 %v1054
        %v4592 = vunpack.c.h.b16 %v1054
        %v4593 = vunpack.c.l.b16 %v1055
        %v4594 = vunpack.c.h.b16 %v1055
        %v4595 = vunpack.c.l.b16 %v1056
        %v4596 = vunpack.c.h.b16 %v1056
        %v4597 = vunpack.c.l.b16 %v1057
        %v4598 = vunpack.c.h.b16 %v1057
        %v4599 = vunpack.c.l.b16 %v1058
        %v4600 = vunpack.c.h.b16 %v1058
        %v4601 = vunpack.c.l.b16 %v1059
        %v4602 = vunpack.c.h.b16 %v1059
        %v4603 = vunpack.c.l.b16 %v1060
        %v4604 = vunpack.c.h.b16 %v1060
        %v4605 = vunpack.c.l.b16 %v1061
        %v4606 = vunpack.c.h.b16 %v1061
        %v4607 = vunpack.c.l.b16 %v1062
        %v4608 = vunpack.c.h.b16 %v1062
        %v4609 = vunpack.c.l.b16 %v1063
        %v4610 = vunpack.c.h.b16 %v1063
        %v4611 = vunpack.c.l.b16 %v1064
        %v4612 = vunpack.c.h.b16 %v1064
        %v4613 = vunpack.c.l.b16 %v1065
        %v4614 = vunpack.c.h.b16 %v1065
        %v4615 = vunpack.c.l.b16 %v1066
        %v4616 = vunpack.c.h.b16 %v1066
        %v4617 = vunpack.c.l.b16 %v1067
        %v4618 = vunpack.c.h.b16 %v1067
        %v4619 = vunpack.c.l.b16 %v1068
        %v4620 = vunpack.c.h.b16 %v1068
        %v4621 = vunpack.c.l.b16 %v1069
        %v4622 = vunpack.c.h.b16 %v1069
        %v4623 = vunpack.c.l.b16 %v1070
        %v4624 = vunpack.c.h.b16 %v1070
        %v4625 = vunpack.c.l.b16 %v1071
        %v4626 = vunpack.c.h.b16 %v1071
        %v4627 = vunpack.c.l.b16 %v1072
        %v4628 = vunpack.c.h.b16 %v1072
        %v4629 = vunpack.c.l.b16 %v1073
        %v4630 = vunpack.c.h.b16 %v1073
        %v4631 = vunpack.c.l.b16 %v1074
        %v4632 = vunpack.c.h.b16 %v1074
        %v4633 = vunpack.c.l.b16 %v1075
        %v4634 = vunpack.c.h.b16 %v1075
        %v4635 = vunpack.c.l.b16 %v1076
        %v4636 = vunpack.c.h.b16 %v1076
        %v4637 = vunpack.c.l.b16 %v1077
        %v4638 = vunpack.c.h.b16 %v1077
        %v4639 = vunpack.c.l.b16 %v1078
        %v4640 = vunpack.c.h.b16 %v1078
        %v4641 = vunpack.c.l.b16 %v1079
        %v4642 = vunpack.c.h.b16 %v1079
        %v4643 = vunpack.c.l.b16 %v1080
        %v4644 = vunpack.c.h.b16 %v1080
        %v4645 = vunpack.c.l.b16 %v1081
        %v4646 = vunpack.c.h.b16 %v1081
        %v4647 = vunpack.c.l.b16 %v1082
        %v4648 = vunpack.c.h.b16 %v1082
        %v4649 = vunpack.c.l.b16 %v1083
        %v4650 = vunpack.c.h.b16 %v1083
        %v4651 = vunpack.c.l.b16 %v1084
        %v4652 = vunpack.c.h.b16 %v1084
        %v4653 = vunpack.c.l.b16 %v1085
        %v4654 = vunpack.c.h.b16 %v1085
        %v4655 = vunpack.c.l.b16 %v1086
        %v4656 = vunpack.c.h.b16 %v1086
        %v4657 = vunpack.c.l.b16 %v1087
        %v4658 = vunpack.c.h.b16 %v1087
        %v4659 = vunpack.c.l.b16 %v1088
        %v4660 = vunpack.c.h.b16 %v1088
        %v4661 = vunpack.c.l.b16 %v1089
        %v4662 = vunpack.c.h.b16 %v1089
        %v4663 = vunpack.c.l.b16 %v1090
        %v4664 = vunpack.c.h.b16 %v1090
        %v4665 = vunpack.c.l.b16 %v1091
        %v4666 = vunpack.c.h.b16 %v1091
        %v4667 = vunpack.c.l.b16 %v1092
        %v4668 = vunpack.c.h.b16 %v1092
        %v4669 = vunpack.c.l.b16 %v1093
        %v4670 = vunpack.c.h.b16 %v1093
        %v4671 = vunpack.c.l.b16 %v1094
        %v4672 = vunpack.c.h.b16 %v1094
        %v4673 = vunpack.c.l.b16 %v1095
        %v4674 = vunpack.c.h.b16 %v1095
        %v4675 = vunpack.c.l.b16 %v1096
        %v4676 = vunpack.c.h.b16 %v1096
        %v4677 = vunpack.c.l.b16 %v1097
        %v4678 = vunpack.c.h.b16 %v1097
        %v4679 = vunpack.c.l.b16 %v1098
        %v4680 = vunpack.c.h.b16 %v1098
        %v4681 = vunpack.c.l.b16 %v1099
        %v4682 = vunpack.c.h.b16 %v1099
        %v4683 = vunpack.c.l.b16 %v1100
        %v4684 = vunpack.c.h.b16 %v1100
        %v4685 = vunpack.c.l.b16 %v1101
        %v4686 = vunpack.c.h.b16 %v1101
        %v4687 = vunpack.c.l.b16 %v1102
        %v4688 = vunpack.c.h.b16 %v1102
        %v4689 = vunpack.c.l.b16 %v1103
        %v4690 = vunpack.c.h.b16 %v1103
        %v4691 = vunpack.c.l.b16 %v1104
        %v4692 = vunpack.c.h.b16 %v1104
        %v4693 = vunpack.c.l.b16 %v1105
        %v4694 = vunpack.c.h.b16 %v1105
        %v4695 = vunpack.c.l.b16 %v1106
        %v4696 = vunpack.c.h.b16 %v1106
        %v4697 = vunpack.c.l.b16 %v1107
        %v4698 = vunpack.c.h.b16 %v1107
        %v4699 = vunpack.c.l.b16 %v1108
        %v4700 = vunpack.c.h.b16 %v1108
        %v4701 = vunpack.c.l.b16 %v1109
        %v4702 = vunpack.c.h.b16 %v1109
        %v4703 = vunpack.c.l.b16 %v1110
        %v4704 = vunpack.c.h.b16 %v1110
        %v4705 = vunpack.c.l.b16 %v1111
        %v4706 = vunpack.c.h.b16 %v1111
        %v4707 = vunpack.c.l.b16 %v1112
        %v4708 = vunpack.c.h.b16 %v1112
        %v4709 = vunpack.c.l.b16 %v1113
        %v4710 = vunpack.c.h.b16 %v1113
        %v4711 = vunpack.c.l.b16 %v1114
        %v4712 = vunpack.c.h.b16 %v1114
        %v4713 = vunpack.c.l.b16 %v1115
        %v4714 = vunpack.c.h.b16 %v1115
        %v4715 = vunpack.c.l.b16 %v1116
        %v4716 = vunpack.c.h.b16 %v1116
        %v4717 = vunpack.c.l.b16 %v1117
        %v4718 = vunpack.c.h.b16 %v1117
        %v4719 = vunpack.c.l.b16 %v1118
        %v4720 = vunpack.c.h.b16 %v1118
        %v4721 = vunpack.c.l.b16 %v1119
        %v4722 = vunpack.c.h.b16 %v1119
        %v4723 = vunpack.c.l.b16 %v1120
        %v4724 = vunpack.c.h.b16 %v1120
        %v4725 = vunpack.c.l.b16 %v1121
        %v4726 = vunpack.c.h.b16 %v1121
        %v4727 = vunpack.c.l.b16 %v1122
        %v4728 = vunpack.c.h.b16 %v1122
        %v4729 = vunpack.c.l.b16 %v1123
        %v4730 = vunpack.c.h.b16 %v1123
        %v4731 = vunpack.c.l.b16 %v1124
        %v4732 = vunpack.c.h.b16 %v1124
        %v4733 = vunpack.c.l.b16 %v1125
        %v4734 = vunpack.c.h.b16 %v1125
        %v4735 = vunpack.c.l.b16 %v1126
        %v4736 = vunpack.c.h.b16 %v1126
        %v4737 = vunpack.c.l.b16 %v1127
        %v4738 = vunpack.c.h.b16 %v1127
        %v4739 = vunpack.c.l.b16 %v1128
        %v4740 = vunpack.c.h.b16 %v1128
        %v4741 = vunpack.c.l.b16 %v1129
        %v4742 = vunpack.c.h.b16 %v1129
        %v4743 = vunpack.c.l.b16 %v1130
        %v4744 = vunpack.c.h.b16 %v1130
        %v4745 = vunpack.c.l.b16 %v1131
        %v4746 = vunpack.c.h.b16 %v1131
        %v4747 = vunpack.c.l.b16 %v1132
        %v4748 = vunpack.c.h.b16 %v1132
        %v4749 = vunpack.c.l.b16 %v1133
        %v4750 = vunpack.c.h.b16 %v1133
        %v4751 = vunpack.c.l.b16 %v1134
        %v4752 = vunpack.c.h.b16 %v1134
        %v4753 = vunpack.c.l.b16 %v1135
        %v4754 = vunpack.c.h.b16 %v1135
        %v4755 = vunpack.c.l.b16 %v1136
        %v4756 = vunpack.c.h.b16 %v1136
        %v4757 = vunpack.c.l.b16 %v1137
        %v4758 = vunpack.c.h.b16 %v1137
        %v4759 = vunpack.c.l.b16 %v1138
        %v4760 = vunpack.c.h.b16 %v1138
        %v4761 = vunpack.c.l.b16 %v1139
        %v4762 = vunpack.c.h.b16 %v1139
        %v4763 = vunpack.c.l.b16 %v1140
        %v4764 = vunpack.c.h.b16 %v1140
        %v4765 = vunpack.c.l.b16 %v1141
        %v4766 = vunpack.c.h.b16 %v1141
        %v4767 = vunpack.c.l.b16 %v1142
        %v4768 = vunpack.c.h.b16 %v1142
        %v4769 = vunpack.c.l.b16 %v1143
        %v4770 = vunpack.c.h.b16 %v1143
        %v4771 = vunpack.c.l.b16 %v1144
        %v4772 = vunpack.c.h.b16 %v1144
        %v4773 = vunpack.c.l.b16 %v1145
        %v4774 = vunpack.c.h.b16 %v1145
        %v4775 = vunpack.c.l.b16 %v1146
        %v4776 = vunpack.c.h.b16 %v1146
        %v4777 = vunpack.c.l.b16 %v1147
        %v4778 = vunpack.c.h.b16 %v1147
        %v4779 = vunpack.c.l.b16 %v1148
        %v4780 = vunpack.c.h.b16 %v1148
        %v4781 = vunpack.c.l.b16 %v1149
        %v4782 = vunpack.c.h.b16 %v1149
        %v4783 = vunpack.c.l.b16 %v1150
        %v4784 = vunpack.c.h.b16 %v1150
        %v4785 = vunpack.c.l.b16 %v1151
        %v4786 = vunpack.c.h.b16 %v1151
        %v4787 = vunpack.c.l.b16 %v1152
        %v4788 = vunpack.c.h.b16 %v1152
        %v4789 = vunpack.c.l.b16 %v1153
        %v4790 = vunpack.c.h.b16 %v1153
        %v4791 = vunpack.c.l.b16 %v1154
        %v4792 = vunpack.c.h.b16 %v1154
        %v4793 = vunpack.c.l.b16 %v1155
        %v4794 = vunpack.c.h.b16 %v1155
        %v4795 = vunpack.c.l.b16 %v1156
        %v4796 = vunpack.c.h.b16 %v1156
        %v4797 = vunpack.c.l.b16 %v1157
        %v4798 = vunpack.c.h.b16 %v1157
        %v4799 = vunpack.c.l.b16 %v1158
        %v4800 = vunpack.c.h.b16 %v1158
        %v4801 = vunpack.c.l.b16 %v1159
        %v4802 = vunpack.c.h.b16 %v1159
        %v4803 = vunpack.c.l.b16 %v1160
        %v4804 = vunpack.c.h.b16 %v1160
        %v4805 = vunpack.c.l.b16 %v1161
        %v4806 = vunpack.c.h.b16 %v1161
        %v4807 = vunpack.c.l.b16 %v1162
        %v4808 = vunpack.c.h.b16 %v1162
        %v4809 = vunpack.c.l.b16 %v1163
        %v4810 = vunpack.c.h.b16 %v1163
        %v4811 = vunpack.c.l.b16 %v1164
        %v4812 = vunpack.c.h.b16 %v1164
        %v4813 = vunpack.c.l.b16 %v1165
        %v4814 = vunpack.c.h.b16 %v1165
        %v4815 = vunpack.c.l.b16 %v1166
        %v4816 = vunpack.c.h.b16 %v1166
        %v4817 = vunpack.c.l.b16 %v1167
        %v4818 = vunpack.c.h.b16 %v1167
        %v4819 = vunpack.c.l.b16 %v1168
        %v4820 = vunpack.c.h.b16 %v1168
        %v4821 = vunpack.c.l.b16 %v1169
        %v4822 = vunpack.c.h.b16 %v1169
        %v4823 = vunpack.c.l.b16 %v1170
        %v4824 = vunpack.c.h.b16 %v1170
        %v4825 = vunpack.c.l.b16 %v1171
        %v4826 = vunpack.c.h.b16 %v1171
        %v4827 = vunpack.c.l.b16 %v1172
        %v4828 = vunpack.c.h.b16 %v1172
        %v4829 = vunpack.c.l.b16 %v1173
        %v4830 = vunpack.c.h.b16 %v1173
        %v4831 = vunpack.c.l.b16 %v1174
        %v4832 = vunpack.c.h.b16 %v1174
        %v4833 = vunpack.c.l.b16 %v1175
        %v4834 = vunpack.c.h.b16 %v1175
        %v4835 = vunpack.c.l.b16 %v1176
        %v4836 = vunpack.c.h.b16 %v1176
        %v4837 = vunpack.c.l.b16 %v1177
        %v4838 = vunpack.c.h.b16 %v1177
        %v4839 = vunpack.c.l.b16 %v1178
        %v4840 = vunpack.c.h.b16 %v1178
        %v4841 = vunpack.c.l.b16 %v1179
        %v4842 = vunpack.c.h.b16 %v1179
        %v4843 = vunpack.c.l.b16 %v1180
        %v4844 = vunpack.c.h.b16 %v1180
        %v4845 = vunpack.c.l.b16 %v1181
        %v4846 = vunpack.c.h.b16 %v1181
        %v4847 = vunpack.c.l.b16 %v1182
        %v4848 = vunpack.c.h.b16 %v1182
        %v4849 = vunpack.c.l.b16 %v1183
        %v4850 = vunpack.c.h.b16 %v1183
        %v4851 = vunpack.c.l.b16 %v1184
        %v4852 = vunpack.c.h.b16 %v1184
        %v4853 = vunpack.c.l.b16 %v1185
        %v4854 = vunpack.c.h.b16 %v1185
        %v4855 = vunpack.c.l.b16 %v1186
        %v4856 = vunpack.c.h.b16 %v1186
        %v4857 = vunpack.c.l.b16 %v1187
        %v4858 = vunpack.c.h.b16 %v1187
        %v4859 = vunpack.c.l.b16 %v1188
        %v4860 = vunpack.c.h.b16 %v1188
        %v4861 = vunpack.c.l.b16 %v1189
        %v4862 = vunpack.c.h.b16 %v1189
        %v4863 = vunpack.c.l.b16 %v1190
        %v4864 = vunpack.c.h.b16 %v1190
        %v4865 = vunpack.c.l.b16 %v1191
        %v4866 = vunpack.c.h.b16 %v1191
        %v4867 = vunpack.c.l.b16 %v1192
        %v4868 = vunpack.c.h.b16 %v1192
        %v4869 = vunpack.c.l.b16 %v1193
        %v4870 = vunpack.c.h.b16 %v1193
        %v4871 = vunpack.c.l.b16 %v1194
        %v4872 = vunpack.c.h.b16 %v1194
        %v4873 = vunpack.c.l.b16 %v1195
        %v4874 = vunpack.c.h.b16 %v1195
        %v4875 = vunpack.c.l.b16 %v1196
        %v4876 = vunpack.c.h.b16 %v1196
        %v4877 = vunpack.c.l.b16 %v1197
        %v4878 = vunpack.c.h.b16 %v1197
        %v4879 = vunpack.c.l.b16 %v1198
        %v4880 = vunpack.c.h.b16 %v1198
        %v4881 = vunpack.c.l.b16 %v1199
        %v4882 = vunpack.c.h.b16 %v1199
        %v4883 = vunpack.c.l.b16 %v1200
        %v4884 = vunpack.c.h.b16 %v1200
        %v4885 = vunpack.c.l.b16 %v1201
        %v4886 = vunpack.c.h.b16 %v1201
        %v4887 = vunpack.c.l.b16 %v1202
        %v4888 = vunpack.c.h.b16 %v1202
        %v4889 = vunpack.c.l.b16 %v1203
        %v4890 = vunpack.c.h.b16 %v1203
        %v4891 = vunpack.c.l.b16 %v1204
        %v4892 = vunpack.c.h.b16 %v1204
        %v4893 = vunpack.c.l.b16 %v1205
        %v4894 = vunpack.c.h.b16 %v1205
        %v4895 = vunpack.c.l.b16 %v1206
        %v4896 = vunpack.c.h.b16 %v1206
        %v4897 = vunpack.c.l.b16 %v1207
        %v4898 = vunpack.c.h.b16 %v1207
        %v4899 = vunpack.c.l.b16 %v1208
        %v4900 = vunpack.c.h.b16 %v1208
        %v4901 = vunpack.c.l.b16 %v1209
        %v4902 = vunpack.c.h.b16 %v1209
        %v4903 = vunpack.c.l.b16 %v1210
        %v4904 = vunpack.c.h.b16 %v1210
        %v4905 = vunpack.c.l.b16 %v1211
        %v4906 = vunpack.c.h.b16 %v1211
        %v4907 = vunpack.c.l.b16 %v1212
        %v4908 = vunpack.c.h.b16 %v1212
        %v4909 = vunpack.c.l.b16 %v1213
        %v4910 = vunpack.c.h.b16 %v1213
        %v4911 = vunpack.c.l.b16 %v1214
        %v4912 = vunpack.c.h.b16 %v1214
        %v4913 = vunpack.c.l.b16 %v1215
        %v4914 = vunpack.c.h.b16 %v1215
        %v4915 = vunpack.c.l.b16 %v1216
        %v4916 = vunpack.c.h.b16 %v1216
        %v4917 = vunpack.c.l.b16 %v1217
        %v4918 = vunpack.c.h.b16 %v1217
        %v4919 = vunpack.c.l.b16 %v1218
        %v4920 = vunpack.c.h.b16 %v1218
        %v4921 = vunpack.c.l.b16 %v1219
        %v4922 = vunpack.c.h.b16 %v1219
        %v4923 = vunpack.c.l.b16 %v1220
        %v4924 = vunpack.c.h.b16 %v1220
        %v4925 = vunpack.c.l.b16 %v1221
        %v4926 = vunpack.c.h.b16 %v1221
        %v4927 = vunpack.c.l.b16 %v1222
        %v4928 = vunpack.c.h.b16 %v1222
        %v4929 = vunpack.c.l.b16 %v1223
        %v4930 = vunpack.c.h.b16 %v1223
        %v4931 = vunpack.c.l.b16 %v1224
        %v4932 = vunpack.c.h.b16 %v1224
        %v4933 = vunpack.c.l.b16 %v1225
        %v4934 = vunpack.c.h.b16 %v1225
        %v4935 = vunpack.c.l.b16 %v1226
        %v4936 = vunpack.c.h.b16 %v1226
        %v4937 = vunpack.c.l.b16 %v1227
        %v4938 = vunpack.c.h.b16 %v1227
        %v4939 = vunpack.c.l.b16 %v1228
        %v4940 = vunpack.c.h.b16 %v1228
        %v4941 = vunpack.c.l.b16 %v1229
        %v4942 = vunpack.c.h.b16 %v1229
        %v4943 = vunpack.c.l.b16 %v1230
        %v4944 = vunpack.c.h.b16 %v1230
        %v4945 = vunpack.c.l.b16 %v1231
        %v4946 = vunpack.c.h.b16 %v1231
        %v4947 = vunpack.c.l.b16 %v1232
        %v4948 = vunpack.c.h.b16 %v1232
        %v4949 = vunpack.c.l.b16 %v1233
        %v4950 = vunpack.c.h.b16 %v1233
        %v4951 = vunpack.c.l.b16 %v1234
        %v4952 = vunpack.c.h.b16 %v1234
        %v4953 = vunpack.c.l.b16 %v1235
        %v4954 = vunpack.c.h.b16 %v1235
        %v4955 = vunpack.c.l.b16 %v1236
        %v4956 = vunpack.c.h.b16 %v1236
        %v4957 = vunpack.c.l.b16 %v1237
        %v4958 = vunpack.c.h.b16 %v1237
        %v4959 = vunpack.c.l.b16 %v1238
        %v4960 = vunpack.c.h.b16 %v1238
        %v4961 = vunpack.c.l.b16 %v1239
        %v4962 = vunpack.c.h.b16 %v1239
        %v4963 = vunpack.c.l.b16 %v1240
        %v4964 = vunpack.c.h.b16 %v1240
        %v4965 = vunpack.c.l.b16 %v1241
        %v4966 = vunpack.c.h.b16 %v1241
        %v4967 = vunpack.c.l.b16 %v1242
        %v4968 = vunpack.c.h.b16 %v1242
        %v4969 = vunpack.c.l.b16 %v1243
        %v4970 = vunpack.c.h.b16 %v1243
        %v4971 = vunpack.c.l.b16 %v1244
        %v4972 = vunpack.c.h.b16 %v1244
        %v4973 = vunpack.c.l.b16 %v1245
        %v4974 = vunpack.c.h.b16 %v1245
        %v4975 = vunpack.c.l.b16 %v1246
        %v4976 = vunpack.c.h.b16 %v1246
        %v4977 = vunpack.c.l.b16 %v1247
        %v4978 = vunpack.c.h.b16 %v1247
        %v4979 = vunpack.c.l.b16 %v1248
        %v4980 = vunpack.c.h.b16 %v1248
        %v4981 = vunpack.c.l.b16 %v1249
        %v4982 = vunpack.c.h.b16 %v1249
        %v4983 = vunpack.c.l.b16 %v1250
        %v4984 = vunpack.c.h.b16 %v1250
        %v4985 = vunpack.c.l.b16 %v1251
        %v4986 = vunpack.c.h.b16 %v1251
        %v4987 = vunpack.c.l.b16 %v1252
        %v4988 = vunpack.c.h.b16 %v1252
        %v4989 = vunpack.c.l.b16 %v1253
        %v4990 = vunpack.c.h.b16 %v1253
        %v4991 = vunpack.c.l.b16 %v1254
        %v4992 = vunpack.c.h.b16 %v1254
        %v4993 = vunpack.c.l.b16 %v1255
        %v4994 = vunpack.c.h.b16 %v1255
        %v4995 = vunpack.c.l.b16 %v1256
        %v4996 = vunpack.c.h.b16 %v1256
        %v4997 = vunpack.c.l.b16 %v1257
        %v4998 = vunpack.c.h.b16 %v1257
        %v4999 = vunpack.c.l.b16 %v1258
        %v5000 = vunpack.c.h.b16 %v1258
        %v5001 = vunpack.c.l.b16 %v1259
        %v5002 = vunpack.c.h.b16 %v1259
        %v5003 = vunpack.c.l.b16 %v1260
        %v5004 = vunpack.c.h.b16 %v1260
        %v5005 = vunpack.c.l.b16 %v1261
        %v5006 = vunpack.c.h.b16 %v1261
        %v5007 = vunpack.c.l.b16 %v1262
        %v5008 = vunpack.c.h.b16 %v1262
        %v5009 = vunpack.c.l.b16 %v1263
        %v5010 = vunpack.c.h.b16 %v1263
        %v5011 = vunpack.c.l.b16 %v1264
        %v5012 = vunpack.c.h.b16 %v1264
        %v5013 = vunpack.c.l.b16 %v1265
        %v5014 = vunpack.c.h.b16 %v1265
        %v5015 = vunpack.c.l.b16 %v1266
        %v5016 = vunpack.c.h.b16 %v1266
        %v5017 = vunpack.c.l.b16 %v1267
        %v5018 = vunpack.c.h.b16 %v1267
        %v5019 = vunpack.c.l.b16 %v1268
        %v5020 = vunpack.c.h.b16 %v1268
        %v5021 = vunpack.c.l.b16 %v1269
        %v5022 = vunpack.c.h.b16 %v1269
        %v5023 = vunpack.c.l.b16 %v1270
        %v5024 = vunpack.c.h.b16 %v1270
        %v5025 = vunpack.c.l.b16 %v1271
        %v5026 = vunpack.c.h.b16 %v1271
        %v5027 = vunpack.c.l.b16 %v1272
        %v5028 = vunpack.c.h.b16 %v1272
        %v5029 = vunpack.c.l.b16 %v1273
        %v5030 = vunpack.c.h.b16 %v1273
        %v5031 = vunpack.c.l.b16 %v1274
        %v5032 = vunpack.c.h.b16 %v1274
        %v5033 = vunpack.c.l.b16 %v1275
        %v5034 = vunpack.c.h.b16 %v1275
        %v5035 = vunpack.c.l.b16 %v1276
        %v5036 = vunpack.c.h.b16 %v1276
        %v5037 = vunpack.c.l.b16 %v1277
        %v5038 = vunpack.c.h.b16 %v1277
        %v5039 = vunpack.c.l.b16 %v1278
        %v5040 = vunpack.c.h.b16 %v1278
        %v5041 = vunpack.c.l.b16 %v1279
        %v5042 = vunpack.c.h.b16 %v1279
        %v5043 = vunpack.c.l.b16 %v1280
        %v5044 = vunpack.c.h.b16 %v1280
        %v5045 = vunpack.c.l.b16 %v1281
        %v5046 = vunpack.c.h.b16 %v1281
        %v5047 = vunpack.c.l.b16 %v1282
        %v5048 = vunpack.c.h.b16 %v1282
        %v5049 = vunpack.c.l.b16 %v1283
        %v5050 = vunpack.c.h.b16 %v1283
        %v5051 = vunpack.c.l.b16 %v1284
        %v5052 = vunpack.c.h.b16 %v1284
        %v5053 = vunpack.c.l.b16 %v1285
        %v5054 = vunpack.c.h.b16 %v1285
        %v5055 = vunpack.c.l.b16 %v1286
        %v5056 = vunpack.c.h.b16 %v1286
        %v5057 = vunpack.c.l.b16 %v1287
        %v5058 = vunpack.c.h.b16 %v1287
        %v5059 = vunpack.c.l.b16 %v1288
        %v5060 = vunpack.c.h.b16 %v1288
        %v5061 = vunpack.c.l.b16 %v1289
        %v5062 = vunpack.c.h.b16 %v1289
        %v5063 = vunpack.c.l.b16 %v1290
        %v5064 = vunpack.c.h.b16 %v1290
        %v5065 = vunpack.c.l.b16 %v1291
        %v5066 = vunpack.c.h.b16 %v1291
        %v5067 = vunpack.c.l.b16 %v1292
        %v5068 = vunpack.c.h.b16 %v1292
        %v5069 = vunpack.c.l.b16 %v1293
        %v5070 = vunpack.c.h.b16 %v1293
        %v5071 = vunpack.c.l.b16 %v1294
        %v5072 = vunpack.c.h.b16 %v1294
        %v5073 = vunpack.c.l.b16 %v1295
        %v5074 = vunpack.c.h.b16 %v1295
        %v5075 = vunpack.c.l.b16 %v1296
        %v5076 = vunpack.c.h.b16 %v1296
        %v5077 = vunpack.c.l.b16 %v1297
        %v5078 = vunpack.c.h.b16 %v1297
        %v5079 = vunpack.c.l.b16 %v1298
        %v5080 = vunpack.c.h.b16 %v1298
        %v5081 = vunpack.c.l.b16 %v1299
        %v5082 = vunpack.c.h.b16 %v1299
        %v5083 = vunpack.c.l.b16 %v1300
        %v5084 = vunpack.c.h.b16 %v1300
        %v5085 = vunpack.c.l.b16 %v1301
        %v5086 = vunpack.c.h.b16 %v1301
        %v5087 = vunpack.c.l.b16 %v1302
        %v5088 = vunpack.c.h.b16 %v1302
        %v5089 = vunpack.c.l.b16 %v1303
        %v5090 = vunpack.c.h.b16 %v1303
        %v5091 = vunpack.c.l.b16 %v1304
        %v5092 = vunpack.c.h.b16 %v1304
        %v5093 = vunpack.c.l.b16 %v1305
        %v5094 = vunpack.c.h.b16 %v1305
        %v5095 = vunpack.c.l.b16 %v1306
        %v5096 = vunpack.c.h.b16 %v1306
        %v5097 = vunpack.c.l.b16 %v1307
        %v5098 = vunpack.c.h.b16 %v1307
        %v5099 = vunpack.c.l.b16 %v1308
        %v5100 = vunpack.c.h.b16 %v1308
        %v5101 = vunpack.c.l.b16 %v1309
        %v5102 = vunpack.c.h.b16 %v1309
        %v5103 = vunpack.c.l.b16 %v1310
        %v5104 = vunpack.c.h.b16 %v1310
        %v5105 = vunpack.c.l.b16 %v1311
        %v5106 = vunpack.c.h.b16 %v1311
        %v5107 = vunpack.c.l.b16 %v1312
        %v5108 = vunpack.c.h.b16 %v1312
        %v5109 = vunpack.c.l.b16 %v1313
        %v5110 = vunpack.c.h.b16 %v1313
        %v5111 = vunpack.c.l.b16 %v1314
        %v5112 = vunpack.c.h.b16 %v1314
        %v5113 = vunpack.c.l.b16 %v1315
        %v5114 = vunpack.c.h.b16 %v1315
        %v5115 = vunpack.c.l.b16 %v1316
        %v5116 = vunpack.c.h.b16 %v1316
        %v5117 = vunpack.c.l.b16 %v1317
        %v5118 = vunpack.c.h.b16 %v1317
        %v5119 = vunpack.c.l.b16 %v1318
        %v5120 = vunpack.c.h.b16 %v1318
        %v5121 = vunpack.c.l.b16 %v1319
        %v5122 = vunpack.c.h.b16 %v1319
        %v5123 = vunpack.c.l.b16 %v1320
        %v5124 = vunpack.c.h.b16 %v1320
        %v5125 = vunpack.c.l.b16 %v1321
        %v5126 = vunpack.c.h.b16 %v1321
        %v5127 = vunpack.c.l.b16 %v1322
        %v5128 = vunpack.c.h.b16 %v1322
        %v5129 = vunpack.c.l.b16 %v1323
        %v5130 = vunpack.c.h.b16 %v1323
        %v5131 = vunpack.c.l.b16 %v1324
        %v5132 = vunpack.c.h.b16 %v1324
        %v5133 = vunpack.c.l.b16 %v1325
        %v5134 = vunpack.c.h.b16 %v1325
        %v5135 = vunpack.c.l.b16 %v1326
        %v5136 = vunpack.c.h.b16 %v1326
        %v5137 = vunpack.c.l.b16 %v1327
        %v5138 = vunpack.c.h.b16 %v1327
        %v5139 = vunpack.c.l.b16 %v1328
        %v5140 = vunpack.c.h.b16 %v1328
        %v5141 = vunpack.c.l.b16 %v1329
        %v5142 = vunpack.c.h.b16 %v1329
        %v5143 = vunpack.c.l.b16 %v1330
        %v5144 = vunpack.c.h.b16 %v1330
        %v5145 = vunpack.c.l.b16 %v1331
        %v5146 = vunpack.c.h.b16 %v1331
        %v5147 = vunpack.c.l.b16 %v1332
        %v5148 = vunpack.c.h.b16 %v1332
        %v5149 = vunpack.c.l.b16 %v1333
        %v5150 = vunpack.c.h.b16 %v1333
        %v5151 = vunpack.c.l.b16 %v1334
        %v5152 = vunpack.c.h.b16 %v1334
        %v5153 = vunpack.c.l.b16 %v1335
        %v5154 = vunpack.c.h.b16 %v1335
        %v5155 = vunpack.c.l.b16 %v1336
        %v5156 = vunpack.c.h.b16 %v1336
        %v5157 = vunpack.c.l.b16 %v1337
        %v5158 = vunpack.c.h.b16 %v1337
        %v5159 = vunpack.c.l.b16 %v1338
        %v5160 = vunpack.c.h.b16 %v1338
        %v5161 = vunpack.c.l.b16 %v1339
        %v5162 = vunpack.c.h.b16 %v1339
        %v5163 = vunpack.c.l.b16 %v1340
        %v5164 = vunpack.c.h.b16 %v1340
        %v5165 = vunpack.c.l.b16 %v1341
        %v5166 = vunpack.c.h.b16 %v1341
        %v5167 = vunpack.c.l.b16 %v1342
        %v5168 = vunpack.c.h.b16 %v1342
        %v5169 = vunpack.c.l.b16 %v1343
        %v5170 = vunpack.c.h.b16 %v1343
        %v5171 = vunpack.c.l.b16 %v1344
        %v5172 = vunpack.c.h.b16 %v1344
        %v5173 = vpack.c.b16 %v3063, %v3061
        %v5174 = vpack.c.b16 %v3064, %v3062
        %v5175 = vpack.c.b16 %v3067, %v3065
        %v5176 = vpack.c.b16 %v3068, %v3066
        %v5177 = vpack.c.b16 %v3071, %v3069
        %v5178 = vpack.c.b16 %v3072, %v3070
        %v5179 = vpack.c.b16 %v3075, %v3073
        %v5180 = vpack.c.b16 %v3076, %v3074
        %v5181 = vpack.c.b16 %v3079, %v3077
        %v5182 = vpack.c.b16 %v3080, %v3078
        %v5183 = vpack.c.b16 %v3083, %v3081
        %v5184 = vpack.c.b16 %v3084, %v3082
        %v5185 = vpack.c.b16 %v3087, %v3085
        %v5186 = vpack.c.b16 %v3088, %v3086
        %v5187 = vpack.c.b16 %v3091, %v3089
        %v5188 = vpack.c.b16 %v3092, %v3090
        %v5189 = vpack.c.b16 %v3095, %v3093
        %v5190 = vpack.c.b16 %v3096, %v3094
        %v5191 = vpack.c.b16 %v3099, %v3097
        %v5192 = vpack.c.b16 %v3100, %v3098
        %v5193 = vpack.c.b16 %v3103, %v3101
        %v5194 = vpack.c.b16 %v3104, %v3102
        %v5195 = vpack.c.b16 %v3107, %v3105
        %v5196 = vpack.c.b16 %v3108, %v3106
        %v5197 = vpack.c.b16 %v3111, %v3109
        %v5198 = vpack.c.b16 %v3112, %v3110
        %v5199 = vpack.c.b16 %v3115, %v3113
        %v5200 = vpack.c.b16 %v3116, %v3114
        %v5201 = vpack.c.b16 %v3119, %v3117
        %v5202 = vpack.c.b16 %v3120, %v3118
        %v5203 = vpack.c.b16 %v3123, %v3121
        %v5204 = vpack.c.b16 %v3124, %v3122
        %v5205 = vpack.c.b16 %v3127, %v3125
        %v5206 = vpack.c.b16 %v3128, %v3126
        %v5207 = vpack.c.b16 %v3131, %v3129
        %v5208 = vpack.c.b16 %v3132, %v3130
        %v5209 = vpack.c.b16 %v3135, %v3133
        %v5210 = vpack.c.b16 %v3136, %v3134
        %v5211 = vpack.c.b16 %v3139, %v3137
        %v5212 = vpack.c.b16 %v3140, %v3138
        %v5213 = vpack.c.b16 %v3143, %v3141
        %v5214 = vpack.c.b16 %v3144, %v3142
        %v5215 = vpack.c.b16 %v3147, %v3145
        %v5216 = vpack.c.b16 %v3148, %v3146
        %v5217 = vpack.c.b16 %v3151, %v3149
        %v5218 = vpack.c.b16 %v3152, %v3150
        %v5219 = vpack.c.b16 %v3155, %v3153
        %v5220 = vpack.c.b16 %v3156, %v3154
        %v5221 = vpack.c.b16 %v3159, %v3157
        %v5222 = vpack.c.b16 %v3160, %v3158
        %v5223 = vpack.c.b16 %v3163, %v3161
        %v5224 = vpack.c.b16 %v3164, %v3162
        %v5225 = vpack.c.b16 %v3167, %v3165
        %v5226 = vpack.c.b16 %v3168, %v3166
        %v5227 = vpack.c.b16 %v3171, %v3169
        %v5228 = vpack.c.b16 %v3172, %v3170
        %v5229 = vpack.c.b16 %v3175, %v3173
        %v5230 = vpack.c.b16 %v3176, %v3174
        %v5231 = vpack.c.b16 %v3179, %v3177
        %v5232 = vpack.c.b16 %v3180, %v3178
        %v5233 = vpack.c.b16 %v3183, %v3181
        %v5234 = vpack.c.b16 %v3184, %v3182
        %v5235 = vpack.c.b16 %v3187, %v3185
        %v5236 = vpack.c.b16 %v3188, %v3186
        %v5237 = vpack.c.b16 %v3191, %v3189
        %v5238 = vpack.c.b16 %v3192, %v3190
        %v5239 = vpack.c.b16 %v3195, %v3193
        %v5240 = vpack.c.b16 %v3196, %v3194
        %v5241 = vpack.c.b16 %v3199, %v3197
        %v5242 = vpack.c.b16 %v3200, %v3198
        %v5243 = vpack.c.b16 %v3203, %v3201
        %v5244 = vpack.c.b16 %v3204, %v3202
        %v5245 = vpack.c.b16 %v3207, %v3205
        %v5246 = vpack.c.b16 %v3208, %v3206
        %v5247 = vpack.c.b16 %v3211, %v3209
        %v5248 = vpack.c.b16 %v3212, %v3210
        %v5249 = vpack.c.b16 %v3215, %v3213
        %v5250 = vpack.c.b16 %v3216, %v3214
        %v5251 = vpack.c.b16 %v3219, %v3217
        %v5252 = vpack.c.b16 %v3220, %v3218
        %v5253 = vpack.c.b16 %v3223, %v3221
        %v5254 = vpack.c.b16 %v3224, %v3222
        %v5255 = vpack.c.b16 %v3227, %v3225
        %v5256 = vpack.c.b16 %v3228, %v3226
        %v5257 = vpack.c.b16 %v3231, %v3229
        %v5258 = vpack.c.b16 %v3232, %v3230
        %v5259 = vpack.c.b16 %v3235, %v3233
        %v5260 = vpack.c.b16 %v3236, %v3234
        %v5261 = vpack.c.b16 %v3239, %v3237
        %v5262 = vpack.c.b16 %v3240, %v3238
        %v5263 = vpack.c.b16 %v3243, %v3241
        %v5264 = vpack.c.b16 %v3244, %v3242
        %v5265 = vpack.c.b16 %v3247, %v3245
        %v5266 = vpack.c.b16 %v3248, %v3246
        %v5267 = vpack.c.b16 %v3251, %v3249
        %v5268 = vpack.c.b16 %v3252, %v3250
        %v5269 = vpack.c.b16 %v3255, %v3253
        %v5270 = vpack.c.b16 %v3256, %v3254
        %v5271 = vpack.c.b16 %v3259, %v3257
        %v5272 = vpack.c.b16 %v3260, %v3258
        %v5273 = vpack.c.b16 %v3263, %v3261
        %v5274 = vpack.c.b16 %v3264, %v3262
        %v5275 = vpack.c.b16 %v3267, %v3265
        %v5276 = vpack.c.b16 %v3268, %v3266
        %v5277 = vpack.c.b16 %v3271, %v3269
        %v5278 = vpack.c.b16 %v3272, %v3270
        %v5279 = vpack.c.b16 %v3275, %v3273
        %v5280 = vpack.c.b16 %v3276, %v3274
        %v5281 = vpack.c.b16 %v3279, %v3277
        %v5282 = vpack.c.b16 %v3280, %v3278
        %v5283 = vpack.c.b16 %v3283, %v3281
        %v5284 = vpack.c.b16 %v3284, %v3282
        %v5285 = vpack.c.b16 %v3287, %v3285
        %v5286 = vpack.c.b16 %v3288, %v3286
        %v5287 = vpack.c.b16 %v3291, %v3289
        %v5288 = vpack.c.b16 %v3292, %v3290
        %v5289 = vpack.c.b16 %v3295, %v3293
        %v5290 = vpack.c.b16 %v3296, %v3294
        %v5291 = vpack.c.b16 %v3299, %v3297
        %v5292 = vpack.c.b16 %v3300, %v3298
        %v5293 = vpack.c.b16 %v3303, %v3301
        %v5294 = vpack.c.b16 %v3304, %v3302
        %v5295 = vpack.c.b16 %v3307, %v3305
        %v5296 = vpack.c.b16 %v3308, %v3306
        %v5297 = vpack.c.b16 %v3311, %v3309
        %v5298 = vpack.c.b16 %v3312, %v3310
        %v5299 = vpack.c.b16 %v3315, %v3313
        %v5300 = vpack.c.b16 %v3316, %v3314
        %v5301 = vpack.c.b16 %v3319, %v3317
        %v5302 = vpack.c.b16 %v3320, %v3318
        %v5303 = vpack.c.b16 %v3323, %v3321
        %v5304 = vpack.c.b16 %v3324, %v3322
        %v5305 = vpack.c.b16 %v3327, %v3325
        %v5306 = vpack.c.b16 %v3328, %v3326
        %v5307 = vpack.c.b16 %v3331, %v3329
        %v5308 = vpack.c.b16 %v3332, %v3330
        %v5309 = vpack.c.b16 %v3335, %v3333
        %v5310 = vpack.c.b16 %v3336, %v3334
        %v5311 = vpack.c.b16 %v3339, %v3337
        %v5312 = vpack.c.b16 %v3340, %v3338
        %v5313 = vpack.c.b16 %v3343, %v3341
        %v5314 = vpack.c.b16 %v3344, %v3342
        %v5315 = vpack.c.b16 %v3347, %v3345
        %v5316 = vpack.c.b16 %v3348, %v3346
        %v5317 = vpack.c.b16 %v3351, %v3349
        %v5318 = vpack.c.b16 %v3352, %v3350
        %v5319 = vpack.c.b16 %v3355, %v3353
        %v5320 = vpack.c.b16 %v3356, %v3354
        %v5321 = vpack.c.b16 %v3359, %v3357
        %v5322 = vpack.c.b16 %v3360, %v3358
        %v5323 = vpack.c.b16 %v3363, %v3361
        %v5324 = vpack.c.b16 %v3364, %v3362
        %v5325 = vpack.c.b16 %v3367, %v3365
        %v5326 = vpack.c.b16 %v3368, %v3366
        %v5327 = vpack.c.b16 %v3371, %v3369
        %v5328 = vpack.c.b16 %v3372, %v3370
        %v5329 = vpack.c.b16 %v3375, %v3373
        %v5330 = vpack.c.b16 %v3376, %v3374
        %v5331 = vpack.c.b16 %v3379, %v3377
        %v5332 = vpack.c.b16 %v3380, %v3378
        %v5333 = vpack.c.b16 %v3383, %v3381
        %v5334 = vpack.c.b16 %v3384, %v3382
        %v5335 = vpack.c.b16 %v3387, %v3385
        %v5336 = vpack.c.b16 %v3388, %v3386
        %v5337 = vpack.c.b16 %v3391, %v3389
        %v5338 = vpack.c.b16 %v3392, %v3390
        %v5339 = vpack.c.b16 %v3395, %v3393
        %v5340 = vpack.c.b16 %v3396, %v3394
        %v5341 = vpack.c.b16 %v3399, %v3397
        %v5342 = vpack.c.b16 %v3400, %v3398
        %v5343 = vpack.c.b16 %v3403, %v3401
        %v5344 = vpack.c.b16 %v3404, %v3402
        %v5345 = vpack.c.b16 %v3407, %v3405
        %v5346 = vpack.c.b16 %v3408, %v3406
        %v5347 = vpack.c.b16 %v3411, %v3409
        %v5348 = vpack.c.b16 %v3412, %v3410
        %v5349 = vpack.c.b16 %v3415, %v3413
        %v5350 = vpack.c.b16 %v3416, %v3414
        %v5351 = vpack.c.b16 %v3419, %v3417
        %v5352 = vpack.c.b16 %v3420, %v3418
        %v5353 = vpack.c.b16 %v3423, %v3421
        %v5354 = vpack.c.b16 %v3424, %v3422
        %v5355 = vpack.c.b16 %v3427, %v3425
        %v5356 = vpack.c.b16 %v3428, %v3426
        %v5357 = vpack.c.b16 %v3431, %v3429
        %v5358 = vpack.c.b16 %v3432, %v3430
        %v5359 = vpack.c.b16 %v3435, %v3433
        %v5360 = vpack.c.b16 %v3436, %v3434
        %v5361 = vpack.c.b16 %v3439, %v3437
        %v5362 = vpack.c.b16 %v3440, %v3438
        %v5363 = vpack.c.b16 %v3443, %v3441
        %v5364 = vpack.c.b16 %v3444, %v3442
        %v5365 = vpack.c.b16 %v3447, %v3445
        %v5366 = vpack.c.b16 %v3448, %v3446
        %v5367 = vpack.c.b16 %v3451, %v3449
        %v5368 = vpack.c.b16 %v3452, %v3450
        %v5369 = vpack.c.b16 %v3455, %v3453
        %v5370 = vpack.c.b16 %v3456, %v3454
        %v5371 = vpack.c.b16 %v3459, %v3457
        %v5372 = vpack.c.b16 %v3460, %v3458
        %v5373 = vpack.c.b16 %v3463, %v3461
        %v5374 = vpack.c.b16 %v3464, %v3462
        %v5375 = vpack.c.b16 %v3467, %v3465
        %v5376 = vpack.c.b16 %v3468, %v3466
        %v5377 = vpack.c.b16 %v3471, %v3469
        %v5378 = vpack.c.b16 %v3472, %v3470
        %v5379 = vpack.c.b16 %v3475, %v3473
        %v5380 = vpack.c.b16 %v3476, %v3474
        %v5381 = vpack.c.b16 %v3479, %v3477
        %v5382 = vpack.c.b16 %v3480, %v3478
        %v5383 = vpack.c.b16 %v3483, %v3481
        %v5384 = vpack.c.b16 %v3484, %v3482
        %v5385 = vpack.c.b16 %v3487, %v3485
        %v5386 = vpack.c.b16 %v3488, %v3486
        %v5387 = vpack.c.b16 %v3491, %v3489
        %v5388 = vpack.c.b16 %v3492, %v3490
        %v5389 = vpack.c.b16 %v3495, %v3493
        %v5390 = vpack.c.b16 %v3496, %v3494
        %v5391 = vpack.c.b16 %v3499, %v3497
        %v5392 = vpack.c.b16 %v3500, %v3498
        %v5393 = vpack.c.b16 %v3503, %v3501
        %v5394 = vpack.c.b16 %v3504, %v3502
        %v5395 = vpack.c.b16 %v3507, %v3505
        %v5396 = vpack.c.b16 %v3508, %v3506
        %v5397 = vpack.c.b16 %v3511, %v3509
        %v5398 = vpack.c.b16 %v3512, %v3510
        %v5399 = vpack.c.b16 %v3515, %v3513
        %v5400 = vpack.c.b16 %v3516, %v3514
        %v5401 = vpack.c.b16 %v3519, %v3517
        %v5402 = vpack.c.b16 %v3520, %v3518
        %v5403 = vpack.c.b16 %v3523, %v3521
        %v5404 = vpack.c.b16 %v3524, %v3522
        %v5405 = vpack.c.b16 %v3527, %v3525
        %v5406 = vpack.c.b16 %v3528, %v3526
        %v5407 = vpack.c.b16 %v3531, %v3529
        %v5408 = vpack.c.b16 %v3532, %v3530
        %v5409 = vpack.c.b16 %v3535, %v3533
        %v5410 = vpack.c.b16 %v3536, %v3534
        %v5411 = vpack.c.b16 %v3539, %v3537
        %v5412 = vpack.c.b16 %v3540, %v3538
        %v5413 = vpack.c.b16 %v3543, %v3541
        %v5414 = vpack.c.b16 %v3544, %v3542
        %v5415 = vpack.c.b16 %v3547, %v3545
        %v5416 = vpack.c.b16 %v3548, %v3546
        %v5417 = vpack.c.b16 %v3551, %v3549
        %v5418 = vpack.c.b16 %v3552, %v3550
        %v5419 = vpack.c.b16 %v3555, %v3553
        %v5420 = vpack.c.b16 %v3556, %v3554
        %v5421 = vpack.c.b16 %v3559, %v3557
        %v5422 = vpack.c.b16 %v3560, %v3558
        %v5423 = vpack.c.b16 %v3563, %v3561
        %v5424 = vpack.c.b16 %v3564, %v3562
        %v5425 = vpack.c.b16 %v3567, %v3565
        %v5426 = vpack.c.b16 %v3568, %v3566
        %v5427 = vpack.c.b16 %v3571, %v3569
        %v5428 = vpack.c.b16 %v3572, %v3570
        %v5429 = vpack.c.b16 %v3575, %v3573
        %v5430 = vpack.c.b16 %v3576, %v3574
        %v5431 = vpack.c.b16 %v3579, %v3577
        %v5432 = vpack.c.b16 %v3580, %v3578
        %v5433 = vpack.c.b16 %v3583, %v3581
        %v5434 = vpack.c.b16 %v3584, %v3582
        %v5435 = vpack.c.b16 %v3587, %v3585
        %v5436 = vpack.c.b16 %v3588, %v3586
        %v5437 = vpack.c.b16 %v3591, %v3589
        %v5438 = vpack.c.b16 %v3592, %v3590
        %v5439 = vpack.c.b16 %v3595, %v3593
        %v5440 = vpack.c.b16 %v3596, %v3594
        %v5441 = vpack.c.b16 %v3599, %v3597
        %v5442 = vpack.c.b16 %v3600, %v3598
        %v5443 = vpack.c.b16 %v3603, %v3601
        %v5444 = vpack.c.b16 %v3604, %v3602
        %v5445 = vpack.c.b16 %v3607, %v3605
        %v5446 = vpack.c.b16 %v3608, %v3606
        %v5447 = vpack.c.b16 %v3611, %v3609
        %v5448 = vpack.c.b16 %v3612, %v3610
        %v5449 = vpack.c.b16 %v3615, %v3613
        %v5450 = vpack.c.b16 %v3616, %v3614
        %v5451 = vpack.c.b16 %v3619, %v3617
        %v5452 = vpack.c.b16 %v3620, %v3618
        %v5453 = vpack.c.b16 %v3623, %v3621
        %v5454 = vpack.c.b16 %v3624, %v3622
        %v5455 = vpack.c.b16 %v3627, %v3625
        %v5456 = vpack.c.b16 %v3628, %v3626
        %v5457 = vpack.c.b16 %v3631, %v3629
        %v5458 = vpack.c.b16 %v3632, %v3630
        %v5459 = vpack.c.b16 %v3635, %v3633
        %v5460 = vpack.c.b16 %v3636, %v3634
        %v5461 = vpack.c.b16 %v3639, %v3637
        %v5462 = vpack.c.b16 %v3640, %v3638
        %v5463 = vpack.c.b16 %v3643, %v3641
        %v5464 = vpack.c.b16 %v3644, %v3642
        %v5465 = vpack.c.b16 %v3647, %v3645
        %v5466 = vpack.c.b16 %v3648, %v3646
        %v5467 = vpack.c.b16 %v3651, %v3649
        %v5468 = vpack.c.b16 %v3652, %v3650
        %v5469 = vpack.c.b16 %v3655, %v3653
        %v5470 = vpack.c.b16 %v3656, %v3654
        %v5471 = vpack.c.b16 %v3659, %v3657
        %v5472 = vpack.c.b16 %v3660, %v3658
        %v5473 = vpack.c.b16 %v3663, %v3661
        %v5474 = vpack.c.b16 %v3664, %v3662
        %v5475 = vpack.c.b16 %v3667, %v3665
        %v5476 = vpack.c.b16 %v3668, %v3666
        %v5477 = vpack.c.b16 %v3671, %v3669
        %v5478 = vpack.c.b16 %v3672, %v3670
        %v5479 = vpack.c.b16 %v3675, %v3673
        %v5480 = vpack.c.b16 %v3676, %v3674
        %v5481 = vpack.c.b16 %v3679, %v3677
        %v5482 = vpack.c.b16 %v3680, %v3678
        %v5483 = vpack.c.b16 %v3683, %v3681
        %v5484 = vpack.c.b16 %v3684, %v3682
        %v5485 = vpack.c.b16 %v3687, %v3685
        %v5486 = vpack.c.b16 %v3688, %v3686
        %v5487 = vpack.c.b16 %v3691, %v3689
        %v5488 = vpack.c.b16 %v3692, %v3690
        %v5489 = vpack.c.b16 %v3695, %v3693
        %v5490 = vpack.c.b16 %v3696, %v3694
        %v5491 = vpack.c.b16 %v3699, %v3697
        %v5492 = vpack.c.b16 %v3700, %v3698
        %v5493 = vpack.c.b16 %v3703, %v3701
        %v5494 = vpack.c.b16 %v3704, %v3702
        %v5495 = vpack.c.b16 %v3707, %v3705
        %v5496 = vpack.c.b16 %v3708, %v3706
        %v5497 = vpack.c.b16 %v3711, %v3709
        %v5498 = vpack.c.b16 %v3712, %v3710
        %v5499 = vpack.c.b16 %v3715, %v3713
        %v5500 = vpack.c.b16 %v3716, %v3714
        %v5501 = vpack.c.b16 %v3719, %v3717
        %v5502 = vpack.c.b16 %v3720, %v3718
        %v5503 = vpack.c.b16 %v3723, %v3721
        %v5504 = vpack.c.b16 %v3724, %v3722
        %v5505 = vpack.c.b16 %v3727, %v3725
        %v5506 = vpack.c.b16 %v3728, %v3726
        %v5507 = vpack.c.b16 %v3731, %v3729
        %v5508 = vpack.c.b16 %v3732, %v3730
        %v5509 = vpack.c.b16 %v3735, %v3733
        %v5510 = vpack.c.b16 %v3736, %v3734
        %v5511 = vpack.c.b16 %v3739, %v3737
        %v5512 = vpack.c.b16 %v3740, %v3738
        %v5513 = vpack.c.b16 %v3743, %v3741
        %v5514 = vpack.c.b16 %v3744, %v3742
        %v5515 = vpack.c.b16 %v3747, %v3745
        %v5516 = vpack.c.b16 %v3748, %v3746
        %v5517 = vpack.c.b16 %v3751, %v3749
        %v5518 = vpack.c.b16 %v3752, %v3750
        %v5519 = vpack.c.b16 %v3755, %v3753
        %v5520 = vpack.c.b16 %v3756, %v3754
        %v5521 = vpack.c.b16 %v3759, %v3757
        %v5522 = vpack.c.b16 %v3760, %v3758
        %v5523 = vpack.c.b16 %v3763, %v3761
        %v5524 = vpack.c.b16 %v3764, %v3762
        %v5525 = vpack.c.b16 %v3767, %v3765
        %v5526 = vpack.c.b16 %v3768, %v3766
        %v5527 = vpack.c.b16 %v3771, %v3769
        %v5528 = vpack.c.b16 %v3772, %v3770
        %v5529 = vpack.c.b16 %v3775, %v3773
        %v5530 = vpack.c.b16 %v3776, %v3774
        %v5531 = vpack.c.b16 %v3779, %v3777
        %v5532 = vpack.c.b16 %v3780, %v3778
        %v5533 = vpack.c.b16 %v3783, %v3781
        %v5534 = vpack.c.b16 %v3784, %v3782
        %v5535 = vpack.c.b16 %v3787, %v3785
        %v5536 = vpack.c.b16 %v3788, %v3786
        %v5537 = vpack.c.b16 %v3791, %v3789
        %v5538 = vpack.c.b16 %v3792, %v3790
        %v5539 = vpack.c.b16 %v3795, %v3793
        %v5540 = vpack.c.b16 %v3796, %v3794
        %v5541 = vpack.c.b16 %v3799, %v3797
        %v5542 = vpack.c.b16 %v3800, %v3798
        %v5543 = vpack.c.b16 %v3803, %v3801
        %v5544 = vpack.c.b16 %v3804, %v3802
        %v5545 = vpack.c.b16 %v3807, %v3805
        %v5546 = vpack.c.b16 %v3808, %v3806
        %v5547 = vpack.c.b16 %v3811, %v3809
        %v5548 = vpack.c.b16 %v3812, %v3810
        %v5549 = vpack.c.b16 %v3815, %v3813
        %v5550 = vpack.c.b16 %v3816, %v3814
        %v5551 = vpack.c.b16 %v3819, %v3817
        %v5552 = vpack.c.b16 %v3820, %v3818
        %v5553 = vpack.c.b16 %v3823, %v3821
        %v5554 = vpack.c.b16 %v3824, %v3822
        %v5555 = vpack.c.b16 %v3827, %v3825
        %v5556 = vpack.c.b16 %v3828, %v3826
        %v5557 = vpack.c.b16 %v3831, %v3829
        %v5558 = vpack.c.b16 %v3832, %v3830
        %v5559 = vpack.c.b16 %v3835, %v3833
        %v5560 = vpack.c.b16 %v3836, %v3834
        %v5561 = vpack.c.b16 %v3839, %v3837
        %v5562 = vpack.c.b16 %v3840, %v3838
        %v5563 = vpack.c.b16 %v3843, %v3841
        %v5564 = vpack.c.b16 %v3844, %v3842
        %v5565 = vpack.c.b16 %v3847, %v3845
        %v5566 = vpack.c.b16 %v3848, %v3846
        %v5567 = vpack.c.b16 %v3851, %v3849
        %v5568 = vpack.c.b16 %v3852, %v3850
        %v5569 = vpack.c.b16 %v3855, %v3853
        %v5570 = vpack.c.b16 %v3856, %v3854
        %v5571 = vpack.c.b16 %v3859, %v3857
        %v5572 = vpack.c.b16 %v3860, %v3858
        %v5573 = vpack.c.b16 %v3863, %v3861
        %v5574 = vpack.c.b16 %v3864, %v3862
        %v5575 = vpack.c.b16 %v3867, %v3865
        %v5576 = vpack.c.b16 %v3868, %v3866
        %v5577 = vpack.c.b16 %v3871, %v3869
        %v5578 = vpack.c.b16 %v3872, %v3870
        %v5579 = vpack.c.b16 %v3875, %v3873
        %v5580 = vpack.c.b16 %v3876, %v3874
        %v5581 = vpack.c.b16 %v3879, %v3877
        %v5582 = vpack.c.b16 %v3880, %v3878
        %v5583 = vpack.c.b16 %v3883, %v3881
        %v5584 = vpack.c.b16 %v3884, %v3882
        %v5585 = vpack.c.b16 %v3887, %v3885
        %v5586 = vpack.c.b16 %v3888, %v3886
        %v5587 = vpack.c.b16 %v3891, %v3889
        %v5588 = vpack.c.b16 %v3892, %v3890
        %v5589 = vpack.c.b16 %v3895, %v3893
        %v5590 = vpack.c.b16 %v3896, %v3894
        %v5591 = vpack.c.b16 %v3899, %v3897
        %v5592 = vpack.c.b16 %v3900, %v3898
        %v5593 = vpack.c.b16 %v3903, %v3901
        %v5594 = vpack.c.b16 %v3904, %v3902
        %v5595 = vpack.c.b16 %v3907, %v3905
        %v5596 = vpack.c.b16 %v3908, %v3906
        %v5597 = vpack.c.b16 %v3911, %v3909
        %v5598 = vpack.c.b16 %v3912, %v3910
        %v5599 = vpack.c.b16 %v3915, %v3913
        %v5600 = vpack.c.b16 %v3916, %v3914
        %v5601 = vpack.c.b16 %v3919, %v3917
        %v5602 = vpack.c.b16 %v3920, %v3918
        %v5603 = vpack.c.b16 %v3923, %v3921
        %v5604 = vpack.c.b16 %v3924, %v3922
        %v5605 = vpack.c.b16 %v3927, %v3925
        %v5606 = vpack.c.b16 %v3928, %v3926
        %v5607 = vpack.c.b16 %v3931, %v3929
        %v5608 = vpack.c.b16 %v3932, %v3930
        %v5609 = vpack.c.b16 %v3935, %v3933
        %v5610 = vpack.c.b16 %v3936, %v3934
        %v5611 = vpack.c.b16 %v3939, %v3937
        %v5612 = vpack.c.b16 %v3940, %v3938
        %v5613 = vpack.c.b16 %v3943, %v3941
        %v5614 = vpack.c.b16 %v3944, %v3942
        %v5615 = vpack.c.b16 %v3947, %v3945
        %v5616 = vpack.c.b16 %v3948, %v3946
        %v5617 = vpack.c.b16 %v3951, %v3949
        %v5618 = vpack.c.b16 %v3952, %v3950
        %v5619 = vpack.c.b16 %v3955, %v3953
        %v5620 = vpack.c.b16 %v3956, %v3954
        %v5621 = vpack.c.b16 %v3959, %v3957
        %v5622 = vpack.c.b16 %v3960, %v3958
        %v5623 = vpack.c.b16 %v3963, %v3961
        %v5624 = vpack.c.b16 %v3964, %v3962
        %v5625 = vpack.c.b16 %v3967, %v3965
        %v5626 = vpack.c.b16 %v3968, %v3966
        %v5627 = vpack.c.b16 %v3971, %v3969
        %v5628 = vpack.c.b16 %v3972, %v3970
        %v5629 = vpack.c.b16 %v3975, %v3973
        %v5630 = vpack.c.b16 %v3976, %v3974
        %v5631 = vpack.c.b16 %v3979, %v3977
        %v5632 = vpack.c.b16 %v3980, %v3978
        %v5633 = vpack.c.b16 %v3983, %v3981
        %v5634 = vpack.c.b16 %v3984, %v3982
        %v5635 = vpack.c.b16 %v3987, %v3985
        %v5636 = vpack.c.b16 %v3988, %v3986
        %v5637 = vpack.c.b16 %v3991, %v3989
        %v5638 = vpack.c.b16 %v3992, %v3990
        %v5639 = vpack.c.b16 %v3995, %v3993
        %v5640 = vpack.c.b16 %v3996, %v3994
        %v5641 = vpack.c.b16 %v3999, %v3997
        %v5642 = vpack.c.b16 %v4000, %v3998
        %v5643 = vpack.c.b16 %v4003, %v4001
        %v5644 = vpack.c.b16 %v4004, %v4002
        %v5645 = vpack.c.b16 %v4007, %v4005
        %v5646 = vpack.c.b16 %v4008, %v4006
        %v5647 = vpack.c.b16 %v4011, %v4009
        %v5648 = vpack.c.b16 %v4012, %v4010
        %v5649 = vpack.c.b16 %v4015, %v4013
        %v5650 = vpack.c.b16 %v4016, %v4014
        %v5651 = vpack.c.b16 %v4019, %v4017
        %v5652 = vpack.c.b16 %v4020, %v4018
        %v5653 = vpack.c.b16 %v4023, %v4021
        %v5654 = vpack.c.b16 %v4024, %v4022
        %v5655 = vpack.c.b16 %v4027, %v4025
        %v5656 = vpack.c.b16 %v4028, %v4026
        %v5657 = vpack.c.b16 %v4031, %v4029
        %v5658 = vpack.c.b16 %v4032, %v4030
        %v5659 = vpack.c.b16 %v4035, %v4033
        %v5660 = vpack.c.b16 %v4036, %v4034
        %v5661 = vpack.c.b16 %v4039, %v4037
        %v5662 = vpack.c.b16 %v4040, %v4038
        %v5663 = vpack.c.b16 %v4043, %v4041
        %v5664 = vpack.c.b16 %v4044, %v4042
        %v5665 = vpack.c.b16 %v4047, %v4045
        %v5666 = vpack.c.b16 %v4048, %v4046
        %v5667 = vpack.c.b16 %v4051, %v4049
        %v5668 = vpack.c.b16 %v4052, %v4050
        %v5669 = vpack.c.b16 %v4055, %v4053
        %v5670 = vpack.c.b16 %v4056, %v4054
        %v5671 = vpack.c.b16 %v4059, %v4057
        %v5672 = vpack.c.b16 %v4060, %v4058
        %v5673 = vpack.c.b16 %v4063, %v4061
        %v5674 = vpack.c.b16 %v4064, %v4062
        %v5675 = vpack.c.b16 %v4067, %v4065
        %v5676 = vpack.c.b16 %v4068, %v4066
        %v5677 = vpack.c.b16 %v4071, %v4069
        %v5678 = vpack.c.b16 %v4072, %v4070
        %v5679 = vpack.c.b16 %v4075, %v4073
        %v5680 = vpack.c.b16 %v4076, %v4074
        %v5681 = vpack.c.b16 %v4079, %v4077
        %v5682 = vpack.c.b16 %v4080, %v4078
        %v5683 = vpack.c.b16 %v4083, %v4081
        %v5684 = vpack.c.b16 %v4084, %v4082
        %v5685 = vpack.c.b16 %v4087, %v4085
        %v5686 = vpack.c.b16 %v4088, %v4086
        %v5687 = vpack.c.b16 %v4091, %v4089
        %v5688 = vpack.c.b16 %v4092, %v4090
        %v5689 = vpack.c.b16 %v4095, %v4093
        %v5690 = vpack.c.b16 %v4096, %v4094
        %v5691 = vpack.c.b16 %v4099, %v4097
        %v5692 = vpack.c.b16 %v4100, %v4098
        %v5693 = vpack.c.b16 %v4103, %v4101
        %v5694 = vpack.c.b16 %v4104, %v4102
        %v5695 = vpack.c.b16 %v4107, %v4105
        %v5696 = vpack.c.b16 %v4108, %v4106
        %v5697 = vpack.c.b16 %v4111, %v4109
        %v5698 = vpack.c.b16 %v4112, %v4110
        %v5699 = vpack.c.b16 %v4115, %v4113
        %v5700 = vpack.c.b16 %v4116, %v4114
        %v5701 = vpack.c.b16 %v4119, %v4117
        %v5702 = vpack.c.b16 %v4120, %v4118
        %v5703 = vpack.c.b16 %v4123, %v4121
        %v5704 = vpack.c.b16 %v4124, %v4122
        %v5705 = vpack.c.b16 %v4127, %v4125
        %v5706 = vpack.c.b16 %v4128, %v4126
        %v5707 = vpack.c.b16 %v4131, %v4129
        %v5708 = vpack.c.b16 %v4132, %v4130
        %v5709 = vpack.c.b16 %v4135, %v4133
        %v5710 = vpack.c.b16 %v4136, %v4134
        %v5711 = vpack.c.b16 %v4139, %v4137
        %v5712 = vpack.c.b16 %v4140, %v4138
        %v5713 = vpack.c.b16 %v4143, %v4141
        %v5714 = vpack.c.b16 %v4144, %v4142
        %v5715 = vpack.c.b16 %v4147, %v4145
        %v5716 = vpack.c.b16 %v4148, %v4146
        %v5717 = vpack.c.b16 %v4151, %v4149
        %v5718 = vpack.c.b16 %v4152, %v4150
        %v5719 = vpack.c.b16 %v4155, %v4153
        %v5720 = vpack.c.b16 %v4156, %v4154
        %v5721 = vpack.c.b16 %v4159, %v4157
        %v5722 = vpack.c.b16 %v4160, %v4158
        %v5723 = vpack.c.b16 %v4163, %v4161
        %v5724 = vpack.c.b16 %v4164, %v4162
        %v5725 = vpack.c.b16 %v4167, %v4165
        %v5726 = vpack.c.b16 %v4168, %v4166
        %v5727 = vpack.c.b16 %v4171, %v4169
        %v5728 = vpack.c.b16 %v4172, %v4170
        %v5729 = vpack.c.b16 %v4175, %v4173
        %v5730 = vpack.c.b16 %v4176, %v4174
        %v5731 = vpack.c.b16 %v4179, %v4177
        %v5732 = vpack.c.b16 %v4180, %v4178
        %v5733 = vpack.c.b16 %v4183, %v4181
        %v5734 = vpack.c.b16 %v4184, %v4182
        %v5735 = vpack.c.b16 %v4187, %v4185
        %v5736 = vpack.c.b16 %v4188, %v4186
        %v5737 = vpack.c.b16 %v4191, %v4189
        %v5738 = vpack.c.b16 %v4192, %v4190
        %v5739 = vpack.c.b16 %v4195, %v4193
        %v5740 = vpack.c.b16 %v4196, %v4194
        %v5741 = vpack.c.b16 %v4199, %v4197
        %v5742 = vpack.c.b16 %v4200, %v4198
        %v5743 = vpack.c.b16 %v4203, %v4201
        %v5744 = vpack.c.b16 %v4204, %v4202
        %v5745 = vpack.c.b16 %v4207, %v4205
        %v5746 = vpack.c.b16 %v4208, %v4206
        %v5747 = vpack.c.b16 %v4211, %v4209
        %v5748 = vpack.c.b16 %v4212, %v4210
        %v5749 = vpack.c.b16 %v4215, %v4213
        %v5750 = vpack.c.b16 %v4216, %v4214
        %v5751 = vpack.c.b16 %v4219, %v4217
        %v5752 = vpack.c.b16 %v4220, %v4218
        %v5753 = vpack.c.b16 %v4223, %v4221
        %v5754 = vpack.c.b16 %v4224, %v4222
        %v5755 = vpack.c.b16 %v4227, %v4225
        %v5756 = vpack.c.b16 %v4228, %v4226
        %v5757 = vpack.c.b16 %v4231, %v4229
        %v5758 = vpack.c.b16 %v4232, %v4230
        %v5759 = vpack.c.b16 %v4235, %v4233
        %v5760 = vpack.c.b16 %v4236, %v4234
        %v5761 = vpack.c.b16 %v4239, %v4237
        %v5762 = vpack.c.b16 %v4240, %v4238
        %v5763 = vpack.c.b16 %v4243, %v4241
        %v5764 = vpack.c.b16 %v4244, %v4242
        %v5765 = vpack.c.b16 %v4247, %v4245
        %v5766 = vpack.c.b16 %v4248, %v4246
        %v5767 = vpack.c.b16 %v4251, %v4249
        %v5768 = vpack.c.b16 %v4252, %v4250
        %v5769 = vpack.c.b16 %v4255, %v4253
        %v5770 = vpack.c.b16 %v4256, %v4254
        %v5771 = vpack.c.b16 %v4259, %v4257
        %v5772 = vpack.c.b16 %v4260, %v4258
        %v5773 = vpack.c.b16 %v4263, %v4261
        %v5774 = vpack.c.b16 %v4264, %v4262
        %v5775 = vpack.c.b16 %v4267, %v4265
        %v5776 = vpack.c.b16 %v4268, %v4266
        %v5777 = vpack.c.b16 %v4271, %v4269
        %v5778 = vpack.c.b16 %v4272, %v4270
        %v5779 = vpack.c.b16 %v4275, %v4273
        %v5780 = vpack.c.b16 %v4276, %v4274
        %v5781 = vpack.c.b16 %v4279, %v4277
        %v5782 = vpack.c.b16 %v4280, %v4278
        %v5783 = vpack.c.b16 %v4283, %v4281
        %v5784 = vpack.c.b16 %v4284, %v4282
        %v5785 = vpack.c.b16 %v4287, %v4285
        %v5786 = vpack.c.b16 %v4288, %v4286
        %v5787 = vpack.c.b16 %v4291, %v4289
        %v5788 = vpack.c.b16 %v4292, %v4290
        %v5789 = vpack.c.b16 %v4295, %v4293
        %v5790 = vpack.c.b16 %v4296, %v4294
        %v5791 = vpack.c.b16 %v4299, %v4297
        %v5792 = vpack.c.b16 %v4300, %v4298
        %v5793 = vpack.c.b16 %v4303, %v4301
        %v5794 = vpack.c.b16 %v4304, %v4302
        %v5795 = vpack.c.b16 %v4307, %v4305
        %v5796 = vpack.c.b16 %v4308, %v4306
        %v5797 = vpack.c.b16 %v4311, %v4309
        %v5798 = vpack.c.b16 %v4312, %v4310
        %v5799 = vpack.c.b16 %v4315, %v4313
        %v5800 = vpack.c.b16 %v4316, %v4314
        %v5801 = vpack.c.b16 %v4319, %v4317
        %v5802 = vpack.c.b16 %v4320, %v4318
        %v5803 = vpack.c.b16 %v4323, %v4321
        %v5804 = vpack.c.b16 %v4324, %v4322
        %v5805 = vpack.c.b16 %v4327, %v4325
        %v5806 = vpack.c.b16 %v4328, %v4326
        %v5807 = vpack.c.b16 %v4331, %v4329
        %v5808 = vpack.c.b16 %v4332, %v4330
        %v5809 = vpack.c.b16 %v4335, %v4333
        %v5810 = vpack.c.b16 %v4336, %v4334
        %v5811 = vpack.c.b16 %v4339, %v4337
        %v5812 = vpack.c.b16 %v4340, %v4338
        %v5813 = vpack.c.b16 %v4343, %v4341
        %v5814 = vpack.c.b16 %v4344, %v4342
        %v5815 = vpack.c.b16 %v4347, %v4345
        %v5816 = vpack.c.b16 %v4348, %v4346
        %v5817 = vpack.c.b16 %v4351, %v4349
        %v5818 = vpack.c.b16 %v4352, %v4350
        %v5819 = vpack.c.b16 %v4355, %v4353
        %v5820 = vpack.c.b16 %v4356, %v4354
        %v5821 = vpack.c.b16 %v4359, %v4357
        %v5822 = vpack.c.b16 %v4360, %v4358
        %v5823 = vpack.c.b16 %v4363, %v4361
        %v5824 = vpack.c.b16 %v4364, %v4362
        %v5825 = vpack.c.b16 %v4367, %v4365
        %v5826 = vpack.c.b16 %v4368, %v4366
        %v5827 = vpack.c.b16 %v4371, %v4369
        %v5828 = vpack.c.b16 %v4372, %v4370
        %v5829 = vpack.c.b16 %v4375, %v4373
        %v5830 = vpack.c.b16 %v4376, %v4374
        %v5831 = vpack.c.b16 %v4379, %v4377
        %v5832 = vpack.c.b16 %v4380, %v4378
        %v5833 = vpack.c.b16 %v4383, %v4381
        %v5834 = vpack.c.b16 %v4384, %v4382
        %v5835 = vpack.c.b16 %v4387, %v4385
        %v5836 = vpack.c.b16 %v4388, %v4386
        %v5837 = vpack.c.b16 %v4391, %v4389
        %v5838 = vpack.c.b16 %v4392, %v4390
        %v5839 = vpack.c.b16 %v4395, %v4393
        %v5840 = vpack.c.b16 %v4396, %v4394
        %v5841 = vpack.c.b16 %v4399, %v4397
        %v5842 = vpack.c.b16 %v4400, %v4398
        %v5843 = vpack.c.b16 %v4403, %v4401
        %v5844 = vpack.c.b16 %v4404, %v4402
        %v5845 = vpack.c.b16 %v4407, %v4405
        %v5846 = vpack.c.b16 %v4408, %v4406
        %v5847 = vpack.c.b16 %v4411, %v4409
        %v5848 = vpack.c.b16 %v4412, %v4410
        %v5849 = vpack.c.b16 %v4415, %v4413
        %v5850 = vpack.c.b16 %v4416, %v4414
        %v5851 = vpack.c.b16 %v4419, %v4417
        %v5852 = vpack.c.b16 %v4420, %v4418
        %v5853 = vpack.c.b16 %v4423, %v4421
        %v5854 = vpack.c.b16 %v4424, %v4422
        %v5855 = vpack.c.b16 %v4427, %v4425
        %v5856 = vpack.c.b16 %v4428, %v4426
        %v5857 = vpack.c.b16 %v4431, %v4429
        %v5858 = vpack.c.b16 %v4432, %v4430
        %v5859 = vpack.c.b16 %v4435, %v4433
        %v5860 = vpack.c.b16 %v4436, %v4434
        %v5861 = vpack.c.b16 %v4439, %v4437
        %v5862 = vpack.c.b16 %v4440, %v4438
        %v5863 = vpack.c.b16 %v4443, %v4441
        %v5864 = vpack.c.b16 %v4444, %v4442
        %v5865 = vpack.c.b16 %v4447, %v4445
        %v5866 = vpack.c.b16 %v4448, %v4446
        %v5867 = vpack.c.b16 %v4451, %v4449
        %v5868 = vpack.c.b16 %v4452, %v4450
        %v5869 = vpack.c.b16 %v4455, %v4453
        %v5870 = vpack.c.b16 %v4456, %v4454
        %v5871 = vpack.c.b16 %v4459, %v4457
        %v5872 = vpack.c.b16 %v4460, %v4458
        %v5873 = vpack.c.b16 %v4463, %v4461
        %v5874 = vpack.c.b16 %v4464, %v4462
        %v5875 = vpack.c.b16 %v4467, %v4465
        %v5876 = vpack.c.b16 %v4468, %v4466
        %v5877 = vpack.c.b16 %v4471, %v4469
        %v5878 = vpack.c.b16 %v4472, %v4470
        %v5879 = vpack.c.b16 %v4475, %v4473
        %v5880 = vpack.c.b16 %v4476, %v4474
        %v5881 = vpack.c.b16 %v4479, %v4477
        %v5882 = vpack.c.b16 %v4480, %v4478
        %v5883 = vpack.c.b16 %v4483, %v4481
        %v5884 = vpack.c.b16 %v4484, %v4482
        %v5885 = vpack.c.b16 %v4487, %v4485
        %v5886 = vpack.c.b16 %v4488, %v4486
        %v5887 = vpack.c.b16 %v4491, %v4489
        %v5888 = vpack.c.b16 %v4492, %v4490
        %v5889 = vpack.c.b16 %v4495, %v4493
        %v5890 = vpack.c.b16 %v4496, %v4494
        %v5891 = vpack.c.b16 %v4499, %v4497
        %v5892 = vpack.c.b16 %v4500, %v4498
        %v5893 = vpack.c.b16 %v4503, %v4501
        %v5894 = vpack.c.b16 %v4504, %v4502
        %v5895 = vpack.c.b16 %v4507, %v4505
        %v5896 = vpack.c.b16 %v4508, %v4506
        %v5897 = vpack.c.b16 %v4511, %v4509
        %v5898 = vpack.c.b16 %v4512, %v4510
        %v5899 = vpack.c.b16 %v4515, %v4513
        %v5900 = vpack.c.b16 %v4516, %v4514
        %v5901 = vpack.c.b16 %v4519, %v4517
        %v5902 = vpack.c.b16 %v4520, %v4518
        %v5903 = vpack.c.b16 %v4523, %v4521
        %v5904 = vpack.c.b16 %v4524, %v4522
        %v5905 = vpack.c.b16 %v4527, %v4525
        %v5906 = vpack.c.b16 %v4528, %v4526
        %v5907 = vpack.c.b16 %v4531, %v4529
        %v5908 = vpack.c.b16 %v4532, %v4530
        %v5909 = vpack.c.b16 %v4535, %v4533
        %v5910 = vpack.c.b16 %v4536, %v4534
        %v5911 = vpack.c.b16 %v4539, %v4537
        %v5912 = vpack.c.b16 %v4540, %v4538
        %v5913 = vpack.c.b16 %v4543, %v4541
        %v5914 = vpack.c.b16 %v4544, %v4542
        %v5915 = vpack.c.b16 %v4547, %v4545
        %v5916 = vpack.c.b16 %v4548, %v4546
        %v5917 = vpack.c.b16 %v4551, %v4549
        %v5918 = vpack.c.b16 %v4552, %v4550
        %v5919 = vpack.c.b16 %v4555, %v4553
        %v5920 = vpack.c.b16 %v4556, %v4554
        %v5921 = vpack.c.b16 %v4559, %v4557
        %v5922 = vpack.c.b16 %v4560, %v4558
        %v5923 = vpack.c.b16 %v4563, %v4561
        %v5924 = vpack.c.b16 %v4564, %v4562
        %v5925 = vpack.c.b16 %v4567, %v4565
        %v5926 = vpack.c.b16 %v4568, %v4566
        %v5927 = vpack.c.b16 %v4571, %v4569
        %v5928 = vpack.c.b16 %v4572, %v4570
        %v5929 = vpack.c.b16 %v4575, %v4573
        %v5930 = vpack.c.b16 %v4576, %v4574
        %v5931 = vpack.c.b16 %v4579, %v4577
        %v5932 = vpack.c.b16 %v4580, %v4578
        %v5933 = vpack.c.b16 %v4583, %v4581
        %v5934 = vpack.c.b16 %v4584, %v4582
        %v5935 = vpack.c.b16 %v4587, %v4585
        %v5936 = vpack.c.b16 %v4588, %v4586
        %v5937 = vpack.c.b16 %v4591, %v4589
        %v5938 = vpack.c.b16 %v4592, %v4590
        %v5939 = vpack.c.b16 %v4595, %v4593
        %v5940 = vpack.c.b16 %v4596, %v4594
        %v5941 = vpack.c.b16 %v4599, %v4597
        %v5942 = vpack.c.b16 %v4600, %v4598
        %v5943 = vpack.c.b16 %v4603, %v4601
        %v5944 = vpack.c.b16 %v4604, %v4602
        %v5945 = vpack.c.b16 %v4607, %v4605
        %v5946 = vpack.c.b16 %v4608, %v4606
        %v5947 = vpack.c.b16 %v4611, %v4609
        %v5948 = vpack.c.b16 %v4612, %v4610
        %v5949 = vpack.c.b16 %v4615, %v4613
        %v5950 = vpack.c.b16 %v4616, %v4614
        %v5951 = vpack.c.b16 %v4619, %v4617
        %v5952 = vpack.c.b16 %v4620, %v4618
        %v5953 = vpack.c.b16 %v4623, %v4621
        %v5954 = vpack.c.b16 %v4624, %v4622
        %v5955 = vpack.c.b16 %v4627, %v4625
        %v5956 = vpack.c.b16 %v4628, %v4626
        %v5957 = vpack.c.b16 %v4631, %v4629
        %v5958 = vpack.c.b16 %v4632, %v4630
        %v5959 = vpack.c.b16 %v4635, %v4633
        %v5960 = vpack.c.b16 %v4636, %v4634
        %v5961 = vpack.c.b16 %v4639, %v4637
        %v5962 = vpack.c.b16 %v4640, %v4638
        %v5963 = vpack.c.b16 %v4643, %v4641
        %v5964 = vpack.c.b16 %v4644, %v4642
        %v5965 = vpack.c.b16 %v4647, %v4645
        %v5966 = vpack.c.b16 %v4648, %v4646
        %v5967 = vpack.c.b16 %v4651, %v4649
        %v5968 = vpack.c.b16 %v4652, %v4650
        %v5969 = vpack.c.b16 %v4655, %v4653
        %v5970 = vpack.c.b16 %v4656, %v4654
        %v5971 = vpack.c.b16 %v4659, %v4657
        %v5972 = vpack.c.b16 %v4660, %v4658
        %v5973 = vpack.c.b16 %v4663, %v4661
        %v5974 = vpack.c.b16 %v4664, %v4662
        %v5975 = vpack.c.b16 %v4667, %v4665
        %v5976 = vpack.c.b16 %v4668, %v4666
        %v5977 = vpack.c.b16 %v4671, %v4669
        %v5978 = vpack.c.b16 %v4672, %v4670
        %v5979 = vpack.c.b16 %v4675, %v4673
        %v5980 = vpack.c.b16 %v4676, %v4674
        %v5981 = vpack.c.b16 %v4679, %v4677
        %v5982 = vpack.c.b16 %v4680, %v4678
        %v5983 = vpack.c.b16 %v4683, %v4681
        %v5984 = vpack.c.b16 %v4684, %v4682
        %v5985 = vpack.c.b16 %v4687, %v4685
        %v5986 = vpack.c.b16 %v4688, %v4686
        %v5987 = vpack.c.b16 %v4691, %v4689
        %v5988 = vpack.c.b16 %v4692, %v4690
        %v5989 = vpack.c.b16 %v4695, %v4693
        %v5990 = vpack.c.b16 %v4696, %v4694
        %v5991 = vpack.c.b16 %v4699, %v4697
        %v5992 = vpack.c.b16 %v4700, %v4698
        %v5993 = vpack.c.b16 %v4703, %v4701
        %v5994 = vpack.c.b16 %v4704, %v4702
        %v5995 = vpack.c.b16 %v4707, %v4705
        %v5996 = vpack.c.b16 %v4708, %v4706
        %v5997 = vpack.c.b16 %v4711, %v4709
        %v5998 = vpack.c.b16 %v4712, %v4710
        %v5999 = vpack.c.b16 %v4715, %v4713
        %v6000 = vpack.c.b16 %v4716, %v4714
        %v6001 = vpack.c.b16 %v4719, %v4717
        %v6002 = vpack.c.b16 %v4720, %v4718
        %v6003 = vpack.c.b16 %v4723, %v4721
        %v6004 = vpack.c.b16 %v4724, %v4722
        %v6005 = vpack.c.b16 %v4727, %v4725
        %v6006 = vpack.c.b16 %v4728, %v4726
        %v6007 = vpack.c.b16 %v4731, %v4729
        %v6008 = vpack.c.b16 %v4732, %v4730
        %v6009 = vpack.c.b16 %v4735, %v4733
        %v6010 = vpack.c.b16 %v4736, %v4734
        %v6011 = vpack.c.b16 %v4739, %v4737
        %v6012 = vpack.c.b16 %v4740, %v4738
        %v6013 = vpack.c.b16 %v4743, %v4741
        %v6014 = vpack.c.b16 %v4744, %v4742
        %v6015 = vpack.c.b16 %v4747, %v4745
        %v6016 = vpack.c.b16 %v4748, %v4746
        %v6017 = vpack.c.b16 %v4751, %v4749
        %v6018 = vpack.c.b16 %v4752, %v4750
        %v6019 = vpack.c.b16 %v4755, %v4753
        %v6020 = vpack.c.b16 %v4756, %v4754
        %v6021 = vpack.c.b16 %v4759, %v4757
        %v6022 = vpack.c.b16 %v4760, %v4758
        %v6023 = vpack.c.b16 %v4763, %v4761
        %v6024 = vpack.c.b16 %v4764, %v4762
        %v6025 = vpack.c.b16 %v4767, %v4765
        %v6026 = vpack.c.b16 %v4768, %v4766
        %v6027 = vpack.c.b16 %v4771, %v4769
        %v6028 = vpack.c.b16 %v4772, %v4770
        %v6029 = vpack.c.b16 %v4775, %v4773
        %v6030 = vpack.c.b16 %v4776, %v4774
        %v6031 = vpack.c.b16 %v4779, %v4777
        %v6032 = vpack.c.b16 %v4780, %v4778
        %v6033 = vpack.c.b16 %v4783, %v4781
        %v6034 = vpack.c.b16 %v4784, %v4782
        %v6035 = vpack.c.b16 %v4787, %v4785
        %v6036 = vpack.c.b16 %v4788, %v4786
        %v6037 = vpack.c.b16 %v4791, %v4789
        %v6038 = vpack.c.b16 %v4792, %v4790
        %v6039 = vpack.c.b16 %v4795, %v4793
        %v6040 = vpack.c.b16 %v4796, %v4794
        %v6041 = vpack.c.b16 %v4799, %v4797
        %v6042 = vpack.c.b16 %v4800, %v4798
        %v6043 = vpack.c.b16 %v4803, %v4801
        %v6044 = vpack.c.b16 %v4804, %v4802
        %v6045 = vpack.c.b16 %v4807, %v4805
        %v6046 = vpack.c.b16 %v4808, %v4806
        %v6047 = vpack.c.b16 %v4811, %v4809
        %v6048 = vpack.c.b16 %v4812, %v4810
        %v6049 = vpack.c.b16 %v4815, %v4813
        %v6050 = vpack.c.b16 %v4816, %v4814
        %v6051 = vpack.c.b16 %v4819, %v4817
        %v6052 = vpack.c.b16 %v4820, %v4818
        %v6053 = vpack.c.b16 %v4823, %v4821
        %v6054 = vpack.c.b16 %v4824, %v4822
        %v6055 = vpack.c.b16 %v4827, %v4825
        %v6056 = vpack.c.b16 %v4828, %v4826
        %v6057 = vpack.c.b16 %v4831, %v4829
        %v6058 = vpack.c.b16 %v4832, %v4830
        %v6059 = vpack.c.b16 %v4835, %v4833
        %v6060 = vpack.c.b16 %v4836, %v4834
        %v6061 = vpack.c.b16 %v4839, %v4837
        %v6062 = vpack.c.b16 %v4840, %v4838
        %v6063 = vpack.c.b16 %v4843, %v4841
        %v6064 = vpack.c.b16 %v4844, %v4842
        %v6065 = vpack.c.b16 %v4847, %v4845
        %v6066 = vpack.c.b16 %v4848, %v4846
        %v6067 = vpack.c.b16 %v4851, %v4849
        %v6068 = vpack.c.b16 %v4852, %v4850
        %v6069 = vpack.c.b16 %v4855, %v4853
        %v6070 = vpack.c.b16 %v4856, %v4854
        %v6071 = vpack.c.b16 %v4859, %v4857
        %v6072 = vpack.c.b16 %v4860, %v4858
        %v6073 = vpack.c.b16 %v4863, %v4861
        %v6074 = vpack.c.b16 %v4864, %v4862
        %v6075 = vpack.c.b16 %v4867, %v4865
        %v6076 = vpack.c.b16 %v4868, %v4866
        %v6077 = vpack.c.b16 %v4871, %v4869
        %v6078 = vpack.c.b16 %v4872, %v4870
        %v6079 = vpack.c.b16 %v4875, %v4873
        %v6080 = vpack.c.b16 %v4876, %v4874
        %v6081 = vpack.c.b16 %v4879, %v4877
        %v6082 = vpack.c.b16 %v4880, %v4878
        %v6083 = vpack.c.b16 %v4883, %v4881
        %v6084 = vpack.c.b16 %v4884, %v4882
        %v6085 = vpack.c.b16 %v4887, %v4885
        %v6086 = vpack.c.b16 %v4888, %v4886
        %v6087 = vpack.c.b16 %v4891, %v4889
        %v6088 = vpack.c.b16 %v4892, %v4890
        %v6089 = vpack.c.b16 %v4895, %v4893
        %v6090 = vpack.c.b16 %v4896, %v4894
        %v6091 = vpack.c.b16 %v4899, %v4897
        %v6092 = vpack.c.b16 %v4900, %v4898
        %v6093 = vpack.c.b16 %v4903, %v4901
        %v6094 = vpack.c.b16 %v4904, %v4902
        %v6095 = vpack.c.b16 %v4907, %v4905
        %v6096 = vpack.c.b16 %v4908, %v4906
        %v6097 = vpack.c.b16 %v4911, %v4909
        %v6098 = vpack.c.b16 %v4912, %v4910
        %v6099 = vpack.c.b16 %v4915, %v4913
        %v6100 = vpack.c.b16 %v4916, %v4914
        %v6101 = vpack.c.b16 %v4919, %v4917
        %v6102 = vpack.c.b16 %v4920, %v4918
        %v6103 = vpack.c.b16 %v4923, %v4921
        %v6104 = vpack.c.b16 %v4924, %v4922
        %v6105 = vpack.c.b16 %v4927, %v4925
        %v6106 = vpack.c.b16 %v4928, %v4926
        %v6107 = vpack.c.b16 %v4931, %v4929
        %v6108 = vpack.c.b16 %v4932, %v4930
        %v6109 = vpack.c.b16 %v4935, %v4933
        %v6110 = vpack.c.b16 %v4936, %v4934
        %v6111 = vpack.c.b16 %v4939, %v4937
        %v6112 = vpack.c.b16 %v4940, %v4938
        %v6113 = vpack.c.b16 %v4943, %v4941
        %v6114 = vpack.c.b16 %v4944, %v4942
        %v6115 = vpack.c.b16 %v4947, %v4945
        %v6116 = vpack.c.b16 %v4948, %v4946
        %v6117 = vpack.c.b16 %v4951, %v4949
        %v6118 = vpack.c.b16 %v4952, %v4950
        %v6119 = vpack.c.b16 %v4955, %v4953
        %v6120 = vpack.c.b16 %v4956, %v4954
        %v6121 = vpack.c.b16 %v4959, %v4957
        %v6122 = vpack.c.b16 %v4960, %v4958
        %v6123 = vpack.c.b16 %v4963, %v4961
        %v6124 = vpack.c.b16 %v4964, %v4962
        %v6125 = vpack.c.b16 %v4967, %v4965
        %v6126 = vpack.c.b16 %v4968, %v4966
        %v6127 = vpack.c.b16 %v4971, %v4969
        %v6128 = vpack.c.b16 %v4972, %v4970
        %v6129 = vpack.c.b16 %v4975, %v4973
        %v6130 = vpack.c.b16 %v4976, %v4974
        %v6131 = vpack.c.b16 %v4979, %v4977
        %v6132 = vpack.c.b16 %v4980, %v4978
        %v6133 = vpack.c.b16 %v4983, %v4981
        %v6134 = vpack.c.b16 %v4984, %v4982
        %v6135 = vpack.c.b16 %v4987, %v4985
        %v6136 = vpack.c.b16 %v4988, %v4986
        %v6137 = vpack.c.b16 %v4991, %v4989
        %v6138 = vpack.c.b16 %v4992, %v4990
        %v6139 = vpack.c.b16 %v4995, %v4993
        %v6140 = vpack.c.b16 %v4996, %v4994
        %v6141 = vpack.c.b16 %v4999, %v4997
        %v6142 = vpack.c.b16 %v5000, %v4998
        %v6143 = vpack.c.b16 %v5003, %v5001
        %v6144 = vpack.c.b16 %v5004, %v5002
        %v6145 = vpack.c.b16 %v5007, %v5005
        %v6146 = vpack.c.b16 %v5008, %v5006
        %v6147 = vpack.c.b16 %v5011, %v5009
        %v6148 = vpack.c.b16 %v5012, %v5010
        %v6149 = vpack.c.b16 %v5015, %v5013
        %v6150 = vpack.c.b16 %v5016, %v5014
        %v6151 = vpack.c.b16 %v5019, %v5017
        %v6152 = vpack.c.b16 %v5020, %v5018
        %v6153 = vpack.c.b16 %v5023, %v5021
        %v6154 = vpack.c.b16 %v5024, %v5022
        %v6155 = vpack.c.b16 %v5027, %v5025
        %v6156 = vpack.c.b16 %v5028, %v5026
        %v6157 = vpack.c.b16 %v5031, %v5029
        %v6158 = vpack.c.b16 %v5032, %v5030
        %v6159 = vpack.c.b16 %v5035, %v5033
        %v6160 = vpack.c.b16 %v5036, %v5034
        %v6161 = vpack.c.b16 %v5039, %v5037
        %v6162 = vpack.c.b16 %v5040, %v5038
        %v6163 = vpack.c.b16 %v5043, %v5041
        %v6164 = vpack.c.b16 %v5044, %v5042
        %v6165 = vpack.c.b16 %v5047, %v5045
        %v6166 = vpack.c.b16 %v5048, %v5046
        %v6167 = vpack.c.b16 %v5051, %v5049
        %v6168 = vpack.c.b16 %v5052, %v5050
        %v6169 = vpack.c.b16 %v5055, %v5053
        %v6170 = vpack.c.b16 %v5056, %v5054
        %v6171 = vpack.c.b16 %v5059, %v5057
        %v6172 = vpack.c.b16 %v5060, %v5058
        %v6173 = vpack.c.b16 %v5063, %v5061
        %v6174 = vpack.c.b16 %v5064, %v5062
        %v6175 = vpack.c.b16 %v5067, %v5065
        %v6176 = vpack.c.b16 %v5068, %v5066
        %v6177 = vpack.c.b16 %v5071, %v5069
        %v6178 = vpack.c.b16 %v5072, %v5070
        %v6179 = vpack.c.b16 %v5075, %v5073
        %v6180 = vpack.c.b16 %v5076, %v5074
        %v6181 = vpack.c.b16 %v5079, %v5077
        %v6182 = vpack.c.b16 %v5080, %v5078
        %v6183 = vpack.c.b16 %v5083, %v5081
        %v6184 = vpack.c.b16 %v5084, %v5082
        %v6185 = vpack.c.b16 %v5087, %v5085
        %v6186 = vpack.c.b16 %v5088, %v5086
        %v6187 = vpack.c.b16 %v5091, %v5089
        %v6188 = vpack.c.b16 %v5092, %v5090
        %v6189 = vpack.c.b16 %v5095, %v5093
        %v6190 = vpack.c.b16 %v5096, %v5094
        %v6191 = vpack.c.b16 %v5099, %v5097
        %v6192 = vpack.c.b16 %v5100, %v5098
        %v6193 = vpack.c.b16 %v5103, %v5101
        %v6194 = vpack.c.b16 %v5104, %v5102
        %v6195 = vpack.c.b16 %v5107, %v5105
        %v6196 = vpack.c.b16 %v5108, %v5106
        %v6197 = vpack.c.b16 %v5111, %v5109
        %v6198 = vpack.c.b16 %v5112, %v5110
        %v6199 = vpack.c.b16 %v5115, %v5113
        %v6200 = vpack.c.b16 %v5116, %v5114
        %v6201 = vpack.c.b16 %v5119, %v5117
        %v6202 = vpack.c.b16 %v5120, %v5118
        %v6203 = vpack.c.b16 %v5123, %v5121
        %v6204 = vpack.c.b16 %v5124, %v5122
        %v6205 = vpack.c.b16 %v5127, %v5125
        %v6206 = vpack.c.b16 %v5128, %v5126
        %v6207 = vpack.c.b16 %v5131, %v5129
        %v6208 = vpack.c.b16 %v5132, %v5130
        %v6209 = vpack.c.b16 %v5135, %v5133
        %v6210 = vpack.c.b16 %v5136, %v5134
        %v6211 = vpack.c.b16 %v5139, %v5137
        %v6212 = vpack.c.b16 %v5140, %v5138
        %v6213 = vpack.c.b16 %v5143, %v5141
        %v6214 = vpack.c.b16 %v5144, %v5142
        %v6215 = vpack.c.b16 %v5147, %v5145
        %v6216 = vpack.c.b16 %v5148, %v5146
        %v6217 = vpack.c.b16 %v5151, %v5149
        %v6218 = vpack.c.b16 %v5152, %v5150
        %v6219 = vpack.c.b16 %v5155, %v5153
        %v6220 = vpack.c.b16 %v5156, %v5154
        %v6221 = vpack.c.b16 %v5159, %v5157
        %v6222 = vpack.c.b16 %v5160, %v5158
        %v6223 = vpack.c.b16 %v5163, %v5161
        %v6224 = vpack.c.b16 %v5164, %v5162
        %v6225 = vpack.c.b16 %v5167, %v5165
        %v6226 = vpack.c.b16 %v5168, %v5166
        %v6227 = vpack.c.b16 %v5171, %v5169
        %v6228 = vpack.c.b16 %v5172, %v5170
        %7285 = vmatprep.subr.bf16.mxu0 %v5174
        %7286 = vmatpush1.bf16.msra.mxu0 %v5173
        %7287 = vmatprep.subr.bf16.mxu0 %v5176
        %7288 = vmatpush1.bf16.msra.mxu0 %v5175
        %7289 = vmatprep.subr.bf16.mxu0 %v5178
        %7290 = vmatpush1.bf16.msra.mxu0 %v5177
        %7291 = vmatprep.subr.bf16.mxu0 %v5180
        %7292 = vmatpush1.bf16.msra.mxu0 %v5179
        %7293 = vmatprep.subr.bf16.mxu0 %v5182
        %7294 = vmatpush1.bf16.msra.mxu0 %v5181
        %7295 = vmatprep.subr.bf16.mxu0 %v5184
        %7296 = vmatpush1.bf16.msra.mxu0 %v5183
        %7297 = vmatprep.subr.bf16.mxu0 %v5186
        %7298 = vmatpush1.bf16.msra.mxu0 %v5185
        %7299 = vmatprep.subr.bf16.mxu0 %v5188
        %7300 = vmatpush1.bf16.msra.mxu0 %v5187
        %7301 = vmatprep.subr.bf16.mxu0 %v5190
        %7302 = vmatpush1.bf16.msra.mxu0 %v5189
        %7303 = vmatprep.subr.bf16.mxu0 %v5192
        %7304 = vmatpush1.bf16.msra.mxu0 %v5191
        %7305 = vmatprep.subr.bf16.mxu0 %v5194
        %7306 = vmatpush1.bf16.msra.mxu0 %v5193
        %7307 = vmatprep.subr.bf16.mxu0 %v5196
        %7308 = vmatpush1.bf16.msra.mxu0 %v5195
        %7309 = vmatprep.subr.bf16.mxu0 %v5198
        %7310 = vmatpush1.bf16.msra.mxu0 %v5197
        %7311 = vmatprep.subr.bf16.mxu0 %v5200
        %7312 = vmatpush1.bf16.msra.mxu0 %v5199
        %7313 = vmatprep.subr.bf16.mxu0 %v5202
        %7314 = vmatpush1.bf16.msra.mxu0 %v5201
        %7315 = vmatprep.subr.bf16.mxu0 %v5204
        %7316 = vmatpush1.bf16.msra.mxu0 %v5203
        %7317 = vmatprep.mubr.bf16.mxu0 %v1742
        %7318 = vmatmul.mubr.bf16.gmra.mrb[0].mxu0 %v1741
        %v7319 = vpop.f32.mrb[0].mxu0
        %v7320 = vadd.f32 0.0, %v7319
        %v7321 = vpop.f32.mrb[0].mxu0
        %v7322 = vadd.f32 0.0, %v7321
        %v7323 = vpop.f32.mrb[0].mxu0
        %v7324 = vpop.f32.mrb[0].mxu0
        %7325 = vmatprep.mubr.bf16.mxu0 %v1808
        %7326 = vmatmul.mubr.bf16.gmra.mrb[0].mxu0 %v1807
        %v7327 = vpop.f32.mrb[0].mxu0
        %v7328 = vadd.f32 0.0, %v7327
        %v7329 = vpop.f32.mrb[0].mxu0
        %v7330 = vadd.f32 0.0, %v7329
        %v7331 = vpop.f32.mrb[0].mxu0
        %v7332 = vadd.f32 0.0, %v7331
        %v7333 = vpop.f32.mrb[0].mxu0
        %v7334 = vadd.f32 0.0, %v7333
        %7335 = vdwg.mxu0
        %7336 = vmatprep.subr.bf16.mxu0 %v5206
        %7337 = vmatpush1.bf16.msra.mxu0 %v5205
        %7338 = vmatprep.subr.bf16.mxu0 %v5208
        %7339 = vmatpush1.bf16.msra.mxu0 %v5207
        %7340 = vmatprep.subr.bf16.mxu0 %v5210
        %7341 = vmatpush1.bf16.msra.mxu0 %v5209
        %7342 = vmatprep.subr.bf16.mxu0 %v5212
        %7343 = vmatpush1.bf16.msra.mxu0 %v5211
        %7344 = vmatprep.subr.bf16.mxu0 %v5214
        %7345 = vmatpush1.bf16.msra.mxu0 %v5213
        %7346 = vmatprep.subr.bf16.mxu0 %v5216
        %7347 = vmatpush1.bf16.msra.mxu0 %v5215
        %7348 = vmatprep.subr.bf16.mxu0 %v5218
        %7349 = vmatpush1.bf16.msra.mxu0 %v5217
        %7350 = vmatprep.subr.bf16.mxu0 %v5220
        %7351 = vmatpush1.bf16.msra.mxu0 %v5219
        %7352 = vmatprep.subr.bf16.mxu0 %v5222
        %7353 = vmatpush1.bf16.msra.mxu0 %v5221
        %7354 = vmatprep.subr.bf16.mxu0 %v5224
        %7355 = vmatpush1.bf16.msra.mxu0 %v5223
        %7356 = vmatprep.subr.bf16.mxu0 %v5226
        %7357 = vmatpush1.bf16.msra.mxu0 %v5225
        %7358 = vmatprep.subr.bf16.mxu0 %v5228
        %7359 = vmatpush1.bf16.msra.mxu0 %v5227
        %7360 = vmatprep.subr.bf16.mxu0 %v5230
        %7361 = vmatpush1.bf16.msra.mxu0 %v5229
        %7362 = vmatprep.subr.bf16.mxu0 %v5232
        %7363 = vmatpush1.bf16.msra.mxu0 %v5231
        %7364 = vmatprep.subr.bf16.mxu0 %v5234
        %7365 = vmatpush1.bf16.msra.mxu0 %v5233
        %7366 = vmatprep.subr.bf16.mxu0 %v5236
        %7367 = vmatpush1.bf16.msra.mxu0 %v5235
        %7368 = vmatprep.mubr.bf16.mxu0 %v1744
        %7369 = vmatmul.mubr.bf16.gmra.mrb[0].mxu0 %v1743
        %v7370 = vpop.f32.mrb[0].mxu0
        %v7371 = vadd.f32 %v7320, %v7370
        %v7372 = vpop.f32.mrb[0].mxu0
        %v7373 = vadd.f32 %v7322, %v7372
        %v7374 = vpop.f32.mrb[0].mxu0
        %v7375 = vpop.f32.mrb[0].mxu0
        %7376 = vmatprep.mubr.bf16.mxu0 %v1810
        %7377 = vmatmul.mubr.bf16.gmra.mrb[0].mxu0 %v1809
        %v7378 = vpop.f32.mrb[0].mxu0
        %v7379 = vadd.f32 %v7328, %v7378
        %v7380 = vpop.f32.mrb[0].mxu0
        %v7381 = vadd.f32 %v7330, %v7380
        %v7382 = vpop.f32.mrb[0].mxu0
        %v7383 = vadd.f32 %v7332, %v7382
        %v7384 = vpop.f32.mrb[0].mxu0
        %v7385 = vadd.f32 %v7334, %v7384
        %7386 = vdwg.mxu0
        %7387 = vmatprep.subr.bf16.mxu0 %v5238
        %7388 = vmatpush1.bf16.msra.mxu0 %v5237
        %7389 = vmatprep.subr.bf16.mxu0 %v5240
        %7390 = vmatpush1.bf16.msra.mxu0 %v5239
        %7391 = vmatprep.subr.bf16.mxu0 %v5242
        %7392 = vmatpush1.bf16.msra.mxu0 %v5241
        %7393 = vmatprep.subr.bf16.mxu0 %v5244
        %7394 = vmatpush1.bf16.msra.mxu0 %v5243
        %7395 = vmatprep.subr.bf16.mxu0 %v5246
        %7396 = vmatpush1.bf16.msra.mxu0 %v5245
        %7397 = vmatprep.subr.bf16.mxu0 %v5248
        %7398 = vmatpush1.bf16.msra.mxu0 %v5247
        %7399 = vmatprep.subr.bf16.mxu0 %v5250
        %7400 = vmatpush1.bf16.msra.mxu0 %v5249
        %7401 = vmatprep.subr.bf16.mxu0 %v5252
        %7402 = vmatpush1.bf16.msra.mxu0 %v5251
        %7403 = vmatprep.subr.bf16.mxu0 %v5254
        %7404 = vmatpush1.bf16.msra.mxu0 %v5253
        %7405 = vmatprep.subr.bf16.mxu0 %v5256
        %7406 = vmatpush1.bf16.msra.mxu0 %v5255
        %7407 = vmatprep.subr.bf16.mxu0 %v5258
        %7408 = vmatpush1.bf16.msra.mxu0 %v5257
        %7409 = vmatprep.subr.bf16.mxu0 %v5260
        %7410 = vmatpush1.bf16.msra.mxu0 %v5259
        %7411 = vmatprep.subr.bf16.mxu0 %v5262
        %7412 = vmatpush1.bf16.msra.mxu0 %v5261
        %7413 = vmatprep.subr.bf16.mxu0 %v5264
        %7414 = vmatpush1.bf16.msra.mxu0 %v5263
        %7415 = vmatprep.subr.bf16.mxu0 %v5266
        %7416 = vmatpush1.bf16.msra.mxu0 %v5265
        %7417 = vmatprep.subr.bf16.mxu0 %v5268
        %7418 = vmatpush1.bf16.msra.mxu0 %v5267
        %7419 = vmatprep.mubr.bf16.mxu0 %v1746
        %7420 = vmatmul.mubr.bf16.gmra.mrb[0].mxu0 %v1745
        %v7421 = vpop.f32.mrb[0].mxu0
        %v7422 = vadd.f32 %v7371, %v7421
        %v7423 = vpop.f32.mrb[0].mxu0
        %v7424 = vadd.f32 %v7373, %v7423
        %v7425 = vpop.f32.mrb[0].mxu0
        %v7426 = vpop.f32.mrb[0].mxu0
        %7427 = vmatprep.mubr.bf16.mxu0 %v1812
        %7428 = vmatmul.mubr.bf16.gmra.mrb[0].mxu0 %v1811
        %v7429 = vpop.f32.mrb[0].mxu0
        %v7430 = vadd.f32 %v7379, %v7429
        %v7431 = vpop.f32.mrb[0].mxu0
        %v7432 = vadd.f32 %v7381, %v7431
        %v7433 = vpop.f32.mrb[0].mxu0
        %v7434 = vadd.f32 %v7383, %v7433
        %v7435 = vpop.f32.mrb[0].mxu0
        %v7436 = vadd.f32 %v7385, %v7435
        %7437 = vdwg.mxu0
        %7438 = vmatprep.subr.bf16.mxu0 %v5270
        %7439 = vmatpush1.bf16.msra.mxu0 %v5269
        %7440 = vmatprep.subr.bf16.mxu0 %v5272
        %7441 = vmatpush1.bf16.msra.mxu0 %v5271
        %7442 = vmatprep.subr.bf16.mxu0 %v5274
        %7443 = vmatpush1.bf16.msra.mxu0 %v5273
        %7444 = vmatprep.subr.bf16.mxu0 %v5276
        %7445 = vmatpush1.bf16.msra.mxu0 %v5275
        %7446 = vmatprep.subr.bf16.mxu0 %v5278
        %7447 = vmatpush1.bf16.msra.mxu0 %v5277
        %7448 = vmatprep.subr.bf16.mxu0 %v5280
        %7449 = vmatpush1.bf16.msra.mxu0 %v5279
        %7450 = vmatprep.subr.bf16.mxu0 %v5282
        %7451 = vmatpush1.bf16.msra.mxu0 %v5281
        %7452 = vmatprep.subr.bf16.mxu0 %v5284
        %7453 = vmatpush1.bf16.msra.mxu0 %v5283
        %7454 = vmatprep.subr.bf16.mxu0 %v5286
        %7455 = vmatpush1.bf16.msra.mxu0 %v5285
        %7456 = vmatprep.subr.bf16.mxu0 %v5288
        %7457 = vmatpush1.bf16.msra.mxu0 %v5287
        %7458 = vmatprep.subr.bf16.mxu0 %v5290
        %7459 = vmatpush1.bf16.msra.mxu0 %v5289
        %7460 = vmatprep.subr.bf16.mxu0 %v5292
        %7461 = vmatpush1.bf16.msra.mxu0 %v5291
        %7462 = vmatprep.subr.bf16.mxu0 %v5294
        %7463 = vmatpush1.bf16.msra.mxu0 %v5293
        %7464 = vmatprep.subr.bf16.mxu0 %v5296
        %7465 = vmatpush1.bf16.msra.mxu0 %v5295
        %7466 = vmatprep.subr.bf16.mxu0 %v5298
        %7467 = vmatpush1.bf16.msra.mxu0 %v5297
        %7468 = vmatprep.subr.bf16.mxu0 %v5300
        %7469 = vmatpush1.bf16.msra.mxu0 %v5299
        %7470 = vmatprep.mubr.bf16.mxu0 %v1748
        %7471 = vmatmul.mubr.bf16.gmra.mrb[0].mxu0 %v1747
        %v7472 = vpop.f32.mrb[0].mxu0
        %v7473 = vadd.f32 %v7422, %v7472
        %v7474 = vpop.f32.mrb[0].mxu0
        %v7475 = vadd.f32 %v7424, %v7474
        %v7476 = vpop.f32.mrb[0].mxu0
        %v7477 = vpop.f32.mrb[0].mxu0
        %7478 = vmatprep.mubr.bf16.mxu0 %v1814
        %7479 = vmatmul.mubr.bf16.gmra.mrb[0].mxu0 %v1813
        %v7480 = vpop.f32.mrb[0].mxu0
        %v7481 = vadd.f32 %v7430, %v7480
        %v7482 = vpop.f32.mrb[0].mxu0
        %v7483 = vadd.f32 %v7432, %v7482
        %v7484 = vpop.f32.mrb[0].mxu0
        %v7485 = vadd.f32 %v7434, %v7484
        %v7486 = vpop.f32.mrb[0].mxu0
        %v7487 = vadd.f32 %v7436, %v7486
        %7488 = vdwg.mxu0
        %7489 = vmatprep.subr.bf16.mxu0 %v5302
        %7490 = vmatpush1.bf16.msra.mxu0 %v5301
        %7491 = vmatprep.subr.bf16.mxu0 %v5304
        %7492 = vmatpush1.bf16.msra.mxu0 %v5303
        %7493 = vmatprep.subr.bf16.mxu0 %v5306
        %7494 = vmatpush1.bf16.msra.mxu0 %v5305
        %7495 = vmatprep.subr.bf16.mxu0 %v5308
        %7496 = vmatpush1.bf16.msra.mxu0 %v5307
        %7497 = vmatprep.subr.bf16.mxu0 %v5310
        %7498 = vmatpush1.bf16.msra.mxu0 %v5309
        %7499 = vmatprep.subr.bf16.mxu0 %v5312
        %7500 = vmatpush1.bf16.msra.mxu0 %v5311
        %7501 = vmatprep.subr.bf16.mxu0 %v5314
        %7502 = vmatpush1.bf16.msra.mxu0 %v5313
        %7503 = vmatprep.subr.bf16.mxu0 %v5316
        %7504 = vmatpush1.bf16.msra.mxu0 %v5315
        %7505 = vmatprep.subr.bf16.mxu0 %v5318
        %7506 = vmatpush1.bf16.msra.mxu0 %v5317
        %7507 = vmatprep.subr.bf16.mxu0 %v5320
        %7508 = vmatpush1.bf16.msra.mxu0 %v5319
        %7509 = vmatprep.subr.bf16.mxu0 %v5322
        %7510 = vmatpush1.bf16.msra.mxu0 %v5321
        %7511 = vmatprep.subr.bf16.mxu0 %v5324
        %7512 = vmatpush1.bf16.msra.mxu0 %v5323
        %7513 = vmatprep.subr.bf16.mxu0 %v5326
        %7514 = vmatpush1.bf16.msra.mxu0 %v5325
        %7515 = vmatprep.subr.bf16.mxu0 %v5328
        %7516 = vmatpush1.bf16.msra.mxu0 %v5327
        %7517 = vmatprep.subr.bf16.mxu0 %v5330
        %7518 = vmatpush1.bf16.msra.mxu0 %v5329
        %7519 = vmatprep.subr.bf16.mxu0 %v5332
        %7520 = vmatpush1.bf16.msra.mxu0 %v5331
        %7521 = vmatprep.mubr.bf16.mxu0 %v1750
        %7522 = vmatmul.mubr.bf16.gmra.mrb[0].mxu0 %v1749
        %v7523 = vpop.f32.mrb[0].mxu0
        %v7524 = vadd.f32 %v7473, %v7523
        %v7525 = vpop.f32.mrb[0].mxu0
        %v7526 = vadd.f32 %v7475, %v7525
        %v7527 = vpop.f32.mrb[0].mxu0
        %v7528 = vpop.f32.mrb[0].mxu0
        %7529 = vmatprep.mubr.bf16.mxu0 %v1816
        %7530 = vmatmul.mubr.bf16.gmra.mrb[0].mxu0 %v1815
        %v7531 = vpop.f32.mrb[0].mxu0
        %v7532 = vadd.f32 %v7481, %v7531
        %v7533 = vpop.f32.mrb[0].mxu0
        %v7534 = vadd.f32 %v7483, %v7533
        %v7535 = vpop.f32.mrb[0].mxu0
        %v7536 = vadd.f32 %v7485, %v7535
        %v7537 = vpop.f32.mrb[0].mxu0
        %v7538 = vadd.f32 %v7487, %v7537
        %7539 = vdwg.mxu0
        %7540 = vmatprep.subr.bf16.mxu0 %v5334
        %7541 = vmatpush1.bf16.msra.mxu0 %v5333
        %7542 = vmatprep.subr.bf16.mxu0 %v5336
        %7543 = vmatpush1.bf16.msra.mxu0 %v5335
        %7544 = vmatprep.subr.bf16.mxu0 %v5338
        %7545 = vmatpush1.bf16.msra.mxu0 %v5337
        %7546 = vmatprep.subr.bf16.mxu0 %v5340
        %7547 = vmatpush1.bf16.msra.mxu0 %v5339
        %7548 = vmatprep.subr.bf16.mxu0 %v5342
        %7549 = vmatpush1.bf16.msra.mxu0 %v5341
        %7550 = vmatprep.subr.bf16.mxu0 %v5344
        %7551 = vmatpush1.bf16.msra.mxu0 %v5343
        %7552 = vmatprep.subr.bf16.mxu0 %v5346
        %7553 = vmatpush1.bf16.msra.mxu0 %v5345
        %7554 = vmatprep.subr.bf16.mxu0 %v5348
        %7555 = vmatpush1.bf16.msra.mxu0 %v5347
        %7556 = vmatprep.subr.bf16.mxu0 %v5350
        %7557 = vmatpush1.bf16.msra.mxu0 %v5349
        %7558 = vmatprep.subr.bf16.mxu0 %v5352
        %7559 = vmatpush1.bf16.msra.mxu0 %v5351
        %7560 = vmatprep.subr.bf16.mxu0 %v5354
        %7561 = vmatpush1.bf16.msra.mxu0 %v5353
        %7562 = vmatprep.subr.bf16.mxu0 %v5356
        %7563 = vmatpush1.bf16.msra.mxu0 %v5355
        %7564 = vmatprep.subr.bf16.mxu0 %v5358
        %7565 = vmatpush1.bf16.msra.mxu0 %v5357
        %7566 = vmatprep.subr.bf16.mxu0 %v5360
        %7567 = vmatpush1.bf16.msra.mxu0 %v5359
        %7568 = vmatprep.subr.bf16.mxu0 %v5362
        %7569 = vmatpush1.bf16.msra.mxu0 %v5361
        %7570 = vmatprep.subr.bf16.mxu0 %v5364
        %7571 = vmatpush1.bf16.msra.mxu0 %v5363
        %7572 = vmatprep.mubr.bf16.mxu0 %v1752
        %7573 = vmatmul.mubr.bf16.gmra.mrb[0].mxu0 %v1751
        %v7574 = vpop.f32.mrb[0].mxu0
        %v7575 = vadd.f32 %v7524, %v7574
        %v7576 = vpop.f32.mrb[0].mxu0
        %v7577 = vadd.f32 %v7526, %v7576
        %v7578 = vpop.f32.mrb[0].mxu0
        %v7579 = vpop.f32.mrb[0].mxu0
        %7580 = vmatprep.mubr.bf16.mxu0 %v1818
        %7581 = vmatmul.mubr.bf16.gmra.mrb[0].mxu0 %v1817
        %v7582 = vpop.f32.mrb[0].mxu0
        %v7583 = vadd.f32 %v7532, %v7582
        %v7584 = vpop.f32.mrb[0].mxu0
        %v7585 = vadd.f32 %v7534, %v7584
        %v7586 = vpop.f32.mrb[0].mxu0
        %v7587 = vadd.f32 %v7536, %v7586
        %v7588 = vpop.f32.mrb[0].mxu0
        %v7589 = vadd.f32 %v7538, %v7588
        %7590 = vdwg.mxu0
        %7591 = vmatprep.subr.bf16.mxu0 %v5366
        %7592 = vmatpush1.bf16.msra.mxu0 %v5365
        %7593 = vmatprep.subr.bf16.mxu0 %v5368
        %7594 = vmatpush1.bf16.msra.mxu0 %v5367
        %7595 = vmatprep.subr.bf16.mxu0 %v5370
        %7596 = vmatpush1.bf16.msra.mxu0 %v5369
        %7597 = vmatprep.subr.bf16.mxu0 %v5372
        %7598 = vmatpush1.bf16.msra.mxu0 %v5371
        %7599 = vmatprep.subr.bf16.mxu0 %v5374
        %7600 = vmatpush1.bf16.msra.mxu0 %v5373
        %7601 = vmatprep.subr.bf16.mxu0 %v5376
        %7602 = vmatpush1.bf16.msra.mxu0 %v5375
        %7603 = vmatprep.subr.bf16.mxu0 %v5378
        %7604 = vmatpush1.bf16.msra.mxu0 %v5377
        %7605 = vmatprep.subr.bf16.mxu0 %v5380
        %7606 = vmatpush1.bf16.msra.mxu0 %v5379
        %7607 = vmatprep.subr.bf16.mxu0 %v5382
        %7608 = vmatpush1.bf16.msra.mxu0 %v5381
        %7609 = vmatprep.subr.bf16.mxu0 %v5384
        %7610 = vmatpush1.bf16.msra.mxu0 %v5383
        %7611 = vmatprep.subr.bf16.mxu0 %v5386
        %7612 = vmatpush1.bf16.msra.mxu0 %v5385
        %7613 = vmatprep.subr.bf16.mxu0 %v5388
        %7614 = vmatpush1.bf16.msra.mxu0 %v5387
        %7615 = vmatprep.subr.bf16.mxu0 %v5390
        %7616 = vmatpush1.bf16.msra.mxu0 %v5389
        %7617 = vmatprep.subr.bf16.mxu0 %v5392
        %7618 = vmatpush1.bf16.msra.mxu0 %v5391
        %7619 = vmatprep.subr.bf16.mxu0 %v5394
        %7620 = vmatpush1.bf16.msra.mxu0 %v5393
        %7621 = vmatprep.subr.bf16.mxu0 %v5396
        %7622 = vmatpush1.bf16.msra.mxu0 %v5395
        %7623 = vmatprep.mubr.bf16.mxu0 %v1754
        %7624 = vmatmul.mubr.bf16.gmra.mrb[0].mxu0 %v1753
        %v7625 = vpop.f32.mrb[0].mxu0
        %v7626 = vadd.f32 %v7575, %v7625
        %v7627 = vpop.f32.mrb[0].mxu0
        %v7628 = vadd.f32 %v7577, %v7627
        %v7629 = vpop.f32.mrb[0].mxu0
        %v7630 = vpop.f32.mrb[0].mxu0
        %7631 = vmatprep.mubr.bf16.mxu0 %v1820
        %7632 = vmatmul.mubr.bf16.gmra.mrb[0].mxu0 %v1819
        %v7633 = vpop.f32.mrb[0].mxu0
        %v7634 = vadd.f32 %v7583, %v7633
        %v7635 = vpop.f32.mrb[0].mxu0
        %v7636 = vadd.f32 %v7585, %v7635
        %v7637 = vpop.f32.mrb[0].mxu0
        %v7638 = vadd.f32 %v7587, %v7637
        %v7639 = vpop.f32.mrb[0].mxu0
        %v7640 = vadd.f32 %v7589, %v7639
        %7641 = vdwg.mxu0
        %7642 = vmatprep.subr.bf16.mxu0 %v5398
        %7643 = vmatpush1.bf16.msra.mxu0 %v5397
        %7644 = vmatprep.subr.bf16.mxu0 %v5400
        %7645 = vmatpush1.bf16.msra.mxu0 %v5399
        %7646 = vmatprep.subr.bf16.mxu0 %v5402
        %7647 = vmatpush1.bf16.msra.mxu0 %v5401
        %7648 = vmatprep.subr.bf16.mxu0 %v5404
        %7649 = vmatpush1.bf16.msra.mxu0 %v5403
        %7650 = vmatprep.subr.bf16.mxu0 %v5406
        %7651 = vmatpush1.bf16.msra.mxu0 %v5405
        %7652 = vmatprep.subr.bf16.mxu0 %v5408
        %7653 = vmatpush1.bf16.msra.mxu0 %v5407
        %7654 = vmatprep.subr.bf16.mxu0 %v5410
        %7655 = vmatpush1.bf16.msra.mxu0 %v5409
        %7656 = vmatprep.subr.bf16.mxu0 %v5412
        %7657 = vmatpush1.bf16.msra.mxu0 %v5411
        %7658 = vmatprep.subr.bf16.mxu0 %v5414
        %7659 = vmatpush1.bf16.msra.mxu0 %v5413
        %7660 = vmatprep.subr.bf16.mxu0 %v5416
        %7661 = vmatpush1.bf16.msra.mxu0 %v5415
        %7662 = vmatprep.subr.bf16.mxu0 %v5418
        %7663 = vmatpush1.bf16.msra.mxu0 %v5417
        %7664 = vmatprep.subr.bf16.mxu0 %v5420
        %7665 = vmatpush1.bf16.msra.mxu0 %v5419
        %7666 = vmatprep.subr.bf16.mxu0 %v5422
        %7667 = vmatpush1.bf16.msra.mxu0 %v5421
        %7668 = vmatprep.subr.bf16.mxu0 %v5424
        %7669 = vmatpush1.bf16.msra.mxu0 %v5423
        %7670 = vmatprep.subr.bf16.mxu0 %v5426
        %7671 = vmatpush1.bf16.msra.mxu0 %v5425
        %7672 = vmatprep.subr.bf16.mxu0 %v5428
        %7673 = vmatpush1.bf16.msra.mxu0 %v5427
        %7674 = vmatprep.mubr.bf16.mxu0 %v1756
        %7675 = vmatmul.mubr.bf16.gmra.mrb[0].mxu0 %v1755
        %v7676 = vpop.f32.mrb[0].mxu0
        %v7677 = vadd.f32 %v7626, %v7676
        %v7678 = vpop.f32.mrb[0].mxu0
        %v7679 = vadd.f32 %v7628, %v7678
        %v7680 = vpop.f32.mrb[0].mxu0
        %v7681 = vpop.f32.mrb[0].mxu0
        %7682 = vmatprep.mubr.bf16.mxu0 %v1822
        %7683 = vmatmul.mubr.bf16.gmra.mrb[0].mxu0 %v1821
        %v7684 = vpop.f32.mrb[0].mxu0
        %v7685 = vadd.f32 %v7634, %v7684
        %v7686 = vpop.f32.mrb[0].mxu0
        %v7687 = vadd.f32 %v7636, %v7686
        %v7688 = vpop.f32.mrb[0].mxu0
        %v7689 = vadd.f32 %v7638, %v7688
        %v7690 = vpop.f32.mrb[0].mxu0
        %v7691 = vadd.f32 %v7640, %v7690
        %7692 = vdwg.mxu0
        %7693 = vmatprep.subr.bf16.mxu0 %v5430
        %7694 = vmatpush1.bf16.msra.mxu0 %v5429
        %7695 = vmatprep.subr.bf16.mxu0 %v5432
        %7696 = vmatpush1.bf16.msra.mxu0 %v5431
        %7697 = vmatprep.subr.bf16.mxu0 %v5434
        %7698 = vmatpush1.bf16.msra.mxu0 %v5433
        %7699 = vmatprep.subr.bf16.mxu0 %v5436
        %7700 = vmatpush1.bf16.msra.mxu0 %v5435
        %7701 = vmatprep.subr.bf16.mxu0 %v5438
        %7702 = vmatpush1.bf16.msra.mxu0 %v5437
        %7703 = vmatprep.subr.bf16.mxu0 %v5440
        %7704 = vmatpush1.bf16.msra.mxu0 %v5439
        %7705 = vmatprep.subr.bf16.mxu0 %v5442
        %7706 = vmatpush1.bf16.msra.mxu0 %v5441
        %7707 = vmatprep.subr.bf16.mxu0 %v5444
        %7708 = vmatpush1.bf16.msra.mxu0 %v5443
        %7709 = vmatprep.subr.bf16.mxu0 %v5446
        %7710 = vmatpush1.bf16.msra.mxu0 %v5445
        %7711 = vmatprep.subr.bf16.mxu0 %v5448
        %7712 = vmatpush1.bf16.msra.mxu0 %v5447
        %7713 = vmatprep.subr.bf16.mxu0 %v5450
        %7714 = vmatpush1.bf16.msra.mxu0 %v5449
        %7715 = vmatprep.subr.bf16.mxu0 %v5452
        %7716 = vmatpush1.bf16.msra.mxu0 %v5451
        %7717 = vmatprep.subr.bf16.mxu0 %v5454
        %7718 = vmatpush1.bf16.msra.mxu0 %v5453
        %7719 = vmatprep.subr.bf16.mxu0 %v5456
        %7720 = vmatpush1.bf16.msra.mxu0 %v5455
        %7721 = vmatprep.subr.bf16.mxu0 %v5458
        %7722 = vmatpush1.bf16.msra.mxu0 %v5457
        %7723 = vmatprep.subr.bf16.mxu0 %v5460
        %7724 = vmatpush1.bf16.msra.mxu0 %v5459
        %7725 = vmatprep.mubr.bf16.mxu0 %v1758
        %7726 = vmatmul.mubr.bf16.gmra.mrb[0].mxu0 %v1757
        %v7727 = vpop.f32.mrb[0].mxu0
        %v7728 = vadd.f32 %v7677, %v7727
        %v7729 = vpop.f32.mrb[0].mxu0
        %v7730 = vadd.f32 %v7679, %v7729
        %v7731 = vpop.f32.mrb[0].mxu0
        %v7732 = vpop.f32.mrb[0].mxu0
        %7733 = vmatprep.mubr.bf16.mxu0 %v1824
        %7734 = vmatmul.mubr.bf16.gmra.mrb[0].mxu0 %v1823
        %v7735 = vpop.f32.mrb[0].mxu0
        %v7736 = vadd.f32 %v7685, %v7735
        %v7737 = vpop.f32.mrb[0].mxu0
        %v7738 = vadd.f32 %v7687, %v7737
        %v7739 = vpop.f32.mrb[0].mxu0
        %v7740 = vadd.f32 %v7689, %v7739
        %v7741 = vpop.f32.mrb[0].mxu0
        %v7742 = vadd.f32 %v7691, %v7741
        %7743 = vdwg.mxu0
        %7744 = vmatprep.subr.bf16.mxu0 %v5462
        %7745 = vmatpush1.bf16.msra.mxu0 %v5461
        %7746 = vmatprep.subr.bf16.mxu0 %v5464
        %7747 = vmatpush1.bf16.msra.mxu0 %v5463
        %7748 = vmatprep.subr.bf16.mxu0 %v5466
        %7749 = vmatpush1.bf16.msra.mxu0 %v5465
        %7750 = vmatprep.subr.bf16.mxu0 %v5468
        %7751 = vmatpush1.bf16.msra.mxu0 %v5467
        %7752 = vmatprep.subr.bf16.mxu0 %v5470
        %7753 = vmatpush1.bf16.msra.mxu0 %v5469
        %7754 = vmatprep.subr.bf16.mxu0 %v5472
        %7755 = vmatpush1.bf16.msra.mxu0 %v5471
        %7756 = vmatprep.subr.bf16.mxu0 %v5474
        %7757 = vmatpush1.bf16.msra.mxu0 %v5473
        %7758 = vmatprep.subr.bf16.mxu0 %v5476
        %7759 = vmatpush1.bf16.msra.mxu0 %v5475
        %7760 = vmatprep.subr.bf16.mxu0 %v5478
        %7761 = vmatpush1.bf16.msra.mxu0 %v5477
        %7762 = vmatprep.subr.bf16.mxu0 %v5480
        %7763 = vmatpush1.bf16.msra.mxu0 %v5479
        %7764 = vmatprep.subr.bf16.mxu0 %v5482
        %7765 = vmatpush1.bf16.msra.mxu0 %v5481
        %7766 = vmatprep.subr.bf16.mxu0 %v5484
        %7767 = vmatpush1.bf16.msra.mxu0 %v5483
        %7768 = vmatprep.subr.bf16.mxu0 %v5486
        %7769 = vmatpush1.bf16.msra.mxu0 %v5485
        %7770 = vmatprep.subr.bf16.mxu0 %v5488
        %7771 = vmatpush1.bf16.msra.mxu0 %v5487
        %7772 = vmatprep.subr.bf16.mxu0 %v5490
        %7773 = vmatpush1.bf16.msra.mxu0 %v5489
        %7774 = vmatprep.subr.bf16.mxu0 %v5492
        %7775 = vmatpush1.bf16.msra.mxu0 %v5491
        %7776 = vmatprep.mubr.bf16.mxu0 %v1760
        %7777 = vmatmul.mubr.bf16.gmra.mrb[0].mxu0 %v1759
        %v7778 = vpop.f32.mrb[0].mxu0
        %v7779 = vadd.f32 %v7728, %v7778
        %v7780 = vpop.f32.mrb[0].mxu0
        %v7781 = vadd.f32 %v7730, %v7780
        %v7782 = vpop.f32.mrb[0].mxu0
        %v7783 = vpop.f32.mrb[0].mxu0
        %7784 = vmatprep.mubr.bf16.mxu0 %v1826
        %7785 = vmatmul.mubr.bf16.gmra.mrb[0].mxu0 %v1825
        %v7786 = vpop.f32.mrb[0].mxu0
        %v7787 = vadd.f32 %v7736, %v7786
        %v7788 = vpop.f32.mrb[0].mxu0
        %v7789 = vadd.f32 %v7738, %v7788
        %v7790 = vpop.f32.mrb[0].mxu0
        %v7791 = vadd.f32 %v7740, %v7790
        %v7792 = vpop.f32.mrb[0].mxu0
        %v7793 = vadd.f32 %v7742, %v7792
        %7794 = vdwg.mxu0
        %7795 = vmatprep.subr.bf16.mxu0 %v5494
        %7796 = vmatpush1.bf16.msra.mxu0 %v5493
        %7797 = vmatprep.subr.bf16.mxu0 %v5496
        %7798 = vmatpush1.bf16.msra.mxu0 %v5495
        %7799 = vmatprep.subr.bf16.mxu0 %v5498
        %7800 = vmatpush1.bf16.msra.mxu0 %v5497
        %7801 = vmatprep.subr.bf16.mxu0 %v5500
        %7802 = vmatpush1.bf16.msra.mxu0 %v5499
        %7803 = vmatprep.subr.bf16.mxu0 %v5502
        %7804 = vmatpush1.bf16.msra.mxu0 %v5501
        %7805 = vmatprep.subr.bf16.mxu0 %v5504
        %7806 = vmatpush1.bf16.msra.mxu0 %v5503
        %7807 = vmatprep.subr.bf16.mxu0 %v5506
        %7808 = vmatpush1.bf16.msra.mxu0 %v5505
        %7809 = vmatprep.subr.bf16.mxu0 %v5508
        %7810 = vmatpush1.bf16.msra.mxu0 %v5507
        %7811 = vmatprep.subr.bf16.mxu0 %v5510
        %7812 = vmatpush1.bf16.msra.mxu0 %v5509
        %7813 = vmatprep.subr.bf16.mxu0 %v5512
        %7814 = vmatpush1.bf16.msra.mxu0 %v5511
        %7815 = vmatprep.subr.bf16.mxu0 %v5514
        %7816 = vmatpush1.bf16.msra.mxu0 %v5513
        %7817 = vmatprep.subr.bf16.mxu0 %v5516
        %7818 = vmatpush1.bf16.msra.mxu0 %v5515
        %7819 = vmatprep.subr.bf16.mxu0 %v5518
        %7820 = vmatpush1.bf16.msra.mxu0 %v5517
        %7821 = vmatprep.subr.bf16.mxu0 %v5520
        %7822 = vmatpush1.bf16.msra.mxu0 %v5519
        %7823 = vmatprep.subr.bf16.mxu0 %v5522
        %7824 = vmatpush1.bf16.msra.mxu0 %v5521
        %7825 = vmatprep.subr.bf16.mxu0 %v5524
        %7826 = vmatpush1.bf16.msra.mxu0 %v5523
        %7827 = vmatprep.mubr.bf16.mxu0 %v1762
        %7828 = vmatmul.mubr.bf16.gmra.mrb[0].mxu0 %v1761
        %v7829 = vpop.f32.mrb[0].mxu0
        %v7830 = vadd.f32 %v7779, %v7829
        %v7831 = vpop.f32.mrb[0].mxu0
        %v7832 = vadd.f32 %v7781, %v7831
        %v7833 = vpop.f32.mrb[0].mxu0
        %v7834 = vpop.f32.mrb[0].mxu0
        %7835 = vmatprep.mubr.bf16.mxu0 %v1828
        %7836 = vmatmul.mubr.bf16.gmra.mrb[0].mxu0 %v1827
        %v7837 = vpop.f32.mrb[0].mxu0
        %v7838 = vadd.f32 %v7787, %v7837
        %v7839 = vpop.f32.mrb[0].mxu0
        %v7840 = vadd.f32 %v7789, %v7839
        %v7841 = vpop.f32.mrb[0].mxu0
        %v7842 = vadd.f32 %v7791, %v7841
        %v7843 = vpop.f32.mrb[0].mxu0
        %v7844 = vadd.f32 %v7793, %v7843
        %7845 = vdwg.mxu0
        %7846 = vmatprep.subr.bf16.mxu0 %v5526
        %7847 = vmatpush1.bf16.msra.mxu0 %v5525
        %7848 = vmatprep.subr.bf16.mxu0 %v5528
        %7849 = vmatpush1.bf16.msra.mxu0 %v5527
        %7850 = vmatprep.subr.bf16.mxu0 %v5530
        %7851 = vmatpush1.bf16.msra.mxu0 %v5529
        %7852 = vmatprep.subr.bf16.mxu0 %v5532
        %7853 = vmatpush1.bf16.msra.mxu0 %v5531
        %7854 = vmatprep.subr.bf16.mxu0 %v5534
        %7855 = vmatpush1.bf16.msra.mxu0 %v5533
        %7856 = vmatprep.subr.bf16.mxu0 %v5536
        %7857 = vmatpush1.bf16.msra.mxu0 %v5535
        %7858 = vmatprep.subr.bf16.mxu0 %v5538
        %7859 = vmatpush1.bf16.msra.mxu0 %v5537
        %7860 = vmatprep.subr.bf16.mxu0 %v5540
        %7861 = vmatpush1.bf16.msra.mxu0 %v5539
        %7862 = vmatprep.subr.bf16.mxu0 %v5542
        %7863 = vmatpush1.bf16.msra.mxu0 %v5541
        %7864 = vmatprep.subr.bf16.mxu0 %v5544
        %7865 = vmatpush1.bf16.msra.mxu0 %v5543
        %7866 = vmatprep.subr.bf16.mxu0 %v5546
        %7867 = vmatpush1.bf16.msra.mxu0 %v5545
        %7868 = vmatprep.subr.bf16.mxu0 %v5548
        %7869 = vmatpush1.bf16.msra.mxu0 %v5547
        %7870 = vmatprep.subr.bf16.mxu0 %v5550
        %7871 = vmatpush1.bf16.msra.mxu0 %v5549
        %7872 = vmatprep.subr.bf16.mxu0 %v5552
        %7873 = vmatpush1.bf16.msra.mxu0 %v5551
        %7874 = vmatprep.subr.bf16.mxu0 %v5554
        %7875 = vmatpush1.bf16.msra.mxu0 %v5553
        %7876 = vmatprep.subr.bf16.mxu0 %v5556
        %7877 = vmatpush1.bf16.msra.mxu0 %v5555
        %7878 = vmatprep.mubr.bf16.mxu0 %v1764
        %7879 = vmatmul.mubr.bf16.gmra.mrb[0].mxu0 %v1763
        %v7880 = vpop.f32.mrb[0].mxu0
        %v7881 = vadd.f32 %v7830, %v7880
        %v7882 = vpop.f32.mrb[0].mxu0
        %v7883 = vadd.f32 %v7832, %v7882
        %v7884 = vpop.f32.mrb[0].mxu0
        %v7885 = vpop.f32.mrb[0].mxu0
        %7886 = vmatprep.mubr.bf16.mxu0 %v1830
        %7887 = vmatmul.mubr.bf16.gmra.mrb[0].mxu0 %v1829
        %v7888 = vpop.f32.mrb[0].mxu0
        %v7889 = vadd.f32 %v7838, %v7888
        %v7890 = vpop.f32.mrb[0].mxu0
        %v7891 = vadd.f32 %v7840, %v7890
        %v7892 = vpop.f32.mrb[0].mxu0
        %v7893 = vadd.f32 %v7842, %v7892
        %v7894 = vpop.f32.mrb[0].mxu0
        %v7895 = vadd.f32 %v7844, %v7894
        %7896 = vdwg.mxu0
        %7897 = vmatprep.subr.bf16.mxu0 %v5558
        %7898 = vmatpush1.bf16.msra.mxu0 %v5557
        %7899 = vmatprep.subr.bf16.mxu0 %v5560
        %7900 = vmatpush1.bf16.msra.mxu0 %v5559
        %7901 = vmatprep.subr.bf16.mxu0 %v5562
        %7902 = vmatpush1.bf16.msra.mxu0 %v5561
        %7903 = vmatprep.subr.bf16.mxu0 %v5564
        %7904 = vmatpush1.bf16.msra.mxu0 %v5563
        %7905 = vmatprep.subr.bf16.mxu0 %v5566
        %7906 = vmatpush1.bf16.msra.mxu0 %v5565
        %7907 = vmatprep.subr.bf16.mxu0 %v5568
        %7908 = vmatpush1.bf16.msra.mxu0 %v5567
        %7909 = vmatprep.subr.bf16.mxu0 %v5570
        %7910 = vmatpush1.bf16.msra.mxu0 %v5569
        %7911 = vmatprep.subr.bf16.mxu0 %v5572
        %7912 = vmatpush1.bf16.msra.mxu0 %v5571
        %7913 = vmatprep.subr.bf16.mxu0 %v5574
        %7914 = vmatpush1.bf16.msra.mxu0 %v5573
        %7915 = vmatprep.subr.bf16.mxu0 %v5576
        %7916 = vmatpush1.bf16.msra.mxu0 %v5575
        %7917 = vmatprep.subr.bf16.mxu0 %v5578
        %7918 = vmatpush1.bf16.msra.mxu0 %v5577
        %7919 = vmatprep.subr.bf16.mxu0 %v5580
        %7920 = vmatpush1.bf16.msra.mxu0 %v5579
        %7921 = vmatprep.subr.bf16.mxu0 %v5582
        %7922 = vmatpush1.bf16.msra.mxu0 %v5581
        %7923 = vmatprep.subr.bf16.mxu0 %v5584
        %7924 = vmatpush1.bf16.msra.mxu0 %v5583
        %7925 = vmatprep.subr.bf16.mxu0 %v5586
        %7926 = vmatpush1.bf16.msra.mxu0 %v5585
        %7927 = vmatprep.subr.bf16.mxu0 %v5588
        %7928 = vmatpush1.bf16.msra.mxu0 %v5587
        %7929 = vmatprep.mubr.bf16.mxu0 %v1766
        %7930 = vmatmul.mubr.bf16.gmra.mrb[0].mxu0 %v1765
        %v7931 = vpop.f32.mrb[0].mxu0
        %v7932 = vadd.f32 %v7881, %v7931
        %v7933 = vpop.f32.mrb[0].mxu0
        %v7934 = vadd.f32 %v7883, %v7933
        %v7935 = vpop.f32.mrb[0].mxu0
        %v7936 = vpop.f32.mrb[0].mxu0
        %7937 = vmatprep.mubr.bf16.mxu0 %v1832
        %7938 = vmatmul.mubr.bf16.gmra.mrb[0].mxu0 %v1831
        %v7939 = vpop.f32.mrb[0].mxu0
        %v7940 = vadd.f32 %v7889, %v7939
        %v7941 = vpop.f32.mrb[0].mxu0
        %v7942 = vadd.f32 %v7891, %v7941
        %v7943 = vpop.f32.mrb[0].mxu0
        %v7944 = vadd.f32 %v7893, %v7943
        %v7945 = vpop.f32.mrb[0].mxu0
        %v7946 = vadd.f32 %v7895, %v7945
        %7947 = vdwg.mxu0
        %7948 = vmatprep.subr.bf16.mxu0 %v5590
        %7949 = vmatpush1.bf16.msra.mxu0 %v5589
        %7950 = vmatprep.subr.bf16.mxu0 %v5592
        %7951 = vmatpush1.bf16.msra.mxu0 %v5591
        %7952 = vmatprep.subr.bf16.mxu0 %v5594
        %7953 = vmatpush1.bf16.msra.mxu0 %v5593
        %7954 = vmatprep.subr.bf16.mxu0 %v5596
        %7955 = vmatpush1.bf16.msra.mxu0 %v5595
        %7956 = vmatprep.subr.bf16.mxu0 %v5598
        %7957 = vmatpush1.bf16.msra.mxu0 %v5597
        %7958 = vmatprep.subr.bf16.mxu0 %v5600
        %7959 = vmatpush1.bf16.msra.mxu0 %v5599
        %7960 = vmatprep.subr.bf16.mxu0 %v5602
        %7961 = vmatpush1.bf16.msra.mxu0 %v5601
        %7962 = vmatprep.subr.bf16.mxu0 %v5604
        %7963 = vmatpush1.bf16.msra.mxu0 %v5603
        %7964 = vmatprep.subr.bf16.mxu0 %v5606
        %7965 = vmatpush1.bf16.msra.mxu0 %v5605
        %7966 = vmatprep.subr.bf16.mxu0 %v5608
        %7967 = vmatpush1.bf16.msra.mxu0 %v5607
        %7968 = vmatprep.subr.bf16.mxu0 %v5610
        %7969 = vmatpush1.bf16.msra.mxu0 %v5609
        %7970 = vmatprep.subr.bf16.mxu0 %v5612
        %7971 = vmatpush1.bf16.msra.mxu0 %v5611
        %7972 = vmatprep.subr.bf16.mxu0 %v5614
        %7973 = vmatpush1.bf16.msra.mxu0 %v5613
        %7974 = vmatprep.subr.bf16.mxu0 %v5616
        %7975 = vmatpush1.bf16.msra.mxu0 %v5615
        %7976 = vmatprep.subr.bf16.mxu0 %v5618
        %7977 = vmatpush1.bf16.msra.mxu0 %v5617
        %7978 = vmatprep.subr.bf16.mxu0 %v5620
        %7979 = vmatpush1.bf16.msra.mxu0 %v5619
        %7980 = vmatprep.mubr.bf16.mxu0 %v1768
        %7981 = vmatmul.mubr.bf16.gmra.mrb[0].mxu0 %v1767
        %v7982 = vpop.f32.mrb[0].mxu0
        %v7983 = vadd.f32 %v7932, %v7982
        %v7984 = vpop.f32.mrb[0].mxu0
        %v7985 = vadd.f32 %v7934, %v7984
        %v7986 = vpop.f32.mrb[0].mxu0
        %v7987 = vpop.f32.mrb[0].mxu0
        %7988 = vmatprep.mubr.bf16.mxu0 %v1834
        %7989 = vmatmul.mubr.bf16.gmra.mrb[0].mxu0 %v1833
        %v7990 = vpop.f32.mrb[0].mxu0
        %v7991 = vadd.f32 %v7940, %v7990
        %v7992 = vpop.f32.mrb[0].mxu0
        %v7993 = vadd.f32 %v7942, %v7992
        %v7994 = vpop.f32.mrb[0].mxu0
        %v7995 = vadd.f32 %v7944, %v7994
        %v7996 = vpop.f32.mrb[0].mxu0
        %v7997 = vadd.f32 %v7946, %v7996
        %7998 = vdwg.mxu0
        %7999 = vmatprep.subr.bf16.mxu0 %v5622
        %8000 = vmatpush1.bf16.msra.mxu0 %v5621
        %8001 = vmatprep.subr.bf16.mxu0 %v5624
        %8002 = vmatpush1.bf16.msra.mxu0 %v5623
        %8003 = vmatprep.subr.bf16.mxu0 %v5626
        %8004 = vmatpush1.bf16.msra.mxu0 %v5625
        %8005 = vmatprep.subr.bf16.mxu0 %v5628
        %8006 = vmatpush1.bf16.msra.mxu0 %v5627
        %8007 = vmatprep.subr.bf16.mxu0 %v5630
        %8008 = vmatpush1.bf16.msra.mxu0 %v5629
        %8009 = vmatprep.subr.bf16.mxu0 %v5632
        %8010 = vmatpush1.bf16.msra.mxu0 %v5631
        %8011 = vmatprep.subr.bf16.mxu0 %v5634
        %8012 = vmatpush1.bf16.msra.mxu0 %v5633
        %8013 = vmatprep.subr.bf16.mxu0 %v5636
        %8014 = vmatpush1.bf16.msra.mxu0 %v5635
        %8015 = vmatprep.subr.bf16.mxu0 %v5638
        %8016 = vmatpush1.bf16.msra.mxu0 %v5637
        %8017 = vmatprep.subr.bf16.mxu0 %v5640
        %8018 = vmatpush1.bf16.msra.mxu0 %v5639
        %8019 = vmatprep.subr.bf16.mxu0 %v5642
        %8020 = vmatpush1.bf16.msra.mxu0 %v5641
        %8021 = vmatprep.subr.bf16.mxu0 %v5644
        %8022 = vmatpush1.bf16.msra.mxu0 %v5643
        %8023 = vmatprep.subr.bf16.mxu0 %v5646
        %8024 = vmatpush1.bf16.msra.mxu0 %v5645
        %8025 = vmatprep.subr.bf16.mxu0 %v5648
        %8026 = vmatpush1.bf16.msra.mxu0 %v5647
        %8027 = vmatprep.subr.bf16.mxu0 %v5650
        %8028 = vmatpush1.bf16.msra.mxu0 %v5649
        %8029 = vmatprep.subr.bf16.mxu0 %v5652
        %8030 = vmatpush1.bf16.msra.mxu0 %v5651
        %8031 = vmatprep.mubr.bf16.mxu0 %v1770
        %8032 = vmatmul.mubr.bf16.gmra.mrb[0].mxu0 %v1769
        %v8033 = vpop.f32.mrb[0].mxu0
        %v8034 = vadd.f32 %v7983, %v8033
        %v8035 = vpop.f32.mrb[0].mxu0
        %v8036 = vadd.f32 %v7985, %v8035
        %v8037 = vpop.f32.mrb[0].mxu0
        %v8038 = vpop.f32.mrb[0].mxu0
        %8039 = vmatprep.mubr.bf16.mxu0 %v1836
        %8040 = vmatmul.mubr.bf16.gmra.mrb[0].mxu0 %v1835
        %v8041 = vpop.f32.mrb[0].mxu0
        %v8042 = vadd.f32 %v7991, %v8041
        %v8043 = vpop.f32.mrb[0].mxu0
        %v8044 = vadd.f32 %v7993, %v8043
        %v8045 = vpop.f32.mrb[0].mxu0
        %v8046 = vadd.f32 %v7995, %v8045
        %v8047 = vpop.f32.mrb[0].mxu0
        %v8048 = vadd.f32 %v7997, %v8047
        %8049 = vdwg.mxu0
        %8050 = vmatprep.subr.bf16.mxu0 %v5654
        %8051 = vmatpush1.bf16.msra.mxu0 %v5653
        %8052 = vmatprep.subr.bf16.mxu0 %v5656
        %8053 = vmatpush1.bf16.msra.mxu0 %v5655
        %8054 = vmatprep.subr.bf16.mxu0 %v5658
        %8055 = vmatpush1.bf16.msra.mxu0 %v5657
        %8056 = vmatprep.subr.bf16.mxu0 %v5660
        %8057 = vmatpush1.bf16.msra.mxu0 %v5659
        %8058 = vmatprep.subr.bf16.mxu0 %v5662
        %8059 = vmatpush1.bf16.msra.mxu0 %v5661
        %8060 = vmatprep.subr.bf16.mxu0 %v5664
        %8061 = vmatpush1.bf16.msra.mxu0 %v5663
        %8062 = vmatprep.subr.bf16.mxu0 %v5666
        %8063 = vmatpush1.bf16.msra.mxu0 %v5665
        %8064 = vmatprep.subr.bf16.mxu0 %v5668
        %8065 = vmatpush1.bf16.msra.mxu0 %v5667
        %8066 = vmatprep.subr.bf16.mxu0 %v5670
        %8067 = vmatpush1.bf16.msra.mxu0 %v5669
        %8068 = vmatprep.subr.bf16.mxu0 %v5672
        %8069 = vmatpush1.bf16.msra.mxu0 %v5671
        %8070 = vmatprep.subr.bf16.mxu0 %v5674
        %8071 = vmatpush1.bf16.msra.mxu0 %v5673
        %8072 = vmatprep.subr.bf16.mxu0 %v5676
        %8073 = vmatpush1.bf16.msra.mxu0 %v5675
        %8074 = vmatprep.subr.bf16.mxu0 %v5678
        %8075 = vmatpush1.bf16.msra.mxu0 %v5677
        %8076 = vmatprep.subr.bf16.mxu0 %v5680
        %8077 = vmatpush1.bf16.msra.mxu0 %v5679
        %8078 = vmatprep.subr.bf16.mxu0 %v5682
        %8079 = vmatpush1.bf16.msra.mxu0 %v5681
        %8080 = vmatprep.subr.bf16.mxu0 %v5684
        %8081 = vmatpush1.bf16.msra.mxu0 %v5683
        %8082 = vmatprep.mubr.bf16.mxu0 %v1772
        %8083 = vmatmul.mubr.bf16.gmra.mrb[0].mxu0 %v1771
        %v8084 = vpop.f32.mrb[0].mxu0
        %v8085 = vadd.f32 %v8034, %v8084
        %v8086 = vpop.f32.mrb[0].mxu0
        %v8087 = vadd.f32 %v8036, %v8086
        %v8088 = vpop.f32.mrb[0].mxu0
        %v8089 = vpop.f32.mrb[0].mxu0
        %8090 = vmatprep.mubr.bf16.mxu0 %v1838
        %8091 = vmatmul.mubr.bf16.gmra.mrb[0].mxu0 %v1837
        %v8092 = vpop.f32.mrb[0].mxu0
        %v8093 = vadd.f32 %v8042, %v8092
        %v8094 = vpop.f32.mrb[0].mxu0
        %v8095 = vadd.f32 %v8044, %v8094
        %v8096 = vpop.f32.mrb[0].mxu0
        %v8097 = vadd.f32 %v8046, %v8096
        %v8098 = vpop.f32.mrb[0].mxu0
        %v8099 = vadd.f32 %v8048, %v8098
        %8100 = vdwg.mxu0
        %8101 = vmatprep.subr.bf16.mxu0 %v5686
        %8102 = vmatpush1.bf16.msra.mxu0 %v5685
        %8103 = vmatprep.subr.bf16.mxu0 %v5688
        %8104 = vmatpush1.bf16.msra.mxu0 %v5687
        %8105 = vmatprep.subr.bf16.mxu0 %v5690
        %8106 = vmatpush1.bf16.msra.mxu0 %v5689
        %8107 = vmatprep.subr.bf16.mxu0 %v5692
        %8108 = vmatpush1.bf16.msra.mxu0 %v5691
        %8109 = vmatprep.subr.bf16.mxu0 %v5694
        %8110 = vmatpush1.bf16.msra.mxu0 %v5693
        %8111 = vmatprep.subr.bf16.mxu0 %v5696
        %8112 = vmatpush1.bf16.msra.mxu0 %v5695
        %8113 = vmatprep.subr.bf16.mxu0 %v5698
        %8114 = vmatpush1.bf16.msra.mxu0 %v5697
        %8115 = vmatprep.subr.bf16.mxu0 %v5700
        %8116 = vmatpush1.bf16.msra.mxu0 %v5699
        %8117 = vmatprep.subr.bf16.mxu0 %v5702
        %8118 = vmatpush1.bf16.msra.mxu0 %v5701
        %8119 = vmatprep.subr.bf16.mxu0 %v5704
        %8120 = vmatpush1.bf16.msra.mxu0 %v5703
        %8121 = vmatprep.subr.bf16.mxu0 %v5706
        %8122 = vmatpush1.bf16.msra.mxu0 %v5705
        %8123 = vmatprep.subr.bf16.mxu0 %v5708
        %8124 = vmatpush1.bf16.msra.mxu0 %v5707
        %8125 = vmatprep.subr.bf16.mxu0 %v5710
        %8126 = vmatpush1.bf16.msra.mxu0 %v5709
        %8127 = vmatprep.subr.bf16.mxu0 %v5712
        %8128 = vmatpush1.bf16.msra.mxu0 %v5711
        %8129 = vmatprep.subr.bf16.mxu0 %v5714
        %8130 = vmatpush1.bf16.msra.mxu0 %v5713
        %8131 = vmatprep.subr.bf16.mxu0 %v5716
        %8132 = vmatpush1.bf16.msra.mxu0 %v5715
        %8133 = vmatprep.mubr.bf16.mxu0 %v1774
        %8134 = vmatmul.mubr.bf16.gmra.mrb[0].mxu0 %v1773
        %v8135 = vpop.f32.mrb[0].mxu0
        %v8136 = vadd.f32 %v8085, %v8135
        %v8137 = vpop.f32.mrb[0].mxu0
        %v8138 = vadd.f32 %v8087, %v8137
        %v8139 = vpop.f32.mrb[0].mxu0
        %v8140 = vpop.f32.mrb[0].mxu0
        %8141 = vmatprep.mubr.bf16.mxu0 %v1840
        %8142 = vmatmul.mubr.bf16.gmra.mrb[0].mxu0 %v1839
        %v8143 = vpop.f32.mrb[0].mxu0
        %v8144 = vadd.f32 %v8093, %v8143
        %v8145 = vpop.f32.mrb[0].mxu0
        %v8146 = vadd.f32 %v8095, %v8145
        %v8147 = vpop.f32.mrb[0].mxu0
        %v8148 = vadd.f32 %v8097, %v8147
        %v8149 = vpop.f32.mrb[0].mxu0
        %v8150 = vadd.f32 %v8099, %v8149
        %8151 = vdwg.mxu0
        %8152 = vmatprep.subr.bf16.mxu0 %v5718
        %8153 = vmatpush1.bf16.msra.mxu0 %v5717
        %8154 = vmatprep.subr.bf16.mxu0 %v5720
        %8155 = vmatpush1.bf16.msra.mxu0 %v5719
        %8156 = vmatprep.subr.bf16.mxu0 %v5722
        %8157 = vmatpush1.bf16.msra.mxu0 %v5721
        %8158 = vmatprep.subr.bf16.mxu0 %v5724
        %8159 = vmatpush1.bf16.msra.mxu0 %v5723
        %8160 = vmatprep.subr.bf16.mxu0 %v5726
        %8161 = vmatpush1.bf16.msra.mxu0 %v5725
        %8162 = vmatprep.subr.bf16.mxu0 %v5728
        %8163 = vmatpush1.bf16.msra.mxu0 %v5727
        %8164 = vmatprep.subr.bf16.mxu0 %v5730
        %8165 = vmatpush1.bf16.msra.mxu0 %v5729
        %8166 = vmatprep.subr.bf16.mxu0 %v5732
        %8167 = vmatpush1.bf16.msra.mxu0 %v5731
        %8168 = vmatprep.subr.bf16.mxu0 %v5734
        %8169 = vmatpush1.bf16.msra.mxu0 %v5733
        %8170 = vmatprep.subr.bf16.mxu0 %v5736
        %8171 = vmatpush1.bf16.msra.mxu0 %v5735
        %8172 = vmatprep.subr.bf16.mxu0 %v5738
        %8173 = vmatpush1.bf16.msra.mxu0 %v5737
        %8174 = vmatprep.subr.bf16.mxu0 %v5740
        %8175 = vmatpush1.bf16.msra.mxu0 %v5739
        %8176 = vmatprep.subr.bf16.mxu0 %v5742
        %8177 = vmatpush1.bf16.msra.mxu0 %v5741
        %8178 = vmatprep.subr.bf16.mxu0 %v5744
        %8179 = vmatpush1.bf16.msra.mxu0 %v5743
        %8180 = vmatprep.subr.bf16.mxu0 %v5746
        %8181 = vmatpush1.bf16.msra.mxu0 %v5745
        %8182 = vmatprep.subr.bf16.mxu0 %v5748
        %8183 = vmatpush1.bf16.msra.mxu0 %v5747
        %8184 = vmatprep.mubr.bf16.mxu0 %v1776
        %8185 = vmatmul.mubr.bf16.gmra.mrb[0].mxu0 %v1775
        %v8186 = vpop.f32.mrb[0].mxu0
        %v8187 = vadd.f32 %v8136, %v8186
        %v8188 = vpop.f32.mrb[0].mxu0
        %v8189 = vadd.f32 %v8138, %v8188
        %v8190 = vpop.f32.mrb[0].mxu0
        %v8191 = vpop.f32.mrb[0].mxu0
        %8192 = vmatprep.mubr.bf16.mxu0 %v1842
        %8193 = vmatmul.mubr.bf16.gmra.mrb[0].mxu0 %v1841
        %v8194 = vpop.f32.mrb[0].mxu0
        %v8195 = vadd.f32 %v8144, %v8194
        %v8196 = vpop.f32.mrb[0].mxu0
        %v8197 = vadd.f32 %v8146, %v8196
        %v8198 = vpop.f32.mrb[0].mxu0
        %v8199 = vadd.f32 %v8148, %v8198
        %v8200 = vpop.f32.mrb[0].mxu0
        %v8201 = vadd.f32 %v8150, %v8200
        %8202 = vdwg.mxu0
        %8203 = vmatprep.subr.bf16.mxu0 %v5750
        %8204 = vmatpush1.bf16.msra.mxu0 %v5749
        %8205 = vmatprep.subr.bf16.mxu0 %v5752
        %8206 = vmatpush1.bf16.msra.mxu0 %v5751
        %8207 = vmatprep.subr.bf16.mxu0 %v5754
        %8208 = vmatpush1.bf16.msra.mxu0 %v5753
        %8209 = vmatprep.subr.bf16.mxu0 %v5756
        %8210 = vmatpush1.bf16.msra.mxu0 %v5755
        %8211 = vmatprep.subr.bf16.mxu0 %v5758
        %8212 = vmatpush1.bf16.msra.mxu0 %v5757
        %8213 = vmatprep.subr.bf16.mxu0 %v5760
        %8214 = vmatpush1.bf16.msra.mxu0 %v5759
        %8215 = vmatprep.subr.bf16.mxu0 %v5762
        %8216 = vmatpush1.bf16.msra.mxu0 %v5761
        %8217 = vmatprep.subr.bf16.mxu0 %v5764
        %8218 = vmatpush1.bf16.msra.mxu0 %v5763
        %8219 = vmatprep.subr.bf16.mxu0 %v5766
        %8220 = vmatpush1.bf16.msra.mxu0 %v5765
        %8221 = vmatprep.subr.bf16.mxu0 %v5768
        %8222 = vmatpush1.bf16.msra.mxu0 %v5767
        %8223 = vmatprep.subr.bf16.mxu0 %v5770
        %8224 = vmatpush1.bf16.msra.mxu0 %v5769
        %8225 = vmatprep.subr.bf16.mxu0 %v5772
        %8226 = vmatpush1.bf16.msra.mxu0 %v5771
        %8227 = vmatprep.subr.bf16.mxu0 %v5774
        %8228 = vmatpush1.bf16.msra.mxu0 %v5773
        %8229 = vmatprep.subr.bf16.mxu0 %v5776
        %8230 = vmatpush1.bf16.msra.mxu0 %v5775
        %8231 = vmatprep.subr.bf16.mxu0 %v5778
        %8232 = vmatpush1.bf16.msra.mxu0 %v5777
        %8233 = vmatprep.subr.bf16.mxu0 %v5780
        %8234 = vmatpush1.bf16.msra.mxu0 %v5779
        %8235 = vmatprep.mubr.bf16.mxu0 %v1778
        %8236 = vmatmul.mubr.bf16.gmra.mrb[0].mxu0 %v1777
        %v8237 = vpop.f32.mrb[0].mxu0
        %v8238 = vadd.f32 %v8187, %v8237
        %v8239 = vpop.f32.mrb[0].mxu0
        %v8240 = vadd.f32 %v8189, %v8239
        %v8241 = vpop.f32.mrb[0].mxu0
        %v8242 = vpop.f32.mrb[0].mxu0
        %8243 = vmatprep.mubr.bf16.mxu0 %v1844
        %8244 = vmatmul.mubr.bf16.gmra.mrb[0].mxu0 %v1843
        %v8245 = vpop.f32.mrb[0].mxu0
        %v8246 = vadd.f32 %v8195, %v8245
        %v8247 = vpop.f32.mrb[0].mxu0
        %v8248 = vadd.f32 %v8197, %v8247
        %v8249 = vpop.f32.mrb[0].mxu0
        %v8250 = vadd.f32 %v8199, %v8249
        %v8251 = vpop.f32.mrb[0].mxu0
        %v8252 = vadd.f32 %v8201, %v8251
        %8253 = vdwg.mxu0
        %8254 = vmatprep.subr.bf16.mxu0 %v5782
        %8255 = vmatpush1.bf16.msra.mxu0 %v5781
        %8256 = vmatprep.subr.bf16.mxu0 %v5784
        %8257 = vmatpush1.bf16.msra.mxu0 %v5783
        %8258 = vmatprep.subr.bf16.mxu0 %v5786
        %8259 = vmatpush1.bf16.msra.mxu0 %v5785
        %8260 = vmatprep.subr.bf16.mxu0 %v5788
        %8261 = vmatpush1.bf16.msra.mxu0 %v5787
        %8262 = vmatprep.subr.bf16.mxu0 %v5790
        %8263 = vmatpush1.bf16.msra.mxu0 %v5789
        %8264 = vmatprep.subr.bf16.mxu0 %v5792
        %8265 = vmatpush1.bf16.msra.mxu0 %v5791
        %8266 = vmatprep.subr.bf16.mxu0 %v5794
        %8267 = vmatpush1.bf16.msra.mxu0 %v5793
        %8268 = vmatprep.subr.bf16.mxu0 %v5796
        %8269 = vmatpush1.bf16.msra.mxu0 %v5795
        %8270 = vmatprep.subr.bf16.mxu0 %v5798
        %8271 = vmatpush1.bf16.msra.mxu0 %v5797
        %8272 = vmatprep.subr.bf16.mxu0 %v5800
        %8273 = vmatpush1.bf16.msra.mxu0 %v5799
        %8274 = vmatprep.subr.bf16.mxu0 %v5802
        %8275 = vmatpush1.bf16.msra.mxu0 %v5801
        %8276 = vmatprep.subr.bf16.mxu0 %v5804
        %8277 = vmatpush1.bf16.msra.mxu0 %v5803
        %8278 = vmatprep.subr.bf16.mxu0 %v5806
        %8279 = vmatpush1.bf16.msra.mxu0 %v5805
        %8280 = vmatprep.subr.bf16.mxu0 %v5808
        %8281 = vmatpush1.bf16.msra.mxu0 %v5807
        %8282 = vmatprep.subr.bf16.mxu0 %v5810
        %8283 = vmatpush1.bf16.msra.mxu0 %v5809
        %8284 = vmatprep.subr.bf16.mxu0 %v5812
        %8285 = vmatpush1.bf16.msra.mxu0 %v5811
        %8286 = vmatprep.mubr.bf16.mxu0 %v1780
        %8287 = vmatmul.mubr.bf16.gmra.mrb[0].mxu0 %v1779
        %v8288 = vpop.f32.mrb[0].mxu0
        %v8289 = vadd.f32 %v8238, %v8288
        %v8290 = vpop.f32.mrb[0].mxu0
        %v8291 = vadd.f32 %v8240, %v8290
        %v8292 = vpop.f32.mrb[0].mxu0
        %v8293 = vpop.f32.mrb[0].mxu0
        %8294 = vmatprep.mubr.bf16.mxu0 %v1846
        %8295 = vmatmul.mubr.bf16.gmra.mrb[0].mxu0 %v1845
        %v8296 = vpop.f32.mrb[0].mxu0
        %v8297 = vadd.f32 %v8246, %v8296
        %v8298 = vpop.f32.mrb[0].mxu0
        %v8299 = vadd.f32 %v8248, %v8298
        %v8300 = vpop.f32.mrb[0].mxu0
        %v8301 = vadd.f32 %v8250, %v8300
        %v8302 = vpop.f32.mrb[0].mxu0
        %v8303 = vadd.f32 %v8252, %v8302
        %8304 = vdwg.mxu0
        %8305 = vmatprep.subr.bf16.mxu0 %v5814
        %8306 = vmatpush1.bf16.msra.mxu0 %v5813
        %8307 = vmatprep.subr.bf16.mxu0 %v5816
        %8308 = vmatpush1.bf16.msra.mxu0 %v5815
        %8309 = vmatprep.subr.bf16.mxu0 %v5818
        %8310 = vmatpush1.bf16.msra.mxu0 %v5817
        %8311 = vmatprep.subr.bf16.mxu0 %v5820
        %8312 = vmatpush1.bf16.msra.mxu0 %v5819
        %8313 = vmatprep.subr.bf16.mxu0 %v5822
        %8314 = vmatpush1.bf16.msra.mxu0 %v5821
        %8315 = vmatprep.subr.bf16.mxu0 %v5824
        %8316 = vmatpush1.bf16.msra.mxu0 %v5823
        %8317 = vmatprep.subr.bf16.mxu0 %v5826
        %8318 = vmatpush1.bf16.msra.mxu0 %v5825
        %8319 = vmatprep.subr.bf16.mxu0 %v5828
        %8320 = vmatpush1.bf16.msra.mxu0 %v5827
        %8321 = vmatprep.subr.bf16.mxu0 %v5830
        %8322 = vmatpush1.bf16.msra.mxu0 %v5829
        %8323 = vmatprep.subr.bf16.mxu0 %v5832
        %8324 = vmatpush1.bf16.msra.mxu0 %v5831
        %8325 = vmatprep.subr.bf16.mxu0 %v5834
        %8326 = vmatpush1.bf16.msra.mxu0 %v5833
        %8327 = vmatprep.subr.bf16.mxu0 %v5836
        %8328 = vmatpush1.bf16.msra.mxu0 %v5835
        %8329 = vmatprep.subr.bf16.mxu0 %v5838
        %8330 = vmatpush1.bf16.msra.mxu0 %v5837
        %8331 = vmatprep.subr.bf16.mxu0 %v5840
        %8332 = vmatpush1.bf16.msra.mxu0 %v5839
        %8333 = vmatprep.subr.bf16.mxu0 %v5842
        %8334 = vmatpush1.bf16.msra.mxu0 %v5841
        %8335 = vmatprep.subr.bf16.mxu0 %v5844
        %8336 = vmatpush1.bf16.msra.mxu0 %v5843
        %8337 = vmatprep.mubr.bf16.mxu0 %v1782
        %8338 = vmatmul.mubr.bf16.gmra.mrb[0].mxu0 %v1781
        %v8339 = vpop.f32.mrb[0].mxu0
        %v8340 = vadd.f32 %v8289, %v8339
        %v8341 = vpop.f32.mrb[0].mxu0
        %v8342 = vadd.f32 %v8291, %v8341
        %v8343 = vpop.f32.mrb[0].mxu0
        %v8344 = vpop.f32.mrb[0].mxu0
        %8345 = vmatprep.mubr.bf16.mxu0 %v1848
        %8346 = vmatmul.mubr.bf16.gmra.mrb[0].mxu0 %v1847
        %v8347 = vpop.f32.mrb[0].mxu0
        %v8348 = vadd.f32 %v8297, %v8347
        %v8349 = vpop.f32.mrb[0].mxu0
        %v8350 = vadd.f32 %v8299, %v8349
        %v8351 = vpop.f32.mrb[0].mxu0
        %v8352 = vadd.f32 %v8301, %v8351
        %v8353 = vpop.f32.mrb[0].mxu0
        %v8354 = vadd.f32 %v8303, %v8353
        %8355 = vdwg.mxu0
        %8356 = vmatprep.subr.bf16.mxu0 %v5846
        %8357 = vmatpush1.bf16.msra.mxu0 %v5845
        %8358 = vmatprep.subr.bf16.mxu0 %v5848
        %8359 = vmatpush1.bf16.msra.mxu0 %v5847
        %8360 = vmatprep.subr.bf16.mxu0 %v5850
        %8361 = vmatpush1.bf16.msra.mxu0 %v5849
        %8362 = vmatprep.subr.bf16.mxu0 %v5852
        %8363 = vmatpush1.bf16.msra.mxu0 %v5851
        %8364 = vmatprep.subr.bf16.mxu0 %v5854
        %8365 = vmatpush1.bf16.msra.mxu0 %v5853
        %8366 = vmatprep.subr.bf16.mxu0 %v5856
        %8367 = vmatpush1.bf16.msra.mxu0 %v5855
        %8368 = vmatprep.subr.bf16.mxu0 %v5858
        %8369 = vmatpush1.bf16.msra.mxu0 %v5857
        %8370 = vmatprep.subr.bf16.mxu0 %v5860
        %8371 = vmatpush1.bf16.msra.mxu0 %v5859
        %8372 = vmatprep.subr.bf16.mxu0 %v5862
        %8373 = vmatpush1.bf16.msra.mxu0 %v5861
        %8374 = vmatprep.subr.bf16.mxu0 %v5864
        %8375 = vmatpush1.bf16.msra.mxu0 %v5863
        %8376 = vmatprep.subr.bf16.mxu0 %v5866
        %8377 = vmatpush1.bf16.msra.mxu0 %v5865
        %8378 = vmatprep.subr.bf16.mxu0 %v5868
        %8379 = vmatpush1.bf16.msra.mxu0 %v5867
        %8380 = vmatprep.subr.bf16.mxu0 %v5870
        %8381 = vmatpush1.bf16.msra.mxu0 %v5869
        %8382 = vmatprep.subr.bf16.mxu0 %v5872
        %8383 = vmatpush1.bf16.msra.mxu0 %v5871
        %8384 = vmatprep.subr.bf16.mxu0 %v5874
        %8385 = vmatpush1.bf16.msra.mxu0 %v5873
        %8386 = vmatprep.subr.bf16.mxu0 %v5876
        %8387 = vmatpush1.bf16.msra.mxu0 %v5875
        %8388 = vmatprep.mubr.bf16.mxu0 %v1784
        %8389 = vmatmul.mubr.bf16.gmra.mrb[0].mxu0 %v1783
        %v8390 = vpop.f32.mrb[0].mxu0
        %v8391 = vadd.f32 %v8340, %v8390
        %v8392 = vpop.f32.mrb[0].mxu0
        %v8393 = vadd.f32 %v8342, %v8392
        %v8394 = vpop.f32.mrb[0].mxu0
        %v8395 = vpop.f32.mrb[0].mxu0
        %8396 = vmatprep.mubr.bf16.mxu0 %v1850
        %8397 = vmatmul.mubr.bf16.gmra.mrb[0].mxu0 %v1849
        %v8398 = vpop.f32.mrb[0].mxu0
        %v8399 = vadd.f32 %v8348, %v8398
        %v8400 = vpop.f32.mrb[0].mxu0
        %v8401 = vadd.f32 %v8350, %v8400
        %v8402 = vpop.f32.mrb[0].mxu0
        %v8403 = vadd.f32 %v8352, %v8402
        %v8404 = vpop.f32.mrb[0].mxu0
        %v8405 = vadd.f32 %v8354, %v8404
        %8406 = vdwg.mxu0
        %8407 = vmatprep.subr.bf16.mxu0 %v5878
        %8408 = vmatpush1.bf16.msra.mxu0 %v5877
        %8409 = vmatprep.subr.bf16.mxu0 %v5880
        %8410 = vmatpush1.bf16.msra.mxu0 %v5879
        %8411 = vmatprep.subr.bf16.mxu0 %v5882
        %8412 = vmatpush1.bf16.msra.mxu0 %v5881
        %8413 = vmatprep.subr.bf16.mxu0 %v5884
        %8414 = vmatpush1.bf16.msra.mxu0 %v5883
        %8415 = vmatprep.subr.bf16.mxu0 %v5886
        %8416 = vmatpush1.bf16.msra.mxu0 %v5885
        %8417 = vmatprep.subr.bf16.mxu0 %v5888
        %8418 = vmatpush1.bf16.msra.mxu0 %v5887
        %8419 = vmatprep.subr.bf16.mxu0 %v5890
        %8420 = vmatpush1.bf16.msra.mxu0 %v5889
        %8421 = vmatprep.subr.bf16.mxu0 %v5892
        %8422 = vmatpush1.bf16.msra.mxu0 %v5891
        %8423 = vmatprep.subr.bf16.mxu0 %v5894
        %8424 = vmatpush1.bf16.msra.mxu0 %v5893
        %8425 = vmatprep.subr.bf16.mxu0 %v5896
        %8426 = vmatpush1.bf16.msra.mxu0 %v5895
        %8427 = vmatprep.subr.bf16.mxu0 %v5898
        %8428 = vmatpush1.bf16.msra.mxu0 %v5897
        %8429 = vmatprep.subr.bf16.mxu0 %v5900
        %8430 = vmatpush1.bf16.msra.mxu0 %v5899
        %8431 = vmatprep.subr.bf16.mxu0 %v5902
        %8432 = vmatpush1.bf16.msra.mxu0 %v5901
        %8433 = vmatprep.subr.bf16.mxu0 %v5904
        %8434 = vmatpush1.bf16.msra.mxu0 %v5903
        %8435 = vmatprep.subr.bf16.mxu0 %v5906
        %8436 = vmatpush1.bf16.msra.mxu0 %v5905
        %8437 = vmatprep.subr.bf16.mxu0 %v5908
        %8438 = vmatpush1.bf16.msra.mxu0 %v5907
        %8439 = vmatprep.mubr.bf16.mxu0 %v1786
        %8440 = vmatmul.mubr.bf16.gmra.mrb[0].mxu0 %v1785
        %v8441 = vpop.f32.mrb[0].mxu0
        %v8442 = vadd.f32 %v8391, %v8441
        %v8443 = vpop.f32.mrb[0].mxu0
        %v8444 = vadd.f32 %v8393, %v8443
        %v8445 = vpop.f32.mrb[0].mxu0
        %v8446 = vpop.f32.mrb[0].mxu0
        %8447 = vmatprep.mubr.bf16.mxu0 %v1852
        %8448 = vmatmul.mubr.bf16.gmra.mrb[0].mxu0 %v1851
        %v8449 = vpop.f32.mrb[0].mxu0
        %v8450 = vadd.f32 %v8399, %v8449
        %v8451 = vpop.f32.mrb[0].mxu0
        %v8452 = vadd.f32 %v8401, %v8451
        %v8453 = vpop.f32.mrb[0].mxu0
        %v8454 = vadd.f32 %v8403, %v8453
        %v8455 = vpop.f32.mrb[0].mxu0
        %v8456 = vadd.f32 %v8405, %v8455
        %8457 = vdwg.mxu0
        %8458 = vmatprep.subr.bf16.mxu0 %v5910
        %8459 = vmatpush1.bf16.msra.mxu0 %v5909
        %8460 = vmatprep.subr.bf16.mxu0 %v5912
        %8461 = vmatpush1.bf16.msra.mxu0 %v5911
        %8462 = vmatprep.subr.bf16.mxu0 %v5914
        %8463 = vmatpush1.bf16.msra.mxu0 %v5913
        %8464 = vmatprep.subr.bf16.mxu0 %v5916
        %8465 = vmatpush1.bf16.msra.mxu0 %v5915
        %8466 = vmatprep.subr.bf16.mxu0 %v5918
        %8467 = vmatpush1.bf16.msra.mxu0 %v5917
        %8468 = vmatprep.subr.bf16.mxu0 %v5920
        %8469 = vmatpush1.bf16.msra.mxu0 %v5919
        %8470 = vmatprep.subr.bf16.mxu0 %v5922
        %8471 = vmatpush1.bf16.msra.mxu0 %v5921
        %8472 = vmatprep.subr.bf16.mxu0 %v5924
        %8473 = vmatpush1.bf16.msra.mxu0 %v5923
        %8474 = vmatprep.subr.bf16.mxu0 %v5926
        %8475 = vmatpush1.bf16.msra.mxu0 %v5925
        %8476 = vmatprep.subr.bf16.mxu0 %v5928
        %8477 = vmatpush1.bf16.msra.mxu0 %v5927
        %8478 = vmatprep.subr.bf16.mxu0 %v5930
        %8479 = vmatpush1.bf16.msra.mxu0 %v5929
        %8480 = vmatprep.subr.bf16.mxu0 %v5932
        %8481 = vmatpush1.bf16.msra.mxu0 %v5931
        %8482 = vmatprep.subr.bf16.mxu0 %v5934
        %8483 = vmatpush1.bf16.msra.mxu0 %v5933
        %8484 = vmatprep.subr.bf16.mxu0 %v5936
        %8485 = vmatpush1.bf16.msra.mxu0 %v5935
        %8486 = vmatprep.subr.bf16.mxu0 %v5938
        %8487 = vmatpush1.bf16.msra.mxu0 %v5937
        %8488 = vmatprep.subr.bf16.mxu0 %v5940
        %8489 = vmatpush1.bf16.msra.mxu0 %v5939
        %8490 = vmatprep.mubr.bf16.mxu0 %v1788
        %8491 = vmatmul.mubr.bf16.gmra.mrb[0].mxu0 %v1787
        %v8492 = vpop.f32.mrb[0].mxu0
        %v8493 = vadd.f32 %v8442, %v8492
        %v8494 = vpop.f32.mrb[0].mxu0
        %v8495 = vadd.f32 %v8444, %v8494
        %v8496 = vpop.f32.mrb[0].mxu0
        %v8497 = vpop.f32.mrb[0].mxu0
        %8498 = vmatprep.mubr.bf16.mxu0 %v1854
        %8499 = vmatmul.mubr.bf16.gmra.mrb[0].mxu0 %v1853
        %v8500 = vpop.f32.mrb[0].mxu0
        %v8501 = vadd.f32 %v8450, %v8500
        %v8502 = vpop.f32.mrb[0].mxu0
        %v8503 = vadd.f32 %v8452, %v8502
        %v8504 = vpop.f32.mrb[0].mxu0
        %v8505 = vadd.f32 %v8454, %v8504
        %v8506 = vpop.f32.mrb[0].mxu0
        %v8507 = vadd.f32 %v8456, %v8506
        %8508 = vdwg.mxu0
        %8509 = vmatprep.subr.bf16.mxu0 %v5942
        %8510 = vmatpush1.bf16.msra.mxu0 %v5941
        %8511 = vmatprep.subr.bf16.mxu0 %v5944
        %8512 = vmatpush1.bf16.msra.mxu0 %v5943
        %8513 = vmatprep.subr.bf16.mxu0 %v5946
        %8514 = vmatpush1.bf16.msra.mxu0 %v5945
        %8515 = vmatprep.subr.bf16.mxu0 %v5948
        %8516 = vmatpush1.bf16.msra.mxu0 %v5947
        %8517 = vmatprep.subr.bf16.mxu0 %v5950
        %8518 = vmatpush1.bf16.msra.mxu0 %v5949
        %8519 = vmatprep.subr.bf16.mxu0 %v5952
        %8520 = vmatpush1.bf16.msra.mxu0 %v5951
        %8521 = vmatprep.subr.bf16.mxu0 %v5954
        %8522 = vmatpush1.bf16.msra.mxu0 %v5953
        %8523 = vmatprep.subr.bf16.mxu0 %v5956
        %8524 = vmatpush1.bf16.msra.mxu0 %v5955
        %8525 = vmatprep.subr.bf16.mxu0 %v5958
        %8526 = vmatpush1.bf16.msra.mxu0 %v5957
        %8527 = vmatprep.subr.bf16.mxu0 %v5960
        %8528 = vmatpush1.bf16.msra.mxu0 %v5959
        %8529 = vmatprep.subr.bf16.mxu0 %v5962
        %8530 = vmatpush1.bf16.msra.mxu0 %v5961
        %8531 = vmatprep.subr.bf16.mxu0 %v5964
        %8532 = vmatpush1.bf16.msra.mxu0 %v5963
        %8533 = vmatprep.subr.bf16.mxu0 %v5966
        %8534 = vmatpush1.bf16.msra.mxu0 %v5965
        %8535 = vmatprep.subr.bf16.mxu0 %v5968
        %8536 = vmatpush1.bf16.msra.mxu0 %v5967
        %8537 = vmatprep.subr.bf16.mxu0 %v5970
        %8538 = vmatpush1.bf16.msra.mxu0 %v5969
        %8539 = vmatprep.subr.bf16.mxu0 %v5972
        %8540 = vmatpush1.bf16.msra.mxu0 %v5971
        %8541 = vmatprep.mubr.bf16.mxu0 %v1790
        %8542 = vmatmul.mubr.bf16.gmra.mrb[0].mxu0 %v1789
        %v8543 = vpop.f32.mrb[0].mxu0
        %v8544 = vadd.f32 %v8493, %v8543
        %v8545 = vpop.f32.mrb[0].mxu0
        %v8546 = vadd.f32 %v8495, %v8545
        %v8547 = vpop.f32.mrb[0].mxu0
        %v8548 = vpop.f32.mrb[0].mxu0
        %8549 = vmatprep.mubr.bf16.mxu0 %v1856
        %8550 = vmatmul.mubr.bf16.gmra.mrb[0].mxu0 %v1855
        %v8551 = vpop.f32.mrb[0].mxu0
        %v8552 = vadd.f32 %v8501, %v8551
        %v8553 = vpop.f32.mrb[0].mxu0
        %v8554 = vadd.f32 %v8503, %v8553
        %v8555 = vpop.f32.mrb[0].mxu0
        %v8556 = vadd.f32 %v8505, %v8555
        %v8557 = vpop.f32.mrb[0].mxu0
        %v8558 = vadd.f32 %v8507, %v8557
        %8559 = vdwg.mxu0
        %8560 = vmatprep.subr.bf16.mxu0 %v5974
        %8561 = vmatpush1.bf16.msra.mxu0 %v5973
        %8562 = vmatprep.subr.bf16.mxu0 %v5976
        %8563 = vmatpush1.bf16.msra.mxu0 %v5975
        %8564 = vmatprep.subr.bf16.mxu0 %v5978
        %8565 = vmatpush1.bf16.msra.mxu0 %v5977
        %8566 = vmatprep.subr.bf16.mxu0 %v5980
        %8567 = vmatpush1.bf16.msra.mxu0 %v5979
        %8568 = vmatprep.subr.bf16.mxu0 %v5982
        %8569 = vmatpush1.bf16.msra.mxu0 %v5981
        %8570 = vmatprep.subr.bf16.mxu0 %v5984
        %8571 = vmatpush1.bf16.msra.mxu0 %v5983
        %8572 = vmatprep.subr.bf16.mxu0 %v5986
        %8573 = vmatpush1.bf16.msra.mxu0 %v5985
        %8574 = vmatprep.subr.bf16.mxu0 %v5988
        %8575 = vmatpush1.bf16.msra.mxu0 %v5987
        %8576 = vmatprep.subr.bf16.mxu0 %v5990
        %8577 = vmatpush1.bf16.msra.mxu0 %v5989
        %8578 = vmatprep.subr.bf16.mxu0 %v5992
        %8579 = vmatpush1.bf16.msra.mxu0 %v5991
        %8580 = vmatprep.subr.bf16.mxu0 %v5994
        %8581 = vmatpush1.bf16.msra.mxu0 %v5993
        %8582 = vmatprep.subr.bf16.mxu0 %v5996
        %8583 = vmatpush1.bf16.msra.mxu0 %v5995
        %8584 = vmatprep.subr.bf16.mxu0 %v5998
        %8585 = vmatpush1.bf16.msra.mxu0 %v5997
        %8586 = vmatprep.subr.bf16.mxu0 %v6000
        %8587 = vmatpush1.bf16.msra.mxu0 %v5999
        %8588 = vmatprep.subr.bf16.mxu0 %v6002
        %8589 = vmatpush1.bf16.msra.mxu0 %v6001
        %8590 = vmatprep.subr.bf16.mxu0 %v6004
        %8591 = vmatpush1.bf16.msra.mxu0 %v6003
        %8592 = vmatprep.mubr.bf16.mxu0 %v1792
        %8593 = vmatmul.mubr.bf16.gmra.mrb[0].mxu0 %v1791
        %v8594 = vpop.f32.mrb[0].mxu0
        %v8595 = vadd.f32 %v8544, %v8594
        %v8596 = vpop.f32.mrb[0].mxu0
        %v8597 = vadd.f32 %v8546, %v8596
        %v8598 = vpop.f32.mrb[0].mxu0
        %v8599 = vpop.f32.mrb[0].mxu0
        %8600 = vmatprep.mubr.bf16.mxu0 %v1858
        %8601 = vmatmul.mubr.bf16.gmra.mrb[0].mxu0 %v1857
        %v8602 = vpop.f32.mrb[0].mxu0
        %v8603 = vadd.f32 %v8552, %v8602
        %v8604 = vpop.f32.mrb[0].mxu0
        %v8605 = vadd.f32 %v8554, %v8604
        %v8606 = vpop.f32.mrb[0].mxu0
        %v8607 = vadd.f32 %v8556, %v8606
        %v8608 = vpop.f32.mrb[0].mxu0
        %v8609 = vadd.f32 %v8558, %v8608
        %8610 = vdwg.mxu0
        %8611 = vmatprep.subr.bf16.mxu0 %v6006
        %8612 = vmatpush1.bf16.msra.mxu0 %v6005
        %8613 = vmatprep.subr.bf16.mxu0 %v6008
        %8614 = vmatpush1.bf16.msra.mxu0 %v6007
        %8615 = vmatprep.subr.bf16.mxu0 %v6010
        %8616 = vmatpush1.bf16.msra.mxu0 %v6009
        %8617 = vmatprep.subr.bf16.mxu0 %v6012
        %8618 = vmatpush1.bf16.msra.mxu0 %v6011
        %8619 = vmatprep.subr.bf16.mxu0 %v6014
        %8620 = vmatpush1.bf16.msra.mxu0 %v6013
        %8621 = vmatprep.subr.bf16.mxu0 %v6016
        %8622 = vmatpush1.bf16.msra.mxu0 %v6015
        %8623 = vmatprep.subr.bf16.mxu0 %v6018
        %8624 = vmatpush1.bf16.msra.mxu0 %v6017
        %8625 = vmatprep.subr.bf16.mxu0 %v6020
        %8626 = vmatpush1.bf16.msra.mxu0 %v6019
        %8627 = vmatprep.subr.bf16.mxu0 %v6022
        %8628 = vmatpush1.bf16.msra.mxu0 %v6021
        %8629 = vmatprep.subr.bf16.mxu0 %v6024
        %8630 = vmatpush1.bf16.msra.mxu0 %v6023
        %8631 = vmatprep.subr.bf16.mxu0 %v6026
        %8632 = vmatpush1.bf16.msra.mxu0 %v6025
        %8633 = vmatprep.subr.bf16.mxu0 %v6028
        %8634 = vmatpush1.bf16.msra.mxu0 %v6027
        %8635 = vmatprep.subr.bf16.mxu0 %v6030
        %8636 = vmatpush1.bf16.msra.mxu0 %v6029
        %8637 = vmatprep.subr.bf16.mxu0 %v6032
        %8638 = vmatpush1.bf16.msra.mxu0 %v6031
        %8639 = vmatprep.subr.bf16.mxu0 %v6034
        %8640 = vmatpush1.bf16.msra.mxu0 %v6033
        %8641 = vmatprep.subr.bf16.mxu0 %v6036
        %8642 = vmatpush1.bf16.msra.mxu0 %v6035
        %8643 = vmatprep.mubr.bf16.mxu0 %v1794
        %8644 = vmatmul.mubr.bf16.gmra.mrb[0].mxu0 %v1793
        %v8645 = vpop.f32.mrb[0].mxu0
        %v8646 = vadd.f32 %v8595, %v8645
        %v8647 = vpop.f32.mrb[0].mxu0
        %v8648 = vadd.f32 %v8597, %v8647
        %v8649 = vpop.f32.mrb[0].mxu0
        %v8650 = vpop.f32.mrb[0].mxu0
        %8651 = vmatprep.mubr.bf16.mxu0 %v1860
        %8652 = vmatmul.mubr.bf16.gmra.mrb[0].mxu0 %v1859
        %v8653 = vpop.f32.mrb[0].mxu0
        %v8654 = vadd.f32 %v8603, %v8653
        %v8655 = vpop.f32.mrb[0].mxu0
        %v8656 = vadd.f32 %v8605, %v8655
        %v8657 = vpop.f32.mrb[0].mxu0
        %v8658 = vadd.f32 %v8607, %v8657
        %v8659 = vpop.f32.mrb[0].mxu0
        %v8660 = vadd.f32 %v8609, %v8659
        %8661 = vdwg.mxu0
        %8662 = vmatprep.subr.bf16.mxu0 %v6038
        %8663 = vmatpush1.bf16.msra.mxu0 %v6037
        %8664 = vmatprep.subr.bf16.mxu0 %v6040
        %8665 = vmatpush1.bf16.msra.mxu0 %v6039
        %8666 = vmatprep.subr.bf16.mxu0 %v6042
        %8667 = vmatpush1.bf16.msra.mxu0 %v6041
        %8668 = vmatprep.subr.bf16.mxu0 %v6044
        %8669 = vmatpush1.bf16.msra.mxu0 %v6043
        %8670 = vmatprep.subr.bf16.mxu0 %v6046
        %8671 = vmatpush1.bf16.msra.mxu0 %v6045
        %8672 = vmatprep.subr.bf16.mxu0 %v6048
        %8673 = vmatpush1.bf16.msra.mxu0 %v6047
        %8674 = vmatprep.subr.bf16.mxu0 %v6050
        %8675 = vmatpush1.bf16.msra.mxu0 %v6049
        %8676 = vmatprep.subr.bf16.mxu0 %v6052
        %8677 = vmatpush1.bf16.msra.mxu0 %v6051
        %8678 = vmatprep.subr.bf16.mxu0 %v6054
        %8679 = vmatpush1.bf16.msra.mxu0 %v6053
        %8680 = vmatprep.subr.bf16.mxu0 %v6056
        %8681 = vmatpush1.bf16.msra.mxu0 %v6055
        %8682 = vmatprep.subr.bf16.mxu0 %v6058
        %8683 = vmatpush1.bf16.msra.mxu0 %v6057
        %8684 = vmatprep.subr.bf16.mxu0 %v6060
        %8685 = vmatpush1.bf16.msra.mxu0 %v6059
        %8686 = vmatprep.subr.bf16.mxu0 %v6062
        %8687 = vmatpush1.bf16.msra.mxu0 %v6061
        %8688 = vmatprep.subr.bf16.mxu0 %v6064
        %8689 = vmatpush1.bf16.msra.mxu0 %v6063
        %8690 = vmatprep.subr.bf16.mxu0 %v6066
        %8691 = vmatpush1.bf16.msra.mxu0 %v6065
        %8692 = vmatprep.subr.bf16.mxu0 %v6068
        %8693 = vmatpush1.bf16.msra.mxu0 %v6067
        %8694 = vmatprep.mubr.bf16.mxu0 %v1796
        %8695 = vmatmul.mubr.bf16.gmra.mrb[0].mxu0 %v1795
        %v8696 = vpop.f32.mrb[0].mxu0
        %v8697 = vadd.f32 %v8646, %v8696
        %v8698 = vpop.f32.mrb[0].mxu0
        %v8699 = vadd.f32 %v8648, %v8698
        %v8700 = vpop.f32.mrb[0].mxu0
        %v8701 = vpop.f32.mrb[0].mxu0
        %8702 = vmatprep.mubr.bf16.mxu0 %v1862
        %8703 = vmatmul.mubr.bf16.gmra.mrb[0].mxu0 %v1861
        %v8704 = vpop.f32.mrb[0].mxu0
        %v8705 = vadd.f32 %v8654, %v8704
        %v8706 = vpop.f32.mrb[0].mxu0
        %v8707 = vadd.f32 %v8656, %v8706
        %v8708 = vpop.f32.mrb[0].mxu0
        %v8709 = vadd.f32 %v8658, %v8708
        %v8710 = vpop.f32.mrb[0].mxu0
        %v8711 = vadd.f32 %v8660, %v8710
        %8712 = vdwg.mxu0
        %8713 = vmatprep.subr.bf16.mxu0 %v6070
        %8714 = vmatpush1.bf16.msra.mxu0 %v6069
        %8715 = vmatprep.subr.bf16.mxu0 %v6072
        %8716 = vmatpush1.bf16.msra.mxu0 %v6071
        %8717 = vmatprep.subr.bf16.mxu0 %v6074
        %8718 = vmatpush1.bf16.msra.mxu0 %v6073
        %8719 = vmatprep.subr.bf16.mxu0 %v6076
        %8720 = vmatpush1.bf16.msra.mxu0 %v6075
        %8721 = vmatprep.subr.bf16.mxu0 %v6078
        %8722 = vmatpush1.bf16.msra.mxu0 %v6077
        %8723 = vmatprep.subr.bf16.mxu0 %v6080
        %8724 = vmatpush1.bf16.msra.mxu0 %v6079
        %8725 = vmatprep.subr.bf16.mxu0 %v6082
        %8726 = vmatpush1.bf16.msra.mxu0 %v6081
        %8727 = vmatprep.subr.bf16.mxu0 %v6084
        %8728 = vmatpush1.bf16.msra.mxu0 %v6083
        %8729 = vmatprep.subr.bf16.mxu0 %v6086
        %8730 = vmatpush1.bf16.msra.mxu0 %v6085
        %8731 = vmatprep.subr.bf16.mxu0 %v6088
        %8732 = vmatpush1.bf16.msra.mxu0 %v6087
        %8733 = vmatprep.subr.bf16.mxu0 %v6090
        %8734 = vmatpush1.bf16.msra.mxu0 %v6089
        %8735 = vmatprep.subr.bf16.mxu0 %v6092
        %8736 = vmatpush1.bf16.msra.mxu0 %v6091
        %8737 = vmatprep.subr.bf16.mxu0 %v6094
        %8738 = vmatpush1.bf16.msra.mxu0 %v6093
        %8739 = vmatprep.subr.bf16.mxu0 %v6096
        %8740 = vmatpush1.bf16.msra.mxu0 %v6095
        %8741 = vmatprep.subr.bf16.mxu0 %v6098
        %8742 = vmatpush1.bf16.msra.mxu0 %v6097
        %8743 = vmatprep.subr.bf16.mxu0 %v6100
        %8744 = vmatpush1.bf16.msra.mxu0 %v6099
        %8745 = vmatprep.mubr.bf16.mxu0 %v1798
        %8746 = vmatmul.mubr.bf16.gmra.mrb[0].mxu0 %v1797
        %v8747 = vpop.f32.mrb[0].mxu0
        %v8748 = vadd.f32 %v8697, %v8747
        %v8749 = vpop.f32.mrb[0].mxu0
        %v8750 = vadd.f32 %v8699, %v8749
        %v8751 = vpop.f32.mrb[0].mxu0
        %v8752 = vpop.f32.mrb[0].mxu0
        %8753 = vmatprep.mubr.bf16.mxu0 %v1864
        %8754 = vmatmul.mubr.bf16.gmra.mrb[0].mxu0 %v1863
        %v8755 = vpop.f32.mrb[0].mxu0
        %v8756 = vadd.f32 %v8705, %v8755
        %v8757 = vpop.f32.mrb[0].mxu0
        %v8758 = vadd.f32 %v8707, %v8757
        %v8759 = vpop.f32.mrb[0].mxu0
        %v8760 = vadd.f32 %v8709, %v8759
        %v8761 = vpop.f32.mrb[0].mxu0
        %v8762 = vadd.f32 %v8711, %v8761
        %8763 = vdwg.mxu0
        %8764 = vmatprep.subr.bf16.mxu0 %v6102
        %8765 = vmatpush1.bf16.msra.mxu0 %v6101
        %8766 = vmatprep.subr.bf16.mxu0 %v6104
        %8767 = vmatpush1.bf16.msra.mxu0 %v6103
        %8768 = vmatprep.subr.bf16.mxu0 %v6106
        %8769 = vmatpush1.bf16.msra.mxu0 %v6105
        %8770 = vmatprep.subr.bf16.mxu0 %v6108
        %8771 = vmatpush1.bf16.msra.mxu0 %v6107
        %8772 = vmatprep.subr.bf16.mxu0 %v6110
        %8773 = vmatpush1.bf16.msra.mxu0 %v6109
        %8774 = vmatprep.subr.bf16.mxu0 %v6112
        %8775 = vmatpush1.bf16.msra.mxu0 %v6111
        %8776 = vmatprep.subr.bf16.mxu0 %v6114
        %8777 = vmatpush1.bf16.msra.mxu0 %v6113
        %8778 = vmatprep.subr.bf16.mxu0 %v6116
        %8779 = vmatpush1.bf16.msra.mxu0 %v6115
        %8780 = vmatprep.subr.bf16.mxu0 %v6118
        %8781 = vmatpush1.bf16.msra.mxu0 %v6117
        %8782 = vmatprep.subr.bf16.mxu0 %v6120
        %8783 = vmatpush1.bf16.msra.mxu0 %v6119
        %8784 = vmatprep.subr.bf16.mxu0 %v6122
        %8785 = vmatpush1.bf16.msra.mxu0 %v6121
        %8786 = vmatprep.subr.bf16.mxu0 %v6124
        %8787 = vmatpush1.bf16.msra.mxu0 %v6123
        %8788 = vmatprep.subr.bf16.mxu0 %v6126
        %8789 = vmatpush1.bf16.msra.mxu0 %v6125
        %8790 = vmatprep.subr.bf16.mxu0 %v6128
        %8791 = vmatpush1.bf16.msra.mxu0 %v6127
        %8792 = vmatprep.subr.bf16.mxu0 %v6130
        %8793 = vmatpush1.bf16.msra.mxu0 %v6129
        %8794 = vmatprep.subr.bf16.mxu0 %v6132
        %8795 = vmatpush1.bf16.msra.mxu0 %v6131
        %8796 = vmatprep.mubr.bf16.mxu0 %v1800
        %8797 = vmatmul.mubr.bf16.gmra.mrb[0].mxu0 %v1799
        %v8798 = vpop.f32.mrb[0].mxu0
        %v8799 = vadd.f32 %v8748, %v8798
        %v8800 = vpop.f32.mrb[0].mxu0
        %v8801 = vadd.f32 %v8750, %v8800
        %v8802 = vpop.f32.mrb[0].mxu0
        %v8803 = vpop.f32.mrb[0].mxu0
        %8804 = vmatprep.mubr.bf16.mxu0 %v1866
        %8805 = vmatmul.mubr.bf16.gmra.mrb[0].mxu0 %v1865
        %v8806 = vpop.f32.mrb[0].mxu0
        %v8807 = vadd.f32 %v8756, %v8806
        %v8808 = vpop.f32.mrb[0].mxu0
        %v8809 = vadd.f32 %v8758, %v8808
        %v8810 = vpop.f32.mrb[0].mxu0
        %v8811 = vadd.f32 %v8760, %v8810
        %v8812 = vpop.f32.mrb[0].mxu0
        %v8813 = vadd.f32 %v8762, %v8812
        %8814 = vdwg.mxu0
        %8815 = vmatprep.subr.bf16.mxu0 %v6134
        %8816 = vmatpush1.bf16.msra.mxu0 %v6133
        %8817 = vmatprep.subr.bf16.mxu0 %v6136
        %8818 = vmatpush1.bf16.msra.mxu0 %v6135
        %8819 = vmatprep.subr.bf16.mxu0 %v6138
        %8820 = vmatpush1.bf16.msra.mxu0 %v6137
        %8821 = vmatprep.subr.bf16.mxu0 %v6140
        %8822 = vmatpush1.bf16.msra.mxu0 %v6139
        %8823 = vmatprep.subr.bf16.mxu0 %v6142
        %8824 = vmatpush1.bf16.msra.mxu0 %v6141
        %8825 = vmatprep.subr.bf16.mxu0 %v6144
        %8826 = vmatpush1.bf16.msra.mxu0 %v6143
        %8827 = vmatprep.subr.bf16.mxu0 %v6146
        %8828 = vmatpush1.bf16.msra.mxu0 %v6145
        %8829 = vmatprep.subr.bf16.mxu0 %v6148
        %8830 = vmatpush1.bf16.msra.mxu0 %v6147
        %8831 = vmatprep.subr.bf16.mxu0 %v6150
        %8832 = vmatpush1.bf16.msra.mxu0 %v6149
        %8833 = vmatprep.subr.bf16.mxu0 %v6152
        %8834 = vmatpush1.bf16.msra.mxu0 %v6151
        %8835 = vmatprep.subr.bf16.mxu0 %v6154
        %8836 = vmatpush1.bf16.msra.mxu0 %v6153
        %8837 = vmatprep.subr.bf16.mxu0 %v6156
        %8838 = vmatpush1.bf16.msra.mxu0 %v6155
        %8839 = vmatprep.subr.bf16.mxu0 %v6158
        %8840 = vmatpush1.bf16.msra.mxu0 %v6157
        %8841 = vmatprep.subr.bf16.mxu0 %v6160
        %8842 = vmatpush1.bf16.msra.mxu0 %v6159
        %8843 = vmatprep.subr.bf16.mxu0 %v6162
        %8844 = vmatpush1.bf16.msra.mxu0 %v6161
        %8845 = vmatprep.subr.bf16.mxu0 %v6164
        %8846 = vmatpush1.bf16.msra.mxu0 %v6163
        %8847 = vmatprep.mubr.bf16.mxu0 %v1802
        %8848 = vmatmul.mubr.bf16.gmra.mrb[0].mxu0 %v1801
        %v8849 = vpop.f32.mrb[0].mxu0
        %v8850 = vadd.f32 %v8799, %v8849
        %v8851 = vpop.f32.mrb[0].mxu0
        %v8852 = vadd.f32 %v8801, %v8851
        %v8853 = vpop.f32.mrb[0].mxu0
        %v8854 = vpop.f32.mrb[0].mxu0
        %8855 = vmatprep.mubr.bf16.mxu0 %v1868
        %8856 = vmatmul.mubr.bf16.gmra.mrb[0].mxu0 %v1867
        %v8857 = vpop.f32.mrb[0].mxu0
        %v8858 = vadd.f32 %v8807, %v8857
        %v8859 = vpop.f32.mrb[0].mxu0
        %v8860 = vadd.f32 %v8809, %v8859
        %v8861 = vpop.f32.mrb[0].mxu0
        %v8862 = vadd.f32 %v8811, %v8861
        %v8863 = vpop.f32.mrb[0].mxu0
        %v8864 = vadd.f32 %v8813, %v8863
        %8865 = vdwg.mxu0
        %8866 = vmatprep.subr.bf16.mxu0 %v6166
        %8867 = vmatpush1.bf16.msra.mxu0 %v6165
        %8868 = vmatprep.subr.bf16.mxu0 %v6168
        %8869 = vmatpush1.bf16.msra.mxu0 %v6167
        %8870 = vmatprep.subr.bf16.mxu0 %v6170
        %8871 = vmatpush1.bf16.msra.mxu0 %v6169
        %8872 = vmatprep.subr.bf16.mxu0 %v6172
        %8873 = vmatpush1.bf16.msra.mxu0 %v6171
        %8874 = vmatprep.subr.bf16.mxu0 %v6174
        %8875 = vmatpush1.bf16.msra.mxu0 %v6173
        %8876 = vmatprep.subr.bf16.mxu0 %v6176
        %8877 = vmatpush1.bf16.msra.mxu0 %v6175
        %8878 = vmatprep.subr.bf16.mxu0 %v6178
        %8879 = vmatpush1.bf16.msra.mxu0 %v6177
        %8880 = vmatprep.subr.bf16.mxu0 %v6180
        %8881 = vmatpush1.bf16.msra.mxu0 %v6179
        %8882 = vmatprep.subr.bf16.mxu0 %v6182
        %8883 = vmatpush1.bf16.msra.mxu0 %v6181
        %8884 = vmatprep.subr.bf16.mxu0 %v6184
        %8885 = vmatpush1.bf16.msra.mxu0 %v6183
        %8886 = vmatprep.subr.bf16.mxu0 %v6186
        %8887 = vmatpush1.bf16.msra.mxu0 %v6185
        %8888 = vmatprep.subr.bf16.mxu0 %v6188
        %8889 = vmatpush1.bf16.msra.mxu0 %v6187
        %8890 = vmatprep.subr.bf16.mxu0 %v6190
        %8891 = vmatpush1.bf16.msra.mxu0 %v6189
        %8892 = vmatprep.subr.bf16.mxu0 %v6192
        %8893 = vmatpush1.bf16.msra.mxu0 %v6191
        %8894 = vmatprep.subr.bf16.mxu0 %v6194
        %8895 = vmatpush1.bf16.msra.mxu0 %v6193
        %8896 = vmatprep.subr.bf16.mxu0 %v6196
        %8897 = vmatpush1.bf16.msra.mxu0 %v6195
        %8898 = vmatprep.mubr.bf16.mxu0 %v1804
        %8899 = vmatmul.mubr.bf16.gmra.mrb[0].mxu0 %v1803
        %v8900 = vpop.f32.mrb[0].mxu0
        %v8901 = vadd.f32 %v8850, %v8900
        %v8902 = vpop.f32.mrb[0].mxu0
        %v8903 = vadd.f32 %v8852, %v8902
        %v8904 = vpop.f32.mrb[0].mxu0
        %v8905 = vpop.f32.mrb[0].mxu0
        %8906 = vmatprep.mubr.bf16.mxu0 %v1870
        %8907 = vmatmul.mubr.bf16.gmra.mrb[0].mxu0 %v1869
        %v8908 = vpop.f32.mrb[0].mxu0
        %v8909 = vadd.f32 %v8858, %v8908
        %v8910 = vpop.f32.mrb[0].mxu0
        %v8911 = vadd.f32 %v8860, %v8910
        %v8912 = vpop.f32.mrb[0].mxu0
        %v8913 = vadd.f32 %v8862, %v8912
        %v8914 = vpop.f32.mrb[0].mxu0
        %v8915 = vadd.f32 %v8864, %v8914
        %8916 = vdwg.mxu0
        %8917 = vmatprep.subr.bf16.mxu0 %v6198
        %8918 = vmatpush1.bf16.msra.mxu0 %v6197
        %8919 = vmatprep.subr.bf16.mxu0 %v6200
        %8920 = vmatpush1.bf16.msra.mxu0 %v6199
        %8921 = vmatprep.subr.bf16.mxu0 %v6202
        %8922 = vmatpush1.bf16.msra.mxu0 %v6201
        %8923 = vmatprep.subr.bf16.mxu0 %v6204
        %8924 = vmatpush1.bf16.msra.mxu0 %v6203
        %8925 = vmatprep.subr.bf16.mxu0 %v6206
        %8926 = vmatpush1.bf16.msra.mxu0 %v6205
        %8927 = vmatprep.subr.bf16.mxu0 %v6208
        %8928 = vmatpush1.bf16.msra.mxu0 %v6207
        %8929 = vmatprep.subr.bf16.mxu0 %v6210
        %8930 = vmatpush1.bf16.msra.mxu0 %v6209
        %8931 = vmatprep.subr.bf16.mxu0 %v6212
        %8932 = vmatpush1.bf16.msra.mxu0 %v6211
        %8933 = vmatprep.subr.bf16.mxu0 %v6214
        %8934 = vmatpush1.bf16.msra.mxu0 %v6213
        %8935 = vmatprep.subr.bf16.mxu0 %v6216
        %8936 = vmatpush1.bf16.msra.mxu0 %v6215
        %8937 = vmatprep.subr.bf16.mxu0 %v6218
        %8938 = vmatpush1.bf16.msra.mxu0 %v6217
        %8939 = vmatprep.subr.bf16.mxu0 %v6220
        %8940 = vmatpush1.bf16.msra.mxu0 %v6219
        %8941 = vmatprep.subr.bf16.mxu0 %v6222
        %8942 = vmatpush1.bf16.msra.mxu0 %v6221
        %8943 = vmatprep.subr.bf16.mxu0 %v6224
        %8944 = vmatpush1.bf16.msra.mxu0 %v6223
        %8945 = vmatprep.subr.bf16.mxu0 %v6226
        %8946 = vmatpush1.bf16.msra.mxu0 %v6225
        %8947 = vmatprep.subr.bf16.mxu0 %v6228
        %8948 = vmatpush1.bf16.msra.mxu0 %v6227
        %8949 = vmatprep.mubr.bf16.mxu0 %v1806
        %8950 = vmatmul.mubr.bf16.gmra.mrb[0].mxu0 %v1805
        %v8951 = vpop.f32.mrb[0].mxu0
        %v8952 = vadd.f32 %v8901, %v8951
        %v8953 = vpop.f32.mrb[0].mxu0
        %v8954 = vadd.f32 %v8903, %v8953
        %v8955 = vpop.f32.mrb[0].mxu0
        %v8956 = vpop.f32.mrb[0].mxu0
        %8957 = vmatprep.mubr.bf16.mxu0 %v1872
        %8958 = vmatmul.mubr.bf16.gmra.mrb[0].mxu0 %v1871
        %v8959 = vpop.f32.mrb[0].mxu0
        %v8960 = vadd.f32 %v8909, %v8959
        %v8961 = vpop.f32.mrb[0].mxu0
        %v8962 = vadd.f32 %v8911, %v8961
        %v8963 = vpop.f32.mrb[0].mxu0
        %v8964 = vadd.f32 %v8913, %v8963
        %v8965 = vpop.f32.mrb[0].mxu0
        %v8966 = vadd.f32 %v8915, %v8965
        %8967 = vdwg.mxu0
        %vm8972 = vcmask 1045504
        %v8973 = vrot.slane %v8960, 2
        %v8974 = vrot.slane %v8964, 2
        %v8975 = vsel %vm8972, %v8973, %v8974
        %v8976 = vrot.slane %v8962, 2
        %v8977 = vrot.slane %v8966, 2
        %v8978 = vsel %vm8972, %v8976, %v8977
        %v8981 = vsub.f32 %v8952, %v8975
        %v8982 = vsub.f32 %v8954, %v8978
        %v8983 = vmul.f32 %v8981, %v8981
        %v8984 = vmul.f32 %v8982, %v8982
        %v8985 = vadd.f32 %v8983, %v8984
        %8986 = vadd.xlane.f32.xlu0 %v8985
        %v8987 = vpop.xlane.xlu0 %8986
        %v8988 = vrot.slane %v8987, 4
        %v8989 = vadd.f32 %v8987, %v8988
        %v8990 = vrot.slane %v8989, 2
        %v8991 = vadd.f32 %v8989, %v8990
        %v8992 = vrot.slane %v8991, 1
        %v8993 = vadd.f32 %v8991, %v8992
        %s8994 = vtos %v8993
        %v8995 = vmul.f32 %v8960, %v8960
        %v8996 = vmul.f32 %v8962, %v8962
        %v8997 = vmul.f32 %v8964, %v8964
        %v8998 = vmul.f32 %v8966, %v8966
        %v9003 = vrot.slane %v8995, 2
        %v9004 = vrot.slane %v8997, 2
        %v9005 = vsel %vm8972, %v9003, %v9004
        %v9006 = vrot.slane %v8996, 2
        %v9007 = vrot.slane %v8998, 2
        %v9008 = vsel %vm8972, %v9006, %v9007
        %v9011 = vadd.f32 %v9005, %v9008
        %9012 = vadd.xlane.f32.xlu0 %v9011
        %v9013 = vpop.xlane.xlu0 %9012
        %v9014 = vrot.slane %v9013, 4
        %v9015 = vadd.f32 %v9013, %v9014
        %v9016 = vrot.slane %v9015, 2
        %v9017 = vadd.f32 %v9015, %v9016
        %v9018 = vrot.slane %v9017, 1
        %v9019 = vadd.f32 %v9017, %v9018
        %s9020 = vtos %v9019
        %v9021 = vlaneseq
        %v9022 = vshrl.u32 %v9021, 7
        %vm9023 = vcmp.eq.s32.totalorder %v9022, 0
        %v9024 = vstv %s8994
        %v9025 = vstv %s9020
        %v9026 = vsel %vm9023, %v9024, %v9025
        %9027 = vst [vmem:[%s151] sm:$0x3] %v9026
        %s9028 = sand.u32 %s72, 1
        %s9029 = scalar_lea.sflag [#allocation4], %s9028
        %s9030 = sand.u32 %s72, 1
        %s9031 = smul.addr %s9030, 2
        %s9032 = scalar_lea.vmem [#allocation5], %s9031
        // Predicated region
        $region33: #{tpu_custom_call.1} parent=27 // pred_check
          %p9033 = pneg %p82
        $region34: #{tpu_custom_call.1} parent=27 // pred_check_branch
          %9035 = sbr.rel (%p9033) target = $region36
        $region35: #{tpu_custom_call.1} parent=27 // pred_region
          %s9037 = ssub.s32 32, 32
          %9038 = vsyncadd %s9029, %s9037
          %s9039 = smul.addr %s17, 32
          %s9040 = scalar_lea.hbm %s2, %s9039
          %s9042 = sshll.u32 %s9032, 4
          %s9043 = int_to_ptr.vmem [resolvable:$true] %s9042
          %9045 = dma.vmem_to_hbm [thread:$0]  %s9043, 32, %s9040, %s9029
        $region36: #{tpu_custom_call.1} parent=27 // pred_fallthru
          _
      $region28: #{tpu_custom_call.1} parent=5 // pred_fallthru
        _
      %p9046 = scmp.le.s32.totalorder 2, %s12
      // Predicated region
      $region37: #{tpu_custom_call.1} parent=5 // pred_check
        %p9047 = pneg %p9046
      $region38: #{tpu_custom_call.1} parent=5 // pred_check_branch
        %9049 = sbr.rel (%p9047) target = $region40
      $region39: #{tpu_custom_call.1} parent=5 // pred_region
        %s9050 = ssub.s32 %s12, 2
        // Predicated region
        $region41: #{tpu_custom_call.1} parent=39 // pred_check
          %p9051 = pneg %p88
        $region42: #{tpu_custom_call.1} parent=39 // pred_check_branch
          %9053 = sbr.rel (%p9051) target = $region44
        $region43: #{tpu_custom_call.1} parent=39 // pred_region
          %s9054 = sand.u32 %s73, 1
          %s9055 = scalar_lea.sflag [#allocation4], %s9054
          %s9056 = sand.u32 %s73, 1
          %s9057 = smul.addr %s9056, 2
          %s9058 = scalar_lea.vmem [#allocation5], %s9057
          %9059 = dma.done %s9055, 32
        $region44: #{tpu_custom_call.1} parent=39 // pred_fallthru
          _
      $region40: #{tpu_custom_call.1} parent=5 // pred_fallthru
        _
    $region6: #{tpu_custom_call.1} parent=1 // loop_footer
      %s16 = sadd.s32 1, %s12
    $region7: #{tpu_custom_call.1} parent=1 // loop_footer_branch
      %11 = sbr.rel target = $region3
    $region8: #{tpu_custom_call.1} parent=1 // loop_exit
      _
    %9060 = vsyncpa [#allocation3], 1
    %s9061 = scalar_lea.sflag [#allocation3], 1
    %9062 = vsyncpa %s9061, 1
    %9063 = vsyncpa [#allocation4], 1
    %s9064 = scalar_lea.sflag [#allocation4], 1
    %9065 = vsyncpa %s9064, 1

</llo_original>
